<compile_context>
chip_gen: v7x
topology: tpu7x:2x2x1
jax: 0.10.0
libtpu: 0.0.40
codegen_flags: <defaults>
</compile_context>

<pallas_src>
import functools

import numpy as np

import jax
import jax.numpy as jnp
from jax.experimental import pallas as pl
from jax.experimental.pallas import tpu as pltpu


# Sub-pixel decomposition of ConvTranspose2d(kernel=4, stride=2, padding=1), per axis:
#   out[2*q + r] = sum_i  x[q + _DOFF[r][i]] * w[..., _KTAP[r][i]]
_DOFF = ((0, -1), (0, 1))   # input offset, per output parity r and tap index i
_KTAP = ((1, 3), (2, 0))    # kernel tap,   per output parity r and tap index i


# ----------------------------- tile-size / VMEM helpers -----------------------------

def _ceil_to(x, m):
    return -(-x // m) * m


def _vmem_capacity_bytes():
    """Physical VMEM of the current generation (64 MiB v7x, 128 MiB v5e/v6e)."""
    try:
        return int(pltpu.get_tpu_info().vmem_capacity_bytes)
    except Exception:
        return 64 * 1024 * 1024      # conservative default (v7x per-core VMEM)


def _block_vmem_bytes(shape, itemsize):
    """VMEM footprint of one block, including (8, 128) sublane/lane padding."""
    lead = 1
    for d in shape[:-2]:
        lead *= d
    return lead * _ceil_to(shape[-2], 8) * _ceil_to(shape[-1], 128) * itemsize


def _pick_tile_rows(H, W, Cin, Cout, in_itemsize, out_itemsize, budget, max_tile_rows):
    """Largest row tile TH (a divisor of H) whose pipeline + scratch fits the budget."""

    def need(th):
        n = 0
        # double-buffered pipeline blocks
        n += 2 * _block_vmem_bytes((1, th, W, Cin), in_itemsize)               # x tile
        n += 4 * _block_vmem_bytes((1, 1, W, Cin), in_itemsize)                # row halos
        n += 2 * _block_vmem_bytes((2, 2, 3 * Cin, 2 * Cout), in_itemsize)     # weights
        n += 2 * _block_vmem_bytes((th, 2, W, 2 * Cout), in_itemsize)          # bias
        n += 2 * _block_vmem_bytes((1, th, 2, W, 2 * Cout), out_itemsize)      # output
        # in-kernel temporaries (padded tile, shifted copies, fused LHS, f32 accs)
        n += 6 * _block_vmem_bytes((th + 2, W, Cin), in_itemsize)
        n += 3 * _block_vmem_bytes((th, W, 2 * Cout), 4)
        return n

    th = H if max_tile_rows is None else min(H, int(max_tile_rows))
    while th > 1 and need(th) > budget:
        th //= 2
    while H % th != 0:
        th -= 1
    return max(th, 1)


# --------------------------------- the Pallas kernel --------------------------------

def _deconv_subpixel_kernel(x_ref, xup_ref, xdn_ref, w_ref, b_ref, o_ref,
                            *, TH, W, Cin, Cout, activation):
    """One (row-tile, batch) step of ConvTranspose2dWNUB(k=4, s=2, p=1) + activation.

    x_ref  : (1, TH, W, Cin)        current NHWC row tile
    xup_ref: (1, 1, W, Cin)         row above the tile (zeroed at the top edge)
    xdn_ref: (1, 1, W, Cin)         row below the tile (zeroed at the bottom edge)
    w_ref  : (2, 2, 3*Cin, 2*Cout)  fused weights [row parity, dy tap, (dx, ci), (rx, co)]
    b_ref  : (TH, 2, W, 2*Cout)     untied bias, already in output layout
    o_ref  : (1, TH, 2, W, 2*Cout)  output; the full (B, H, 2, W, 2*Cout) array is the
                                    same row-major buffer as (B, 2H, 2W, Cout)
    """
    i = pl.program_id(0)
    last = pl.num_programs(0) - 1

    # ---- (TH + 2)-row tile with the 1-row zero halo (replaces wrapper jnp.pad) ------
    top = xup_ref[0] * (i > 0).astype(xup_ref.dtype)       # (1, W, Cin)
    bot = xdn_ref[0] * (i < last).astype(xdn_ref.dtype)    # (1, W, Cin)
    xe = jnp.concatenate([top, x_ref[0], bot], axis=0)     # (TH+2, W, Cin)

    # ---- fuse the 3 column shifts into the contraction dim (K = 3*Cin) --------------
    zcol = jnp.zeros((TH + 2, 1, Cin), xe.dtype)
    x_m1 = jnp.concatenate([zcol, xe[:, :W - 1, :]], axis=1)   # col qx -> x[qx - 1]
    x_p1 = jnp.concatenate([xe[:, 1:, :], zcol], axis=1)       # col qx -> x[qx + 1]
    xc = jnp.concatenate([x_m1, xe, x_p1], axis=-1)            # (TH+2, W, 3*Cin)

    k3 = 3 * Cin
    n2 = 2 * Cout
    lhs0 = xc[1:TH + 1].reshape(TH * W, k3)    # dy = 0 rows, shared by both parities

    for ry in range(2):                        # output row parity (static unroll)
        dy = _DOFF[ry][1]                      # second row tap: -1 (ry=0) / +1 (ry=1)
        lhs1 = xc[1 + dy:1 + dy + TH].reshape(TH * W, k3)
        acc = jnp.dot(lhs0, w_ref[ry, 0], preferred_element_type=jnp.float32)
        acc = acc + jnp.dot(lhs1, w_ref[ry, 1], preferred_element_type=jnp.float32)
        # (TH*W, 2*Cout) -> (TH, W, 2*Cout) is layout-preserving (W % 8 == 0).
        out = acc.reshape(TH, W, n2) + b_ref[:, ry, :, :].astype(jnp.float32)
        if activation == "lrelu":
            out = jnp.where(out >= 0, out, 0.2 * out)
        elif activation == "rgb":              # fused RGBSlabDecoder epilogue
            out = jnp.maximum(25.0 * out + 100.0, 0.0)
        o_ref[0, :, ry, :, :] = out.astype(o_ref.dtype)


def deconv_wnub_layer(x_nhwc, w_fused, b_fused, activation, out_dtype, max_tile_rows):
    """One ConvTranspose2dWNUB(k=4, s=2, p=1) layer (+ fused activation) via Pallas.

    x_nhwc : (B, H, W, Cin);  w_fused: (2, 2, 3*Cin, 2*Cout);  b_fused: (H, 2, W, 2*Cout)
    returns (B, 2H, 2W, Cout)
    """
    B, H, W, Cin = x_nhwc.shape
    Cout = w_fused.shape[-1] // 2

    cap = _vmem_capacity_bytes()
    vmem_limit = min(3 * cap // 4, 100 * 1024 * 1024)
    TH = _pick_tile_rows(H, W, Cin, Cout,
                         x_nhwc.dtype.itemsize, np.dtype(out_dtype).itemsize,
                         int(0.8 * vmem_limit), max_tile_rows)

    kernel = functools.partial(_deconv_subpixel_kernel, TH=TH, W=W, Cin=Cin,
                               Cout=Cout, activation=activation)
    out = pl.pallas_call(
        kernel,
        out_shape=jax.ShapeDtypeStruct((B, H, 2, W, 2 * Cout), out_dtype),
        # batch is innermost so the weight / untied-bias blocks are revisited (no
        # re-DMA per batch element); row tiles are "parallel" for v7x megacore.
        grid=(H // TH, B),
        in_specs=[
            pl.BlockSpec((1, TH, W, Cin), lambda i, b: (b, i, 0, 0)),
            pl.BlockSpec((1, 1, W, Cin),
                         lambda i, b: (b, jnp.maximum(i * TH - 1, 0), 0, 0)),
            pl.BlockSpec((1, 1, W, Cin),
                         lambda i, b: (b, jnp.minimum((i + 1) * TH, H - 1), 0, 0)),
            pl.BlockSpec((2, 2, 3 * Cin, 2 * Cout), lambda i, b: (0, 0, 0, 0)),
            pl.BlockSpec((TH, 2, W, 2 * Cout), lambda i, b: (i, 0, 0, 0)),
        ],
        out_specs=pl.BlockSpec((1, TH, 2, W, 2 * Cout), lambda i, b: (b, i, 0, 0, 0)),
        compiler_params=pltpu.CompilerParams(
            dimension_semantics=("parallel", "arbitrary"),
            vmem_limit_bytes=int(vmem_limit)),
    )(x_nhwc, x_nhwc, x_nhwc, w_fused, b_fused)

    # (B, H, 2, W, 2*Cout) is the same row-major buffer as (B, 2H, 2W, Cout): free
    # reshape, no pixel-shuffle HBM round trip.
    return out.reshape(B, 2 * H, 2 * W, Cout)


# --------------------- parameter preparation (hoisted out of forward) ---------------

def prepare_layer_params(weight, g, bias, act_dtype):
    """Fold weight-norm + sub-pixel fusion + untied-bias relayout into kernel tensors.

    weight: (Cin, Cout, 4, 4) PyTorch ConvTranspose2d layout; g: (Cout,);
    bias: (Cout, 2H, 2W).  Runs once at parameter-load time, not per forward.
    """
    weight = weight.astype(jnp.float32)
    Cin, Cout = weight.shape[0], weight.shape[1]
    # ca_code ConvTranspose2dWNUB: a single Frobenius norm over the whole weight tensor.
    wnorm = jnp.sqrt(jnp.sum(weight ** 2))
    v = weight * (g.astype(jnp.float32)[None, :, None, None] / wnorm)

    parities = []
    for ry in range(2):
        taps = []
        for ti in range(2):
            kr = _KTAP[ry][ti]
            dx_blocks = []
            for dx in (-1, 0, 1):
                rx_blocks = []
                for rx in range(2):
                    if dx in _DOFF[rx]:
                        kc = _KTAP[rx][_DOFF[rx].index(dx)]
                        rx_blocks.append(v[:, :, kr, kc])                 # (Cin, Cout)
                    else:
                        rx_blocks.append(jnp.zeros((Cin, Cout), jnp.float32))
                dx_blocks.append(jnp.concatenate(rx_blocks, axis=1))      # (Cin, 2*Cout)
            taps.append(jnp.concatenate(dx_blocks, axis=0))               # (3*Cin, 2*Cout)
        parities.append(jnp.stack(taps, axis=0))
    w_fused = jnp.stack(parities, axis=0).astype(act_dtype)               # (2,2,3Cin,2Cout)

    H, W = bias.shape[1] // 2, bias.shape[2] // 2
    b_fused = (jnp.transpose(bias, (1, 2, 0))        # (2H, 2W, Cout)
                  .reshape(H, 2, W, 2 * Cout)        # (qy, ry, qx, rx*Cout + c)
                  .astype(act_dtype))
    return dict(w=w_fused, b=b_fused)


def prepare_decoder_params(raw_params, act_dtype=jnp.bfloat16):
    return [prepare_layer_params(p["weight"], p["g"], p["bias"], act_dtype)
            for p in raw_params]


# ----------------------------------- forward pass -----------------------------------

@functools.partial(jax.jit, static_argnames=("primsize_z", "uv_size", "max_tile_rows"))
def rgb_slab_decoder_forward(view_cos_uv, joint, ambient_occlusion, params, *,
                             primsize_z, uv_size, max_tile_rows=None):
    """RGBSlabDecoder.forward.  Inputs are NCHW like the PyTorch module.

    view_cos_uv: (B, Cv, S, S); joint: (B, Cj, S, S); ambient_occlusion: (B, Ca, h, w);
    S = uv_size // 16 (64 in production).  Returns (B, primsize_z, 3, uv, uv).
    """
    B = joint.shape[0]
    base = uv_size // 16
    # Tiny preprocessing glue kept in plain JAX (matches F.interpolate(..., 'bilinear')).
    ao_ds = jax.image.resize(ambient_occlusion,
                             (B, ambient_occlusion.shape[1], base, base),
                             method="bilinear", antialias=False)
    view_cond = jnp.concatenate([joint, view_cos_uv, ao_ds], axis=1)       # NCHW

    act_dtype = params[0]["w"].dtype
    x = jnp.transpose(view_cond, (0, 2, 3, 1)).astype(act_dtype)           # -> NHWC
    n = len(params)
    for li, p in enumerate(params):
        is_last = li == n - 1
        x = deconv_wnub_layer(
            x, p["w"], p["b"],
            activation="rgb" if is_last else "lrelu",   # relu(25x+100) fused in-kernel
            out_dtype=jnp.float32 if is_last else act_dtype,
            max_tile_rows=max_tile_rows)

    # x: (B, uv, uv, primsize_z*3), already through relu(25*x + 100).
    # TODO(synk): fuse this NHWC->NCHW permute into the last layer's store (write
    # channel-major) to save one HBM round trip over the largest tensor.
    rgb = jnp.transpose(x, (0, 3, 1, 2)).reshape(B, primsize_z, 3, uv_size, uv_size)
    return rgb


# ---------------------- deterministic parameter init (test only) --------------------

def init_raw_params(key, inch, primsize_z, outch, in_size):
    chans = [inch, 32, 32, 16, primsize_z * outch]
    params = []
    for i in range(4):
        key, k1, k2, k3 = jax.random.split(key, 4)
        cin, cout = chans[i], chans[i + 1]
        hw = in_size * (2 ** (i + 1))
        w = jax.random.normal(k1, (cin, cout, 4, 4), jnp.float32) * (2.0 / (cin + cout)) ** 0.5
        g = (4.0 * cout) ** 0.5 * (1.0 + 0.05 * jax.random.normal(k2, (cout,), jnp.float32))
        b = 0.01 * jax.random.normal(k3, (cout, hw, hw), jnp.float32)
        params.append(dict(weight=w, g=g, bias=b))
    return params


# --------------------------- plain-JAX reference (check) ----------------------------

def _reference_layer(x_nhwc, weight, g, bias, neg_slope):
    wnorm = jnp.sqrt(jnp.sum(weight ** 2))
    v = weight * (g[None, :, None, None] / wnorm)              # (Cin, Cout, 4, 4)
    w_conv = jnp.flip(v, axis=(2, 3)).transpose(2, 3, 0, 1)    # HWIO, spatially flipped
    y = jax.lax.conv_general_dilated(
        x_nhwc, w_conv, window_strides=(1, 1), padding=((2, 2), (2, 2)),
        lhs_dilation=(2, 2), dimension_numbers=("NHWC", "HWIO", "NHWC"),
        precision=jax.lax.Precision.HIGHEST)
    y = y + jnp.transpose(bias, (1, 2, 0))[None]
    if neg_slope is not None:
        y = jnp.where(y >= 0, y, neg_slope * y)
    return y


def reference_rgb_slab_decoder(view_cos_uv, joint, ambient_occlusion, raw_params,
                               primsize_z, uv_size):
    B = joint.shape[0]
    base = uv_size // 16
    ao_ds = jax.image.resize(ambient_occlusion,
                             (B, ambient_occlusion.shape[1], base, base),
                             method="bilinear", antialias=False)
    x = jnp.transpose(jnp.concatenate([joint, view_cos_uv, ao_ds], axis=1), (0, 2, 3, 1))
    n = len(raw_params)
    for li, p in enumerate(raw_params):
        slope = 0.2 if li < n - 1 else None
        x = _reference_layer(x, p["weight"], p["g"], p["bias"], slope)
    tex = jnp.transpose(x, (0, 3, 1, 2))
    rgb = jax.nn.relu(25.0 * tex + 100.0).reshape(B, primsize_z, 3, uv_size, uv_size)
    return rgb


# ----------------------------------------- main -------------------------------------

if __name__ == "__main__":
    B = 2
    S = 8                        # decoder input resolution (64 in production)
    uv_size = 16 * S             # 128       (1024 in production)
    primsize_z, outch = 2, 3     # the module always decodes 3 (RGB) channels per slab
    cj, cv, ca = 2, 1, 1         # toy channel counts for joint / view_cos_uv / AO
    inch = cj + cv + ca

    key = jax.random.PRNGKey(0)
    key, kj, kv, ka = jax.random.split(key, 4)
    joint = jax.random.normal(kj, (B, cj, S, S), jnp.float32)
    view_cos_uv = jax.random.normal(kv, (B, cv, S, S), jnp.float32)
    ambient_occlusion = jax.random.uniform(ka, (B, ca, 4 * S, 4 * S), jnp.float32)
    raw_params = init_raw_params(key, inch, primsize_z, outch, S)

    ref = jax.block_until_ready(
        reference_rgb_slab_decoder(view_cos_uv, joint, ambient_occlusion,
                                   raw_params, primsize_z, uv_size))

    # 1) f32 activations with forced spatial tiling (max_tile_rows=4) so the multi-tile
    #    grid + row-halo path is exercised even at toy sizes.
    params_f32 = prepare_decoder_params(raw_params, act_dtype=jnp.float32)
    rgb_f32 = jax.block_until_ready(
        rgb_slab_decoder_forward(view_cos_uv, joint, ambient_occlusion, params_f32,
                                 primsize_z=primsize_z, uv_size=uv_size,
                                 max_tile_rows=4))
    assert rgb_f32.shape == (B, primsize_z, 3, uv_size, uv_size), rgb_f32.shape
    err_f32 = float(jnp.max(jnp.abs(rgb_f32 - ref)) / (jnp.max(jnp.abs(ref)) + 1e-8))
    assert err_f32 < 5e-3, f"f32 mismatch vs reference, rel err = {err_f32}"

    # 2) bf16 activation / weight / bias carry (production configuration), auto tiling.
    params_bf16 = prepare_decoder_params(raw_params, act_dtype=jnp.bfloat16)
    rgb_bf16 = jax.block_until_ready(
        rgb_slab_decoder_forward(view_cos_uv, joint, ambient_occlusion, params_bf16,
                                 primsize_z=primsize_z, uv_size=uv_size))
    assert rgb_bf16.shape == (B, primsize_z, 3, uv_size, uv_size), rgb_bf16.shape
    err_bf16 = float(jnp.max(jnp.abs(rgb_bf16 - ref)) / (jnp.max(jnp.abs(ref)) + 1e-8))
    assert err_bf16 < 3e-2, f"bf16 mismatch vs reference, rel err = {err_bf16}"

    print("KERNEL_OK")
</pallas_src>

<mosaic_0001>
module attributes {stable_mosaic.version = 11 : i64} {
  func.func @_deconv_subpixel_kernel(%arg0: i32, %arg1: i32, %arg2: memref<1x4x8x4xf32, #tpu.memory_space<vmem>>, %arg3: memref<1x1x8x4xf32, #tpu.memory_space<vmem>>, %arg4: memref<1x1x8x4xf32, #tpu.memory_space<vmem>>, %arg5: memref<2x2x12x64xf32, #tpu.memory_space<vmem>>, %arg6: memref<4x2x8x64xf32, #tpu.memory_space<vmem>>, %arg7: memref<1x4x2x8x64xf32, #tpu.memory_space<vmem>>) attributes {dimension_semantics = [#tpu.dimension_semantics<parallel>, #tpu.dimension_semantics<arbitrary>], iteration_bounds = array<i64: 2, 2>, scalar_prefetch = 0 : i64, scratch_operands = 0 : i64, tpu.core_type = #tpu.core_type<tc>, window_params = [{transform_indices = @transform_0, window_bounds = array<i64: 1, 4, 8, 4>}, {transform_indices = @transform_1, window_bounds = array<i64: 1, 1, 8, 4>}, {transform_indices = @transform_2, window_bounds = array<i64: 1, 1, 8, 4>}, {pipeline_mode = #tpu.pipeline_mode<synchronous>, transform_indices = @transform_3, window_bounds = array<i64: 2, 2, 12, 64>}, {transform_indices = @transform_4, window_bounds = array<i64: 4, 2, 8, 64>}, {transform_indices = @transform_5, window_bounds = array<i64: 1, 4, 2, 8, 64>}]} {
    %c0 = arith.constant 0 : index
    %c0_0 = arith.constant 0 : index
    %c0_1 = arith.constant 0 : index
    %c0_2 = arith.constant 0 : index
    %0 = vector.load %arg3[%c0, %c0_0, %c0_1, %c0_2] : memref<1x1x8x4xf32, #tpu.memory_space<vmem>>, vector<1x1x8x4xf32>
    %1 = vector.shape_cast %0 : vector<1x1x8x4xf32> to vector<1x8x4xf32>
    %c0_i32 = arith.constant 0 : i32
    %2 = arith.cmpi sgt, %arg0, %c0_i32 : i32
    %3 = arith.extui %2 : i1 to i32
    %4 = arith.sitofp %3 : i32 to f32
    %5 = vector.broadcast %4 : f32 to vector<1x8x4xf32>
    %6 = arith.mulf %1, %5 : vector<1x8x4xf32>
    %c0_3 = arith.constant 0 : index
    %c0_4 = arith.constant 0 : index
    %c0_5 = arith.constant 0 : index
    %c0_6 = arith.constant 0 : index
    %7 = vector.load %arg4[%c0_3, %c0_4, %c0_5, %c0_6] : memref<1x1x8x4xf32, #tpu.memory_space<vmem>>, vector<1x1x8x4xf32>
    %8 = vector.shape_cast %7 : vector<1x1x8x4xf32> to vector<1x8x4xf32>
    %c1_i32 = arith.constant 1 : i32
    %9 = arith.cmpi slt, %arg0, %c1_i32 : i32
    %10 = arith.extui %9 : i1 to i32
    %11 = arith.sitofp %10 : i32 to f32
    %12 = vector.broadcast %11 : f32 to vector<1x8x4xf32>
    %13 = arith.mulf %8, %12 : vector<1x8x4xf32>
    %c0_7 = arith.constant 0 : index
    %c0_8 = arith.constant 0 : index
    %c0_9 = arith.constant 0 : index
    %c0_10 = arith.constant 0 : index
    %14 = vector.load %arg2[%c0_7, %c0_8, %c0_9, %c0_10] : memref<1x4x8x4xf32, #tpu.memory_space<vmem>>, vector<1x4x8x4xf32>
    %15 = vector.shape_cast %14 : vector<1x4x8x4xf32> to vector<4x8x4xf32>
    %16 = tpu.concatenate %6, %15, %13 in 0 : vector<1x8x4xf32>, vector<4x8x4xf32>, vector<1x8x4xf32> -> vector<6x8x4xf32>
    %cst = arith.constant 0.000000e+00 : f32
    %17 = vector.broadcast %cst : f32 to vector<6x1x4xf32>
    %18 = vector.extract_strided_slice %16 {offsets = [0, 0, 0], sizes = [6, 7, 4], strides = [1, 1, 1]} : vector<6x8x4xf32> to vector<6x7x4xf32>
    %19 = tpu.concatenate %17, %18 in 1 : vector<6x1x4xf32>, vector<6x7x4xf32> -> vector<6x8x4xf32>
    %20 = vector.extract_strided_slice %16 {offsets = [0, 1, 0], sizes = [6, 7, 4], strides = [1, 1, 1]} : vector<6x8x4xf32> to vector<6x7x4xf32>
    %21 = tpu.concatenate %20, %17 in 1 : vector<6x7x4xf32>, vector<6x1x4xf32> -> vector<6x8x4xf32>
    %22 = tpu.concatenate %19, %16, %21 in 2 : vector<6x8x4xf32>, vector<6x8x4xf32>, vector<6x8x4xf32> -> vector<6x8x12xf32>
    %23 = vector.extract_strided_slice %22 {offsets = [1, 0, 0], sizes = [4, 8, 12], strides = [1, 1, 1]} : vector<6x8x12xf32> to vector<4x8x12xf32>
    %24 = vector.shape_cast %23 : vector<4x8x12xf32> to vector<32x12xf32>
    %25 = vector.extract_strided_slice %22 {offsets = [0, 0, 0], sizes = [4, 8, 12], strides = [1, 1, 1]} : vector<6x8x12xf32> to vector<4x8x12xf32>
    %26 = vector.shape_cast %25 : vector<4x8x12xf32> to vector<32x12xf32>
    %c0_11 = arith.constant 0 : index
    %c0_12 = arith.constant 0 : index
    %c0_13 = arith.constant 0 : index
    %c0_14 = arith.constant 0 : index
    %27 = vector.load %arg5[%c0_11, %c0_12, %c0_13, %c0_14] : memref<2x2x12x64xf32, #tpu.memory_space<vmem>>, vector<1x1x12x64xf32>
    %28 = vector.shape_cast %27 : vector<1x1x12x64xf32> to vector<12x64xf32>
    %cst_15 = arith.constant dense<0.000000e+00> : vector<32x64xf32>
    %29 = tpu.matmul %24, %28, %cst_15 {dimension_numbers = #tpu.dot_dimension_numbers<[1], [0], [0], [1], [0, 0, 1, 1], [], []>} : vector<32x12xf32>, vector<12x64xf32>, vector<32x64xf32> -> vector<32x64xf32>
    %c0_16 = arith.constant 0 : index
    %c1 = arith.constant 1 : index
    %c0_17 = arith.constant 0 : index
    %c0_18 = arith.constant 0 : index
    %30 = vector.load %arg5[%c0_16, %c1, %c0_17, %c0_18] : memref<2x2x12x64xf32, #tpu.memory_space<vmem>>, vector<1x1x12x64xf32>
    %31 = vector.shape_cast %30 : vector<1x1x12x64xf32> to vector<12x64xf32>
    %cst_19 = arith.constant dense<0.000000e+00> : vector<32x64xf32>
    %32 = tpu.matmul %26, %31, %cst_19 {dimension_numbers = #tpu.dot_dimension_numbers<[1], [0], [0], [1], [0, 0, 1, 1], [], []>} : vector<32x12xf32>, vector<12x64xf32>, vector<32x64xf32> -> vector<32x64xf32>
    %33 = arith.addf %29, %32 : vector<32x64xf32>
    %34 = vector.shape_cast %33 : vector<32x64xf32> to vector<4x8x64xf32>
    %c0_20 = arith.constant 0 : index
    %c0_21 = arith.constant 0 : index
    %c0_22 = arith.constant 0 : index
    %c0_23 = arith.constant 0 : index
    %35 = vector.load %arg6[%c0_20, %c0_21, %c0_22, %c0_23] : memref<4x2x8x64xf32, #tpu.memory_space<vmem>>, vector<4x1x8x64xf32>
    %36 = vector.shape_cast %35 : vector<4x1x8x64xf32> to vector<4x8x64xf32>
    %37 = arith.addf %34, %36 : vector<4x8x64xf32>
    %cst_24 = arith.constant 0.000000e+00 : f32
    %38 = vector.broadcast %cst_24 : f32 to vector<4x8x64xf32>
    %39 = arith.cmpf oge, %37, %38 : vector<4x8x64xf32>
    %cst_25 = arith.constant 2.000000e-01 : f32
    %40 = vector.broadcast %cst_25 : f32 to vector<4x8x64xf32>
    %41 = arith.mulf %40, %37 : vector<4x8x64xf32>
    %42 = arith.select %39, %37, %41 : vector<4x8x64xi1>, vector<4x8x64xf32>
    %c0_26 = arith.constant 0 : index
    %c0_27 = arith.constant 0 : index
    %c0_28 = arith.constant 0 : index
    %c0_29 = arith.constant 0 : index
    %c0_30 = arith.constant 0 : index
    %43 = vector.load %arg7[%c0_26, %c0_27, %c0_28, %c0_29, %c0_30] : memref<1x4x2x8x64xf32, #tpu.memory_space<vmem>>, vector<1x4x1x8x64xf32>
    %44 = vector.shape_cast %43 : vector<1x4x1x8x64xf32> to vector<4x8x64xf32>
    %45 = vector.shape_cast %42 : vector<4x8x64xf32> to vector<1x4x1x8x64xf32>
    tpu.vector_store %arg7[%c0_26, %c0_27, %c0_28, %c0_29, %c0_30], %45 {strides = array<i32>} : memref<1x4x2x8x64xf32, #tpu.memory_space<vmem>>, vector<1x4x1x8x64xf32>,
    %46 = vector.extract_strided_slice %22 {offsets = [2, 0, 0], sizes = [4, 8, 12], strides = [1, 1, 1]} : vector<6x8x12xf32> to vector<4x8x12xf32>
    %47 = vector.shape_cast %46 : vector<4x8x12xf32> to vector<32x12xf32>
    %c1_31 = arith.constant 1 : index
    %c0_32 = arith.constant 0 : index
    %c0_33 = arith.constant 0 : index
    %c0_34 = arith.constant 0 : index
    %48 = vector.load %arg5[%c1_31, %c0_32, %c0_33, %c0_34] : memref<2x2x12x64xf32, #tpu.memory_space<vmem>>, vector<1x1x12x64xf32>
    %49 = vector.shape_cast %48 : vector<1x1x12x64xf32> to vector<12x64xf32>
    %cst_35 = arith.constant dense<0.000000e+00> : vector<32x64xf32>
    %50 = tpu.matmul %24, %49, %cst_35 {dimension_numbers = #tpu.dot_dimension_numbers<[1], [0], [0], [1], [0, 0, 1, 1], [], []>} : vector<32x12xf32>, vector<12x64xf32>, vector<32x64xf32> -> vector<32x64xf32>
    %c1_36 = arith.constant 1 : index
    %c1_37 = arith.constant 1 : index
    %c0_38 = arith.constant 0 : index
    %c0_39 = arith.constant 0 : index
    %51 = vector.load %arg5[%c1_36, %c1_37, %c0_38, %c0_39] : memref<2x2x12x64xf32, #tpu.memory_space<vmem>>, vector<1x1x12x64xf32>
    %52 = vector.shape_cast %51 : vector<1x1x12x64xf32> to vector<12x64xf32>
    %cst_40 = arith.constant dense<0.000000e+00> : vector<32x64xf32>
    %53 = tpu.matmul %47, %52, %cst_40 {dimension_numbers = #tpu.dot_dimension_numbers<[1], [0], [0], [1], [0, 0, 1, 1], [], []>} : vector<32x12xf32>, vector<12x64xf32>, vector<32x64xf32> -> vector<32x64xf32>
    %54 = arith.addf %50, %53 : vector<32x64xf32>
    %55 = vector.shape_cast %54 : vector<32x64xf32> to vector<4x8x64xf32>
    %c0_41 = arith.constant 0 : index
    %c1_42 = arith.constant 1 : index
    %c0_43 = arith.constant 0 : index
    %c0_44 = arith.constant 0 : index
    %56 = vector.load %arg6[%c0_41, %c1_42, %c0_43, %c0_44] : memref<4x2x8x64xf32, #tpu.memory_space<vmem>>, vector<4x1x8x64xf32>
    %57 = vector.shape_cast %56 : vector<4x1x8x64xf32> to vector<4x8x64xf32>
    %58 = arith.addf %55, %57 : vector<4x8x64xf32>
    %cst_45 = arith.constant 0.000000e+00 : f32
    %59 = vector.broadcast %cst_45 : f32 to vector<4x8x64xf32>
    %60 = arith.cmpf oge, %58, %59 : vector<4x8x64xf32>
    %cst_46 = arith.constant 2.000000e-01 : f32
    %61 = vector.broadcast %cst_46 : f32 to vector<4x8x64xf32>
    %62 = arith.mulf %61, %58 : vector<4x8x64xf32>
    %63 = arith.select %60, %58, %62 : vector<4x8x64xi1>, vector<4x8x64xf32>
    %c0_47 = arith.constant 0 : index
    %c0_48 = arith.constant 0 : index
    %c1_49 = arith.constant 1 : index
    %c0_50 = arith.constant 0 : index
    %c0_51 = arith.constant 0 : index
    %64 = vector.load %arg7[%c0_47, %c0_48, %c1_49, %c0_50, %c0_51] : memref<1x4x2x8x64xf32, #tpu.memory_space<vmem>>, vector<1x4x1x8x64xf32>
    %65 = vector.shape_cast %64 : vector<1x4x1x8x64xf32> to vector<4x8x64xf32>
    %66 = vector.shape_cast %63 : vector<4x8x64xf32> to vector<1x4x1x8x64xf32>
    tpu.vector_store %arg7[%c0_47, %c0_48, %c1_49, %c0_50, %c0_51], %66 {strides = array<i32>} : memref<1x4x2x8x64xf32, #tpu.memory_space<vmem>>, vector<1x4x1x8x64xf32>,
    return
  }
  func.func @transform_0(%arg0: i32, %arg1: i32) -> (i32, i32, i32, i32) {
    %c0_i32 = arith.constant 0 : i32
    %c0_i32_0 = arith.constant 0 : i32
    %c0_i32_1 = arith.constant 0 : i32
    return %arg1, %arg0, %c0_i32, %c0_i32_0 : i32, i32, i32, i32
  }
  func.func @transform_1(%arg0: i32, %arg1: i32) -> (i32, i32, i32, i32) {
    %c4_i32 = arith.constant 4 : i32
    %0 = arith.muli %arg0, %c4_i32 : i32
    %c1_i32 = arith.constant 1 : i32
    %1 = arith.subi %0, %c1_i32 : i32
    %c0_i32 = arith.constant 0 : i32
    %2 = arith.maxsi %1, %c0_i32 : i32
    %c0_i32_0 = arith.constant 0 : i32
    %c0_i32_1 = arith.constant 0 : i32
    %c0_i32_2 = arith.constant 0 : i32
    return %arg1, %2, %c0_i32_0, %c0_i32_1 : i32, i32, i32, i32
  }
  func.func @transform_2(%arg0: i32, %arg1: i32) -> (i32, i32, i32, i32) {
    %c1_i32 = arith.constant 1 : i32
    %0 = arith.addi %arg0, %c1_i32 : i32
    %c4_i32 = arith.constant 4 : i32
    %1 = arith.muli %0, %c4_i32 : i32
    %c7_i32 = arith.constant 7 : i32
    %2 = arith.minsi %1, %c7_i32 : i32
    %c0_i32 = arith.constant 0 : i32
    %c0_i32_0 = arith.constant 0 : i32
    %c0_i32_1 = arith.constant 0 : i32
    return %arg1, %2, %c0_i32, %c0_i32_0 : i32, i32, i32, i32
  }
  func.func @transform_3(%arg0: i32, %arg1: i32) -> (i32, i32, i32, i32) {
    %c0_i32 = arith.constant 0 : i32
    %c0_i32_0 = arith.constant 0 : i32
    %c0_i32_1 = arith.constant 0 : i32
    %c0_i32_2 = arith.constant 0 : i32
    %c0_i32_3 = arith.constant 0 : i32
    return %c0_i32, %c0_i32_0, %c0_i32_1, %c0_i32_2 : i32, i32, i32, i32
  }
  func.func @transform_4(%arg0: i32, %arg1: i32) -> (i32, i32, i32, i32) {
    %c0_i32 = arith.constant 0 : i32
    %c0_i32_0 = arith.constant 0 : i32
    %c0_i32_1 = arith.constant 0 : i32
    %c0_i32_2 = arith.constant 0 : i32
    return %arg0, %c0_i32, %c0_i32_0, %c0_i32_1 : i32, i32, i32, i32
  }
  func.func @transform_5(%arg0: i32, %arg1: i32) -> (i32, i32, i32, i32, i32) {
    %c0_i32 = arith.constant 0 : i32
    %c0_i32_0 = arith.constant 0 : i32
    %c0_i32_1 = arith.constant 0 : i32
    %c0_i32_2 = arith.constant 0 : i32
    return %arg1, %arg0, %c0_i32, %c0_i32_0, %c0_i32_1 : i32, i32, i32, i32, i32
  }
}

module attributes {stable_mosaic.version = 11 : i64} {
  func.func @_deconv_subpixel_kernel(%arg0: i32, %arg1: i32, %arg2: memref<1x4x16x32xf32, #tpu.memory_space<vmem>>, %arg3: memref<1x1x16x32xf32, #tpu.memory_space<vmem>>, %arg4: memref<1x1x16x32xf32, #tpu.memory_space<vmem>>, %arg5: memref<2x2x96x64xf32, #tpu.memory_space<vmem>>, %arg6: memref<4x2x16x64xf32, #tpu.memory_space<vmem>>, %arg7: memref<1x4x2x16x64xf32, #tpu.memory_space<vmem>>) attributes {dimension_semantics = [#tpu.dimension_semantics<parallel>, #tpu.dimension_semantics<arbitrary>], iteration_bounds = array<i64: 4, 2>, scalar_prefetch = 0 : i64, scratch_operands = 0 : i64, tpu.core_type = #tpu.core_type<tc>, window_params = [{transform_indices = @transform_0, window_bounds = array<i64: 1, 4, 16, 32>}, {transform_indices = @transform_1, window_bounds = array<i64: 1, 1, 16, 32>}, {transform_indices = @transform_2, window_bounds = array<i64: 1, 1, 16, 32>}, {pipeline_mode = #tpu.pipeline_mode<synchronous>, transform_indices = @transform_3, window_bounds = array<i64: 2, 2, 96, 64>}, {transform_indices = @transform_4, window_bounds = array<i64: 4, 2, 16, 64>}, {transform_indices = @transform_5, window_bounds = array<i64: 1, 4, 2, 16, 64>}]} {
    %c0 = arith.constant 0 : index
    %c0_0 = arith.constant 0 : index
    %c0_1 = arith.constant 0 : index
    %c0_2 = arith.constant 0 : index
    %0 = vector.load %arg3[%c0, %c0_0, %c0_1, %c0_2] : memref<1x1x16x32xf32, #tpu.memory_space<vmem>>, vector<1x1x16x32xf32>
    %1 = vector.shape_cast %0 : vector<1x1x16x32xf32> to vector<1x16x32xf32>
    %c0_i32 = arith.constant 0 : i32
    %2 = arith.cmpi sgt, %arg0, %c0_i32 : i32
    %3 = arith.extui %2 : i1 to i32
    %4 = arith.sitofp %3 : i32 to f32
    %5 = vector.broadcast %4 : f32 to vector<1x16x32xf32>
    %6 = arith.mulf %1, %5 : vector<1x16x32xf32>
    %c0_3 = arith.constant 0 : index
    %c0_4 = arith.constant 0 : index
    %c0_5 = arith.constant 0 : index
    %c0_6 = arith.constant 0 : index
    %7 = vector.load %arg4[%c0_3, %c0_4, %c0_5, %c0_6] : memref<1x1x16x32xf32, #tpu.memory_space<vmem>>, vector<1x1x16x32xf32>
    %8 = vector.shape_cast %7 : vector<1x1x16x32xf32> to vector<1x16x32xf32>
    %c3_i32 = arith.constant 3 : i32
    %9 = arith.cmpi slt, %arg0, %c3_i32 : i32
    %10 = arith.extui %9 : i1 to i32
    %11 = arith.sitofp %10 : i32 to f32
    %12 = vector.broadcast %11 : f32 to vector<1x16x32xf32>
    %13 = arith.mulf %8, %12 : vector<1x16x32xf32>
    %c0_7 = arith.constant 0 : index
    %c0_8 = arith.constant 0 : index
    %c0_9 = arith.constant 0 : index
    %c0_10 = arith.constant 0 : index
    %14 = vector.load %arg2[%c0_7, %c0_8, %c0_9, %c0_10] : memref<1x4x16x32xf32, #tpu.memory_space<vmem>>, vector<1x4x16x32xf32>
    %15 = vector.shape_cast %14 : vector<1x4x16x32xf32> to vector<4x16x32xf32>
    %16 = tpu.concatenate %6, %15, %13 in 0 : vector<1x16x32xf32>, vector<4x16x32xf32>, vector<1x16x32xf32> -> vector<6x16x32xf32>
    %cst = arith.constant 0.000000e+00 : f32
    %17 = vector.broadcast %cst : f32 to vector<6x1x32xf32>
    %18 = vector.extract_strided_slice %16 {offsets = [0, 0, 0], sizes = [6, 15, 32], strides = [1, 1, 1]} : vector<6x16x32xf32> to vector<6x15x32xf32>
    %19 = tpu.concatenate %17, %18 in 1 : vector<6x1x32xf32>, vector<6x15x32xf32> -> vector<6x16x32xf32>
    %20 = vector.extract_strided_slice %16 {offsets = [0, 1, 0], sizes = [6, 15, 32], strides = [1, 1, 1]} : vector<6x16x32xf32> to vector<6x15x32xf32>
    %21 = tpu.concatenate %20, %17 in 1 : vector<6x15x32xf32>, vector<6x1x32xf32> -> vector<6x16x32xf32>
    %22 = tpu.concatenate %19, %16, %21 in 2 : vector<6x16x32xf32>, vector<6x16x32xf32>, vector<6x16x32xf32> -> vector<6x16x96xf32>
    %23 = vector.extract_strided_slice %22 {offsets = [1, 0, 0], sizes = [4, 16, 96], strides = [1, 1, 1]} : vector<6x16x96xf32> to vector<4x16x96xf32>
    %24 = vector.shape_cast %23 : vector<4x16x96xf32> to vector<64x96xf32>
    %25 = vector.extract_strided_slice %22 {offsets = [0, 0, 0], sizes = [4, 16, 96], strides = [1, 1, 1]} : vector<6x16x96xf32> to vector<4x16x96xf32>
    %26 = vector.shape_cast %25 : vector<4x16x96xf32> to vector<64x96xf32>
    %c0_11 = arith.constant 0 : index
    %c0_12 = arith.constant 0 : index
    %c0_13 = arith.constant 0 : index
    %c0_14 = arith.constant 0 : index
    %27 = vector.load %arg5[%c0_11, %c0_12, %c0_13, %c0_14] : memref<2x2x96x64xf32, #tpu.memory_space<vmem>>, vector<1x1x96x64xf32>
    %28 = vector.shape_cast %27 : vector<1x1x96x64xf32> to vector<96x64xf32>
    %cst_15 = arith.constant dense<0.000000e+00> : vector<64x64xf32>
    %29 = tpu.matmul %24, %28, %cst_15 {dimension_numbers = #tpu.dot_dimension_numbers<[1], [0], [0], [1], [0, 0, 1, 1], [], []>} : vector<64x96xf32>, vector<96x64xf32>, vector<64x64xf32> -> vector<64x64xf32>
    %c0_16 = arith.constant 0 : index
    %c1 = arith.constant 1 : index
    %c0_17 = arith.constant 0 : index
    %c0_18 = arith.constant 0 : index
    %30 = vector.load %arg5[%c0_16, %c1, %c0_17, %c0_18] : memref<2x2x96x64xf32, #tpu.memory_space<vmem>>, vector<1x1x96x64xf32>
    %31 = vector.shape_cast %30 : vector<1x1x96x64xf32> to vector<96x64xf32>
    %cst_19 = arith.constant dense<0.000000e+00> : vector<64x64xf32>
    %32 = tpu.matmul %26, %31, %cst_19 {dimension_numbers = #tpu.dot_dimension_numbers<[1], [0], [0], [1], [0, 0, 1, 1], [], []>} : vector<64x96xf32>, vector<96x64xf32>, vector<64x64xf32> -> vector<64x64xf32>
    %33 = arith.addf %29, %32 : vector<64x64xf32>
    %34 = vector.shape_cast %33 : vector<64x64xf32> to vector<4x16x64xf32>
    %c0_20 = arith.constant 0 : index
    %c0_21 = arith.constant 0 : index
    %c0_22 = arith.constant 0 : index
    %c0_23 = arith.constant 0 : index
    %35 = vector.load %arg6[%c0_20, %c0_21, %c0_22, %c0_23] : memref<4x2x16x64xf32, #tpu.memory_space<vmem>>, vector<4x1x16x64xf32>
    %36 = vector.shape_cast %35 : vector<4x1x16x64xf32> to vector<4x16x64xf32>
    %37 = arith.addf %34, %36 : vector<4x16x64xf32>
    %cst_24 = arith.constant 0.000000e+00 : f32
    %38 = vector.broadcast %cst_24 : f32 to vector<4x16x64xf32>
    %39 = arith.cmpf oge, %37, %38 : vector<4x16x64xf32>
    %cst_25 = arith.constant 2.000000e-01 : f32
    %40 = vector.broadcast %cst_25 : f32 to vector<4x16x64xf32>
    %41 = arith.mulf %40, %37 : vector<4x16x64xf32>
    %42 = arith.select %39, %37, %41 : vector<4x16x64xi1>, vector<4x16x64xf32>
    %c0_26 = arith.constant 0 : index
    %c0_27 = arith.constant 0 : index
    %c0_28 = arith.constant 0 : index
    %c0_29 = arith.constant 0 : index
    %c0_30 = arith.constant 0 : index
    %43 = vector.load %arg7[%c0_26, %c0_27, %c0_28, %c0_29, %c0_30] : memref<1x4x2x16x64xf32, #tpu.memory_space<vmem>>, vector<1x4x1x16x64xf32>
    %44 = vector.shape_cast %43 : vector<1x4x1x16x64xf32> to vector<4x16x64xf32>
    %45 = vector.shape_cast %42 : vector<4x16x64xf32> to vector<1x4x1x16x64xf32>
    tpu.vector_store %arg7[%c0_26, %c0_27, %c0_28, %c0_29, %c0_30], %45 {strides = array<i32>} : memref<1x4x2x16x64xf32, #tpu.memory_space<vmem>>, vector<1x4x1x16x64xf32>,
    %46 = vector.extract_strided_slice %22 {offsets = [2, 0, 0], sizes = [4, 16, 96], strides = [1, 1, 1]} : vector<6x16x96xf32> to vector<4x16x96xf32>
    %47 = vector.shape_cast %46 : vector<4x16x96xf32> to vector<64x96xf32>
    %c1_31 = arith.constant 1 : index
    %c0_32 = arith.constant 0 : index
    %c0_33 = arith.constant 0 : index
    %c0_34 = arith.constant 0 : index
    %48 = vector.load %arg5[%c1_31, %c0_32, %c0_33, %c0_34] : memref<2x2x96x64xf32, #tpu.memory_space<vmem>>, vector<1x1x96x64xf32>
    %49 = vector.shape_cast %48 : vector<1x1x96x64xf32> to vector<96x64xf32>
    %cst_35 = arith.constant dense<0.000000e+00> : vector<64x64xf32>
    %50 = tpu.matmul %24, %49, %cst_35 {dimension_numbers = #tpu.dot_dimension_numbers<[1], [0], [0], [1], [0, 0, 1, 1], [], []>} : vector<64x96xf32>, vector<96x64xf32>, vector<64x64xf32> -> vector<64x64xf32>
    %c1_36 = arith.constant 1 : index
    %c1_37 = arith.constant 1 : index
    %c0_38 = arith.constant 0 : index
    %c0_39 = arith.constant 0 : index
    %51 = vector.load %arg5[%c1_36, %c1_37, %c0_38, %c0_39] : memref<2x2x96x64xf32, #tpu.memory_space<vmem>>, vector<1x1x96x64xf32>
    %52 = vector.shape_cast %51 : vector<1x1x96x64xf32> to vector<96x64xf32>
    %cst_40 = arith.constant dense<0.000000e+00> : vector<64x64xf32>
    %53 = tpu.matmul %47, %52, %cst_40 {dimension_numbers = #tpu.dot_dimension_numbers<[1], [0], [0], [1], [0, 0, 1, 1], [], []>} : vector<64x96xf32>, vector<96x64xf32>, vector<64x64xf32> -> vector<64x64xf32>
    %54 = arith.addf %50, %53 : vector<64x64xf32>
    %55 = vector.shape_cast %54 : vector<64x64xf32> to vector<4x16x64xf32>
    %c0_41 = arith.constant 0 : index
    %c1_42 = arith.constant 1 : index
    %c0_43 = arith.constant 0 : index
    %c0_44 = arith.constant 0 : index
    %56 = vector.load %arg6[%c0_41, %c1_42, %c0_43, %c0_44] : memref<4x2x16x64xf32, #tpu.memory_space<vmem>>, vector<4x1x16x64xf32>
    %57 = vector.shape_cast %56 : vector<4x1x16x64xf32> to vector<4x16x64xf32>
    %58 = arith.addf %55, %57 : vector<4x16x64xf32>
    %cst_45 = arith.constant 0.000000e+00 : f32
    %59 = vector.broadcast %cst_45 : f32 to vector<4x16x64xf32>
    %60 = arith.cmpf oge, %58, %59 : vector<4x16x64xf32>
    %cst_46 = arith.constant 2.000000e-01 : f32
    %61 = vector.broadcast %cst_46 : f32 to vector<4x16x64xf32>
    %62 = arith.mulf %61, %58 : vector<4x16x64xf32>
    %63 = arith.select %60, %58, %62 : vector<4x16x64xi1>, vector<4x16x64xf32>
    %c0_47 = arith.constant 0 : index
    %c0_48 = arith.constant 0 : index
    %c1_49 = arith.constant 1 : index
    %c0_50 = arith.constant 0 : index
    %c0_51 = arith.constant 0 : index
    %64 = vector.load %arg7[%c0_47, %c0_48, %c1_49, %c0_50, %c0_51] : memref<1x4x2x16x64xf32, #tpu.memory_space<vmem>>, vector<1x4x1x16x64xf32>
    %65 = vector.shape_cast %64 : vector<1x4x1x16x64xf32> to vector<4x16x64xf32>
    %66 = vector.shape_cast %63 : vector<4x16x64xf32> to vector<1x4x1x16x64xf32>
    tpu.vector_store %arg7[%c0_47, %c0_48, %c1_49, %c0_50, %c0_51], %66 {strides = array<i32>} : memref<1x4x2x16x64xf32, #tpu.memory_space<vmem>>, vector<1x4x1x16x64xf32>,
    return
  }
  func.func @transform_0(%arg0: i32, %arg1: i32) -> (i32, i32, i32, i32) {
    %c0_i32 = arith.constant 0 : i32
    %c0_i32_0 = arith.constant 0 : i32
    %c0_i32_1 = arith.constant 0 : i32
    return %arg1, %arg0, %c0_i32, %c0_i32_0 : i32, i32, i32, i32
  }
  func.func @transform_1(%arg0: i32, %arg1: i32) -> (i32, i32, i32, i32) {
    %c4_i32 = arith.constant 4 : i32
    %0 = arith.muli %arg0, %c4_i32 : i32
    %c1_i32 = arith.constant 1 : i32
    %1 = arith.subi %0, %c1_i32 : i32
    %c0_i32 = arith.constant 0 : i32
    %2 = arith.maxsi %1, %c0_i32 : i32
    %c0_i32_0 = arith.constant 0 : i32
    %c0_i32_1 = arith.constant 0 : i32
    %c0_i32_2 = arith.constant 0 : i32
    return %arg1, %2, %c0_i32_0, %c0_i32_1 : i32, i32, i32, i32
  }
  func.func @transform_2(%arg0: i32, %arg1: i32) -> (i32, i32, i32, i32) {
    %c1_i32 = arith.constant 1 : i32
    %0 = arith.addi %arg0, %c1_i32 : i32
    %c4_i32 = arith.constant 4 : i32
    %1 = arith.muli %0, %c4_i32 : i32
    %c15_i32 = arith.constant 15 : i32
    %2 = arith.minsi %1, %c15_i32 : i32
    %c0_i32 = arith.constant 0 : i32
    %c0_i32_0 = arith.constant 0 : i32
    %c0_i32_1 = arith.constant 0 : i32
    return %arg1, %2, %c0_i32, %c0_i32_0 : i32, i32, i32, i32
  }
  func.func @transform_3(%arg0: i32, %arg1: i32) -> (i32, i32, i32, i32) {
    %c0_i32 = arith.constant 0 : i32
    %c0_i32_0 = arith.constant 0 : i32
    %c0_i32_1 = arith.constant 0 : i32
    %c0_i32_2 = arith.constant 0 : i32
    %c0_i32_3 = arith.constant 0 : i32
    return %c0_i32, %c0_i32_0, %c0_i32_1, %c0_i32_2 : i32, i32, i32, i32
  }
  func.func @transform_4(%arg0: i32, %arg1: i32) -> (i32, i32, i32, i32) {
    %c0_i32 = arith.constant 0 : i32
    %c0_i32_0 = arith.constant 0 : i32
    %c0_i32_1 = arith.constant 0 : i32
    %c0_i32_2 = arith.constant 0 : i32
    return %arg0, %c0_i32, %c0_i32_0, %c0_i32_1 : i32, i32, i32, i32
  }
  func.func @transform_5(%arg0: i32, %arg1: i32) -> (i32, i32, i32, i32, i32) {
    %c0_i32 = arith.constant 0 : i32
    %c0_i32_0 = arith.constant 0 : i32
    %c0_i32_1 = arith.constant 0 : i32
    %c0_i32_2 = arith.constant 0 : i32
    return %arg1, %arg0, %c0_i32, %c0_i32_0, %c0_i32_1 : i32, i32, i32, i32, i32
  }
}

module attributes {stable_mosaic.version = 11 : i64} {
  func.func @_deconv_subpixel_kernel(%arg0: i32, %arg1: i32, %arg2: memref<1x4x32x32xf32, #tpu.memory_space<vmem>>, %arg3: memref<1x1x32x32xf32, #tpu.memory_space<vmem>>, %arg4: memref<1x1x32x32xf32, #tpu.memory_space<vmem>>, %arg5: memref<2x2x96x32xf32, #tpu.memory_space<vmem>>, %arg6: memref<4x2x32x32xf32, #tpu.memory_space<vmem>>, %arg7: memref<1x4x2x32x32xf32, #tpu.memory_space<vmem>>) attributes {dimension_semantics = [#tpu.dimension_semantics<parallel>, #tpu.dimension_semantics<arbitrary>], iteration_bounds = array<i64: 8, 2>, scalar_prefetch = 0 : i64, scratch_operands = 0 : i64, tpu.core_type = #tpu.core_type<tc>, window_params = [{transform_indices = @transform_0, window_bounds = array<i64: 1, 4, 32, 32>}, {transform_indices = @transform_1, window_bounds = array<i64: 1, 1, 32, 32>}, {transform_indices = @transform_2, window_bounds = array<i64: 1, 1, 32, 32>}, {pipeline_mode = #tpu.pipeline_mode<synchronous>, transform_indices = @transform_3, window_bounds = array<i64: 2, 2, 96, 32>}, {transform_indices = @transform_4, window_bounds = array<i64: 4, 2, 32, 32>}, {transform_indices = @transform_5, window_bounds = array<i64: 1, 4, 2, 32, 32>}]} {
    %c0 = arith.constant 0 : index
    %c0_0 = arith.constant 0 : index
    %c0_1 = arith.constant 0 : index
    %c0_2 = arith.constant 0 : index
    %0 = vector.load %arg3[%c0, %c0_0, %c0_1, %c0_2] : memref<1x1x32x32xf32, #tpu.memory_space<vmem>>, vector<1x1x32x32xf32>
    %1 = vector.shape_cast %0 : vector<1x1x32x32xf32> to vector<1x32x32xf32>
    %c0_i32 = arith.constant 0 : i32
    %2 = arith.cmpi sgt, %arg0, %c0_i32 : i32
    %3 = arith.extui %2 : i1 to i32
    %4 = arith.sitofp %3 : i32 to f32
    %5 = vector.broadcast %4 : f32 to vector<1x32x32xf32>
    %6 = arith.mulf %1, %5 : vector<1x32x32xf32>
    %c0_3 = arith.constant 0 : index
    %c0_4 = arith.constant 0 : index
    %c0_5 = arith.constant 0 : index
    %c0_6 = arith.constant 0 : index
    %7 = vector.load %arg4[%c0_3, %c0_4, %c0_5, %c0_6] : memref<1x1x32x32xf32, #tpu.memory_space<vmem>>, vector<1x1x32x32xf32>
    %8 = vector.shape_cast %7 : vector<1x1x32x32xf32> to vector<1x32x32xf32>
    %c7_i32 = arith.constant 7 : i32
    %9 = arith.cmpi slt, %arg0, %c7_i32 : i32
    %10 = arith.extui %9 : i1 to i32
    %11 = arith.sitofp %10 : i32 to f32
    %12 = vector.broadcast %11 : f32 to vector<1x32x32xf32>
    %13 = arith.mulf %8, %12 : vector<1x32x32xf32>
    %c0_7 = arith.constant 0 : index
    %c0_8 = arith.constant 0 : index
    %c0_9 = arith.constant 0 : index
    %c0_10 = arith.constant 0 : index
    %14 = vector.load %arg2[%c0_7, %c0_8, %c0_9, %c0_10] : memref<1x4x32x32xf32, #tpu.memory_space<vmem>>, vector<1x4x32x32xf32>
    %15 = vector.shape_cast %14 : vector<1x4x32x32xf32> to vector<4x32x32xf32>
    %16 = tpu.concatenate %6, %15, %13 in 0 : vector<1x32x32xf32>, vector<4x32x32xf32>, vector<1x32x32xf32> -> vector<6x32x32xf32>
    %cst = arith.constant 0.000000e+00 : f32
    %17 = vector.broadcast %cst : f32 to vector<6x1x32xf32>
    %18 = vector.extract_strided_slice %16 {offsets = [0, 0, 0], sizes = [6, 31, 32], strides = [1, 1, 1]} : vector<6x32x32xf32> to vector<6x31x32xf32>
    %19 = tpu.concatenate %17, %18 in 1 : vector<6x1x32xf32>, vector<6x31x32xf32> -> vector<6x32x32xf32>
    %20 = vector.extract_strided_slice %16 {offsets = [0, 1, 0], sizes = [6, 31, 32], strides = [1, 1, 1]} : vector<6x32x32xf32> to vector<6x31x32xf32>
    %21 = tpu.concatenate %20, %17 in 1 : vector<6x31x32xf32>, vector<6x1x32xf32> -> vector<6x32x32xf32>
    %22 = tpu.concatenate %19, %16, %21 in 2 : vector<6x32x32xf32>, vector<6x32x32xf32>, vector<6x32x32xf32> -> vector<6x32x96xf32>
    %23 = vector.extract_strided_slice %22 {offsets = [1, 0, 0], sizes = [4, 32, 96], strides = [1, 1, 1]} : vector<6x32x96xf32> to vector<4x32x96xf32>
    %24 = vector.shape_cast %23 : vector<4x32x96xf32> to vector<128x96xf32>
    %25 = vector.extract_strided_slice %22 {offsets = [0, 0, 0], sizes = [4, 32, 96], strides = [1, 1, 1]} : vector<6x32x96xf32> to vector<4x32x96xf32>
    %26 = vector.shape_cast %25 : vector<4x32x96xf32> to vector<128x96xf32>
    %c0_11 = arith.constant 0 : index
    %c0_12 = arith.constant 0 : index
    %c0_13 = arith.constant 0 : index
    %c0_14 = arith.constant 0 : index
    %27 = vector.load %arg5[%c0_11, %c0_12, %c0_13, %c0_14] : memref<2x2x96x32xf32, #tpu.memory_space<vmem>>, vector<1x1x96x32xf32>
    %28 = vector.shape_cast %27 : vector<1x1x96x32xf32> to vector<96x32xf32>
    %cst_15 = arith.constant dense<0.000000e+00> : vector<128x32xf32>
    %29 = tpu.matmul %24, %28, %cst_15 {dimension_numbers = #tpu.dot_dimension_numbers<[1], [0], [0], [1], [0, 0, 1, 1], [], []>} : vector<128x96xf32>, vector<96x32xf32>, vector<128x32xf32> -> vector<128x32xf32>
    %c0_16 = arith.constant 0 : index
    %c1 = arith.constant 1 : index
    %c0_17 = arith.constant 0 : index
    %c0_18 = arith.constant 0 : index
    %30 = vector.load %arg5[%c0_16, %c1, %c0_17, %c0_18] : memref<2x2x96x32xf32, #tpu.memory_space<vmem>>, vector<1x1x96x32xf32>
    %31 = vector.shape_cast %30 : vector<1x1x96x32xf32> to vector<96x32xf32>
    %cst_19 = arith.constant dense<0.000000e+00> : vector<128x32xf32>
    %32 = tpu.matmul %26, %31, %cst_19 {dimension_numbers = #tpu.dot_dimension_numbers<[1], [0], [0], [1], [0, 0, 1, 1], [], []>} : vector<128x96xf32>, vector<96x32xf32>, vector<128x32xf32> -> vector<128x32xf32>
    %33 = arith.addf %29, %32 : vector<128x32xf32>
    %34 = vector.shape_cast %33 : vector<128x32xf32> to vector<4x32x32xf32>
    %c0_20 = arith.constant 0 : index
    %c0_21 = arith.constant 0 : index
    %c0_22 = arith.constant 0 : index
    %c0_23 = arith.constant 0 : index
    %35 = vector.load %arg6[%c0_20, %c0_21, %c0_22, %c0_23] : memref<4x2x32x32xf32, #tpu.memory_space<vmem>>, vector<4x1x32x32xf32>
    %36 = vector.shape_cast %35 : vector<4x1x32x32xf32> to vector<4x32x32xf32>
    %37 = arith.addf %34, %36 : vector<4x32x32xf32>
    %cst_24 = arith.constant 0.000000e+00 : f32
    %38 = vector.broadcast %cst_24 : f32 to vector<4x32x32xf32>
    %39 = arith.cmpf oge, %37, %38 : vector<4x32x32xf32>
    %cst_25 = arith.constant 2.000000e-01 : f32
    %40 = vector.broadcast %cst_25 : f32 to vector<4x32x32xf32>
    %41 = arith.mulf %40, %37 : vector<4x32x32xf32>
    %42 = arith.select %39, %37, %41 : vector<4x32x32xi1>, vector<4x32x32xf32>
    %c0_26 = arith.constant 0 : index
    %c0_27 = arith.constant 0 : index
    %c0_28 = arith.constant 0 : index
    %c0_29 = arith.constant 0 : index
    %c0_30 = arith.constant 0 : index
    %43 = vector.load %arg7[%c0_26, %c0_27, %c0_28, %c0_29, %c0_30] : memref<1x4x2x32x32xf32, #tpu.memory_space<vmem>>, vector<1x4x1x32x32xf32>
    %44 = vector.shape_cast %43 : vector<1x4x1x32x32xf32> to vector<4x32x32xf32>
    %45 = vector.shape_cast %42 : vector<4x32x32xf32> to vector<1x4x1x32x32xf32>
    tpu.vector_store %arg7[%c0_26, %c0_27, %c0_28, %c0_29, %c0_30], %45 {strides = array<i32>} : memref<1x4x2x32x32xf32, #tpu.memory_space<vmem>>, vector<1x4x1x32x32xf32>,
    %46 = vector.extract_strided_slice %22 {offsets = [2, 0, 0], sizes = [4, 32, 96], strides = [1, 1, 1]} : vector<6x32x96xf32> to vector<4x32x96xf32>
    %47 = vector.shape_cast %46 : vector<4x32x96xf32> to vector<128x96xf32>
    %c1_31 = arith.constant 1 : index
    %c0_32 = arith.constant 0 : index
    %c0_33 = arith.constant 0 : index
    %c0_34 = arith.constant 0 : index
    %48 = vector.load %arg5[%c1_31, %c0_32, %c0_33, %c0_34] : memref<2x2x96x32xf32, #tpu.memory_space<vmem>>, vector<1x1x96x32xf32>
    %49 = vector.shape_cast %48 : vector<1x1x96x32xf32> to vector<96x32xf32>
    %cst_35 = arith.constant dense<0.000000e+00> : vector<128x32xf32>
    %50 = tpu.matmul %24, %49, %cst_35 {dimension_numbers = #tpu.dot_dimension_numbers<[1], [0], [0], [1], [0, 0, 1, 1], [], []>} : vector<128x96xf32>, vector<96x32xf32>, vector<128x32xf32> -> vector<128x32xf32>
    %c1_36 = arith.constant 1 : index
    %c1_37 = arith.constant 1 : index
    %c0_38 = arith.constant 0 : index
    %c0_39 = arith.constant 0 : index
    %51 = vector.load %arg5[%c1_36, %c1_37, %c0_38, %c0_39] : memref<2x2x96x32xf32, #tpu.memory_space<vmem>>, vector<1x1x96x32xf32>
    %52 = vector.shape_cast %51 : vector<1x1x96x32xf32> to vector<96x32xf32>
    %cst_40 = arith.constant dense<0.000000e+00> : vector<128x32xf32>
    %53 = tpu.matmul %47, %52, %cst_40 {dimension_numbers = #tpu.dot_dimension_numbers<[1], [0], [0], [1], [0, 0, 1, 1], [], []>} : vector<128x96xf32>, vector<96x32xf32>, vector<128x32xf32> -> vector<128x32xf32>
    %54 = arith.addf %50, %53 : vector<128x32xf32>
    %55 = vector.shape_cast %54 : vector<128x32xf32> to vector<4x32x32xf32>
    %c0_41 = arith.constant 0 : index
    %c1_42 = arith.constant 1 : index
    %c0_43 = arith.constant 0 : index
    %c0_44 = arith.constant 0 : index
    %56 = vector.load %arg6[%c0_41, %c1_42, %c0_43, %c0_44] : memref<4x2x32x32xf32, #tpu.memory_space<vmem>>, vector<4x1x32x32xf32>
    %57 = vector.shape_cast %56 : vector<4x1x32x32xf32> to vector<4x32x32xf32>
    %58 = arith.addf %55, %57 : vector<4x32x32xf32>
    %cst_45 = arith.constant 0.000000e+00 : f32
    %59 = vector.broadcast %cst_45 : f32 to vector<4x32x32xf32>
    %60 = arith.cmpf oge, %58, %59 : vector<4x32x32xf32>
    %cst_46 = arith.constant 2.000000e-01 : f32
    %61 = vector.broadcast %cst_46 : f32 to vector<4x32x32xf32>
    %62 = arith.mulf %61, %58 : vector<4x32x32xf32>
    %63 = arith.select %60, %58, %62 : vector<4x32x32xi1>, vector<4x32x32xf32>
    %c0_47 = arith.constant 0 : index
    %c0_48 = arith.constant 0 : index
    %c1_49 = arith.constant 1 : index
    %c0_50 = arith.constant 0 : index
    %c0_51 = arith.constant 0 : index
    %64 = vector.load %arg7[%c0_47, %c0_48, %c1_49, %c0_50, %c0_51] : memref<1x4x2x32x32xf32, #tpu.memory_space<vmem>>, vector<1x4x1x32x32xf32>
    %65 = vector.shape_cast %64 : vector<1x4x1x32x32xf32> to vector<4x32x32xf32>
    %66 = vector.shape_cast %63 : vector<4x32x32xf32> to vector<1x4x1x32x32xf32>
    tpu.vector_store %arg7[%c0_47, %c0_48, %c1_49, %c0_50, %c0_51], %66 {strides = array<i32>} : memref<1x4x2x32x32xf32, #tpu.memory_space<vmem>>, vector<1x4x1x32x32xf32>,
    return
  }
  func.func @transform_0(%arg0: i32, %arg1: i32) -> (i32, i32, i32, i32) {
    %c0_i32 = arith.constant 0 : i32
    %c0_i32_0 = arith.constant 0 : i32
    %c0_i32_1 = arith.constant 0 : i32
    return %arg1, %arg0, %c0_i32, %c0_i32_0 : i32, i32, i32, i32
  }
  func.func @transform_1(%arg0: i32, %arg1: i32) -> (i32, i32, i32, i32) {
    %c4_i32 = arith.constant 4 : i32
    %0 = arith.muli %arg0, %c4_i32 : i32
    %c1_i32 = arith.constant 1 : i32
    %1 = arith.subi %0, %c1_i32 : i32
    %c0_i32 = arith.constant 0 : i32
    %2 = arith.maxsi %1, %c0_i32 : i32
    %c0_i32_0 = arith.constant 0 : i32
    %c0_i32_1 = arith.constant 0 : i32
    %c0_i32_2 = arith.constant 0 : i32
    return %arg1, %2, %c0_i32_0, %c0_i32_1 : i32, i32, i32, i32
  }
  func.func @transform_2(%arg0: i32, %arg1: i32) -> (i32, i32, i32, i32) {
    %c1_i32 = arith.constant 1 : i32
    %0 = arith.addi %arg0, %c1_i32 : i32
    %c4_i32 = arith.constant 4 : i32
    %1 = arith.muli %0, %c4_i32 : i32
    %c31_i32 = arith.constant 31 : i32
    %2 = arith.minsi %1, %c31_i32 : i32
    %c0_i32 = arith.constant 0 : i32
    %c0_i32_0 = arith.constant 0 : i32
    %c0_i32_1 = arith.constant 0 : i32
    return %arg1, %2, %c0_i32, %c0_i32_0 : i32, i32, i32, i32
  }
  func.func @transform_3(%arg0: i32, %arg1: i32) -> (i32, i32, i32, i32) {
    %c0_i32 = arith.constant 0 : i32
    %c0_i32_0 = arith.constant 0 : i32
    %c0_i32_1 = arith.constant 0 : i32
    %c0_i32_2 = arith.constant 0 : i32
    %c0_i32_3 = arith.constant 0 : i32
    return %c0_i32, %c0_i32_0, %c0_i32_1, %c0_i32_2 : i32, i32, i32, i32
  }
  func.func @transform_4(%arg0: i32, %arg1: i32) -> (i32, i32, i32, i32) {
    %c0_i32 = arith.constant 0 : i32
    %c0_i32_0 = arith.constant 0 : i32
    %c0_i32_1 = arith.constant 0 : i32
    %c0_i32_2 = arith.constant 0 : i32
    return %arg0, %c0_i32, %c0_i32_0, %c0_i32_1 : i32, i32, i32, i32
  }
  func.func @transform_5(%arg0: i32, %arg1: i32) -> (i32, i32, i32, i32, i32) {
    %c0_i32 = arith.constant 0 : i32
    %c0_i32_0 = arith.constant 0 : i32
    %c0_i32_1 = arith.constant 0 : i32
    %c0_i32_2 = arith.constant 0 : i32
    return %arg1, %arg0, %c0_i32, %c0_i32_0, %c0_i32_1 : i32, i32, i32, i32, i32
  }
}

module attributes {stable_mosaic.version = 11 : i64} {
  func.func @_deconv_subpixel_kernel(%arg0: i32, %arg1: i32, %arg2: memref<1x4x64x16xf32, #tpu.memory_space<vmem>>, %arg3: memref<1x1x64x16xf32, #tpu.memory_space<vmem>>, %arg4: memref<1x1x64x16xf32, #tpu.memory_space<vmem>>, %arg5: memref<2x2x48x12xf32, #tpu.memory_space<vmem>>, %arg6: memref<4x2x64x12xf32, #tpu.memory_space<vmem>>, %arg7: memref<1x4x2x64x12xf32, #tpu.memory_space<vmem>>) attributes {dimension_semantics = [#tpu.dimension_semantics<parallel>, #tpu.dimension_semantics<arbitrary>], iteration_bounds = array<i64: 16, 2>, scalar_prefetch = 0 : i64, scratch_operands = 0 : i64, tpu.core_type = #tpu.core_type<tc>, window_params = [{transform_indices = @transform_0, window_bounds = array<i64: 1, 4, 64, 16>}, {transform_indices = @transform_1, window_bounds = array<i64: 1, 1, 64, 16>}, {transform_indices = @transform_2, window_bounds = array<i64: 1, 1, 64, 16>}, {pipeline_mode = #tpu.pipeline_mode<synchronous>, transform_indices = @transform_3, window_bounds = array<i64: 2, 2, 48, 12>}, {transform_indices = @transform_4, window_bounds = array<i64: 4, 2, 64, 12>}, {transform_indices = @transform_5, window_bounds = array<i64: 1, 4, 2, 64, 12>}]} {
    %c0 = arith.constant 0 : index
    %c0_0 = arith.constant 0 : index
    %c0_1 = arith.constant 0 : index
    %c0_2 = arith.constant 0 : index
    %0 = vector.load %arg3[%c0, %c0_0, %c0_1, %c0_2] : memref<1x1x64x16xf32, #tpu.memory_space<vmem>>, vector<1x1x64x16xf32>
    %1 = vector.shape_cast %0 : vector<1x1x64x16xf32> to vector<1x64x16xf32>
    %c0_i32 = arith.constant 0 : i32
    %2 = arith.cmpi sgt, %arg0, %c0_i32 : i32
    %3 = arith.extui %2 : i1 to i32
    %4 = arith.sitofp %3 : i32 to f32
    %5 = vector.broadcast %4 : f32 to vector<1x64x16xf32>
    %6 = arith.mulf %1, %5 : vector<1x64x16xf32>
    %c0_3 = arith.constant 0 : index
    %c0_4 = arith.constant 0 : index
    %c0_5 = arith.constant 0 : index
    %c0_6 = arith.constant 0 : index
    %7 = vector.load %arg4[%c0_3, %c0_4, %c0_5, %c0_6] : memref<1x1x64x16xf32, #tpu.memory_space<vmem>>, vector<1x1x64x16xf32>
    %8 = vector.shape_cast %7 : vector<1x1x64x16xf32> to vector<1x64x16xf32>
    %c15_i32 = arith.constant 15 : i32
    %9 = arith.cmpi slt, %arg0, %c15_i32 : i32
    %10 = arith.extui %9 : i1 to i32
    %11 = arith.sitofp %10 : i32 to f32
    %12 = vector.broadcast %11 : f32 to vector<1x64x16xf32>
    %13 = arith.mulf %8, %12 : vector<1x64x16xf32>
    %c0_7 = arith.constant 0 : index
    %c0_8 = arith.constant 0 : index
    %c0_9 = arith.constant 0 : index
    %c0_10 = arith.constant 0 : index
    %14 = vector.load %arg2[%c0_7, %c0_8, %c0_9, %c0_10] : memref<1x4x64x16xf32, #tpu.memory_space<vmem>>, vector<1x4x64x16xf32>
    %15 = vector.shape_cast %14 : vector<1x4x64x16xf32> to vector<4x64x16xf32>
    %16 = tpu.concatenate %6, %15, %13 in 0 : vector<1x64x16xf32>, vector<4x64x16xf32>, vector<1x64x16xf32> -> vector<6x64x16xf32>
    %cst = arith.constant 0.000000e+00 : f32
    %17 = vector.broadcast %cst : f32 to vector<6x1x16xf32>
    %18 = vector.extract_strided_slice %16 {offsets = [0, 0, 0], sizes = [6, 63, 16], strides = [1, 1, 1]} : vector<6x64x16xf32> to vector<6x63x16xf32>
    %19 = tpu.concatenate %17, %18 in 1 : vector<6x1x16xf32>, vector<6x63x16xf32> -> vector<6x64x16xf32>
    %20 = vector.extract_strided_slice %16 {offsets = [0, 1, 0], sizes = [6, 63, 16], strides = [1, 1, 1]} : vector<6x64x16xf32> to vector<6x63x16xf32>
    %21 = tpu.concatenate %20, %17 in 1 : vector<6x63x16xf32>, vector<6x1x16xf32> -> vector<6x64x16xf32>
    %22 = tpu.concatenate %19, %16, %21 in 2 : vector<6x64x16xf32>, vector<6x64x16xf32>, vector<6x64x16xf32> -> vector<6x64x48xf32>
    %23 = vector.extract_strided_slice %22 {offsets = [1, 0, 0], sizes = [4, 64, 48], strides = [1, 1, 1]} : vector<6x64x48xf32> to vector<4x64x48xf32>
    %24 = vector.shape_cast %23 : vector<4x64x48xf32> to vector<256x48xf32>
    %25 = vector.extract_strided_slice %22 {offsets = [0, 0, 0], sizes = [4, 64, 48], strides = [1, 1, 1]} : vector<6x64x48xf32> to vector<4x64x48xf32>
    %26 = vector.shape_cast %25 : vector<4x64x48xf32> to vector<256x48xf32>
    %c0_11 = arith.constant 0 : index
    %c0_12 = arith.constant 0 : index
    %c0_13 = arith.constant 0 : index
    %c0_14 = arith.constant 0 : index
    %27 = vector.load %arg5[%c0_11, %c0_12, %c0_13, %c0_14] : memref<2x2x48x12xf32, #tpu.memory_space<vmem>>, vector<1x1x48x12xf32>
    %28 = vector.shape_cast %27 : vector<1x1x48x12xf32> to vector<48x12xf32>
    %cst_15 = arith.constant dense<0.000000e+00> : vector<256x12xf32>
    %29 = tpu.matmul %24, %28, %cst_15 {dimension_numbers = #tpu.dot_dimension_numbers<[1], [0], [0], [1], [0, 0, 1, 1], [], []>} : vector<256x48xf32>, vector<48x12xf32>, vector<256x12xf32> -> vector<256x12xf32>
    %c0_16 = arith.constant 0 : index
    %c1 = arith.constant 1 : index
    %c0_17 = arith.constant 0 : index
    %c0_18 = arith.constant 0 : index
    %30 = vector.load %arg5[%c0_16, %c1, %c0_17, %c0_18] : memref<2x2x48x12xf32, #tpu.memory_space<vmem>>, vector<1x1x48x12xf32>
    %31 = vector.shape_cast %30 : vector<1x1x48x12xf32> to vector<48x12xf32>
    %cst_19 = arith.constant dense<0.000000e+00> : vector<256x12xf32>
    %32 = tpu.matmul %26, %31, %cst_19 {dimension_numbers = #tpu.dot_dimension_numbers<[1], [0], [0], [1], [0, 0, 1, 1], [], []>} : vector<256x48xf32>, vector<48x12xf32>, vector<256x12xf32> -> vector<256x12xf32>
    %33 = arith.addf %29, %32 : vector<256x12xf32>
    %34 = vector.shape_cast %33 : vector<256x12xf32> to vector<4x64x12xf32>
    %c0_20 = arith.constant 0 : index
    %c0_21 = arith.constant 0 : index
    %c0_22 = arith.constant 0 : index
    %c0_23 = arith.constant 0 : index
    %35 = vector.load %arg6[%c0_20, %c0_21, %c0_22, %c0_23] : memref<4x2x64x12xf32, #tpu.memory_space<vmem>>, vector<4x1x64x12xf32>
    %36 = vector.shape_cast %35 : vector<4x1x64x12xf32> to vector<4x64x12xf32>
    %37 = arith.addf %34, %36 : vector<4x64x12xf32>
    %cst_24 = arith.constant 2.500000e+01 : f32
    %38 = vector.broadcast %cst_24 : f32 to vector<4x64x12xf32>
    %39 = arith.mulf %38, %37 : vector<4x64x12xf32>
    %cst_25 = arith.constant 1.000000e+02 : f32
    %40 = vector.broadcast %cst_25 : f32 to vector<4x64x12xf32>
    %41 = arith.addf %39, %40 : vector<4x64x12xf32>
    %cst_26 = arith.constant 0.000000e+00 : f32
    %42 = vector.broadcast %cst_26 : f32 to vector<4x64x12xf32>
    %43 = arith.maximumf %41, %42 : vector<4x64x12xf32>
    %c0_27 = arith.constant 0 : index
    %c0_28 = arith.constant 0 : index
    %c0_29 = arith.constant 0 : index
    %c0_30 = arith.constant 0 : index
    %c0_31 = arith.constant 0 : index
    %44 = vector.load %arg7[%c0_27, %c0_28, %c0_29, %c0_30, %c0_31] : memref<1x4x2x64x12xf32, #tpu.memory_space<vmem>>, vector<1x4x1x64x12xf32>
    %45 = vector.shape_cast %44 : vector<1x4x1x64x12xf32> to vector<4x64x12xf32>
    %46 = vector.shape_cast %43 : vector<4x64x12xf32> to vector<1x4x1x64x12xf32>
    tpu.vector_store %arg7[%c0_27, %c0_28, %c0_29, %c0_30, %c0_31], %46 {strides = array<i32>} : memref<1x4x2x64x12xf32, #tpu.memory_space<vmem>>, vector<1x4x1x64x12xf32>,
    %47 = vector.extract_strided_slice %22 {offsets = [2, 0, 0], sizes = [4, 64, 48], strides = [1, 1, 1]} : vector<6x64x48xf32> to vector<4x64x48xf32>
    %48 = vector.shape_cast %47 : vector<4x64x48xf32> to vector<256x48xf32>
    %c1_32 = arith.constant 1 : index
    %c0_33 = arith.constant 0 : index
    %c0_34 = arith.constant 0 : index
    %c0_35 = arith.constant 0 : index
    %49 = vector.load %arg5[%c1_32, %c0_33, %c0_34, %c0_35] : memref<2x2x48x12xf32, #tpu.memory_space<vmem>>, vector<1x1x48x12xf32>
    %50 = vector.shape_cast %49 : vector<1x1x48x12xf32> to vector<48x12xf32>
    %cst_36 = arith.constant dense<0.000000e+00> : vector<256x12xf32>
    %51 = tpu.matmul %24, %50, %cst_36 {dimension_numbers = #tpu.dot_dimension_numbers<[1], [0], [0], [1], [0, 0, 1, 1], [], []>} : vector<256x48xf32>, vector<48x12xf32>, vector<256x12xf32> -> vector<256x12xf32>
    %c1_37 = arith.constant 1 : index
    %c1_38 = arith.constant 1 : index
    %c0_39 = arith.constant 0 : index
    %c0_40 = arith.constant 0 : index
    %52 = vector.load %arg5[%c1_37, %c1_38, %c0_39, %c0_40] : memref<2x2x48x12xf32, #tpu.memory_space<vmem>>, vector<1x1x48x12xf32>
    %53 = vector.shape_cast %52 : vector<1x1x48x12xf32> to vector<48x12xf32>
    %cst_41 = arith.constant dense<0.000000e+00> : vector<256x12xf32>
    %54 = tpu.matmul %48, %53, %cst_41 {dimension_numbers = #tpu.dot_dimension_numbers<[1], [0], [0], [1], [0, 0, 1, 1], [], []>} : vector<256x48xf32>, vector<48x12xf32>, vector<256x12xf32> -> vector<256x12xf32>
    %55 = arith.addf %51, %54 : vector<256x12xf32>
    %56 = vector.shape_cast %55 : vector<256x12xf32> to vector<4x64x12xf32>
    %c0_42 = arith.constant 0 : index
    %c1_43 = arith.constant 1 : index
    %c0_44 = arith.constant 0 : index
    %c0_45 = arith.constant 0 : index
    %57 = vector.load %arg6[%c0_42, %c1_43, %c0_44, %c0_45] : memref<4x2x64x12xf32, #tpu.memory_space<vmem>>, vector<4x1x64x12xf32>
    %58 = vector.shape_cast %57 : vector<4x1x64x12xf32> to vector<4x64x12xf32>
    %59 = arith.addf %56, %58 : vector<4x64x12xf32>
    %cst_46 = arith.constant 2.500000e+01 : f32
    %60 = vector.broadcast %cst_46 : f32 to vector<4x64x12xf32>
    %61 = arith.mulf %60, %59 : vector<4x64x12xf32>
    %cst_47 = arith.constant 1.000000e+02 : f32
    %62 = vector.broadcast %cst_47 : f32 to vector<4x64x12xf32>
    %63 = arith.addf %61, %62 : vector<4x64x12xf32>
    %cst_48 = arith.constant 0.000000e+00 : f32
    %64 = vector.broadcast %cst_48 : f32 to vector<4x64x12xf32>
    %65 = arith.maximumf %63, %64 : vector<4x64x12xf32>
    %c0_49 = arith.constant 0 : index
    %c0_50 = arith.constant 0 : index
    %c1_51 = arith.constant 1 : index
    %c0_52 = arith.constant 0 : index
    %c0_53 = arith.constant 0 : index
    %66 = vector.load %arg7[%c0_49, %c0_50, %c1_51, %c0_52, %c0_53] : memref<1x4x2x64x12xf32, #tpu.memory_space<vmem>>, vector<1x4x1x64x12xf32>
    %67 = vector.shape_cast %66 : vector<1x4x1x64x12xf32> to vector<4x64x12xf32>
    %68 = vector.shape_cast %65 : vector<4x64x12xf32> to vector<1x4x1x64x12xf32>
    tpu.vector_store %arg7[%c0_49, %c0_50, %c1_51, %c0_52, %c0_53], %68 {strides = array<i32>} : memref<1x4x2x64x12xf32, #tpu.memory_space<vmem>>, vector<1x4x1x64x12xf32>,
    return
  }
  func.func @transform_0(%arg0: i32, %arg1: i32) -> (i32, i32, i32, i32) {
    %c0_i32 = arith.constant 0 : i32
    %c0_i32_0 = arith.constant 0 : i32
    %c0_i32_1 = arith.constant 0 : i32
    return %arg1, %arg0, %c0_i32, %c0_i32_0 : i32, i32, i32, i32
  }
  func.func @transform_1(%arg0: i32, %arg1: i32) -> (i32, i32, i32, i32) {
    %c4_i32 = arith.constant 4 : i32
    %0 = arith.muli %arg0, %c4_i32 : i32
    %c1_i32 = arith.constant 1 : i32
    %1 = arith.subi %0, %c1_i32 : i32
    %c0_i32 = arith.constant 0 : i32
    %2 = arith.maxsi %1, %c0_i32 : i32
    %c0_i32_0 = arith.constant 0 : i32
    %c0_i32_1 = arith.constant 0 : i32
    %c0_i32_2 = arith.constant 0 : i32
    return %arg1, %2, %c0_i32_0, %c0_i32_1 : i32, i32, i32, i32
  }
  func.func @transform_2(%arg0: i32, %arg1: i32) -> (i32, i32, i32, i32) {
    %c1_i32 = arith.constant 1 : i32
    %0 = arith.addi %arg0, %c1_i32 : i32
    %c4_i32 = arith.constant 4 : i32
    %1 = arith.muli %0, %c4_i32 : i32
    %c63_i32 = arith.constant 63 : i32
    %2 = arith.minsi %1, %c63_i32 : i32
    %c0_i32 = arith.constant 0 : i32
    %c0_i32_0 = arith.constant 0 : i32
    %c0_i32_1 = arith.constant 0 : i32
    return %arg1, %2, %c0_i32, %c0_i32_0 : i32, i32, i32, i32
  }
  func.func @transform_3(%arg0: i32, %arg1: i32) -> (i32, i32, i32, i32) {
    %c0_i32 = arith.constant 0 : i32
    %c0_i32_0 = arith.constant 0 : i32
    %c0_i32_1 = arith.constant 0 : i32
    %c0_i32_2 = arith.constant 0 : i32
    %c0_i32_3 = arith.constant 0 : i32
    return %c0_i32, %c0_i32_0, %c0_i32_1, %c0_i32_2 : i32, i32, i32, i32
  }
  func.func @transform_4(%arg0: i32, %arg1: i32) -> (i32, i32, i32, i32) {
    %c0_i32 = arith.constant 0 : i32
    %c0_i32_0 = arith.constant 0 : i32
    %c0_i32_1 = arith.constant 0 : i32
    %c0_i32_2 = arith.constant 0 : i32
    return %arg0, %c0_i32, %c0_i32_0, %c0_i32_1 : i32, i32, i32, i32
  }
  func.func @transform_5(%arg0: i32, %arg1: i32) -> (i32, i32, i32, i32, i32) {
    %c0_i32 = arith.constant 0 : i32
    %c0_i32_0 = arith.constant 0 : i32
    %c0_i32_1 = arith.constant 0 : i32
    %c0_i32_2 = arith.constant 0 : i32
    return %arg1, %arg0, %c0_i32, %c0_i32_0, %c0_i32_1 : i32, i32, i32, i32, i32
  }
}

</mosaic_0001>

<llo_original>
// kernel: rgb_slab_decoder_forward.4
$region0: #{rgb_slab_decoder_forward.4}
  #allocation0 [shape = 'u32[]', space=smem, size = 0x4, offset = 0x4, fixed_abs, tag = 'smem constant byte address 0x4 - core index']
  #allocation1 [shape = 'u32[144,128]{1,0:T(1,128)}', space=vmem, size = 0x12000, scoped, tag = 'internal scratch']
  %s0 = inlined_call_operand.vmem [shape: f32[2,8,8,4], index: 0, kind: input, shape index: {}, may-alias: {0,1,2}]
  %s1 = inlined_call_operand.vmem [shape: f32[2,8,8,4], index: 1, kind: input, shape index: {}, may-alias: {0,1,2}]
  %s2 = inlined_call_operand.vmem [shape: f32[2,8,8,4], index: 2, kind: input, shape index: {}, may-alias: {0,1,2}]
  %s3 = inlined_call_operand.vmem [shape: f32[2,2,12,64], index: 3, kind: input, shape index: {}]
  %s4 = inlined_call_operand.hbm [shape: f32[8,2,8,64], index: 4, kind: input, shape index: {}]
  %s5 = inlined_call_operand.vmem [shape: f32[2,8,2,8,64], index: 5, kind: output, shape index: {}]
  %s6 = sld [smem:[#allocation0]]
  $region57: #{rgb_slab_decoder_forward.4} parent=0
    _
  %s8 = ssub.s32 1, %s6
  %s9 = scalar_select 0, %s8, %s6
  $region1: #{rgb_slab_decoder_forward.4} parent=0
    #allocation2 [shape = 'u8[65536]{0}', space=vmem, size = 0x10000, scoped, tag = 'input window, operand 4']
    #allocation3 [shape = 's32[2]{0}', space=sflag, size = 0x8, scoped, tag = 'scoped memory for rgb_slab_decoder_forward.4']
    %10 = vsyncpa [#allocation3], 0
    %s11 = scalar_lea.sflag [#allocation3], 1
    %12 = vsyncpa %s11, 0
    loop: start=0, step=1, limit=6
    $region2: #{rgb_slab_decoder_forward.4} parent=1 // loop_pre_header
      _
    $region3: #{rgb_slab_decoder_forward.4} parent=1 // loop_header
      %s14 = sphi 0, %s18
      %p15 = scmp.ge.s32.totalorder %s14, 6
      %s21 = sphi 0, %s33
      %s22 = sphi 0, %s29
      %s23 = sphi 0, %s21
      %s24 = sphi 0, %s22
      %s25 = sphi 0, %s23
      %s26 = sphi 0, %s24
      %s38 = sphi 0, %s40
      %s41 = sphi 0, %s38
      %s42 = sphi 0, %s41
      %s58 = sphi 0, %s42
      %s74 = sphi 0, %s76
      %s77 = sphi 0, %s74
      %s78 = sphi 0, %s77
      %s94 = sphi 0, %s78
      %s110 = sphi 0, %s112
      %s113 = sphi 0, %s110
      %s114 = sphi 0, %s113
      %s130 = sphi 0, %s114
      %s134 = sphi 0, %s134
      %s136 = sphi 0, %s134
      %s137 = sphi 0, %s136
      %s151 = sphi 0, %s137
      %s157 = sphi 0, %s159
      %s160 = sphi 0, %s157
      %s161 = sphi 0, %s160
      %s177 = sphi 0, %s161
      %s185 = sphi 0, %s187
      %s188 = sphi 0, %s185
      %s189 = sphi 0, %s188
      %s205 = sphi 0, %s189
    $region4: #{rgb_slab_decoder_forward.4} parent=1 // loop_header_branch
      %17 = sbr.rel (%p15) target = $region8
    $region5: #{rgb_slab_decoder_forward.4} parent=1 // loop_body
      %s19 = ssub.s32 %s14, 1
      %s20 = ssub.s32 %s14, 2
      %s27 = sadd.s32 1, %s22
      %p28 = scmp.ge.s32.totalorder %s27, 2
      %s29 = scalar_select %p28, 0, %s27
      %s30 = sadd.s32 1, %s21
      %s31 = scalar_select %p28, %s30, %s21
      %p32 = scmp.ge.s32.totalorder %s31, 2
      %s33 = scalar_select %p32, 0, %s31
      %s34 = ssub.s32 %s22, %s29
      %s35 = ssub.s32 %s21, %s33
      %s36 = sor.u32 %s34, %s35
      %p37 = scmp.eq.s32.totalorder %s36, 0
      %s39 = sadd.s32 %s38, 1
      %s40 = scalar_select %p37, %s38, %s39
      %p43 = pneg %p37
      %p44 = scmp.eq.s32.totalorder %s14, 3
      %p45 = por %p43, %p44
      %p46 = scmp.ne.s32.totalorder %s38, %s41
      %p47 = scmp.eq.s32.totalorder %s14, 0
      %p48 = por %p46, %p47
      %p49 = scmp.ne.s32.totalorder %s38, %s41
      %p50 = scmp.eq.s32.totalorder %s19, 3
      %p51 = por %p49, %p50
      %p52 = scmp.ne.s32.totalorder %s41, %s42
      %p53 = scmp.eq.s32.totalorder %s19, 0
      %p54 = por %p52, %p53
      %p55 = scmp.ne.s32.totalorder %s41, %s42
      %p56 = scmp.eq.s32.totalorder %s20, 3
      %p57 = por %p55, %p56
      %p59 = scmp.ne.s32.totalorder %s42, %s58
      %p60 = scmp.eq.s32.totalorder %s20, 0
      %p61 = por %p59, %p60
      %s62 = smul.u32 %s21, 4
      %s63 = ssub.s32 %s62, 1
      %p64 = scmp.gt.s32.totalorder %s63, 0
      %s65 = scalar_select %p64, %s63, 0
      %s66 = smul.u32 %s33, 4
      %s67 = ssub.s32 %s66, 1
      %p68 = scmp.gt.s32.totalorder %s67, 0
      %s69 = scalar_select %p68, %s67, 0
      %s70 = ssub.s32 %s22, %s29
      %s71 = ssub.s32 %s65, %s69
      %s72 = sor.u32 %s70, %s71
      %p73 = scmp.eq.s32.totalorder %s72, 0
      %s75 = sadd.s32 %s74, 1
      %s76 = scalar_select %p73, %s74, %s75
      %p79 = pneg %p73
      %p80 = scmp.eq.s32.totalorder %s14, 3
      %p81 = por %p79, %p80
      %p82 = scmp.ne.s32.totalorder %s74, %s77
      %p83 = scmp.eq.s32.totalorder %s14, 0
      %p84 = por %p82, %p83
      %p85 = scmp.ne.s32.totalorder %s74, %s77
      %p86 = scmp.eq.s32.totalorder %s19, 3
      %p87 = por %p85, %p86
      %p88 = scmp.ne.s32.totalorder %s77, %s78
      %p89 = scmp.eq.s32.totalorder %s19, 0
      %p90 = por %p88, %p89
      %p91 = scmp.ne.s32.totalorder %s77, %s78
      %p92 = scmp.eq.s32.totalorder %s20, 3
      %p93 = por %p91, %p92
      %p95 = scmp.ne.s32.totalorder %s78, %s94
      %p96 = scmp.eq.s32.totalorder %s20, 0
      %p97 = por %p95, %p96
      %s98 = sadd.s32 %s21, 1
      %s99 = smul.u32 %s98, 4
      %p100 = scmp.lt.s32.totalorder %s99, 7
      %s101 = scalar_select %p100, %s99, 7
      %s102 = sadd.s32 %s33, 1
      %s103 = smul.u32 %s102, 4
      %p104 = scmp.lt.s32.totalorder %s103, 7
      %s105 = scalar_select %p104, %s103, 7
      %s106 = ssub.s32 %s22, %s29
      %s107 = ssub.s32 %s101, %s105
      %s108 = sor.u32 %s106, %s107
      %p109 = scmp.eq.s32.totalorder %s108, 0
      %s111 = sadd.s32 %s110, 1
      %s112 = scalar_select %p109, %s110, %s111
      %p115 = pneg %p109
      %p116 = scmp.eq.s32.totalorder %s14, 3
      %p117 = por %p115, %p116
      %p118 = scmp.ne.s32.totalorder %s110, %s113
      %p119 = scmp.eq.s32.totalorder %s14, 0
      %p120 = por %p118, %p119
      %p121 = scmp.ne.s32.totalorder %s110, %s113
      %p122 = scmp.eq.s32.totalorder %s19, 3
      %p123 = por %p121, %p122
      %p124 = scmp.ne.s32.totalorder %s113, %s114
      %p125 = scmp.eq.s32.totalorder %s19, 0
      %p126 = por %p124, %p125
      %p127 = scmp.ne.s32.totalorder %s113, %s114
      %p128 = scmp.eq.s32.totalorder %s20, 3
      %p129 = por %p127, %p128
      %p131 = scmp.ne.s32.totalorder %s114, %s130
      %p132 = scmp.eq.s32.totalorder %s20, 0
      %p133 = por %p131, %p132
      %s135 = sadd.s32 %s134, 1
      %p138 = scmp.eq.s32.totalorder %s14, 3
      %p139 = scmp.ne.s32.totalorder %s134, %s136
      %p140 = scmp.eq.s32.totalorder %s14, 0
      %p141 = por %p139, %p140
      %p142 = scmp.ne.s32.totalorder %s134, %s136
      %p143 = scmp.eq.s32.totalorder %s19, 3
      %p144 = por %p142, %p143
      %p145 = scmp.ne.s32.totalorder %s136, %s137
      %p146 = scmp.eq.s32.totalorder %s19, 0
      %p147 = por %p145, %p146
      %p148 = scmp.ne.s32.totalorder %s136, %s137
      %p149 = scmp.eq.s32.totalorder %s20, 3
      %p150 = por %p148, %p149
      %p152 = scmp.ne.s32.totalorder %s137, %s151
      %p153 = scmp.eq.s32.totalorder %s20, 0
      %p154 = por %p152, %p153
      %s155 = ssub.s32 %s21, %s33
      %p156 = scmp.eq.s32.totalorder %s155, 0
      %s158 = sadd.s32 %s157, 1
      %s159 = scalar_select %p156, %s157, %s158
      %p162 = pneg %p156
      %p163 = scmp.eq.s32.totalorder %s14, 3
      %p164 = por %p162, %p163
      %p165 = scmp.ne.s32.totalorder %s157, %s160
      %p166 = scmp.eq.s32.totalorder %s14, 0
      %p167 = por %p165, %p166
      %p168 = scmp.ne.s32.totalorder %s157, %s160
      %p169 = scmp.eq.s32.totalorder %s19, 3
      %p170 = por %p168, %p169
      %p171 = scmp.ne.s32.totalorder %s160, %s161
      %p172 = scmp.eq.s32.totalorder %s19, 0
      %p173 = por %p171, %p172
      %p174 = scmp.ne.s32.totalorder %s160, %s161
      %p175 = scmp.eq.s32.totalorder %s20, 3
      %p176 = por %p174, %p175
      %p178 = scmp.ne.s32.totalorder %s161, %s177
      %p179 = scmp.eq.s32.totalorder %s20, 0
      %p180 = por %p178, %p179
      %s181 = ssub.s32 %s22, %s29
      %s182 = ssub.s32 %s21, %s33
      %s183 = sor.u32 %s181, %s182
      %p184 = scmp.eq.s32.totalorder %s183, 0
      %s186 = sadd.s32 %s185, 1
      %s187 = scalar_select %p184, %s185, %s186
      %p190 = pneg %p184
      %p191 = scmp.eq.s32.totalorder %s14, 3
      %p192 = por %p190, %p191
      %p193 = scmp.ne.s32.totalorder %s185, %s188
      %p194 = scmp.eq.s32.totalorder %s14, 0
      %p195 = por %p193, %p194
      %p196 = scmp.ne.s32.totalorder %s185, %s188
      %p197 = scmp.eq.s32.totalorder %s19, 3
      %p198 = por %p196, %p197
      %p199 = scmp.ne.s32.totalorder %s188, %s189
      %p200 = scmp.eq.s32.totalorder %s19, 0
      %p201 = por %p199, %p200
      %p202 = scmp.ne.s32.totalorder %s188, %s189
      %p203 = scmp.eq.s32.totalorder %s20, 3
      %p204 = por %p202, %p203
      %p206 = scmp.ne.s32.totalorder %s189, %s205
      %p207 = scmp.eq.s32.totalorder %s20, 0
      %p208 = por %p206, %p207
      %p209 = scmp.le.s32.totalorder 1, %s14
      %p210 = scmp.lt.s32.totalorder %s14, 5
      %p211 = pnand %p209, %p210
      %p212 = pneg %p211
      // Predicated region
      $region9: #{rgb_slab_decoder_forward.4} parent=5 // pred_check
        _
      $region10: #{rgb_slab_decoder_forward.4} parent=5 // pred_check_branch
        %214 = sbr.rel (%p211) target = $region12
      $region11: #{rgb_slab_decoder_forward.4} parent=5 // pred_region
        %s215 = ssub.s32 %s14, 1
        // Predicated region
        $region13: #{rgb_slab_decoder_forward.4} parent=11 // pred_check
          %p216 = pneg %p147
        $region14: #{rgb_slab_decoder_forward.4} parent=11 // pred_check_branch
          %218 = sbr.rel (%p216) target = $region16
        $region15: #{rgb_slab_decoder_forward.4} parent=11 // pred_region
          _
        $region16: #{rgb_slab_decoder_forward.4} parent=11 // pred_fallthru
          _
      $region12: #{rgb_slab_decoder_forward.4} parent=5 // pred_fallthru
        _
      %p219 = scmp.lt.s32.totalorder %s14, 4
      // Predicated region
      $region17: #{rgb_slab_decoder_forward.4} parent=5 // pred_check
        %p220 = pneg %p219
      $region18: #{rgb_slab_decoder_forward.4} parent=5 // pred_check_branch
        %222 = sbr.rel (%p220) target = $region20
      $region19: #{rgb_slab_decoder_forward.4} parent=5 // pred_region
        // Predicated region
        $region21: #{rgb_slab_decoder_forward.4} parent=19 // pred_check
          %p223 = pneg %p48
        $region22: #{rgb_slab_decoder_forward.4} parent=19 // pred_check_branch
          %225 = sbr.rel (%p223) target = $region24
        $region23: #{rgb_slab_decoder_forward.4} parent=19 // pred_region
          %s226 = smul.u32 4, %s21
          %p227 = scmp.lt.s32.totalorder %s22, 1
          %s228 = scalar_select %p227, %s22, 1
          %p229 = scmp.lt.s32.totalorder %s226, 7
          %s230 = scalar_select %p229, %s226, 7
          %s231 = smul.addr %s228, 8
          %s232 = sadd.s32 %s230, %s231
          %s233 = smul.addr %s232, 8
          %s234 = scalar_lea.vmem %s0, %s233
          %s235 = smul.u32 4, %s21
        $region24: #{rgb_slab_decoder_forward.4} parent=19 // pred_fallthru
          _
        // Predicated region
        $region25: #{rgb_slab_decoder_forward.4} parent=19 // pred_check
          %p236 = pneg %p84
        $region26: #{rgb_slab_decoder_forward.4} parent=19 // pred_check_branch
          %238 = sbr.rel (%p236) target = $region28
        $region27: #{rgb_slab_decoder_forward.4} parent=19 // pred_region
          %s239 = smul.u32 %s21, 4
          %s240 = ssub.s32 %s239, 1
          %p241 = scmp.gt.s32.totalorder %s240, 0
          %s242 = scalar_select %p241, %s240, 0
          %p243 = scmp.lt.s32.totalorder %s22, 1
          %s244 = scalar_select %p243, %s22, 1
          %p245 = scmp.lt.s32.totalorder %s242, 7
          %s246 = scalar_select %p245, %s242, 7
          %s247 = smul.addr %s244, 8
          %s248 = sadd.s32 %s246, %s247
          %s249 = smul.addr %s248, 8
          %s250 = scalar_lea.vmem %s1, %s249
          %s251 = smul.u32 %s21, 4
          %s252 = ssub.s32 %s251, 1
          %p253 = scmp.gt.s32.totalorder %s252, 0
          %s254 = scalar_select %p253, %s252, 0
        $region28: #{rgb_slab_decoder_forward.4} parent=19 // pred_fallthru
          _
        // Predicated region
        $region29: #{rgb_slab_decoder_forward.4} parent=19 // pred_check
          %p255 = pneg %p120
        $region30: #{rgb_slab_decoder_forward.4} parent=19 // pred_check_branch
          %257 = sbr.rel (%p255) target = $region32
        $region31: #{rgb_slab_decoder_forward.4} parent=19 // pred_region
          %s258 = sadd.s32 %s21, 1
          %s259 = smul.u32 %s258, 4
          %p260 = scmp.lt.s32.totalorder %s259, 7
          %s261 = scalar_select %p260, %s259, 7
          %p262 = scmp.lt.s32.totalorder %s22, 1
          %s263 = scalar_select %p262, %s22, 1
          %p264 = scmp.lt.s32.totalorder %s261, 7
          %s265 = scalar_select %p264, %s261, 7
          %s266 = smul.addr %s263, 8
          %s267 = sadd.s32 %s265, %s266
          %s268 = smul.addr %s267, 8
          %s269 = scalar_lea.vmem %s2, %s268
          %s270 = sadd.s32 %s21, 1
          %s271 = smul.u32 %s270, 4
          %p272 = scmp.lt.s32.totalorder %s271, 7
          %s273 = scalar_select %p272, %s271, 7
        $region32: #{rgb_slab_decoder_forward.4} parent=19 // pred_fallthru
          _
        // Predicated region
        $region33: #{rgb_slab_decoder_forward.4} parent=19 // pred_check
          %p274 = pneg %p167
        $region34: #{rgb_slab_decoder_forward.4} parent=19 // pred_check_branch
          %276 = sbr.rel (%p274) target = $region36
        $region35: #{rgb_slab_decoder_forward.4} parent=19 // pred_region
          %s277 = sand.u32 %s157, 1
          %s278 = scalar_lea.sflag [#allocation3], %s277
          %s279 = sand.u32 %s157, 1
          %s280 = smul.addr %s279, 64
          %s281 = scalar_lea.vmem [#allocation2], %s280
          %s282 = smul.u32 4, %s21
          %s284 = ssub.s32 1024, 1024
          %285 = vsyncadd %s278, %s284
          %s286 = smul.addr %s282, 2
          %s287 = smul.addr %s286, 128
          %s288 = scalar_lea.hbm %s4, %s287
          %s289 = sshll.u32 %s281, 4
          %s290 = int_to_ptr.vmem [resolvable:$true] %s289
          %295 = dma.hbm_to_vmem [thread:$0]  %s288, 1024, %s290, %s278, 128, 128, 8
        $region36: #{rgb_slab_decoder_forward.4} parent=19 // pred_fallthru
          _
      $region20: #{rgb_slab_decoder_forward.4} parent=5 // pred_fallthru
        _
      %p296 = scmp.le.s32.totalorder 1, %s14
      %p297 = scmp.lt.s32.totalorder %s14, 5
      %p298 = pnand %p296, %p297
      %p299 = pneg %p298
      // Predicated region
      $region37: #{rgb_slab_decoder_forward.4} parent=5 // pred_check
        _
      $region38: #{rgb_slab_decoder_forward.4} parent=5 // pred_check_branch
        %301 = sbr.rel (%p298) target = $region40
      $region39: #{rgb_slab_decoder_forward.4} parent=5 // pred_region
        %s302 = ssub.s32 %s14, 1
        %s303 = sand.u32 %s160, 1
        %s304 = scalar_lea.sflag [#allocation3], %s303
        %s305 = sand.u32 %s160, 1
        %s306 = smul.addr %s305, 64
        %s307 = scalar_lea.vmem [#allocation2], %s306
        // Predicated region
        $region41: #{rgb_slab_decoder_forward.4} parent=39 // pred_check
          %p308 = pneg %p173
        $region42: #{rgb_slab_decoder_forward.4} parent=39 // pred_check_branch
          %310 = sbr.rel (%p308) target = $region44
        $region43: #{rgb_slab_decoder_forward.4} parent=39 // pred_region
          %311 = dma.done %s304, 1024
        $region44: #{rgb_slab_decoder_forward.4} parent=39 // pred_fallthru
          _
        %s312 = smul.u32 4, %s23
        %p313 = scmp.lt.s32.totalorder %s24, 1
        %s314 = scalar_select %p313, %s24, 1
        %p315 = scmp.lt.s32.totalorder %s312, 7
        %s316 = scalar_select %p315, %s312, 7
        %s317 = smul.addr %s314, 8
        %s318 = sadd.s32 %s316, %s317
        %s319 = smul.addr %s318, 8
        %s320 = scalar_lea.vmem %s0, %s319
        %p321 = pneg %p54
        %p322 = pneg %p51
        %s323 = smul.u32 %s23, 4
        %s324 = ssub.s32 %s323, 1
        %p325 = scmp.gt.s32.totalorder %s324, 0
        %s326 = scalar_select %p325, %s324, 0
        %p327 = scmp.lt.s32.totalorder %s24, 1
        %s328 = scalar_select %p327, %s24, 1
        %p329 = scmp.lt.s32.totalorder %s326, 7
        %s330 = scalar_select %p329, %s326, 7
        %s331 = smul.addr %s328, 8
        %s332 = sadd.s32 %s330, %s331
        %s333 = smul.addr %s332, 8
        %s334 = scalar_lea.vmem %s1, %s333
        %p335 = pneg %p90
        %p336 = pneg %p87
        %s337 = sadd.s32 %s23, 1
        %s338 = smul.u32 %s337, 4
        %p339 = scmp.lt.s32.totalorder %s338, 7
        %s340 = scalar_select %p339, %s338, 7
        %p341 = scmp.lt.s32.totalorder %s24, 1
        %s342 = scalar_select %p341, %s24, 1
        %p343 = scmp.lt.s32.totalorder %s340, 7
        %s344 = scalar_select %p343, %s340, 7
        %s345 = smul.addr %s342, 8
        %s346 = sadd.s32 %s344, %s345
        %s347 = smul.addr %s346, 8
        %s348 = scalar_lea.vmem %s2, %s347
        %p349 = pneg %p126
        %p350 = pneg %p123
        %p351 = pneg %p147
        %p352 = pneg %p144
        %s353 = sand.u32 %s160, 1
        %s354 = scalar_lea.sflag [#allocation3], %s353
        %s355 = sand.u32 %s160, 1
        %s356 = smul.addr %s355, 64
        %s357 = scalar_lea.vmem [#allocation2], %s356
        %p358 = pneg %p173
        %p359 = pneg %p170
        %p360 = pneg %p201
        %p361 = pneg %p198
        %s362 = smul.u32 4, %s23
        %p363 = scmp.lt.s32.totalorder %s24, 1
        %s364 = scalar_select %p363, %s24, 1
        %p365 = scmp.lt.s32.totalorder %s362, 7
        %s366 = scalar_select %p365, %s362, 7
        %s367 = smul.addr %s366, 2
        %s368 = smul.addr %s364, 16
        %s369 = sadd.s32 %s367, %s368
        %s370 = smul.addr %s369, 8
        %s371 = scalar_lea.vmem %s5, %s370
        %s372 = smul.u32 4, %s23
        %p373 = scmp.lt.s32.totalorder %s24, 1
        %s374 = scalar_select %p373, %s24, 1
        %p375 = scmp.lt.s32.totalorder %s372, 7
        %s376 = scalar_select %p375, %s372, 7
        %s377 = smul.addr %s374, 8
        %s378 = sadd.s32 %s376, %s377
        %s379 = smul.addr %s378, 8
        %s380 = scalar_lea.vmem %s0, %s379
        %s381 = smul.u32 4, %s23
        %s382 = smul.u32 %s23, 4
        %s383 = ssub.s32 %s382, 1
        %p384 = scmp.gt.s32.totalorder %s383, 0
        %s385 = scalar_select %p384, %s383, 0
        %p386 = scmp.lt.s32.totalorder %s24, 1
        %s387 = scalar_select %p386, %s24, 1
        %p388 = scmp.lt.s32.totalorder %s385, 7
        %s389 = scalar_select %p388, %s385, 7
        %s390 = smul.addr %s387, 8
        %s391 = sadd.s32 %s389, %s390
        %s392 = smul.addr %s391, 8
        %s393 = scalar_lea.vmem %s1, %s392
        %s394 = smul.u32 %s23, 4
        %s395 = ssub.s32 %s394, 1
        %p396 = scmp.gt.s32.totalorder %s395, 0
        %s397 = scalar_select %p396, %s395, 0
        %s398 = sadd.s32 %s23, 1
        %s399 = smul.u32 %s398, 4
        %p400 = scmp.lt.s32.totalorder %s399, 7
        %s401 = scalar_select %p400, %s399, 7
        %p402 = scmp.lt.s32.totalorder %s24, 1
        %s403 = scalar_select %p402, %s24, 1
        %p404 = scmp.lt.s32.totalorder %s401, 7
        %s405 = scalar_select %p404, %s401, 7
        %s406 = smul.addr %s403, 8
        %s407 = sadd.s32 %s405, %s406
        %s408 = smul.addr %s407, 8
        %s409 = scalar_lea.vmem %s2, %s408
        %s410 = sadd.s32 %s23, 1
        %s411 = smul.u32 %s410, 4
        %p412 = scmp.lt.s32.totalorder %s411, 7
        %s413 = scalar_select %p412, %s411, 7
        %s414 = smul.u32 4, %s23
        %s415 = smul.u32 4, %s23
        %p416 = scmp.lt.s32.totalorder %s24, 1
        %s417 = scalar_select %p416, %s24, 1
        %p418 = scmp.lt.s32.totalorder %s415, 7
        %s419 = scalar_select %p418, %s415, 7
        %s420 = smul.addr %s419, 2
        %s421 = smul.addr %s417, 16
        %s422 = sadd.s32 %s420, %s421
        %s423 = smul.addr %s422, 8
        %s424 = scalar_lea.vmem %s5, %s423
        %s425 = smul.u32 4, %s23
        %v426 = vld [vmem:[%s393] sm:$0xff]
        %p427 = scmp.gt.s32.totalorder %s23, 0
        %s428 = scalar_select %p427, 1, 0
        %s429 = scvt.s32.f32 %s428
        %v430 = vstv %s429
        %v431 = vmul.f32 %v426, %v430
        %v432 = vld [vmem:[%s409] sm:$0xff]
        %p433 = scmp.lt.s32.totalorder %s23, 1
        %s434 = scalar_select %p433, 1, 0
        %s435 = scvt.s32.f32 %s434
        %v436 = vstv %s435
        %v437 = vmul.f32 %v432, %v436
        %v438 = vld [vmem:[%s380] sm:$0xff]
        %v439 = vld [vmem:[%s380 + $0x8] sm:$0xff]
        %v440 = vld [vmem:[%s380 + $0x10] sm:$0xff]
        %v441 = vld [vmem:[%s380 + $0x18] sm:$0xff]
        %v448 = vrot.slane %v431, 7
        %v449 = vrot.slane %v438, 7
        %v450 = vrot.slane %v439, 7
        %v451 = vrot.slane %v440, 7
        %v452 = vrot.slane %v441, 7
        %v453 = vrot.slane %v437, 7
        %vm460 = vcmask 1040384
        %v461 = vsel %vm460, 0.0, %v448
        %v462 = vsel %vm460, 0.0, %v449
        %v463 = vsel %vm460, 0.0, %v450
        %v464 = vsel %vm460, 0.0, %v451
        %v465 = vsel %vm460, 0.0, %v452
        %v466 = vsel %vm460, 0.0, %v453
        %v467 = vrot.slane %v431, 1
        %v468 = vrot.slane %v438, 1
        %v469 = vrot.slane %v439, 1
        %v470 = vrot.slane %v440, 1
        %v471 = vrot.slane %v441, 1
        %v472 = vrot.slane %v437, 1
        %vm479 = vcmask 1046528
        %v480 = vsel %vm479, %v467, 0.0
        %v481 = vsel %vm479, %v468, 0.0
        %v482 = vsel %vm479, %v469, 0.0
        %v483 = vsel %vm479, %v470, 0.0
        %v484 = vsel %vm479, %v471, 0.0
        %v485 = vsel %vm479, %v472, 0.0
        %486 = vrot.lane.b32.xlu0 %v431, 4
        %v487 = vpop.permute.xlu0 %486
        %488 = vrot.lane.b32.xlu0 %v438, 4
        %v489 = vpop.permute.xlu0 %488
        %490 = vrot.lane.b32.xlu0 %v439, 4
        %v491 = vpop.permute.xlu0 %490
        %492 = vrot.lane.b32.xlu0 %v440, 4
        %v493 = vpop.permute.xlu0 %492
        %494 = vrot.lane.b32.xlu0 %v441, 4
        %v495 = vpop.permute.xlu0 %494
        %496 = vrot.lane.b32.xlu0 %v437, 4
        %v497 = vpop.permute.xlu0 %496
        %510 = vrot.lane.b32.xlu0 %v480, 8
        %v511 = vpop.permute.xlu0 %510
        %512 = vrot.lane.b32.xlu0 %v481, 8
        %v513 = vpop.permute.xlu0 %512
        %514 = vrot.lane.b32.xlu0 %v482, 8
        %v515 = vpop.permute.xlu0 %514
        %516 = vrot.lane.b32.xlu0 %v483, 8
        %v517 = vpop.permute.xlu0 %516
        %518 = vrot.lane.b32.xlu0 %v484, 8
        %v519 = vpop.permute.xlu0 %518
        %520 = vrot.lane.b32.xlu0 %v485, 8
        %v521 = vpop.permute.xlu0 %520
        %vm528 = vcmask 31744
        %v529 = vsel %vm528, %v461, %v487
        %v530 = vsel %vm528, %v462, %v489
        %v531 = vsel %vm528, %v463, %v491
        %v532 = vsel %vm528, %v464, %v493
        %v533 = vsel %vm528, %v465, %v495
        %v534 = vsel %vm528, %v466, %v497
        %vm535 = vcmask 64512
        %v536 = vsel %vm535, %v529, %v511
        %v537 = vsel %vm535, %v530, %v513
        %v538 = vsel %vm535, %v531, %v515
        %v539 = vsel %vm535, %v532, %v517
        %v540 = vsel %vm535, %v533, %v519
        %v541 = vsel %vm535, %v534, %v521
        %v542 = vld [vmem:[%s3] sm:$0xff]
        %v543 = vld [vmem:[%s3 + $0x8] sm:$0xf]
        %s544 = scalar_lea.vmem %s3, 16
        %v545 = vld [vmem:[%s544] sm:$0xff]
        %v546 = vld [vmem:[%s544 + $0x8] sm:$0xf]
        %vm547 = vcmask 97280
        %v549 = vsel %vm547, %v536, 0
        %v552 = vsel %vm547, %v537, 0
        %v555 = vsel %vm547, %v538, 0
        %v558 = vsel %vm547, %v539, 0
        %vm560 = vcmask 1043456
        %v562 = vsel %vm560, %v546, 0
        %564 = vmatprep.subr.mxu0 0.0
        %565 = vmatpush1.msra.mxu0 %v545
        %566 = vmatprep.subr.mxu0 0.0
        %567 = vmatpush1.msra.mxu0 %v562
        %568 = vmatprep.subr.mxu0 0.0
        %569 = vmatpush1.msra.mxu0 0.0
        %570 = vmatprep.subr.mxu0 0.0
        %571 = vmatpush1.msra.mxu0 0.0
        %572 = vmatprep.subr.mxu0 0.0
        %573 = vmatpush1.msra.mxu0 0.0
        %574 = vmatprep.subr.mxu0 0.0
        %575 = vmatpush1.msra.mxu0 0.0
        %576 = vmatprep.subr.mxu0 0.0
        %577 = vmatpush1.msra.mxu0 0.0
        %578 = vmatprep.subr.mxu0 0.0
        %579 = vmatpush1.msra.mxu0 0.0
        %580 = vmatprep.subr.mxu0 0.0
        %581 = vmatpush1.msra.mxu0 0.0
        %582 = vmatprep.subr.mxu0 0.0
        %583 = vmatpush1.msra.mxu0 0.0
        %584 = vmatprep.subr.mxu0 0.0
        %585 = vmatpush1.msra.mxu0 0.0
        %586 = vmatprep.subr.mxu0 0.0
        %587 = vmatpush1.msra.mxu0 0.0
        %588 = vmatprep.subr.mxu0 0.0
        %589 = vmatpush1.msra.mxu0 0.0
        %590 = vmatprep.subr.mxu0 0.0
        %591 = vmatpush1.msra.mxu0 0.0
        %592 = vmatprep.subr.mxu0 0.0
        %593 = vmatpush1.msra.mxu0 0.0
        %594 = vmatprep.subr.mxu0 0.0
        %595 = vmatpush1.msra.mxu0 0.0
        %596 = vmatprep.subr.mxu0 0.0
        %597 = vmatpush1.msra.mxu0 0.0
        %598 = vmatprep.subr.mxu0 0.0
        %599 = vmatpush1.msra.mxu0 0.0
        %600 = vmatprep.subr.mxu0 0.0
        %601 = vmatpush1.msra.mxu0 0.0
        %602 = vmatprep.subr.mxu0 0.0
        %603 = vmatpush1.msra.mxu0 0.0
        %604 = vmatprep.subr.mxu0 0.0
        %605 = vmatpush1.msra.mxu0 0.0
        %606 = vmatprep.subr.mxu0 0.0
        %607 = vmatpush1.msra.mxu0 0.0
        %608 = vmatprep.subr.mxu0 0.0
        %609 = vmatpush1.msra.mxu0 0.0
        %610 = vmatprep.subr.mxu0 0.0
        %611 = vmatpush1.msra.mxu0 0.0
        %612 = vmatprep.subr.mxu0 0.0
        %613 = vmatpush1.msra.mxu0 0.0
        %614 = vmatprep.subr.mxu0 0.0
        %615 = vmatpush1.msra.mxu0 0.0
        %616 = vmatprep.subr.mxu0 0.0
        %617 = vmatpush1.msra.mxu0 0.0
        %618 = vmatprep.subr.mxu0 0.0
        %619 = vmatpush1.msra.mxu0 0.0
        %620 = vmatprep.subr.mxu0 0.0
        %621 = vmatpush1.msra.mxu0 0.0
        %622 = vmatprep.subr.mxu0 0.0
        %623 = vmatpush1.msra.mxu0 0.0
        %624 = vmatprep.subr.mxu0 0.0
        %625 = vmatpush1.msra.mxu0 0.0
        %626 = vmatprep.subr.mxu0 0.0
        %627 = vmatpush1.msra.mxu0 0.0
        %628 = vmatprep.mubr.f32.mxu0 0.0
        %629 = vmatmul.mubr.f32.gmra.mrb[0].mxu0 %v549
        %v630 = vpop.f32.mrb[0].mxu0
        %v631 = vadd.f32 0.0, %v630
        %v632 = vpop.f32.mrb[0].mxu0
        %633 = vmatprep.mubr.f32.mxu0 0.0
        %634 = vmatmul.mubr.f32.gmra.mrb[0].mxu0 %v552
        %v635 = vpop.f32.mrb[0].mxu0
        %v636 = vadd.f32 0.0, %v635
        %v637 = vpop.f32.mrb[0].mxu0
        %638 = vmatprep.mubr.f32.mxu0 0.0
        %639 = vmatmul.mubr.f32.gmra.mrb[0].mxu0 %v555
        %v640 = vpop.f32.mrb[0].mxu0
        %v641 = vadd.f32 0.0, %v640
        %v642 = vpop.f32.mrb[0].mxu0
        %643 = vmatprep.mubr.f32.mxu0 0.0
        %644 = vmatmul.mubr.f32.gmra.mrb[0].mxu0 %v558
        %v645 = vpop.f32.mrb[0].mxu0
        %v646 = vadd.f32 0.0, %v645
        %v647 = vpop.f32.mrb[0].mxu0
        %648 = vdwg.mxu0
        %v650 = vsel %vm547, %v540, 0
        %v653 = vsel %vm560, %v543, 0
        %655 = vmatprep.subr.mxu0 0.0
        %656 = vmatpush1.msra.mxu0 %v542
        %657 = vmatprep.subr.mxu0 0.0
        %658 = vmatpush1.msra.mxu0 %v653
        %659 = vmatprep.subr.mxu0 0.0
        %660 = vmatpush1.msra.mxu0 0.0
        %661 = vmatprep.subr.mxu0 0.0
        %662 = vmatpush1.msra.mxu0 0.0
        %663 = vmatprep.subr.mxu0 0.0
        %664 = vmatpush1.msra.mxu0 0.0
        %665 = vmatprep.subr.mxu0 0.0
        %666 = vmatpush1.msra.mxu0 0.0
        %667 = vmatprep.subr.mxu0 0.0
        %668 = vmatpush1.msra.mxu0 0.0
        %669 = vmatprep.subr.mxu0 0.0
        %670 = vmatpush1.msra.mxu0 0.0
        %671 = vmatprep.subr.mxu0 0.0
        %672 = vmatpush1.msra.mxu0 0.0
        %673 = vmatprep.subr.mxu0 0.0
        %674 = vmatpush1.msra.mxu0 0.0
        %675 = vmatprep.subr.mxu0 0.0
        %676 = vmatpush1.msra.mxu0 0.0
        %677 = vmatprep.subr.mxu0 0.0
        %678 = vmatpush1.msra.mxu0 0.0
        %679 = vmatprep.subr.mxu0 0.0
        %680 = vmatpush1.msra.mxu0 0.0
        %681 = vmatprep.subr.mxu0 0.0
        %682 = vmatpush1.msra.mxu0 0.0
        %683 = vmatprep.subr.mxu0 0.0
        %684 = vmatpush1.msra.mxu0 0.0
        %685 = vmatprep.subr.mxu0 0.0
        %686 = vmatpush1.msra.mxu0 0.0
        %687 = vmatprep.subr.mxu0 0.0
        %688 = vmatpush1.msra.mxu0 0.0
        %689 = vmatprep.subr.mxu0 0.0
        %690 = vmatpush1.msra.mxu0 0.0
        %691 = vmatprep.subr.mxu0 0.0
        %692 = vmatpush1.msra.mxu0 0.0
        %693 = vmatprep.subr.mxu0 0.0
        %694 = vmatpush1.msra.mxu0 0.0
        %695 = vmatprep.subr.mxu0 0.0
        %696 = vmatpush1.msra.mxu0 0.0
        %697 = vmatprep.subr.mxu0 0.0
        %698 = vmatpush1.msra.mxu0 0.0
        %699 = vmatprep.subr.mxu0 0.0
        %700 = vmatpush1.msra.mxu0 0.0
        %701 = vmatprep.subr.mxu0 0.0
        %702 = vmatpush1.msra.mxu0 0.0
        %703 = vmatprep.subr.mxu0 0.0
        %704 = vmatpush1.msra.mxu0 0.0
        %705 = vmatprep.subr.mxu0 0.0
        %706 = vmatpush1.msra.mxu0 0.0
        %707 = vmatprep.subr.mxu0 0.0
        %708 = vmatpush1.msra.mxu0 0.0
        %709 = vmatprep.subr.mxu0 0.0
        %710 = vmatpush1.msra.mxu0 0.0
        %711 = vmatprep.subr.mxu0 0.0
        %712 = vmatpush1.msra.mxu0 0.0
        %713 = vmatprep.subr.mxu0 0.0
        %714 = vmatpush1.msra.mxu0 0.0
        %715 = vmatprep.subr.mxu0 0.0
        %716 = vmatpush1.msra.mxu0 0.0
        %717 = vmatprep.subr.mxu0 0.0
        %718 = vmatpush1.msra.mxu0 0.0
        %719 = vmatprep.mubr.f32.mxu0 0.0
        %720 = vmatmul.mubr.f32.gmra.mrb[0].mxu0 %v552
        %v721 = vpop.f32.mrb[0].mxu0
        %v722 = vadd.f32 %v631, %v721
        %v723 = vpop.f32.mrb[0].mxu0
        %724 = vmatprep.mubr.f32.mxu0 0.0
        %725 = vmatmul.mubr.f32.gmra.mrb[0].mxu0 %v555
        %v726 = vpop.f32.mrb[0].mxu0
        %v727 = vadd.f32 %v636, %v726
        %v728 = vpop.f32.mrb[0].mxu0
        %729 = vmatprep.mubr.f32.mxu0 0.0
        %730 = vmatmul.mubr.f32.gmra.mrb[0].mxu0 %v558
        %v731 = vpop.f32.mrb[0].mxu0
        %v732 = vadd.f32 %v641, %v731
        %v733 = vpop.f32.mrb[0].mxu0
        %734 = vmatprep.mubr.f32.mxu0 0.0
        %735 = vmatmul.mubr.f32.gmra.mrb[0].mxu0 %v650
        %v736 = vpop.f32.mrb[0].mxu0
        %v737 = vadd.f32 %v646, %v736
        %v738 = vpop.f32.mrb[0].mxu0
        %739 = vdwg.mxu0
        %v740 = vld [vmem:[%s307] sm:$0xff]
        %v741 = vld [vmem:[%s307 + $0x10] sm:$0xff]
        %v742 = vld [vmem:[%s307 + $0x20] sm:$0xff]
        %v743 = vld [vmem:[%s307 + $0x30] sm:$0xff]
        %v744 = vadd.f32 %v722, %v740
        %v745 = vadd.f32 %v727, %v741
        %v746 = vadd.f32 %v732, %v742
        %v747 = vadd.f32 %v737, %v743
        %vm748 = vcmp.ge.f32.partialorder %v744, 0.0
        %vm749 = vcmp.ge.f32.partialorder %v745, 0.0
        %vm750 = vcmp.ge.f32.partialorder %v746, 0.0
        %vm751 = vcmp.ge.f32.partialorder %v747, 0.0
        %v752 = vmul.f32 %v744, 0.2
        %v753 = vmul.f32 %v745, 0.2
        %v754 = vmul.f32 %v746, 0.2
        %v755 = vmul.f32 %v747, 0.2
        %v756 = vsel %vm748, %v744, %v752
        %v757 = vsel %vm749, %v745, %v753
        %v758 = vsel %vm750, %v746, %v754
        %v759 = vsel %vm751, %v747, %v755
        %vm760 = vcmask 523264
        %761 = vst.msk [vmem:[%s424] sm:$0xff] %vm760, %v756
        %762 = vst.msk [vmem:[%s424 + $0x10] sm:$0xff] %vm760, %v757
        %763 = vst.msk [vmem:[%s424 + $0x20] sm:$0xff] %vm760, %v758
        %764 = vst.msk [vmem:[%s424 + $0x30] sm:$0xff] %vm760, %v759
        %s765 = scalar_lea.vmem %s3, 32
        %v766 = vld [vmem:[%s765] sm:$0xff]
        %v767 = vld [vmem:[%s765 + $0x8] sm:$0xf]
        %s768 = scalar_lea.vmem %s3, 48
        %v769 = vld [vmem:[%s768] sm:$0xff]
        %v770 = vld [vmem:[%s768 + $0x8] sm:$0xf]
        %v772 = vsel %vm547, %v541, 0
        %v775 = vsel %vm560, %v770, 0
        %777 = vmatprep.subr.mxu0 0.0
        %778 = vmatpush1.msra.mxu0 %v769
        %779 = vmatprep.subr.mxu0 0.0
        %780 = vmatpush1.msra.mxu0 %v775
        %781 = vmatprep.subr.mxu0 0.0
        %782 = vmatpush1.msra.mxu0 0.0
        %783 = vmatprep.subr.mxu0 0.0
        %784 = vmatpush1.msra.mxu0 0.0
        %785 = vmatprep.subr.mxu0 0.0
        %786 = vmatpush1.msra.mxu0 0.0
        %787 = vmatprep.subr.mxu0 0.0
        %788 = vmatpush1.msra.mxu0 0.0
        %789 = vmatprep.subr.mxu0 0.0
        %790 = vmatpush1.msra.mxu0 0.0
        %791 = vmatprep.subr.mxu0 0.0
        %792 = vmatpush1.msra.mxu0 0.0
        %793 = vmatprep.subr.mxu0 0.0
        %794 = vmatpush1.msra.mxu0 0.0
        %795 = vmatprep.subr.mxu0 0.0
        %796 = vmatpush1.msra.mxu0 0.0
        %797 = vmatprep.subr.mxu0 0.0
        %798 = vmatpush1.msra.mxu0 0.0
        %799 = vmatprep.subr.mxu0 0.0
        %800 = vmatpush1.msra.mxu0 0.0
        %801 = vmatprep.subr.mxu0 0.0
        %802 = vmatpush1.msra.mxu0 0.0
        %803 = vmatprep.subr.mxu0 0.0
        %804 = vmatpush1.msra.mxu0 0.0
        %805 = vmatprep.subr.mxu0 0.0
        %806 = vmatpush1.msra.mxu0 0.0
        %807 = vmatprep.subr.mxu0 0.0
        %808 = vmatpush1.msra.mxu0 0.0
        %809 = vmatprep.subr.mxu0 0.0
        %810 = vmatpush1.msra.mxu0 0.0
        %811 = vmatprep.subr.mxu0 0.0
        %812 = vmatpush1.msra.mxu0 0.0
        %813 = vmatprep.subr.mxu0 0.0
        %814 = vmatpush1.msra.mxu0 0.0
        %815 = vmatprep.subr.mxu0 0.0
        %816 = vmatpush1.msra.mxu0 0.0
        %817 = vmatprep.subr.mxu0 0.0
        %818 = vmatpush1.msra.mxu0 0.0
        %819 = vmatprep.subr.mxu0 0.0
        %820 = vmatpush1.msra.mxu0 0.0
        %821 = vmatprep.subr.mxu0 0.0
        %822 = vmatpush1.msra.mxu0 0.0
        %823 = vmatprep.subr.mxu0 0.0
        %824 = vmatpush1.msra.mxu0 0.0
        %825 = vmatprep.subr.mxu0 0.0
        %826 = vmatpush1.msra.mxu0 0.0
        %827 = vmatprep.subr.mxu0 0.0
        %828 = vmatpush1.msra.mxu0 0.0
        %829 = vmatprep.subr.mxu0 0.0
        %830 = vmatpush1.msra.mxu0 0.0
        %831 = vmatprep.subr.mxu0 0.0
        %832 = vmatpush1.msra.mxu0 0.0
        %833 = vmatprep.subr.mxu0 0.0
        %834 = vmatpush1.msra.mxu0 0.0
        %835 = vmatprep.subr.mxu0 0.0
        %836 = vmatpush1.msra.mxu0 0.0
        %837 = vmatprep.subr.mxu0 0.0
        %838 = vmatpush1.msra.mxu0 0.0
        %839 = vmatprep.subr.mxu0 0.0
        %840 = vmatpush1.msra.mxu0 0.0
        %841 = vmatprep.mubr.f32.mxu0 0.0
        %842 = vmatmul.mubr.f32.gmra.mrb[0].mxu0 %v555
        %v843 = vpop.f32.mrb[0].mxu0
        %v844 = vadd.f32 0.0, %v843
        %v845 = vpop.f32.mrb[0].mxu0
        %846 = vmatprep.mubr.f32.mxu0 0.0
        %847 = vmatmul.mubr.f32.gmra.mrb[0].mxu0 %v558
        %v848 = vpop.f32.mrb[0].mxu0
        %v849 = vadd.f32 0.0, %v848
        %v850 = vpop.f32.mrb[0].mxu0
        %851 = vmatprep.mubr.f32.mxu0 0.0
        %852 = vmatmul.mubr.f32.gmra.mrb[0].mxu0 %v650
        %v853 = vpop.f32.mrb[0].mxu0
        %v854 = vadd.f32 0.0, %v853
        %v855 = vpop.f32.mrb[0].mxu0
        %856 = vmatprep.mubr.f32.mxu0 0.0
        %857 = vmatmul.mubr.f32.gmra.mrb[0].mxu0 %v772
        %v858 = vpop.f32.mrb[0].mxu0
        %v859 = vadd.f32 0.0, %v858
        %v860 = vpop.f32.mrb[0].mxu0
        %861 = vdwg.mxu0
        %v863 = vsel %vm560, %v767, 0
        %865 = vmatprep.subr.mxu0 0.0
        %866 = vmatpush1.msra.mxu0 %v766
        %867 = vmatprep.subr.mxu0 0.0
        %868 = vmatpush1.msra.mxu0 %v863
        %869 = vmatprep.subr.mxu0 0.0
        %870 = vmatpush1.msra.mxu0 0.0
        %871 = vmatprep.subr.mxu0 0.0
        %872 = vmatpush1.msra.mxu0 0.0
        %873 = vmatprep.subr.mxu0 0.0
        %874 = vmatpush1.msra.mxu0 0.0
        %875 = vmatprep.subr.mxu0 0.0
        %876 = vmatpush1.msra.mxu0 0.0
        %877 = vmatprep.subr.mxu0 0.0
        %878 = vmatpush1.msra.mxu0 0.0
        %879 = vmatprep.subr.mxu0 0.0
        %880 = vmatpush1.msra.mxu0 0.0
        %881 = vmatprep.subr.mxu0 0.0
        %882 = vmatpush1.msra.mxu0 0.0
        %883 = vmatprep.subr.mxu0 0.0
        %884 = vmatpush1.msra.mxu0 0.0
        %885 = vmatprep.subr.mxu0 0.0
        %886 = vmatpush1.msra.mxu0 0.0
        %887 = vmatprep.subr.mxu0 0.0
        %888 = vmatpush1.msra.mxu0 0.0
        %889 = vmatprep.subr.mxu0 0.0
        %890 = vmatpush1.msra.mxu0 0.0
        %891 = vmatprep.subr.mxu0 0.0
        %892 = vmatpush1.msra.mxu0 0.0
        %893 = vmatprep.subr.mxu0 0.0
        %894 = vmatpush1.msra.mxu0 0.0
        %895 = vmatprep.subr.mxu0 0.0
        %896 = vmatpush1.msra.mxu0 0.0
        %897 = vmatprep.subr.mxu0 0.0
        %898 = vmatpush1.msra.mxu0 0.0
        %899 = vmatprep.subr.mxu0 0.0
        %900 = vmatpush1.msra.mxu0 0.0
        %901 = vmatprep.subr.mxu0 0.0
        %902 = vmatpush1.msra.mxu0 0.0
        %903 = vmatprep.subr.mxu0 0.0
        %904 = vmatpush1.msra.mxu0 0.0
        %905 = vmatprep.subr.mxu0 0.0
        %906 = vmatpush1.msra.mxu0 0.0
        %907 = vmatprep.subr.mxu0 0.0
        %908 = vmatpush1.msra.mxu0 0.0
        %909 = vmatprep.subr.mxu0 0.0
        %910 = vmatpush1.msra.mxu0 0.0
        %911 = vmatprep.subr.mxu0 0.0
        %912 = vmatpush1.msra.mxu0 0.0
        %913 = vmatprep.subr.mxu0 0.0
        %914 = vmatpush1.msra.mxu0 0.0
        %915 = vmatprep.subr.mxu0 0.0
        %916 = vmatpush1.msra.mxu0 0.0
        %917 = vmatprep.subr.mxu0 0.0
        %918 = vmatpush1.msra.mxu0 0.0
        %919 = vmatprep.subr.mxu0 0.0
        %920 = vmatpush1.msra.mxu0 0.0
        %921 = vmatprep.subr.mxu0 0.0
        %922 = vmatpush1.msra.mxu0 0.0
        %923 = vmatprep.subr.mxu0 0.0
        %924 = vmatpush1.msra.mxu0 0.0
        %925 = vmatprep.subr.mxu0 0.0
        %926 = vmatpush1.msra.mxu0 0.0
        %927 = vmatprep.subr.mxu0 0.0
        %928 = vmatpush1.msra.mxu0 0.0
        %929 = vmatprep.mubr.f32.mxu0 0.0
        %930 = vmatmul.mubr.f32.gmra.mrb[0].mxu0 %v552
        %v931 = vpop.f32.mrb[0].mxu0
        %v932 = vadd.f32 %v844, %v931
        %v933 = vpop.f32.mrb[0].mxu0
        %934 = vmatprep.mubr.f32.mxu0 0.0
        %935 = vmatmul.mubr.f32.gmra.mrb[0].mxu0 %v555
        %v936 = vpop.f32.mrb[0].mxu0
        %v937 = vadd.f32 %v849, %v936
        %v938 = vpop.f32.mrb[0].mxu0
        %939 = vmatprep.mubr.f32.mxu0 0.0
        %940 = vmatmul.mubr.f32.gmra.mrb[0].mxu0 %v558
        %v941 = vpop.f32.mrb[0].mxu0
        %v942 = vadd.f32 %v854, %v941
        %v943 = vpop.f32.mrb[0].mxu0
        %944 = vmatprep.mubr.f32.mxu0 0.0
        %945 = vmatmul.mubr.f32.gmra.mrb[0].mxu0 %v650
        %v946 = vpop.f32.mrb[0].mxu0
        %v947 = vadd.f32 %v859, %v946
        %v948 = vpop.f32.mrb[0].mxu0
        %949 = vdwg.mxu0
        %s950 = scalar_lea.vmem %s307, 8 [#allocation2]
        %v951 = vld [vmem:[%s950] sm:$0xff]
        %v952 = vld [vmem:[%s950 + $0x10] sm:$0xff]
        %v953 = vld [vmem:[%s950 + $0x20] sm:$0xff]
        %v954 = vld [vmem:[%s950 + $0x30] sm:$0xff]
        %v955 = vadd.f32 %v932, %v951
        %v956 = vadd.f32 %v937, %v952
        %v957 = vadd.f32 %v942, %v953
        %v958 = vadd.f32 %v947, %v954
        %vm959 = vcmp.ge.f32.partialorder %v955, 0.0
        %vm960 = vcmp.ge.f32.partialorder %v956, 0.0
        %vm961 = vcmp.ge.f32.partialorder %v957, 0.0
        %vm962 = vcmp.ge.f32.partialorder %v958, 0.0
        %v963 = vmul.f32 %v955, 0.2
        %v964 = vmul.f32 %v956, 0.2
        %v965 = vmul.f32 %v957, 0.2
        %v966 = vmul.f32 %v958, 0.2
        %v967 = vsel %vm959, %v955, %v963
        %v968 = vsel %vm960, %v956, %v964
        %v969 = vsel %vm961, %v957, %v965
        %v970 = vsel %vm962, %v958, %v966
        %s971 = scalar_lea.vmem %s424, 8
        %972 = vst.msk [vmem:[%s971] sm:$0xff] %vm760, %v967
        %973 = vst.msk [vmem:[%s971 + $0x10] sm:$0xff] %vm760, %v968
        %974 = vst.msk [vmem:[%s971 + $0x20] sm:$0xff] %vm760, %v969
        %975 = vst.msk [vmem:[%s971 + $0x30] sm:$0xff] %vm760, %v970
        %s976 = smul.u32 4, %s23
        %p977 = scmp.lt.s32.totalorder %s24, 1
        %s978 = scalar_select %p977, %s24, 1
        %p979 = scmp.lt.s32.totalorder %s976, 7
        %s980 = scalar_select %p979, %s976, 7
        %s981 = smul.addr %s980, 2
        %s982 = smul.addr %s978, 16
        %s983 = sadd.s32 %s981, %s982
        %s984 = smul.addr %s983, 8
        %s985 = scalar_lea.vmem %s5, %s984
        // Predicated region
        $region45: #{rgb_slab_decoder_forward.4} parent=39 // pred_check
          %p986 = pneg %p198
        $region46: #{rgb_slab_decoder_forward.4} parent=39 // pred_check_branch
          %988 = sbr.rel (%p986) target = $region48
        $region47: #{rgb_slab_decoder_forward.4} parent=39 // pred_region
          %s989 = smul.u32 4, %s23
        $region48: #{rgb_slab_decoder_forward.4} parent=39 // pred_fallthru
          _
      $region40: #{rgb_slab_decoder_forward.4} parent=5 // pred_fallthru
        _
      %p990 = scmp.le.s32.totalorder 2, %s14
      // Predicated region
      $region49: #{rgb_slab_decoder_forward.4} parent=5 // pred_check
        %p991 = pneg %p990
      $region50: #{rgb_slab_decoder_forward.4} parent=5 // pred_check_branch
        %993 = sbr.rel (%p991) target = $region52
      $region51: #{rgb_slab_decoder_forward.4} parent=5 // pred_region
        %s994 = ssub.s32 %s14, 2
        // Predicated region
        $region53: #{rgb_slab_decoder_forward.4} parent=51 // pred_check
          %p995 = pneg %p204
        $region54: #{rgb_slab_decoder_forward.4} parent=51 // pred_check_branch
          %997 = sbr.rel (%p995) target = $region56
        $region55: #{rgb_slab_decoder_forward.4} parent=51 // pred_region
          %s998 = smul.u32 4, %s25
          %p999 = scmp.lt.s32.totalorder %s26, 1
          %s1000 = scalar_select %p999, %s26, 1
          %p1001 = scmp.lt.s32.totalorder %s998, 7
          %s1002 = scalar_select %p1001, %s998, 7
          %s1003 = smul.addr %s1002, 2
          %s1004 = smul.addr %s1000, 16
          %s1005 = sadd.s32 %s1003, %s1004
          %s1006 = smul.addr %s1005, 8
          %s1007 = scalar_lea.vmem %s5, %s1006
        $region56: #{rgb_slab_decoder_forward.4} parent=51 // pred_fallthru
          _
      $region52: #{rgb_slab_decoder_forward.4} parent=5 // pred_fallthru
        _
    $region6: #{rgb_slab_decoder_forward.4} parent=1 // loop_footer
      %s18 = sadd.s32 1, %s14
    $region7: #{rgb_slab_decoder_forward.4} parent=1 // loop_footer_branch
      %13 = sbr.rel target = $region3
    $region8: #{rgb_slab_decoder_forward.4} parent=1 // loop_exit
      _
    %1008 = vsyncpa [#allocation3], 1
    %s1009 = scalar_lea.sflag [#allocation3], 1
    %1010 = vsyncpa %s1009, 1

// kernel: rgb_slab_decoder_forward.5
$region0: #{rgb_slab_decoder_forward.5}
  #allocation0 [shape = 'u32[]', space=smem, size = 0x4, offset = 0x4, fixed_abs, tag = 'smem constant byte address 0x4 - core index']
  #allocation1 [shape = 'u32[144,128]{1,0:T(1,128)}', space=vmem, size = 0x12000, scoped, tag = 'internal scratch']
  %s0 = inlined_call_operand.vmem [shape: f32[2,16,16,32], index: 0, kind: input, shape index: {}, may-alias: {0,1,2}]
  %s1 = inlined_call_operand.vmem [shape: f32[2,16,16,32], index: 1, kind: input, shape index: {}, may-alias: {0,1,2}]
  %s2 = inlined_call_operand.vmem [shape: f32[2,16,16,32], index: 2, kind: input, shape index: {}, may-alias: {0,1,2}]
  %s3 = inlined_call_operand.vmem [shape: f32[2,2,96,64], index: 3, kind: input, shape index: {}]
  %s4 = inlined_call_operand.hbm [shape: f32[16,2,16,64], index: 4, kind: input, shape index: {}]
  %s5 = inlined_call_operand.vmem [shape: f32[2,16,2,16,64], index: 5, kind: output, shape index: {}]
  %s6 = sld [smem:[#allocation0]]
  $region57: #{rgb_slab_decoder_forward.5} parent=0
    _
  %s8 = ssub.s32 1, %s6
  %s9 = scalar_select 0, %s8, %s6
  $region1: #{rgb_slab_decoder_forward.5} parent=0
    #allocation2 [shape = 'u8[131072]{0}', space=vmem, size = 0x20000, scoped, tag = 'input window, operand 4']
    #allocation3 [shape = 's32[2]{0}', space=sflag, size = 0x8, scoped, tag = 'scoped memory for rgb_slab_decoder_forward.5']
    %10 = vsyncpa [#allocation3], 0
    %s11 = scalar_lea.sflag [#allocation3], 1
    %12 = vsyncpa %s11, 0
    loop: start=0, step=1, limit=10
    $region2: #{rgb_slab_decoder_forward.5} parent=1 // loop_pre_header
      _
    $region3: #{rgb_slab_decoder_forward.5} parent=1 // loop_header
      %s14 = sphi 0, %s18
      %p15 = scmp.ge.s32.totalorder %s14, 10
      %s21 = sphi 0, %s33
      %s22 = sphi 0, %s29
      %s23 = sphi 0, %s21
      %s24 = sphi 0, %s22
      %s25 = sphi 0, %s23
      %s26 = sphi 0, %s24
      %s38 = sphi 0, %s40
      %s41 = sphi 0, %s38
      %s42 = sphi 0, %s41
      %s58 = sphi 0, %s42
      %s74 = sphi 0, %s76
      %s77 = sphi 0, %s74
      %s78 = sphi 0, %s77
      %s94 = sphi 0, %s78
      %s110 = sphi 0, %s112
      %s113 = sphi 0, %s110
      %s114 = sphi 0, %s113
      %s130 = sphi 0, %s114
      %s134 = sphi 0, %s134
      %s136 = sphi 0, %s134
      %s137 = sphi 0, %s136
      %s151 = sphi 0, %s137
      %s157 = sphi 0, %s159
      %s160 = sphi 0, %s157
      %s161 = sphi 0, %s160
      %s177 = sphi 0, %s161
      %s185 = sphi 0, %s187
      %s188 = sphi 0, %s185
      %s189 = sphi 0, %s188
      %s205 = sphi 0, %s189
    $region4: #{rgb_slab_decoder_forward.5} parent=1 // loop_header_branch
      %17 = sbr.rel (%p15) target = $region8
    $region5: #{rgb_slab_decoder_forward.5} parent=1 // loop_body
      %s19 = ssub.s32 %s14, 1
      %s20 = ssub.s32 %s14, 2
      %s27 = sadd.s32 1, %s22
      %p28 = scmp.ge.s32.totalorder %s27, 2
      %s29 = scalar_select %p28, 0, %s27
      %s30 = sadd.s32 1, %s21
      %s31 = scalar_select %p28, %s30, %s21
      %p32 = scmp.ge.s32.totalorder %s31, 4
      %s33 = scalar_select %p32, 0, %s31
      %s34 = ssub.s32 %s22, %s29
      %s35 = ssub.s32 %s21, %s33
      %s36 = sor.u32 %s34, %s35
      %p37 = scmp.eq.s32.totalorder %s36, 0
      %s39 = sadd.s32 %s38, 1
      %s40 = scalar_select %p37, %s38, %s39
      %p43 = pneg %p37
      %p44 = scmp.eq.s32.totalorder %s14, 7
      %p45 = por %p43, %p44
      %p46 = scmp.ne.s32.totalorder %s38, %s41
      %p47 = scmp.eq.s32.totalorder %s14, 0
      %p48 = por %p46, %p47
      %p49 = scmp.ne.s32.totalorder %s38, %s41
      %p50 = scmp.eq.s32.totalorder %s19, 7
      %p51 = por %p49, %p50
      %p52 = scmp.ne.s32.totalorder %s41, %s42
      %p53 = scmp.eq.s32.totalorder %s19, 0
      %p54 = por %p52, %p53
      %p55 = scmp.ne.s32.totalorder %s41, %s42
      %p56 = scmp.eq.s32.totalorder %s20, 7
      %p57 = por %p55, %p56
      %p59 = scmp.ne.s32.totalorder %s42, %s58
      %p60 = scmp.eq.s32.totalorder %s20, 0
      %p61 = por %p59, %p60
      %s62 = smul.u32 %s21, 4
      %s63 = ssub.s32 %s62, 1
      %p64 = scmp.gt.s32.totalorder %s63, 0
      %s65 = scalar_select %p64, %s63, 0
      %s66 = smul.u32 %s33, 4
      %s67 = ssub.s32 %s66, 1
      %p68 = scmp.gt.s32.totalorder %s67, 0
      %s69 = scalar_select %p68, %s67, 0
      %s70 = ssub.s32 %s22, %s29
      %s71 = ssub.s32 %s65, %s69
      %s72 = sor.u32 %s70, %s71
      %p73 = scmp.eq.s32.totalorder %s72, 0
      %s75 = sadd.s32 %s74, 1
      %s76 = scalar_select %p73, %s74, %s75
      %p79 = pneg %p73
      %p80 = scmp.eq.s32.totalorder %s14, 7
      %p81 = por %p79, %p80
      %p82 = scmp.ne.s32.totalorder %s74, %s77
      %p83 = scmp.eq.s32.totalorder %s14, 0
      %p84 = por %p82, %p83
      %p85 = scmp.ne.s32.totalorder %s74, %s77
      %p86 = scmp.eq.s32.totalorder %s19, 7
      %p87 = por %p85, %p86
      %p88 = scmp.ne.s32.totalorder %s77, %s78
      %p89 = scmp.eq.s32.totalorder %s19, 0
      %p90 = por %p88, %p89
      %p91 = scmp.ne.s32.totalorder %s77, %s78
      %p92 = scmp.eq.s32.totalorder %s20, 7
      %p93 = por %p91, %p92
      %p95 = scmp.ne.s32.totalorder %s78, %s94
      %p96 = scmp.eq.s32.totalorder %s20, 0
      %p97 = por %p95, %p96
      %s98 = sadd.s32 %s21, 1
      %s99 = smul.u32 %s98, 4
      %p100 = scmp.lt.s32.totalorder %s99, 15
      %s101 = scalar_select %p100, %s99, 15
      %s102 = sadd.s32 %s33, 1
      %s103 = smul.u32 %s102, 4
      %p104 = scmp.lt.s32.totalorder %s103, 15
      %s105 = scalar_select %p104, %s103, 15
      %s106 = ssub.s32 %s22, %s29
      %s107 = ssub.s32 %s101, %s105
      %s108 = sor.u32 %s106, %s107
      %p109 = scmp.eq.s32.totalorder %s108, 0
      %s111 = sadd.s32 %s110, 1
      %s112 = scalar_select %p109, %s110, %s111
      %p115 = pneg %p109
      %p116 = scmp.eq.s32.totalorder %s14, 7
      %p117 = por %p115, %p116
      %p118 = scmp.ne.s32.totalorder %s110, %s113
      %p119 = scmp.eq.s32.totalorder %s14, 0
      %p120 = por %p118, %p119
      %p121 = scmp.ne.s32.totalorder %s110, %s113
      %p122 = scmp.eq.s32.totalorder %s19, 7
      %p123 = por %p121, %p122
      %p124 = scmp.ne.s32.totalorder %s113, %s114
      %p125 = scmp.eq.s32.totalorder %s19, 0
      %p126 = por %p124, %p125
      %p127 = scmp.ne.s32.totalorder %s113, %s114
      %p128 = scmp.eq.s32.totalorder %s20, 7
      %p129 = por %p127, %p128
      %p131 = scmp.ne.s32.totalorder %s114, %s130
      %p132 = scmp.eq.s32.totalorder %s20, 0
      %p133 = por %p131, %p132
      %s135 = sadd.s32 %s134, 1
      %p138 = scmp.eq.s32.totalorder %s14, 7
      %p139 = scmp.ne.s32.totalorder %s134, %s136
      %p140 = scmp.eq.s32.totalorder %s14, 0
      %p141 = por %p139, %p140
      %p142 = scmp.ne.s32.totalorder %s134, %s136
      %p143 = scmp.eq.s32.totalorder %s19, 7
      %p144 = por %p142, %p143
      %p145 = scmp.ne.s32.totalorder %s136, %s137
      %p146 = scmp.eq.s32.totalorder %s19, 0
      %p147 = por %p145, %p146
      %p148 = scmp.ne.s32.totalorder %s136, %s137
      %p149 = scmp.eq.s32.totalorder %s20, 7
      %p150 = por %p148, %p149
      %p152 = scmp.ne.s32.totalorder %s137, %s151
      %p153 = scmp.eq.s32.totalorder %s20, 0
      %p154 = por %p152, %p153
      %s155 = ssub.s32 %s21, %s33
      %p156 = scmp.eq.s32.totalorder %s155, 0
      %s158 = sadd.s32 %s157, 1
      %s159 = scalar_select %p156, %s157, %s158
      %p162 = pneg %p156
      %p163 = scmp.eq.s32.totalorder %s14, 7
      %p164 = por %p162, %p163
      %p165 = scmp.ne.s32.totalorder %s157, %s160
      %p166 = scmp.eq.s32.totalorder %s14, 0
      %p167 = por %p165, %p166
      %p168 = scmp.ne.s32.totalorder %s157, %s160
      %p169 = scmp.eq.s32.totalorder %s19, 7
      %p170 = por %p168, %p169
      %p171 = scmp.ne.s32.totalorder %s160, %s161
      %p172 = scmp.eq.s32.totalorder %s19, 0
      %p173 = por %p171, %p172
      %p174 = scmp.ne.s32.totalorder %s160, %s161
      %p175 = scmp.eq.s32.totalorder %s20, 7
      %p176 = por %p174, %p175
      %p178 = scmp.ne.s32.totalorder %s161, %s177
      %p179 = scmp.eq.s32.totalorder %s20, 0
      %p180 = por %p178, %p179
      %s181 = ssub.s32 %s22, %s29
      %s182 = ssub.s32 %s21, %s33
      %s183 = sor.u32 %s181, %s182
      %p184 = scmp.eq.s32.totalorder %s183, 0
      %s186 = sadd.s32 %s185, 1
      %s187 = scalar_select %p184, %s185, %s186
      %p190 = pneg %p184
      %p191 = scmp.eq.s32.totalorder %s14, 7
      %p192 = por %p190, %p191
      %p193 = scmp.ne.s32.totalorder %s185, %s188
      %p194 = scmp.eq.s32.totalorder %s14, 0
      %p195 = por %p193, %p194
      %p196 = scmp.ne.s32.totalorder %s185, %s188
      %p197 = scmp.eq.s32.totalorder %s19, 7
      %p198 = por %p196, %p197
      %p199 = scmp.ne.s32.totalorder %s188, %s189
      %p200 = scmp.eq.s32.totalorder %s19, 0
      %p201 = por %p199, %p200
      %p202 = scmp.ne.s32.totalorder %s188, %s189
      %p203 = scmp.eq.s32.totalorder %s20, 7
      %p204 = por %p202, %p203
      %p206 = scmp.ne.s32.totalorder %s189, %s205
      %p207 = scmp.eq.s32.totalorder %s20, 0
      %p208 = por %p206, %p207
      %p209 = scmp.le.s32.totalorder 1, %s14
      %p210 = scmp.lt.s32.totalorder %s14, 9
      %p211 = pnand %p209, %p210
      %p212 = pneg %p211
      // Predicated region
      $region9: #{rgb_slab_decoder_forward.5} parent=5 // pred_check
        _
      $region10: #{rgb_slab_decoder_forward.5} parent=5 // pred_check_branch
        %214 = sbr.rel (%p211) target = $region12
      $region11: #{rgb_slab_decoder_forward.5} parent=5 // pred_region
        %s215 = ssub.s32 %s14, 1
        // Predicated region
        $region13: #{rgb_slab_decoder_forward.5} parent=11 // pred_check
          %p216 = pneg %p147
        $region14: #{rgb_slab_decoder_forward.5} parent=11 // pred_check_branch
          %218 = sbr.rel (%p216) target = $region16
        $region15: #{rgb_slab_decoder_forward.5} parent=11 // pred_region
          _
        $region16: #{rgb_slab_decoder_forward.5} parent=11 // pred_fallthru
          _
      $region12: #{rgb_slab_decoder_forward.5} parent=5 // pred_fallthru
        _
      %p219 = scmp.lt.s32.totalorder %s14, 8
      // Predicated region
      $region17: #{rgb_slab_decoder_forward.5} parent=5 // pred_check
        %p220 = pneg %p219
      $region18: #{rgb_slab_decoder_forward.5} parent=5 // pred_check_branch
        %222 = sbr.rel (%p220) target = $region20
      $region19: #{rgb_slab_decoder_forward.5} parent=5 // pred_region
        // Predicated region
        $region21: #{rgb_slab_decoder_forward.5} parent=19 // pred_check
          %p223 = pneg %p48
        $region22: #{rgb_slab_decoder_forward.5} parent=19 // pred_check_branch
          %225 = sbr.rel (%p223) target = $region24
        $region23: #{rgb_slab_decoder_forward.5} parent=19 // pred_region
          %s226 = smul.u32 4, %s21
          %p227 = scmp.lt.s32.totalorder %s22, 1
          %s228 = scalar_select %p227, %s22, 1
          %p229 = scmp.lt.s32.totalorder %s226, 15
          %s230 = scalar_select %p229, %s226, 15
          %s231 = smul.addr %s230, 2
          %s232 = smul.addr %s228, 32
          %s233 = sadd.s32 %s231, %s232
          %s234 = smul.addr %s233, 8
          %s235 = scalar_lea.vmem %s0, %s234
          %s236 = smul.u32 4, %s21
        $region24: #{rgb_slab_decoder_forward.5} parent=19 // pred_fallthru
          _
        // Predicated region
        $region25: #{rgb_slab_decoder_forward.5} parent=19 // pred_check
          %p237 = pneg %p84
        $region26: #{rgb_slab_decoder_forward.5} parent=19 // pred_check_branch
          %239 = sbr.rel (%p237) target = $region28
        $region27: #{rgb_slab_decoder_forward.5} parent=19 // pred_region
          %s240 = smul.u32 %s21, 4
          %s241 = ssub.s32 %s240, 1
          %p242 = scmp.gt.s32.totalorder %s241, 0
          %s243 = scalar_select %p242, %s241, 0
          %p244 = scmp.lt.s32.totalorder %s22, 1
          %s245 = scalar_select %p244, %s22, 1
          %p246 = scmp.lt.s32.totalorder %s243, 15
          %s247 = scalar_select %p246, %s243, 15
          %s248 = smul.addr %s247, 2
          %s249 = smul.addr %s245, 32
          %s250 = sadd.s32 %s248, %s249
          %s251 = smul.addr %s250, 8
          %s252 = scalar_lea.vmem %s1, %s251
          %s253 = smul.u32 %s21, 4
          %s254 = ssub.s32 %s253, 1
          %p255 = scmp.gt.s32.totalorder %s254, 0
          %s256 = scalar_select %p255, %s254, 0
        $region28: #{rgb_slab_decoder_forward.5} parent=19 // pred_fallthru
          _
        // Predicated region
        $region29: #{rgb_slab_decoder_forward.5} parent=19 // pred_check
          %p257 = pneg %p120
        $region30: #{rgb_slab_decoder_forward.5} parent=19 // pred_check_branch
          %259 = sbr.rel (%p257) target = $region32
        $region31: #{rgb_slab_decoder_forward.5} parent=19 // pred_region
          %s260 = sadd.s32 %s21, 1
          %s261 = smul.u32 %s260, 4
          %p262 = scmp.lt.s32.totalorder %s261, 15
          %s263 = scalar_select %p262, %s261, 15
          %p264 = scmp.lt.s32.totalorder %s22, 1
          %s265 = scalar_select %p264, %s22, 1
          %p266 = scmp.lt.s32.totalorder %s263, 15
          %s267 = scalar_select %p266, %s263, 15
          %s268 = smul.addr %s267, 2
          %s269 = smul.addr %s265, 32
          %s270 = sadd.s32 %s268, %s269
          %s271 = smul.addr %s270, 8
          %s272 = scalar_lea.vmem %s2, %s271
          %s273 = sadd.s32 %s21, 1
          %s274 = smul.u32 %s273, 4
          %p275 = scmp.lt.s32.totalorder %s274, 15
          %s276 = scalar_select %p275, %s274, 15
        $region32: #{rgb_slab_decoder_forward.5} parent=19 // pred_fallthru
          _
        // Predicated region
        $region33: #{rgb_slab_decoder_forward.5} parent=19 // pred_check
          %p277 = pneg %p167
        $region34: #{rgb_slab_decoder_forward.5} parent=19 // pred_check_branch
          %279 = sbr.rel (%p277) target = $region36
        $region35: #{rgb_slab_decoder_forward.5} parent=19 // pred_region
          %s280 = sand.u32 %s157, 1
          %s281 = scalar_lea.sflag [#allocation3], %s280
          %s282 = sand.u32 %s157, 1
          %s283 = smul.addr %s282, 128
          %s284 = scalar_lea.vmem [#allocation2], %s283
          %s285 = smul.u32 4, %s21
          %s287 = ssub.s32 2048, 2048
          %288 = vsyncadd %s281, %s287
          %s289 = smul.addr %s285, 4
          %s290 = smul.addr %s289, 128
          %s291 = scalar_lea.hbm %s4, %s290
          %s292 = sshll.u32 %s284, 4
          %s293 = int_to_ptr.vmem [resolvable:$true] %s292
          %298 = dma.hbm_to_vmem [thread:$0]  %s291, 2048, %s293, %s281, 128, 128, 8
        $region36: #{rgb_slab_decoder_forward.5} parent=19 // pred_fallthru
          _
      $region20: #{rgb_slab_decoder_forward.5} parent=5 // pred_fallthru
        _
      %p299 = scmp.le.s32.totalorder 1, %s14
      %p300 = scmp.lt.s32.totalorder %s14, 9
      %p301 = pnand %p299, %p300
      %p302 = pneg %p301
      // Predicated region
      $region37: #{rgb_slab_decoder_forward.5} parent=5 // pred_check
        _
      $region38: #{rgb_slab_decoder_forward.5} parent=5 // pred_check_branch
        %304 = sbr.rel (%p301) target = $region40
      $region39: #{rgb_slab_decoder_forward.5} parent=5 // pred_region
        %s305 = ssub.s32 %s14, 1
        %s306 = sand.u32 %s160, 1
        %s307 = scalar_lea.sflag [#allocation3], %s306
        %s308 = sand.u32 %s160, 1
        %s309 = smul.addr %s308, 128
        %s310 = scalar_lea.vmem [#allocation2], %s309
        // Predicated region
        $region41: #{rgb_slab_decoder_forward.5} parent=39 // pred_check
          %p311 = pneg %p173
        $region42: #{rgb_slab_decoder_forward.5} parent=39 // pred_check_branch
          %313 = sbr.rel (%p311) target = $region44
        $region43: #{rgb_slab_decoder_forward.5} parent=39 // pred_region
          %314 = dma.done %s307, 2048
        $region44: #{rgb_slab_decoder_forward.5} parent=39 // pred_fallthru
          _
        %s315 = smul.u32 4, %s23
        %p316 = scmp.lt.s32.totalorder %s24, 1
        %s317 = scalar_select %p316, %s24, 1
        %p318 = scmp.lt.s32.totalorder %s315, 15
        %s319 = scalar_select %p318, %s315, 15
        %s320 = smul.addr %s319, 2
        %s321 = smul.addr %s317, 32
        %s322 = sadd.s32 %s320, %s321
        %s323 = smul.addr %s322, 8
        %s324 = scalar_lea.vmem %s0, %s323
        %p325 = pneg %p54
        %p326 = pneg %p51
        %s327 = smul.u32 %s23, 4
        %s328 = ssub.s32 %s327, 1
        %p329 = scmp.gt.s32.totalorder %s328, 0
        %s330 = scalar_select %p329, %s328, 0
        %p331 = scmp.lt.s32.totalorder %s24, 1
        %s332 = scalar_select %p331, %s24, 1
        %p333 = scmp.lt.s32.totalorder %s330, 15
        %s334 = scalar_select %p333, %s330, 15
        %s335 = smul.addr %s334, 2
        %s336 = smul.addr %s332, 32
        %s337 = sadd.s32 %s335, %s336
        %s338 = smul.addr %s337, 8
        %s339 = scalar_lea.vmem %s1, %s338
        %p340 = pneg %p90
        %p341 = pneg %p87
        %s342 = sadd.s32 %s23, 1
        %s343 = smul.u32 %s342, 4
        %p344 = scmp.lt.s32.totalorder %s343, 15
        %s345 = scalar_select %p344, %s343, 15
        %p346 = scmp.lt.s32.totalorder %s24, 1
        %s347 = scalar_select %p346, %s24, 1
        %p348 = scmp.lt.s32.totalorder %s345, 15
        %s349 = scalar_select %p348, %s345, 15
        %s350 = smul.addr %s349, 2
        %s351 = smul.addr %s347, 32
        %s352 = sadd.s32 %s350, %s351
        %s353 = smul.addr %s352, 8
        %s354 = scalar_lea.vmem %s2, %s353
        %p355 = pneg %p126
        %p356 = pneg %p123
        %p357 = pneg %p147
        %p358 = pneg %p144
        %s359 = sand.u32 %s160, 1
        %s360 = scalar_lea.sflag [#allocation3], %s359
        %s361 = sand.u32 %s160, 1
        %s362 = smul.addr %s361, 128
        %s363 = scalar_lea.vmem [#allocation2], %s362
        %p364 = pneg %p173
        %p365 = pneg %p170
        %p366 = pneg %p201
        %p367 = pneg %p198
        %s368 = smul.u32 4, %s23
        %p369 = scmp.lt.s32.totalorder %s24, 1
        %s370 = scalar_select %p369, %s24, 1
        %p371 = scmp.lt.s32.totalorder %s368, 15
        %s372 = scalar_select %p371, %s368, 15
        %s373 = smul.addr %s372, 4
        %s374 = smul.addr %s370, 64
        %s375 = sadd.s32 %s373, %s374
        %s376 = smul.addr %s375, 8
        %s377 = scalar_lea.vmem %s5, %s376
        %s378 = smul.u32 4, %s23
        %p379 = scmp.lt.s32.totalorder %s24, 1
        %s380 = scalar_select %p379, %s24, 1
        %p381 = scmp.lt.s32.totalorder %s378, 15
        %s382 = scalar_select %p381, %s378, 15
        %s383 = smul.addr %s382, 2
        %s384 = smul.addr %s380, 32
        %s385 = sadd.s32 %s383, %s384
        %s386 = smul.addr %s385, 8
        %s387 = scalar_lea.vmem %s0, %s386
        %s388 = smul.u32 4, %s23
        %s389 = smul.u32 %s23, 4
        %s390 = ssub.s32 %s389, 1
        %p391 = scmp.gt.s32.totalorder %s390, 0
        %s392 = scalar_select %p391, %s390, 0
        %p393 = scmp.lt.s32.totalorder %s24, 1
        %s394 = scalar_select %p393, %s24, 1
        %p395 = scmp.lt.s32.totalorder %s392, 15
        %s396 = scalar_select %p395, %s392, 15
        %s397 = smul.addr %s396, 2
        %s398 = smul.addr %s394, 32
        %s399 = sadd.s32 %s397, %s398
        %s400 = smul.addr %s399, 8
        %s401 = scalar_lea.vmem %s1, %s400
        %s402 = smul.u32 %s23, 4
        %s403 = ssub.s32 %s402, 1
        %p404 = scmp.gt.s32.totalorder %s403, 0
        %s405 = scalar_select %p404, %s403, 0
        %s406 = sadd.s32 %s23, 1
        %s407 = smul.u32 %s406, 4
        %p408 = scmp.lt.s32.totalorder %s407, 15
        %s409 = scalar_select %p408, %s407, 15
        %p410 = scmp.lt.s32.totalorder %s24, 1
        %s411 = scalar_select %p410, %s24, 1
        %p412 = scmp.lt.s32.totalorder %s409, 15
        %s413 = scalar_select %p412, %s409, 15
        %s414 = smul.addr %s413, 2
        %s415 = smul.addr %s411, 32
        %s416 = sadd.s32 %s414, %s415
        %s417 = smul.addr %s416, 8
        %s418 = scalar_lea.vmem %s2, %s417
        %s419 = sadd.s32 %s23, 1
        %s420 = smul.u32 %s419, 4
        %p421 = scmp.lt.s32.totalorder %s420, 15
        %s422 = scalar_select %p421, %s420, 15
        %s423 = smul.u32 4, %s23
        %s424 = smul.u32 4, %s23
        %p425 = scmp.lt.s32.totalorder %s24, 1
        %s426 = scalar_select %p425, %s24, 1
        %p427 = scmp.lt.s32.totalorder %s424, 15
        %s428 = scalar_select %p427, %s424, 15
        %s429 = smul.addr %s428, 4
        %s430 = smul.addr %s426, 64
        %s431 = sadd.s32 %s429, %s430
        %s432 = smul.addr %s431, 8
        %s433 = scalar_lea.vmem %s5, %s432
        %s434 = smul.u32 4, %s23
        %v435 = vld [vmem:[%s401] sm:$0xff]
        %v436 = vld [vmem:[%s401 + $0x8] sm:$0xff]
        %p437 = scmp.gt.s32.totalorder %s23, 0
        %s438 = scalar_select %p437, 1, 0
        %s439 = scvt.s32.f32 %s438
        %v440 = vstv %s439
        %v441 = vmul.f32 %v435, %v440
        %v442 = vmul.f32 %v436, %v440
        %v443 = vld [vmem:[%s418] sm:$0xff]
        %v444 = vld [vmem:[%s418 + $0x8] sm:$0xff]
        %p445 = scmp.lt.s32.totalorder %s23, 3
        %s446 = scalar_select %p445, 1, 0
        %s447 = scvt.s32.f32 %s446
        %v448 = vstv %s447
        %v449 = vmul.f32 %v443, %v448
        %v450 = vmul.f32 %v444, %v448
        %v451 = vld [vmem:[%s387] sm:$0xff]
        %v452 = vld [vmem:[%s387 + $0x8] sm:$0xff]
        %v453 = vld [vmem:[%s387 + $0x10] sm:$0xff]
        %v454 = vld [vmem:[%s387 + $0x18] sm:$0xff]
        %v455 = vld [vmem:[%s387 + $0x20] sm:$0xff]
        %v456 = vld [vmem:[%s387 + $0x28] sm:$0xff]
        %v457 = vld [vmem:[%s387 + $0x30] sm:$0xff]
        %v458 = vld [vmem:[%s387 + $0x38] sm:$0xff]
        %vm471 = vcmask 1040384
        %v472 = vrot.slane %v441, 7
        %v473 = vrot.slane %v442, 7
        %v474 = vsel %vm471, %v472, %v473
        %v475 = vrot.slane %v451, 7
        %v476 = vrot.slane %v452, 7
        %v477 = vsel %vm471, %v475, %v476
        %v478 = vrot.slane %v453, 7
        %v479 = vrot.slane %v454, 7
        %v480 = vsel %vm471, %v478, %v479
        %v481 = vrot.slane %v455, 7
        %v482 = vrot.slane %v456, 7
        %v483 = vsel %vm471, %v481, %v482
        %v484 = vrot.slane %v457, 7
        %v485 = vrot.slane %v458, 7
        %v486 = vsel %vm471, %v484, %v485
        %v487 = vrot.slane %v449, 7
        %v488 = vrot.slane %v450, 7
        %v489 = vsel %vm471, %v487, %v488
        %v502 = vsel %vm471, 0.0, %v472
        %v503 = vsel %vm471, 0.0, %v475
        %v504 = vsel %vm471, 0.0, %v478
        %v505 = vsel %vm471, 0.0, %v481
        %v506 = vsel %vm471, 0.0, %v484
        %v507 = vsel %vm471, 0.0, %v487
        %vm508 = vcmask 1046528
        %v509 = vrot.slane %v441, 1
        %v510 = vrot.slane %v442, 1
        %v511 = vsel %vm508, %v509, %v510
        %v512 = vrot.slane %v451, 1
        %v513 = vrot.slane %v452, 1
        %v514 = vsel %vm508, %v512, %v513
        %v515 = vrot.slane %v453, 1
        %v516 = vrot.slane %v454, 1
        %v517 = vsel %vm508, %v515, %v516
        %v518 = vrot.slane %v455, 1
        %v519 = vrot.slane %v456, 1
        %v520 = vsel %vm508, %v518, %v519
        %v521 = vrot.slane %v457, 1
        %v522 = vrot.slane %v458, 1
        %v523 = vsel %vm508, %v521, %v522
        %v524 = vrot.slane %v449, 1
        %v525 = vrot.slane %v450, 1
        %v526 = vsel %vm508, %v524, %v525
        %v533 = vsel %vm508, %v510, 0.0
        %v534 = vsel %vm508, %v513, 0.0
        %v535 = vsel %vm508, %v516, 0.0
        %v536 = vsel %vm508, %v519, 0.0
        %v537 = vsel %vm508, %v522, 0.0
        %v538 = vsel %vm508, %v525, 0.0
        %539 = vrot.lane.b32.xlu0 %v441, 32
        %v540 = vpop.permute.xlu0 %539
        %541 = vrot.lane.b32.xlu0 %v442, 32
        %v542 = vpop.permute.xlu0 %541
        %543 = vrot.lane.b32.xlu0 %v451, 32
        %v544 = vpop.permute.xlu0 %543
        %545 = vrot.lane.b32.xlu0 %v452, 32
        %v546 = vpop.permute.xlu0 %545
        %547 = vrot.lane.b32.xlu0 %v453, 32
        %v548 = vpop.permute.xlu0 %547
        %549 = vrot.lane.b32.xlu0 %v454, 32
        %v550 = vpop.permute.xlu0 %549
        %551 = vrot.lane.b32.xlu0 %v455, 32
        %v552 = vpop.permute.xlu0 %551
        %553 = vrot.lane.b32.xlu0 %v456, 32
        %v554 = vpop.permute.xlu0 %553
        %555 = vrot.lane.b32.xlu0 %v457, 32
        %v556 = vpop.permute.xlu0 %555
        %557 = vrot.lane.b32.xlu0 %v458, 32
        %v558 = vpop.permute.xlu0 %557
        %559 = vrot.lane.b32.xlu0 %v449, 32
        %v560 = vpop.permute.xlu0 %559
        %561 = vrot.lane.b32.xlu0 %v450, 32
        %v562 = vpop.permute.xlu0 %561
        %581 = vrot.lane.b32.xlu0 %v511, 64
        %v582 = vpop.permute.xlu0 %581
        %583 = vrot.lane.b32.xlu0 %v533, 64
        %v584 = vpop.permute.xlu0 %583
        %585 = vrot.lane.b32.xlu0 %v514, 64
        %v586 = vpop.permute.xlu0 %585
        %587 = vrot.lane.b32.xlu0 %v534, 64
        %v588 = vpop.permute.xlu0 %587
        %589 = vrot.lane.b32.xlu0 %v517, 64
        %v590 = vpop.permute.xlu0 %589
        %591 = vrot.lane.b32.xlu0 %v535, 64
        %v592 = vpop.permute.xlu0 %591
        %593 = vrot.lane.b32.xlu0 %v520, 64
        %v594 = vpop.permute.xlu0 %593
        %595 = vrot.lane.b32.xlu0 %v536, 64
        %v596 = vpop.permute.xlu0 %595
        %597 = vrot.lane.b32.xlu0 %v523, 64
        %v598 = vpop.permute.xlu0 %597
        %599 = vrot.lane.b32.xlu0 %v537, 64
        %v600 = vpop.permute.xlu0 %599
        %601 = vrot.lane.b32.xlu0 %v526, 64
        %v602 = vpop.permute.xlu0 %601
        %603 = vrot.lane.b32.xlu0 %v538, 64
        %v604 = vpop.permute.xlu0 %603
        %vm617 = vcmask 261120
        %v618 = vsel %vm617, %v502, %v540
        %v619 = vsel %vm617, %v474, %v542
        %v620 = vsel %vm617, %v503, %v544
        %v621 = vsel %vm617, %v477, %v546
        %v622 = vsel %vm617, %v504, %v548
        %v623 = vsel %vm617, %v480, %v550
        %v624 = vsel %vm617, %v505, %v552
        %v625 = vsel %vm617, %v483, %v554
        %v626 = vsel %vm617, %v506, %v556
        %v627 = vsel %vm617, %v486, %v558
        %v628 = vsel %vm617, %v507, %v560
        %v629 = vsel %vm617, %v489, %v562
        %vm630 = vcmask 523264
        %v631 = vsel %vm630, %v618, %v582
        %v632 = vsel %vm630, %v619, %v584
        %v633 = vsel %vm630, %v620, %v586
        %v634 = vsel %vm630, %v621, %v588
        %v635 = vsel %vm630, %v622, %v590
        %v636 = vsel %vm630, %v623, %v592
        %v637 = vsel %vm630, %v624, %v594
        %v638 = vsel %vm630, %v625, %v596
        %v639 = vsel %vm630, %v626, %v598
        %v640 = vsel %vm630, %v627, %v600
        %v641 = vsel %vm630, %v628, %v602
        %v642 = vsel %vm630, %v629, %v604
        %v643 = vld [vmem:[%s3] sm:$0xff]
        %v644 = vld [vmem:[%s3 + $0x8] sm:$0xff]
        %v645 = vld [vmem:[%s3 + $0x10] sm:$0xff]
        %v646 = vld [vmem:[%s3 + $0x18] sm:$0xff]
        %v647 = vld [vmem:[%s3 + $0x20] sm:$0xff]
        %v648 = vld [vmem:[%s3 + $0x28] sm:$0xff]
        %v649 = vld [vmem:[%s3 + $0x30] sm:$0xff]
        %v650 = vld [vmem:[%s3 + $0x38] sm:$0xff]
        %v651 = vld [vmem:[%s3 + $0x40] sm:$0xff]
        %v652 = vld [vmem:[%s3 + $0x48] sm:$0xff]
        %v653 = vld [vmem:[%s3 + $0x50] sm:$0xff]
        %v654 = vld [vmem:[%s3 + $0x58] sm:$0xff]
        %s655 = scalar_lea.vmem %s3, 96
        %v656 = vld [vmem:[%s655] sm:$0xff]
        %v657 = vld [vmem:[%s655 + $0x8] sm:$0xff]
        %v658 = vld [vmem:[%s655 + $0x10] sm:$0xff]
        %v659 = vld [vmem:[%s655 + $0x18] sm:$0xff]
        %v660 = vld [vmem:[%s655 + $0x20] sm:$0xff]
        %v661 = vld [vmem:[%s655 + $0x28] sm:$0xff]
        %v662 = vld [vmem:[%s655 + $0x30] sm:$0xff]
        %v663 = vld [vmem:[%s655 + $0x38] sm:$0xff]
        %v664 = vld [vmem:[%s655 + $0x40] sm:$0xff]
        %v665 = vld [vmem:[%s655 + $0x48] sm:$0xff]
        %v666 = vld [vmem:[%s655 + $0x50] sm:$0xff]
        %v667 = vld [vmem:[%s655 + $0x58] sm:$0xff]
        %vm668 = vcmask 785408
        %v670 = vsel %vm668, %v631, 0
        %v673 = vsel %vm668, %v632, 0
        %v676 = vsel %vm668, %v633, 0
        %v679 = vsel %vm668, %v634, 0
        %v682 = vsel %vm668, %v635, 0
        %v685 = vsel %vm668, %v636, 0
        %v688 = vsel %vm668, %v637, 0
        %v691 = vsel %vm668, %v638, 0
        %693 = vmatprep.subr.mxu0 0.0
        %694 = vmatpush1.msra.mxu0 %v656
        %695 = vmatprep.subr.mxu0 0.0
        %696 = vmatpush1.msra.mxu0 %v657
        %697 = vmatprep.subr.mxu0 0.0
        %698 = vmatpush1.msra.mxu0 %v658
        %699 = vmatprep.subr.mxu0 0.0
        %700 = vmatpush1.msra.mxu0 %v659
        %701 = vmatprep.subr.mxu0 0.0
        %702 = vmatpush1.msra.mxu0 %v660
        %703 = vmatprep.subr.mxu0 0.0
        %704 = vmatpush1.msra.mxu0 %v661
        %705 = vmatprep.subr.mxu0 0.0
        %706 = vmatpush1.msra.mxu0 %v662
        %707 = vmatprep.subr.mxu0 0.0
        %708 = vmatpush1.msra.mxu0 %v663
        %709 = vmatprep.subr.mxu0 0.0
        %710 = vmatpush1.msra.mxu0 %v664
        %711 = vmatprep.subr.mxu0 0.0
        %712 = vmatpush1.msra.mxu0 %v665
        %713 = vmatprep.subr.mxu0 0.0
        %714 = vmatpush1.msra.mxu0 %v666
        %715 = vmatprep.subr.mxu0 0.0
        %716 = vmatpush1.msra.mxu0 %v667
        %717 = vmatprep.subr.mxu0 0.0
        %718 = vmatpush1.msra.mxu0 0.0
        %719 = vmatprep.subr.mxu0 0.0
        %720 = vmatpush1.msra.mxu0 0.0
        %721 = vmatprep.subr.mxu0 0.0
        %722 = vmatpush1.msra.mxu0 0.0
        %723 = vmatprep.subr.mxu0 0.0
        %724 = vmatpush1.msra.mxu0 0.0
        %725 = vmatprep.subr.mxu0 0.0
        %726 = vmatpush1.msra.mxu0 0.0
        %727 = vmatprep.subr.mxu0 0.0
        %728 = vmatpush1.msra.mxu0 0.0
        %729 = vmatprep.subr.mxu0 0.0
        %730 = vmatpush1.msra.mxu0 0.0
        %731 = vmatprep.subr.mxu0 0.0
        %732 = vmatpush1.msra.mxu0 0.0
        %733 = vmatprep.subr.mxu0 0.0
        %734 = vmatpush1.msra.mxu0 0.0
        %735 = vmatprep.subr.mxu0 0.0
        %736 = vmatpush1.msra.mxu0 0.0
        %737 = vmatprep.subr.mxu0 0.0
        %738 = vmatpush1.msra.mxu0 0.0
        %739 = vmatprep.subr.mxu0 0.0
        %740 = vmatpush1.msra.mxu0 0.0
        %741 = vmatprep.subr.mxu0 0.0
        %742 = vmatpush1.msra.mxu0 0.0
        %743 = vmatprep.subr.mxu0 0.0
        %744 = vmatpush1.msra.mxu0 0.0
        %745 = vmatprep.subr.mxu0 0.0
        %746 = vmatpush1.msra.mxu0 0.0
        %747 = vmatprep.subr.mxu0 0.0
        %748 = vmatpush1.msra.mxu0 0.0
        %749 = vmatprep.subr.mxu0 0.0
        %750 = vmatpush1.msra.mxu0 0.0
        %751 = vmatprep.subr.mxu0 0.0
        %752 = vmatpush1.msra.mxu0 0.0
        %753 = vmatprep.subr.mxu0 0.0
        %754 = vmatpush1.msra.mxu0 0.0
        %755 = vmatprep.subr.mxu0 0.0
        %756 = vmatpush1.msra.mxu0 0.0
        %757 = vmatprep.mubr.f32.mxu0 0.0
        %758 = vmatmul.mubr.f32.gmra.mrb[0].mxu0 %v670
        %v759 = vpop.f32.mrb[0].mxu0
        %v760 = vadd.f32 0.0, %v759
        %v761 = vpop.f32.mrb[0].mxu0
        %762 = vmatprep.mubr.f32.mxu0 0.0
        %763 = vmatmul.mubr.f32.gmra.mrb[0].mxu0 %v673
        %v764 = vpop.f32.mrb[0].mxu0
        %v765 = vadd.f32 0.0, %v764
        %v766 = vpop.f32.mrb[0].mxu0
        %767 = vmatprep.mubr.f32.mxu0 0.0
        %768 = vmatmul.mubr.f32.gmra.mrb[0].mxu0 %v676
        %v769 = vpop.f32.mrb[0].mxu0
        %v770 = vadd.f32 0.0, %v769
        %v771 = vpop.f32.mrb[0].mxu0
        %772 = vmatprep.mubr.f32.mxu0 0.0
        %773 = vmatmul.mubr.f32.gmra.mrb[0].mxu0 %v679
        %v774 = vpop.f32.mrb[0].mxu0
        %v775 = vadd.f32 0.0, %v774
        %v776 = vpop.f32.mrb[0].mxu0
        %777 = vmatprep.mubr.f32.mxu0 0.0
        %778 = vmatmul.mubr.f32.gmra.mrb[0].mxu0 %v682
        %v779 = vpop.f32.mrb[0].mxu0
        %v780 = vadd.f32 0.0, %v779
        %v781 = vpop.f32.mrb[0].mxu0
        %782 = vmatprep.mubr.f32.mxu0 0.0
        %783 = vmatmul.mubr.f32.gmra.mrb[0].mxu0 %v685
        %v784 = vpop.f32.mrb[0].mxu0
        %v785 = vadd.f32 0.0, %v784
        %v786 = vpop.f32.mrb[0].mxu0
        %787 = vmatprep.mubr.f32.mxu0 0.0
        %788 = vmatmul.mubr.f32.gmra.mrb[0].mxu0 %v688
        %v789 = vpop.f32.mrb[0].mxu0
        %v790 = vadd.f32 0.0, %v789
        %v791 = vpop.f32.mrb[0].mxu0
        %792 = vmatprep.mubr.f32.mxu0 0.0
        %793 = vmatmul.mubr.f32.gmra.mrb[0].mxu0 %v691
        %v794 = vpop.f32.mrb[0].mxu0
        %v795 = vadd.f32 0.0, %v794
        %v796 = vpop.f32.mrb[0].mxu0
        %797 = vdwg.mxu0
        %v799 = vsel %vm668, %v639, 0
        %v802 = vsel %vm668, %v640, 0
        %804 = vmatprep.subr.mxu0 0.0
        %805 = vmatpush1.msra.mxu0 %v643
        %806 = vmatprep.subr.mxu0 0.0
        %807 = vmatpush1.msra.mxu0 %v644
        %808 = vmatprep.subr.mxu0 0.0
        %809 = vmatpush1.msra.mxu0 %v645
        %810 = vmatprep.subr.mxu0 0.0
        %811 = vmatpush1.msra.mxu0 %v646
        %812 = vmatprep.subr.mxu0 0.0
        %813 = vmatpush1.msra.mxu0 %v647
        %814 = vmatprep.subr.mxu0 0.0
        %815 = vmatpush1.msra.mxu0 %v648
        %816 = vmatprep.subr.mxu0 0.0
        %817 = vmatpush1.msra.mxu0 %v649
        %818 = vmatprep.subr.mxu0 0.0
        %819 = vmatpush1.msra.mxu0 %v650
        %820 = vmatprep.subr.mxu0 0.0
        %821 = vmatpush1.msra.mxu0 %v651
        %822 = vmatprep.subr.mxu0 0.0
        %823 = vmatpush1.msra.mxu0 %v652
        %824 = vmatprep.subr.mxu0 0.0
        %825 = vmatpush1.msra.mxu0 %v653
        %826 = vmatprep.subr.mxu0 0.0
        %827 = vmatpush1.msra.mxu0 %v654
        %828 = vmatprep.subr.mxu0 0.0
        %829 = vmatpush1.msra.mxu0 0.0
        %830 = vmatprep.subr.mxu0 0.0
        %831 = vmatpush1.msra.mxu0 0.0
        %832 = vmatprep.subr.mxu0 0.0
        %833 = vmatpush1.msra.mxu0 0.0
        %834 = vmatprep.subr.mxu0 0.0
        %835 = vmatpush1.msra.mxu0 0.0
        %836 = vmatprep.subr.mxu0 0.0
        %837 = vmatpush1.msra.mxu0 0.0
        %838 = vmatprep.subr.mxu0 0.0
        %839 = vmatpush1.msra.mxu0 0.0
        %840 = vmatprep.subr.mxu0 0.0
        %841 = vmatpush1.msra.mxu0 0.0
        %842 = vmatprep.subr.mxu0 0.0
        %843 = vmatpush1.msra.mxu0 0.0
        %844 = vmatprep.subr.mxu0 0.0
        %845 = vmatpush1.msra.mxu0 0.0
        %846 = vmatprep.subr.mxu0 0.0
        %847 = vmatpush1.msra.mxu0 0.0
        %848 = vmatprep.subr.mxu0 0.0
        %849 = vmatpush1.msra.mxu0 0.0
        %850 = vmatprep.subr.mxu0 0.0
        %851 = vmatpush1.msra.mxu0 0.0
        %852 = vmatprep.subr.mxu0 0.0
        %853 = vmatpush1.msra.mxu0 0.0
        %854 = vmatprep.subr.mxu0 0.0
        %855 = vmatpush1.msra.mxu0 0.0
        %856 = vmatprep.subr.mxu0 0.0
        %857 = vmatpush1.msra.mxu0 0.0
        %858 = vmatprep.subr.mxu0 0.0
        %859 = vmatpush1.msra.mxu0 0.0
        %860 = vmatprep.subr.mxu0 0.0
        %861 = vmatpush1.msra.mxu0 0.0
        %862 = vmatprep.subr.mxu0 0.0
        %863 = vmatpush1.msra.mxu0 0.0
        %864 = vmatprep.subr.mxu0 0.0
        %865 = vmatpush1.msra.mxu0 0.0
        %866 = vmatprep.subr.mxu0 0.0
        %867 = vmatpush1.msra.mxu0 0.0
        %868 = vmatprep.mubr.f32.mxu0 0.0
        %869 = vmatmul.mubr.f32.gmra.mrb[0].mxu0 %v676
        %v870 = vpop.f32.mrb[0].mxu0
        %v871 = vadd.f32 %v760, %v870
        %v872 = vpop.f32.mrb[0].mxu0
        %873 = vmatprep.mubr.f32.mxu0 0.0
        %874 = vmatmul.mubr.f32.gmra.mrb[0].mxu0 %v679
        %v875 = vpop.f32.mrb[0].mxu0
        %v876 = vadd.f32 %v765, %v875
        %v877 = vpop.f32.mrb[0].mxu0
        %878 = vmatprep.mubr.f32.mxu0 0.0
        %879 = vmatmul.mubr.f32.gmra.mrb[0].mxu0 %v682
        %v880 = vpop.f32.mrb[0].mxu0
        %v881 = vadd.f32 %v770, %v880
        %v882 = vpop.f32.mrb[0].mxu0
        %883 = vmatprep.mubr.f32.mxu0 0.0
        %884 = vmatmul.mubr.f32.gmra.mrb[0].mxu0 %v685
        %v885 = vpop.f32.mrb[0].mxu0
        %v886 = vadd.f32 %v775, %v885
        %v887 = vpop.f32.mrb[0].mxu0
        %888 = vmatprep.mubr.f32.mxu0 0.0
        %889 = vmatmul.mubr.f32.gmra.mrb[0].mxu0 %v688
        %v890 = vpop.f32.mrb[0].mxu0
        %v891 = vadd.f32 %v780, %v890
        %v892 = vpop.f32.mrb[0].mxu0
        %893 = vmatprep.mubr.f32.mxu0 0.0
        %894 = vmatmul.mubr.f32.gmra.mrb[0].mxu0 %v691
        %v895 = vpop.f32.mrb[0].mxu0
        %v896 = vadd.f32 %v785, %v895
        %v897 = vpop.f32.mrb[0].mxu0
        %898 = vmatprep.mubr.f32.mxu0 0.0
        %899 = vmatmul.mubr.f32.gmra.mrb[0].mxu0 %v799
        %v900 = vpop.f32.mrb[0].mxu0
        %v901 = vadd.f32 %v790, %v900
        %v902 = vpop.f32.mrb[0].mxu0
        %903 = vmatprep.mubr.f32.mxu0 0.0
        %904 = vmatmul.mubr.f32.gmra.mrb[0].mxu0 %v802
        %v905 = vpop.f32.mrb[0].mxu0
        %v906 = vadd.f32 %v795, %v905
        %v907 = vpop.f32.mrb[0].mxu0
        %908 = vdwg.mxu0
        %v909 = vld [vmem:[%s310] sm:$0xff]
        %v910 = vld [vmem:[%s310 + $0x8] sm:$0xff]
        %v911 = vld [vmem:[%s310 + $0x20] sm:$0xff]
        %v912 = vld [vmem:[%s310 + $0x28] sm:$0xff]
        %v913 = vld [vmem:[%s310 + $0x40] sm:$0xff]
        %v914 = vld [vmem:[%s310 + $0x48] sm:$0xff]
        %v915 = vld [vmem:[%s310 + $0x60] sm:$0xff]
        %v916 = vld [vmem:[%s310 + $0x68] sm:$0xff]
        %v917 = vadd.f32 %v871, %v909
        %v918 = vadd.f32 %v876, %v910
        %v919 = vadd.f32 %v881, %v911
        %v920 = vadd.f32 %v886, %v912
        %v921 = vadd.f32 %v891, %v913
        %v922 = vadd.f32 %v896, %v914
        %v923 = vadd.f32 %v901, %v915
        %v924 = vadd.f32 %v906, %v916
        %vm925 = vcmp.ge.f32.partialorder %v917, 0.0
        %vm926 = vcmp.ge.f32.partialorder %v918, 0.0
        %vm927 = vcmp.ge.f32.partialorder %v919, 0.0
        %vm928 = vcmp.ge.f32.partialorder %v920, 0.0
        %vm929 = vcmp.ge.f32.partialorder %v921, 0.0
        %vm930 = vcmp.ge.f32.partialorder %v922, 0.0
        %vm931 = vcmp.ge.f32.partialorder %v923, 0.0
        %vm932 = vcmp.ge.f32.partialorder %v924, 0.0
        %v933 = vmul.f32 %v917, 0.2
        %v934 = vmul.f32 %v918, 0.2
        %v935 = vmul.f32 %v919, 0.2
        %v936 = vmul.f32 %v920, 0.2
        %v937 = vmul.f32 %v921, 0.2
        %v938 = vmul.f32 %v922, 0.2
        %v939 = vmul.f32 %v923, 0.2
        %v940 = vmul.f32 %v924, 0.2
        %v941 = vsel %vm925, %v917, %v933
        %v942 = vsel %vm926, %v918, %v934
        %v943 = vsel %vm927, %v919, %v935
        %v944 = vsel %vm928, %v920, %v936
        %v945 = vsel %vm929, %v921, %v937
        %v946 = vsel %vm930, %v922, %v938
        %v947 = vsel %vm931, %v923, %v939
        %v948 = vsel %vm932, %v924, %v940
        %949 = vst.msk [vmem:[%s433] sm:$0xff] %vm630, %v941
        %950 = vst.msk [vmem:[%s433 + $0x8] sm:$0xff] %vm630, %v942
        %951 = vst.msk [vmem:[%s433 + $0x20] sm:$0xff] %vm630, %v943
        %952 = vst.msk [vmem:[%s433 + $0x28] sm:$0xff] %vm630, %v944
        %953 = vst.msk [vmem:[%s433 + $0x40] sm:$0xff] %vm630, %v945
        %954 = vst.msk [vmem:[%s433 + $0x48] sm:$0xff] %vm630, %v946
        %955 = vst.msk [vmem:[%s433 + $0x60] sm:$0xff] %vm630, %v947
        %956 = vst.msk [vmem:[%s433 + $0x68] sm:$0xff] %vm630, %v948
        %s957 = scalar_lea.vmem %s3, 192
        %v958 = vld [vmem:[%s957] sm:$0xff]
        %v959 = vld [vmem:[%s957 + $0x8] sm:$0xff]
        %v960 = vld [vmem:[%s957 + $0x10] sm:$0xff]
        %v961 = vld [vmem:[%s957 + $0x18] sm:$0xff]
        %v962 = vld [vmem:[%s957 + $0x20] sm:$0xff]
        %v963 = vld [vmem:[%s957 + $0x28] sm:$0xff]
        %v964 = vld [vmem:[%s957 + $0x30] sm:$0xff]
        %v965 = vld [vmem:[%s957 + $0x38] sm:$0xff]
        %v966 = vld [vmem:[%s957 + $0x40] sm:$0xff]
        %v967 = vld [vmem:[%s957 + $0x48] sm:$0xff]
        %v968 = vld [vmem:[%s957 + $0x50] sm:$0xff]
        %v969 = vld [vmem:[%s957 + $0x58] sm:$0xff]
        %s970 = scalar_lea.vmem %s3, 288
        %v971 = vld [vmem:[%s970] sm:$0xff]
        %v972 = vld [vmem:[%s970 + $0x8] sm:$0xff]
        %v973 = vld [vmem:[%s970 + $0x10] sm:$0xff]
        %v974 = vld [vmem:[%s970 + $0x18] sm:$0xff]
        %v975 = vld [vmem:[%s970 + $0x20] sm:$0xff]
        %v976 = vld [vmem:[%s970 + $0x28] sm:$0xff]
        %v977 = vld [vmem:[%s970 + $0x30] sm:$0xff]
        %v978 = vld [vmem:[%s970 + $0x38] sm:$0xff]
        %v979 = vld [vmem:[%s970 + $0x40] sm:$0xff]
        %v980 = vld [vmem:[%s970 + $0x48] sm:$0xff]
        %v981 = vld [vmem:[%s970 + $0x50] sm:$0xff]
        %v982 = vld [vmem:[%s970 + $0x58] sm:$0xff]
        %v984 = vsel %vm668, %v641, 0
        %v987 = vsel %vm668, %v642, 0
        %989 = vmatprep.subr.mxu0 0.0
        %990 = vmatpush1.msra.mxu0 %v971
        %991 = vmatprep.subr.mxu0 0.0
        %992 = vmatpush1.msra.mxu0 %v972
        %993 = vmatprep.subr.mxu0 0.0
        %994 = vmatpush1.msra.mxu0 %v973
        %995 = vmatprep.subr.mxu0 0.0
        %996 = vmatpush1.msra.mxu0 %v974
        %997 = vmatprep.subr.mxu0 0.0
        %998 = vmatpush1.msra.mxu0 %v975
        %999 = vmatprep.subr.mxu0 0.0
        %1000 = vmatpush1.msra.mxu0 %v976
        %1001 = vmatprep.subr.mxu0 0.0
        %1002 = vmatpush1.msra.mxu0 %v977
        %1003 = vmatprep.subr.mxu0 0.0
        %1004 = vmatpush1.msra.mxu0 %v978
        %1005 = vmatprep.subr.mxu0 0.0
        %1006 = vmatpush1.msra.mxu0 %v979
        %1007 = vmatprep.subr.mxu0 0.0
        %1008 = vmatpush1.msra.mxu0 %v980
        %1009 = vmatprep.subr.mxu0 0.0
        %1010 = vmatpush1.msra.mxu0 %v981
        %1011 = vmatprep.subr.mxu0 0.0
        %1012 = vmatpush1.msra.mxu0 %v982
        %1013 = vmatprep.subr.mxu0 0.0
        %1014 = vmatpush1.msra.mxu0 0.0
        %1015 = vmatprep.subr.mxu0 0.0
        %1016 = vmatpush1.msra.mxu0 0.0
        %1017 = vmatprep.subr.mxu0 0.0
        %1018 = vmatpush1.msra.mxu0 0.0
        %1019 = vmatprep.subr.mxu0 0.0
        %1020 = vmatpush1.msra.mxu0 0.0
        %1021 = vmatprep.subr.mxu0 0.0
        %1022 = vmatpush1.msra.mxu0 0.0
        %1023 = vmatprep.subr.mxu0 0.0
        %1024 = vmatpush1.msra.mxu0 0.0
        %1025 = vmatprep.subr.mxu0 0.0
        %1026 = vmatpush1.msra.mxu0 0.0
        %1027 = vmatprep.subr.mxu0 0.0
        %1028 = vmatpush1.msra.mxu0 0.0
        %1029 = vmatprep.subr.mxu0 0.0
        %1030 = vmatpush1.msra.mxu0 0.0
        %1031 = vmatprep.subr.mxu0 0.0
        %1032 = vmatpush1.msra.mxu0 0.0
        %1033 = vmatprep.subr.mxu0 0.0
        %1034 = vmatpush1.msra.mxu0 0.0
        %1035 = vmatprep.subr.mxu0 0.0
        %1036 = vmatpush1.msra.mxu0 0.0
        %1037 = vmatprep.subr.mxu0 0.0
        %1038 = vmatpush1.msra.mxu0 0.0
        %1039 = vmatprep.subr.mxu0 0.0
        %1040 = vmatpush1.msra.mxu0 0.0
        %1041 = vmatprep.subr.mxu0 0.0
        %1042 = vmatpush1.msra.mxu0 0.0
        %1043 = vmatprep.subr.mxu0 0.0
        %1044 = vmatpush1.msra.mxu0 0.0
        %1045 = vmatprep.subr.mxu0 0.0
        %1046 = vmatpush1.msra.mxu0 0.0
        %1047 = vmatprep.subr.mxu0 0.0
        %1048 = vmatpush1.msra.mxu0 0.0
        %1049 = vmatprep.subr.mxu0 0.0
        %1050 = vmatpush1.msra.mxu0 0.0
        %1051 = vmatprep.subr.mxu0 0.0
        %1052 = vmatpush1.msra.mxu0 0.0
        %1053 = vmatprep.mubr.f32.mxu0 0.0
        %1054 = vmatmul.mubr.f32.gmra.mrb[0].mxu0 %v682
        %v1055 = vpop.f32.mrb[0].mxu0
        %v1056 = vadd.f32 0.0, %v1055
        %v1057 = vpop.f32.mrb[0].mxu0
        %1058 = vmatprep.mubr.f32.mxu0 0.0
        %1059 = vmatmul.mubr.f32.gmra.mrb[0].mxu0 %v685
        %v1060 = vpop.f32.mrb[0].mxu0
        %v1061 = vadd.f32 0.0, %v1060
        %v1062 = vpop.f32.mrb[0].mxu0
        %1063 = vmatprep.mubr.f32.mxu0 0.0
        %1064 = vmatmul.mubr.f32.gmra.mrb[0].mxu0 %v688
        %v1065 = vpop.f32.mrb[0].mxu0
        %v1066 = vadd.f32 0.0, %v1065
        %v1067 = vpop.f32.mrb[0].mxu0
        %1068 = vmatprep.mubr.f32.mxu0 0.0
        %1069 = vmatmul.mubr.f32.gmra.mrb[0].mxu0 %v691
        %v1070 = vpop.f32.mrb[0].mxu0
        %v1071 = vadd.f32 0.0, %v1070
        %v1072 = vpop.f32.mrb[0].mxu0
        %1073 = vmatprep.mubr.f32.mxu0 0.0
        %1074 = vmatmul.mubr.f32.gmra.mrb[0].mxu0 %v799
        %v1075 = vpop.f32.mrb[0].mxu0
        %v1076 = vadd.f32 0.0, %v1075
        %v1077 = vpop.f32.mrb[0].mxu0
        %1078 = vmatprep.mubr.f32.mxu0 0.0
        %1079 = vmatmul.mubr.f32.gmra.mrb[0].mxu0 %v802
        %v1080 = vpop.f32.mrb[0].mxu0
        %v1081 = vadd.f32 0.0, %v1080
        %v1082 = vpop.f32.mrb[0].mxu0
        %1083 = vmatprep.mubr.f32.mxu0 0.0
        %1084 = vmatmul.mubr.f32.gmra.mrb[0].mxu0 %v984
        %v1085 = vpop.f32.mrb[0].mxu0
        %v1086 = vadd.f32 0.0, %v1085
        %v1087 = vpop.f32.mrb[0].mxu0
        %1088 = vmatprep.mubr.f32.mxu0 0.0
        %1089 = vmatmul.mubr.f32.gmra.mrb[0].mxu0 %v987
        %v1090 = vpop.f32.mrb[0].mxu0
        %v1091 = vadd.f32 0.0, %v1090
        %v1092 = vpop.f32.mrb[0].mxu0
        %1093 = vdwg.mxu0
        %1094 = vmatprep.subr.mxu0 0.0
        %1095 = vmatpush1.msra.mxu0 %v958
        %1096 = vmatprep.subr.mxu0 0.0
        %1097 = vmatpush1.msra.mxu0 %v959
        %1098 = vmatprep.subr.mxu0 0.0
        %1099 = vmatpush1.msra.mxu0 %v960
        %1100 = vmatprep.subr.mxu0 0.0
        %1101 = vmatpush1.msra.mxu0 %v961
        %1102 = vmatprep.subr.mxu0 0.0
        %1103 = vmatpush1.msra.mxu0 %v962
        %1104 = vmatprep.subr.mxu0 0.0
        %1105 = vmatpush1.msra.mxu0 %v963
        %1106 = vmatprep.subr.mxu0 0.0
        %1107 = vmatpush1.msra.mxu0 %v964
        %1108 = vmatprep.subr.mxu0 0.0
        %1109 = vmatpush1.msra.mxu0 %v965
        %1110 = vmatprep.subr.mxu0 0.0
        %1111 = vmatpush1.msra.mxu0 %v966
        %1112 = vmatprep.subr.mxu0 0.0
        %1113 = vmatpush1.msra.mxu0 %v967
        %1114 = vmatprep.subr.mxu0 0.0
        %1115 = vmatpush1.msra.mxu0 %v968
        %1116 = vmatprep.subr.mxu0 0.0
        %1117 = vmatpush1.msra.mxu0 %v969
        %1118 = vmatprep.subr.mxu0 0.0
        %1119 = vmatpush1.msra.mxu0 0.0
        %1120 = vmatprep.subr.mxu0 0.0
        %1121 = vmatpush1.msra.mxu0 0.0
        %1122 = vmatprep.subr.mxu0 0.0
        %1123 = vmatpush1.msra.mxu0 0.0
        %1124 = vmatprep.subr.mxu0 0.0
        %1125 = vmatpush1.msra.mxu0 0.0
        %1126 = vmatprep.subr.mxu0 0.0
        %1127 = vmatpush1.msra.mxu0 0.0
        %1128 = vmatprep.subr.mxu0 0.0
        %1129 = vmatpush1.msra.mxu0 0.0
        %1130 = vmatprep.subr.mxu0 0.0
        %1131 = vmatpush1.msra.mxu0 0.0
        %1132 = vmatprep.subr.mxu0 0.0
        %1133 = vmatpush1.msra.mxu0 0.0
        %1134 = vmatprep.subr.mxu0 0.0
        %1135 = vmatpush1.msra.mxu0 0.0
        %1136 = vmatprep.subr.mxu0 0.0
        %1137 = vmatpush1.msra.mxu0 0.0
        %1138 = vmatprep.subr.mxu0 0.0
        %1139 = vmatpush1.msra.mxu0 0.0
        %1140 = vmatprep.subr.mxu0 0.0
        %1141 = vmatpush1.msra.mxu0 0.0
        %1142 = vmatprep.subr.mxu0 0.0
        %1143 = vmatpush1.msra.mxu0 0.0
        %1144 = vmatprep.subr.mxu0 0.0
        %1145 = vmatpush1.msra.mxu0 0.0
        %1146 = vmatprep.subr.mxu0 0.0
        %1147 = vmatpush1.msra.mxu0 0.0
        %1148 = vmatprep.subr.mxu0 0.0
        %1149 = vmatpush1.msra.mxu0 0.0
        %1150 = vmatprep.subr.mxu0 0.0
        %1151 = vmatpush1.msra.mxu0 0.0
        %1152 = vmatprep.subr.mxu0 0.0
        %1153 = vmatpush1.msra.mxu0 0.0
        %1154 = vmatprep.subr.mxu0 0.0
        %1155 = vmatpush1.msra.mxu0 0.0
        %1156 = vmatprep.subr.mxu0 0.0
        %1157 = vmatpush1.msra.mxu0 0.0
        %1158 = vmatprep.mubr.f32.mxu0 0.0
        %1159 = vmatmul.mubr.f32.gmra.mrb[0].mxu0 %v676
        %v1160 = vpop.f32.mrb[0].mxu0
        %v1161 = vadd.f32 %v1056, %v1160
        %v1162 = vpop.f32.mrb[0].mxu0
        %1163 = vmatprep.mubr.f32.mxu0 0.0
        %1164 = vmatmul.mubr.f32.gmra.mrb[0].mxu0 %v679
        %v1165 = vpop.f32.mrb[0].mxu0
        %v1166 = vadd.f32 %v1061, %v1165
        %v1167 = vpop.f32.mrb[0].mxu0
        %1168 = vmatprep.mubr.f32.mxu0 0.0
        %1169 = vmatmul.mubr.f32.gmra.mrb[0].mxu0 %v682
        %v1170 = vpop.f32.mrb[0].mxu0
        %v1171 = vadd.f32 %v1066, %v1170
        %v1172 = vpop.f32.mrb[0].mxu0
        %1173 = vmatprep.mubr.f32.mxu0 0.0
        %1174 = vmatmul.mubr.f32.gmra.mrb[0].mxu0 %v685
        %v1175 = vpop.f32.mrb[0].mxu0
        %v1176 = vadd.f32 %v1071, %v1175
        %v1177 = vpop.f32.mrb[0].mxu0
        %1178 = vmatprep.mubr.f32.mxu0 0.0
        %1179 = vmatmul.mubr.f32.gmra.mrb[0].mxu0 %v688
        %v1180 = vpop.f32.mrb[0].mxu0
        %v1181 = vadd.f32 %v1076, %v1180
        %v1182 = vpop.f32.mrb[0].mxu0
        %1183 = vmatprep.mubr.f32.mxu0 0.0
        %1184 = vmatmul.mubr.f32.gmra.mrb[0].mxu0 %v691
        %v1185 = vpop.f32.mrb[0].mxu0
        %v1186 = vadd.f32 %v1081, %v1185
        %v1187 = vpop.f32.mrb[0].mxu0
        %1188 = vmatprep.mubr.f32.mxu0 0.0
        %1189 = vmatmul.mubr.f32.gmra.mrb[0].mxu0 %v799
        %v1190 = vpop.f32.mrb[0].mxu0
        %v1191 = vadd.f32 %v1086, %v1190
        %v1192 = vpop.f32.mrb[0].mxu0
        %1193 = vmatprep.mubr.f32.mxu0 0.0
        %1194 = vmatmul.mubr.f32.gmra.mrb[0].mxu0 %v802
        %v1195 = vpop.f32.mrb[0].mxu0
        %v1196 = vadd.f32 %v1091, %v1195
        %v1197 = vpop.f32.mrb[0].mxu0
        %1198 = vdwg.mxu0
        %s1199 = scalar_lea.vmem %s310, 16 [#allocation2]
        %v1200 = vld [vmem:[%s1199] sm:$0xff]
        %v1201 = vld [vmem:[%s1199 + $0x8] sm:$0xff]
        %v1202 = vld [vmem:[%s1199 + $0x20] sm:$0xff]
        %v1203 = vld [vmem:[%s1199 + $0x28] sm:$0xff]
        %v1204 = vld [vmem:[%s1199 + $0x40] sm:$0xff]
        %v1205 = vld [vmem:[%s1199 + $0x48] sm:$0xff]
        %v1206 = vld [vmem:[%s1199 + $0x60] sm:$0xff]
        %v1207 = vld [vmem:[%s1199 + $0x68] sm:$0xff]
        %v1208 = vadd.f32 %v1161, %v1200
        %v1209 = vadd.f32 %v1166, %v1201
        %v1210 = vadd.f32 %v1171, %v1202
        %v1211 = vadd.f32 %v1176, %v1203
        %v1212 = vadd.f32 %v1181, %v1204
        %v1213 = vadd.f32 %v1186, %v1205
        %v1214 = vadd.f32 %v1191, %v1206
        %v1215 = vadd.f32 %v1196, %v1207
        %vm1216 = vcmp.ge.f32.partialorder %v1208, 0.0
        %vm1217 = vcmp.ge.f32.partialorder %v1209, 0.0
        %vm1218 = vcmp.ge.f32.partialorder %v1210, 0.0
        %vm1219 = vcmp.ge.f32.partialorder %v1211, 0.0
        %vm1220 = vcmp.ge.f32.partialorder %v1212, 0.0
        %vm1221 = vcmp.ge.f32.partialorder %v1213, 0.0
        %vm1222 = vcmp.ge.f32.partialorder %v1214, 0.0
        %vm1223 = vcmp.ge.f32.partialorder %v1215, 0.0
        %v1224 = vmul.f32 %v1208, 0.2
        %v1225 = vmul.f32 %v1209, 0.2
        %v1226 = vmul.f32 %v1210, 0.2
        %v1227 = vmul.f32 %v1211, 0.2
        %v1228 = vmul.f32 %v1212, 0.2
        %v1229 = vmul.f32 %v1213, 0.2
        %v1230 = vmul.f32 %v1214, 0.2
        %v1231 = vmul.f32 %v1215, 0.2
        %v1232 = vsel %vm1216, %v1208, %v1224
        %v1233 = vsel %vm1217, %v1209, %v1225
        %v1234 = vsel %vm1218, %v1210, %v1226
        %v1235 = vsel %vm1219, %v1211, %v1227
        %v1236 = vsel %vm1220, %v1212, %v1228
        %v1237 = vsel %vm1221, %v1213, %v1229
        %v1238 = vsel %vm1222, %v1214, %v1230
        %v1239 = vsel %vm1223, %v1215, %v1231
        %s1240 = scalar_lea.vmem %s433, 16
        %1241 = vst.msk [vmem:[%s1240] sm:$0xff] %vm630, %v1232
        %1242 = vst.msk [vmem:[%s1240 + $0x8] sm:$0xff] %vm630, %v1233
        %1243 = vst.msk [vmem:[%s1240 + $0x20] sm:$0xff] %vm630, %v1234
        %1244 = vst.msk [vmem:[%s1240 + $0x28] sm:$0xff] %vm630, %v1235
        %1245 = vst.msk [vmem:[%s1240 + $0x40] sm:$0xff] %vm630, %v1236
        %1246 = vst.msk [vmem:[%s1240 + $0x48] sm:$0xff] %vm630, %v1237
        %1247 = vst.msk [vmem:[%s1240 + $0x60] sm:$0xff] %vm630, %v1238
        %1248 = vst.msk [vmem:[%s1240 + $0x68] sm:$0xff] %vm630, %v1239
        %s1249 = smul.u32 4, %s23
        %p1250 = scmp.lt.s32.totalorder %s24, 1
        %s1251 = scalar_select %p1250, %s24, 1
        %p1252 = scmp.lt.s32.totalorder %s1249, 15
        %s1253 = scalar_select %p1252, %s1249, 15
        %s1254 = smul.addr %s1253, 4
        %s1255 = smul.addr %s1251, 64
        %s1256 = sadd.s32 %s1254, %s1255
        %s1257 = smul.addr %s1256, 8
        %s1258 = scalar_lea.vmem %s5, %s1257
        // Predicated region
        $region45: #{rgb_slab_decoder_forward.5} parent=39 // pred_check
          %p1259 = pneg %p198
        $region46: #{rgb_slab_decoder_forward.5} parent=39 // pred_check_branch
          %1261 = sbr.rel (%p1259) target = $region48
        $region47: #{rgb_slab_decoder_forward.5} parent=39 // pred_region
          %s1262 = smul.u32 4, %s23
        $region48: #{rgb_slab_decoder_forward.5} parent=39 // pred_fallthru
          _
      $region40: #{rgb_slab_decoder_forward.5} parent=5 // pred_fallthru
        _
      %p1263 = scmp.le.s32.totalorder 2, %s14
      // Predicated region
      $region49: #{rgb_slab_decoder_forward.5} parent=5 // pred_check
        %p1264 = pneg %p1263
      $region50: #{rgb_slab_decoder_forward.5} parent=5 // pred_check_branch
        %1266 = sbr.rel (%p1264) target = $region52
      $region51: #{rgb_slab_decoder_forward.5} parent=5 // pred_region
        %s1267 = ssub.s32 %s14, 2
        // Predicated region
        $region53: #{rgb_slab_decoder_forward.5} parent=51 // pred_check
          %p1268 = pneg %p204
        $region54: #{rgb_slab_decoder_forward.5} parent=51 // pred_check_branch
          %1270 = sbr.rel (%p1268) target = $region56
        $region55: #{rgb_slab_decoder_forward.5} parent=51 // pred_region
          %s1271 = smul.u32 4, %s25
          %p1272 = scmp.lt.s32.totalorder %s26, 1
          %s1273 = scalar_select %p1272, %s26, 1
          %p1274 = scmp.lt.s32.totalorder %s1271, 15
          %s1275 = scalar_select %p1274, %s1271, 15
          %s1276 = smul.addr %s1275, 4
          %s1277 = smul.addr %s1273, 64
          %s1278 = sadd.s32 %s1276, %s1277
          %s1279 = smul.addr %s1278, 8
          %s1280 = scalar_lea.vmem %s5, %s1279
        $region56: #{rgb_slab_decoder_forward.5} parent=51 // pred_fallthru
          _
      $region52: #{rgb_slab_decoder_forward.5} parent=5 // pred_fallthru
        _
    $region6: #{rgb_slab_decoder_forward.5} parent=1 // loop_footer
      %s18 = sadd.s32 1, %s14
    $region7: #{rgb_slab_decoder_forward.5} parent=1 // loop_footer_branch
      %13 = sbr.rel target = $region3
    $region8: #{rgb_slab_decoder_forward.5} parent=1 // loop_exit
      _
    %1281 = vsyncpa [#allocation3], 1
    %s1282 = scalar_lea.sflag [#allocation3], 1
    %1283 = vsyncpa %s1282, 1

// kernel: rgb_slab_decoder_forward.6
$region0: #{rgb_slab_decoder_forward.6}
  #allocation0 [shape = 'u32[]', space=smem, size = 0x4, offset = 0x4, fixed_abs, tag = 'smem constant byte address 0x4 - core index']
  #allocation1 [shape = 'u32[144,128]{1,0:T(1,128)}', space=vmem, size = 0x12000, scoped, tag = 'internal scratch']
  %s0 = inlined_call_operand.vmem [shape: f32[2,32,32,32], index: 0, kind: input, shape index: {}, may-alias: {0,1,2}]
  %s1 = inlined_call_operand.vmem [shape: f32[2,32,32,32], index: 1, kind: input, shape index: {}, may-alias: {0,1,2}]
  %s2 = inlined_call_operand.vmem [shape: f32[2,32,32,32], index: 2, kind: input, shape index: {}, may-alias: {0,1,2}]
  %s3 = inlined_call_operand.vmem [shape: f32[2,2,96,32], index: 3, kind: input, shape index: {}]
  %s4 = inlined_call_operand.vmem [shape: f32[32,2,32,32], index: 4, kind: input, shape index: {}]
  %s5 = inlined_call_operand.vmem [shape: f32[2,32,2,32,32], index: 5, kind: output, shape index: {}]
  %s6 = sld [smem:[#allocation0]]
  $region53: #{rgb_slab_decoder_forward.6} parent=0
    _
  %s8 = ssub.s32 1, %s6
  %s9 = scalar_select 0, %s8, %s6
  loop: start=0, step=1, limit=18
  $region2: #{rgb_slab_decoder_forward.6} parent=0 // loop_pre_header
    _
  $region3: #{rgb_slab_decoder_forward.6} parent=0 // loop_header
    %s11 = sphi 0, %s15
    %p12 = scmp.ge.s32.totalorder %s11, 18
    %s18 = sphi 0, %s30
    %s19 = sphi 0, %s26
    %s20 = sphi 0, %s18
    %s21 = sphi 0, %s19
    %s22 = sphi 0, %s20
    %s23 = sphi 0, %s21
    %s35 = sphi 0, %s37
    %s38 = sphi 0, %s35
    %s39 = sphi 0, %s38
    %s55 = sphi 0, %s39
    %s71 = sphi 0, %s73
    %s74 = sphi 0, %s71
    %s75 = sphi 0, %s74
    %s91 = sphi 0, %s75
    %s107 = sphi 0, %s109
    %s110 = sphi 0, %s107
    %s111 = sphi 0, %s110
    %s127 = sphi 0, %s111
    %s131 = sphi 0, %s131
    %s133 = sphi 0, %s131
    %s134 = sphi 0, %s133
    %s148 = sphi 0, %s134
    %s154 = sphi 0, %s156
    %s157 = sphi 0, %s154
    %s158 = sphi 0, %s157
    %s174 = sphi 0, %s158
    %s182 = sphi 0, %s184
    %s185 = sphi 0, %s182
    %s186 = sphi 0, %s185
    %s202 = sphi 0, %s186
  $region4: #{rgb_slab_decoder_forward.6} parent=0 // loop_header_branch
    %14 = sbr.rel (%p12) target = $region8
  $region5: #{rgb_slab_decoder_forward.6} parent=0 // loop_body
    %s16 = ssub.s32 %s11, 1
    %s17 = ssub.s32 %s11, 2
    %s24 = sadd.s32 1, %s19
    %p25 = scmp.ge.s32.totalorder %s24, 2
    %s26 = scalar_select %p25, 0, %s24
    %s27 = sadd.s32 1, %s18
    %s28 = scalar_select %p25, %s27, %s18
    %p29 = scmp.ge.s32.totalorder %s28, 8
    %s30 = scalar_select %p29, 0, %s28
    %s31 = ssub.s32 %s19, %s26
    %s32 = ssub.s32 %s18, %s30
    %s33 = sor.u32 %s31, %s32
    %p34 = scmp.eq.s32.totalorder %s33, 0
    %s36 = sadd.s32 %s35, 1
    %s37 = scalar_select %p34, %s35, %s36
    %p40 = pneg %p34
    %p41 = scmp.eq.s32.totalorder %s11, 15
    %p42 = por %p40, %p41
    %p43 = scmp.ne.s32.totalorder %s35, %s38
    %p44 = scmp.eq.s32.totalorder %s11, 0
    %p45 = por %p43, %p44
    %p46 = scmp.ne.s32.totalorder %s35, %s38
    %p47 = scmp.eq.s32.totalorder %s16, 15
    %p48 = por %p46, %p47
    %p49 = scmp.ne.s32.totalorder %s38, %s39
    %p50 = scmp.eq.s32.totalorder %s16, 0
    %p51 = por %p49, %p50
    %p52 = scmp.ne.s32.totalorder %s38, %s39
    %p53 = scmp.eq.s32.totalorder %s17, 15
    %p54 = por %p52, %p53
    %p56 = scmp.ne.s32.totalorder %s39, %s55
    %p57 = scmp.eq.s32.totalorder %s17, 0
    %p58 = por %p56, %p57
    %s59 = smul.u32 %s18, 4
    %s60 = ssub.s32 %s59, 1
    %p61 = scmp.gt.s32.totalorder %s60, 0
    %s62 = scalar_select %p61, %s60, 0
    %s63 = smul.u32 %s30, 4
    %s64 = ssub.s32 %s63, 1
    %p65 = scmp.gt.s32.totalorder %s64, 0
    %s66 = scalar_select %p65, %s64, 0
    %s67 = ssub.s32 %s19, %s26
    %s68 = ssub.s32 %s62, %s66
    %s69 = sor.u32 %s67, %s68
    %p70 = scmp.eq.s32.totalorder %s69, 0
    %s72 = sadd.s32 %s71, 1
    %s73 = scalar_select %p70, %s71, %s72
    %p76 = pneg %p70
    %p77 = scmp.eq.s32.totalorder %s11, 15
    %p78 = por %p76, %p77
    %p79 = scmp.ne.s32.totalorder %s71, %s74
    %p80 = scmp.eq.s32.totalorder %s11, 0
    %p81 = por %p79, %p80
    %p82 = scmp.ne.s32.totalorder %s71, %s74
    %p83 = scmp.eq.s32.totalorder %s16, 15
    %p84 = por %p82, %p83
    %p85 = scmp.ne.s32.totalorder %s74, %s75
    %p86 = scmp.eq.s32.totalorder %s16, 0
    %p87 = por %p85, %p86
    %p88 = scmp.ne.s32.totalorder %s74, %s75
    %p89 = scmp.eq.s32.totalorder %s17, 15
    %p90 = por %p88, %p89
    %p92 = scmp.ne.s32.totalorder %s75, %s91
    %p93 = scmp.eq.s32.totalorder %s17, 0
    %p94 = por %p92, %p93
    %s95 = sadd.s32 %s18, 1
    %s96 = smul.u32 %s95, 4
    %p97 = scmp.lt.s32.totalorder %s96, 31
    %s98 = scalar_select %p97, %s96, 31
    %s99 = sadd.s32 %s30, 1
    %s100 = smul.u32 %s99, 4
    %p101 = scmp.lt.s32.totalorder %s100, 31
    %s102 = scalar_select %p101, %s100, 31
    %s103 = ssub.s32 %s19, %s26
    %s104 = ssub.s32 %s98, %s102
    %s105 = sor.u32 %s103, %s104
    %p106 = scmp.eq.s32.totalorder %s105, 0
    %s108 = sadd.s32 %s107, 1
    %s109 = scalar_select %p106, %s107, %s108
    %p112 = pneg %p106
    %p113 = scmp.eq.s32.totalorder %s11, 15
    %p114 = por %p112, %p113
    %p115 = scmp.ne.s32.totalorder %s107, %s110
    %p116 = scmp.eq.s32.totalorder %s11, 0
    %p117 = por %p115, %p116
    %p118 = scmp.ne.s32.totalorder %s107, %s110
    %p119 = scmp.eq.s32.totalorder %s16, 15
    %p120 = por %p118, %p119
    %p121 = scmp.ne.s32.totalorder %s110, %s111
    %p122 = scmp.eq.s32.totalorder %s16, 0
    %p123 = por %p121, %p122
    %p124 = scmp.ne.s32.totalorder %s110, %s111
    %p125 = scmp.eq.s32.totalorder %s17, 15
    %p126 = por %p124, %p125
    %p128 = scmp.ne.s32.totalorder %s111, %s127
    %p129 = scmp.eq.s32.totalorder %s17, 0
    %p130 = por %p128, %p129
    %s132 = sadd.s32 %s131, 1
    %p135 = scmp.eq.s32.totalorder %s11, 15
    %p136 = scmp.ne.s32.totalorder %s131, %s133
    %p137 = scmp.eq.s32.totalorder %s11, 0
    %p138 = por %p136, %p137
    %p139 = scmp.ne.s32.totalorder %s131, %s133
    %p140 = scmp.eq.s32.totalorder %s16, 15
    %p141 = por %p139, %p140
    %p142 = scmp.ne.s32.totalorder %s133, %s134
    %p143 = scmp.eq.s32.totalorder %s16, 0
    %p144 = por %p142, %p143
    %p145 = scmp.ne.s32.totalorder %s133, %s134
    %p146 = scmp.eq.s32.totalorder %s17, 15
    %p147 = por %p145, %p146
    %p149 = scmp.ne.s32.totalorder %s134, %s148
    %p150 = scmp.eq.s32.totalorder %s17, 0
    %p151 = por %p149, %p150
    %s152 = ssub.s32 %s18, %s30
    %p153 = scmp.eq.s32.totalorder %s152, 0
    %s155 = sadd.s32 %s154, 1
    %s156 = scalar_select %p153, %s154, %s155
    %p159 = pneg %p153
    %p160 = scmp.eq.s32.totalorder %s11, 15
    %p161 = por %p159, %p160
    %p162 = scmp.ne.s32.totalorder %s154, %s157
    %p163 = scmp.eq.s32.totalorder %s11, 0
    %p164 = por %p162, %p163
    %p165 = scmp.ne.s32.totalorder %s154, %s157
    %p166 = scmp.eq.s32.totalorder %s16, 15
    %p167 = por %p165, %p166
    %p168 = scmp.ne.s32.totalorder %s157, %s158
    %p169 = scmp.eq.s32.totalorder %s16, 0
    %p170 = por %p168, %p169
    %p171 = scmp.ne.s32.totalorder %s157, %s158
    %p172 = scmp.eq.s32.totalorder %s17, 15
    %p173 = por %p171, %p172
    %p175 = scmp.ne.s32.totalorder %s158, %s174
    %p176 = scmp.eq.s32.totalorder %s17, 0
    %p177 = por %p175, %p176
    %s178 = ssub.s32 %s19, %s26
    %s179 = ssub.s32 %s18, %s30
    %s180 = sor.u32 %s178, %s179
    %p181 = scmp.eq.s32.totalorder %s180, 0
    %s183 = sadd.s32 %s182, 1
    %s184 = scalar_select %p181, %s182, %s183
    %p187 = pneg %p181
    %p188 = scmp.eq.s32.totalorder %s11, 15
    %p189 = por %p187, %p188
    %p190 = scmp.ne.s32.totalorder %s182, %s185
    %p191 = scmp.eq.s32.totalorder %s11, 0
    %p192 = por %p190, %p191
    %p193 = scmp.ne.s32.totalorder %s182, %s185
    %p194 = scmp.eq.s32.totalorder %s16, 15
    %p195 = por %p193, %p194
    %p196 = scmp.ne.s32.totalorder %s185, %s186
    %p197 = scmp.eq.s32.totalorder %s16, 0
    %p198 = por %p196, %p197
    %p199 = scmp.ne.s32.totalorder %s185, %s186
    %p200 = scmp.eq.s32.totalorder %s17, 15
    %p201 = por %p199, %p200
    %p203 = scmp.ne.s32.totalorder %s186, %s202
    %p204 = scmp.eq.s32.totalorder %s17, 0
    %p205 = por %p203, %p204
    %p206 = scmp.le.s32.totalorder 1, %s11
    %p207 = scmp.lt.s32.totalorder %s11, 17
    %p208 = pnand %p206, %p207
    %p209 = pneg %p208
    // Predicated region
    $region9: #{rgb_slab_decoder_forward.6} parent=5 // pred_check
      _
    $region10: #{rgb_slab_decoder_forward.6} parent=5 // pred_check_branch
      %211 = sbr.rel (%p208) target = $region12
    $region11: #{rgb_slab_decoder_forward.6} parent=5 // pred_region
      %s212 = ssub.s32 %s11, 1
      // Predicated region
      $region13: #{rgb_slab_decoder_forward.6} parent=11 // pred_check
        %p213 = pneg %p144
      $region14: #{rgb_slab_decoder_forward.6} parent=11 // pred_check_branch
        %215 = sbr.rel (%p213) target = $region16
      $region15: #{rgb_slab_decoder_forward.6} parent=11 // pred_region
        _
      $region16: #{rgb_slab_decoder_forward.6} parent=11 // pred_fallthru
        _
    $region12: #{rgb_slab_decoder_forward.6} parent=5 // pred_fallthru
      _
    %p216 = scmp.lt.s32.totalorder %s11, 16
    // Predicated region
    $region17: #{rgb_slab_decoder_forward.6} parent=5 // pred_check
      %p217 = pneg %p216
    $region18: #{rgb_slab_decoder_forward.6} parent=5 // pred_check_branch
      %219 = sbr.rel (%p217) target = $region20
    $region19: #{rgb_slab_decoder_forward.6} parent=5 // pred_region
      // Predicated region
      $region21: #{rgb_slab_decoder_forward.6} parent=19 // pred_check
        %p220 = pneg %p45
      $region22: #{rgb_slab_decoder_forward.6} parent=19 // pred_check_branch
        %222 = sbr.rel (%p220) target = $region24
      $region23: #{rgb_slab_decoder_forward.6} parent=19 // pred_region
        %s223 = smul.u32 4, %s18
        %p224 = scmp.lt.s32.totalorder %s19, 1
        %s225 = scalar_select %p224, %s19, 1
        %p226 = scmp.lt.s32.totalorder %s223, 31
        %s227 = scalar_select %p226, %s223, 31
        %s228 = smul.addr %s227, 4
        %s229 = smul.addr %s225, 128
        %s230 = sadd.s32 %s228, %s229
        %s231 = smul.addr %s230, 8
        %s232 = scalar_lea.vmem %s0, %s231
        %s233 = smul.u32 4, %s18
      $region24: #{rgb_slab_decoder_forward.6} parent=19 // pred_fallthru
        _
      // Predicated region
      $region25: #{rgb_slab_decoder_forward.6} parent=19 // pred_check
        %p234 = pneg %p81
      $region26: #{rgb_slab_decoder_forward.6} parent=19 // pred_check_branch
        %236 = sbr.rel (%p234) target = $region28
      $region27: #{rgb_slab_decoder_forward.6} parent=19 // pred_region
        %s237 = smul.u32 %s18, 4
        %s238 = ssub.s32 %s237, 1
        %p239 = scmp.gt.s32.totalorder %s238, 0
        %s240 = scalar_select %p239, %s238, 0
        %p241 = scmp.lt.s32.totalorder %s19, 1
        %s242 = scalar_select %p241, %s19, 1
        %p243 = scmp.lt.s32.totalorder %s240, 31
        %s244 = scalar_select %p243, %s240, 31
        %s245 = smul.addr %s244, 4
        %s246 = smul.addr %s242, 128
        %s247 = sadd.s32 %s245, %s246
        %s248 = smul.addr %s247, 8
        %s249 = scalar_lea.vmem %s1, %s248
        %s250 = smul.u32 %s18, 4
        %s251 = ssub.s32 %s250, 1
        %p252 = scmp.gt.s32.totalorder %s251, 0
        %s253 = scalar_select %p252, %s251, 0
      $region28: #{rgb_slab_decoder_forward.6} parent=19 // pred_fallthru
        _
      // Predicated region
      $region29: #{rgb_slab_decoder_forward.6} parent=19 // pred_check
        %p254 = pneg %p117
      $region30: #{rgb_slab_decoder_forward.6} parent=19 // pred_check_branch
        %256 = sbr.rel (%p254) target = $region32
      $region31: #{rgb_slab_decoder_forward.6} parent=19 // pred_region
        %s257 = sadd.s32 %s18, 1
        %s258 = smul.u32 %s257, 4
        %p259 = scmp.lt.s32.totalorder %s258, 31
        %s260 = scalar_select %p259, %s258, 31
        %p261 = scmp.lt.s32.totalorder %s19, 1
        %s262 = scalar_select %p261, %s19, 1
        %p263 = scmp.lt.s32.totalorder %s260, 31
        %s264 = scalar_select %p263, %s260, 31
        %s265 = smul.addr %s264, 4
        %s266 = smul.addr %s262, 128
        %s267 = sadd.s32 %s265, %s266
        %s268 = smul.addr %s267, 8
        %s269 = scalar_lea.vmem %s2, %s268
        %s270 = sadd.s32 %s18, 1
        %s271 = smul.u32 %s270, 4
        %p272 = scmp.lt.s32.totalorder %s271, 31
        %s273 = scalar_select %p272, %s271, 31
      $region32: #{rgb_slab_decoder_forward.6} parent=19 // pred_fallthru
        _
      // Predicated region
      $region33: #{rgb_slab_decoder_forward.6} parent=19 // pred_check
        %p274 = pneg %p164
      $region34: #{rgb_slab_decoder_forward.6} parent=19 // pred_check_branch
        %276 = sbr.rel (%p274) target = $region36
      $region35: #{rgb_slab_decoder_forward.6} parent=19 // pred_region
        %s277 = smul.u32 4, %s18
        %p278 = scmp.lt.s32.totalorder %s277, 31
        %s279 = scalar_select %p278, %s277, 31
        %s280 = smul.addr %s279, 8
        %s281 = smul.addr %s280, 8
        %s282 = scalar_lea.vmem %s4, %s281
        %s283 = smul.u32 4, %s18
      $region36: #{rgb_slab_decoder_forward.6} parent=19 // pred_fallthru
        _
    $region20: #{rgb_slab_decoder_forward.6} parent=5 // pred_fallthru
      _
    %p284 = scmp.le.s32.totalorder 1, %s11
    %p285 = scmp.lt.s32.totalorder %s11, 17
    %p286 = pnand %p284, %p285
    %p287 = pneg %p286
    // Predicated region
    $region37: #{rgb_slab_decoder_forward.6} parent=5 // pred_check
      _
    $region38: #{rgb_slab_decoder_forward.6} parent=5 // pred_check_branch
      %289 = sbr.rel (%p286) target = $region40
    $region39: #{rgb_slab_decoder_forward.6} parent=5 // pred_region
      %s290 = ssub.s32 %s11, 1
      %s291 = smul.u32 4, %s20
      %p292 = scmp.lt.s32.totalorder %s21, 1
      %s293 = scalar_select %p292, %s21, 1
      %p294 = scmp.lt.s32.totalorder %s291, 31
      %s295 = scalar_select %p294, %s291, 31
      %s296 = smul.addr %s295, 4
      %s297 = smul.addr %s293, 128
      %s298 = sadd.s32 %s296, %s297
      %s299 = smul.addr %s298, 8
      %s300 = scalar_lea.vmem %s0, %s299
      %p301 = pneg %p51
      %p302 = pneg %p48
      %s303 = smul.u32 %s20, 4
      %s304 = ssub.s32 %s303, 1
      %p305 = scmp.gt.s32.totalorder %s304, 0
      %s306 = scalar_select %p305, %s304, 0
      %p307 = scmp.lt.s32.totalorder %s21, 1
      %s308 = scalar_select %p307, %s21, 1
      %p309 = scmp.lt.s32.totalorder %s306, 31
      %s310 = scalar_select %p309, %s306, 31
      %s311 = smul.addr %s310, 4
      %s312 = smul.addr %s308, 128
      %s313 = sadd.s32 %s311, %s312
      %s314 = smul.addr %s313, 8
      %s315 = scalar_lea.vmem %s1, %s314
      %p316 = pneg %p87
      %p317 = pneg %p84
      %s318 = sadd.s32 %s20, 1
      %s319 = smul.u32 %s318, 4
      %p320 = scmp.lt.s32.totalorder %s319, 31
      %s321 = scalar_select %p320, %s319, 31
      %p322 = scmp.lt.s32.totalorder %s21, 1
      %s323 = scalar_select %p322, %s21, 1
      %p324 = scmp.lt.s32.totalorder %s321, 31
      %s325 = scalar_select %p324, %s321, 31
      %s326 = smul.addr %s325, 4
      %s327 = smul.addr %s323, 128
      %s328 = sadd.s32 %s326, %s327
      %s329 = smul.addr %s328, 8
      %s330 = scalar_lea.vmem %s2, %s329
      %p331 = pneg %p123
      %p332 = pneg %p120
      %p333 = pneg %p144
      %p334 = pneg %p141
      %s335 = smul.u32 4, %s20
      %p336 = scmp.lt.s32.totalorder %s335, 31
      %s337 = scalar_select %p336, %s335, 31
      %s338 = smul.addr %s337, 8
      %s339 = smul.addr %s338, 8
      %s340 = scalar_lea.vmem %s4, %s339
      %p341 = pneg %p170
      %p342 = pneg %p167
      %p343 = pneg %p198
      %p344 = pneg %p195
      %s345 = smul.u32 4, %s20
      %p346 = scmp.lt.s32.totalorder %s21, 1
      %s347 = scalar_select %p346, %s21, 1
      %p348 = scmp.lt.s32.totalorder %s345, 31
      %s349 = scalar_select %p348, %s345, 31
      %s350 = smul.addr %s349, 8
      %s351 = smul.addr %s347, 256
      %s352 = sadd.s32 %s350, %s351
      %s353 = smul.addr %s352, 8
      %s354 = scalar_lea.vmem %s5, %s353
      %s355 = smul.u32 4, %s20
      %p356 = scmp.lt.s32.totalorder %s21, 1
      %s357 = scalar_select %p356, %s21, 1
      %p358 = scmp.lt.s32.totalorder %s355, 31
      %s359 = scalar_select %p358, %s355, 31
      %s360 = smul.addr %s359, 4
      %s361 = smul.addr %s357, 128
      %s362 = sadd.s32 %s360, %s361
      %s363 = smul.addr %s362, 8
      %s364 = scalar_lea.vmem %s0, %s363
      %s365 = smul.u32 4, %s20
      %s366 = smul.u32 %s20, 4
      %s367 = ssub.s32 %s366, 1
      %p368 = scmp.gt.s32.totalorder %s367, 0
      %s369 = scalar_select %p368, %s367, 0
      %p370 = scmp.lt.s32.totalorder %s21, 1
      %s371 = scalar_select %p370, %s21, 1
      %p372 = scmp.lt.s32.totalorder %s369, 31
      %s373 = scalar_select %p372, %s369, 31
      %s374 = smul.addr %s373, 4
      %s375 = smul.addr %s371, 128
      %s376 = sadd.s32 %s374, %s375
      %s377 = smul.addr %s376, 8
      %s378 = scalar_lea.vmem %s1, %s377
      %s379 = smul.u32 %s20, 4
      %s380 = ssub.s32 %s379, 1
      %p381 = scmp.gt.s32.totalorder %s380, 0
      %s382 = scalar_select %p381, %s380, 0
      %s383 = sadd.s32 %s20, 1
      %s384 = smul.u32 %s383, 4
      %p385 = scmp.lt.s32.totalorder %s384, 31
      %s386 = scalar_select %p385, %s384, 31
      %p387 = scmp.lt.s32.totalorder %s21, 1
      %s388 = scalar_select %p387, %s21, 1
      %p389 = scmp.lt.s32.totalorder %s386, 31
      %s390 = scalar_select %p389, %s386, 31
      %s391 = smul.addr %s390, 4
      %s392 = smul.addr %s388, 128
      %s393 = sadd.s32 %s391, %s392
      %s394 = smul.addr %s393, 8
      %s395 = scalar_lea.vmem %s2, %s394
      %s396 = sadd.s32 %s20, 1
      %s397 = smul.u32 %s396, 4
      %p398 = scmp.lt.s32.totalorder %s397, 31
      %s399 = scalar_select %p398, %s397, 31
      %s400 = smul.u32 4, %s20
      %p401 = scmp.lt.s32.totalorder %s400, 31
      %s402 = scalar_select %p401, %s400, 31
      %s403 = smul.addr %s402, 8
      %s404 = smul.addr %s403, 8
      %s405 = scalar_lea.vmem %s4, %s404
      %s406 = smul.u32 4, %s20
      %s407 = smul.u32 4, %s20
      %p408 = scmp.lt.s32.totalorder %s21, 1
      %s409 = scalar_select %p408, %s21, 1
      %p410 = scmp.lt.s32.totalorder %s407, 31
      %s411 = scalar_select %p410, %s407, 31
      %s412 = smul.addr %s411, 8
      %s413 = smul.addr %s409, 256
      %s414 = sadd.s32 %s412, %s413
      %s415 = smul.addr %s414, 8
      %s416 = scalar_lea.vmem %s5, %s415
      %s417 = smul.u32 4, %s20
      %v418 = vld [vmem:[%s378] sm:$0xff]
      %v419 = vld [vmem:[%s378 + $0x8] sm:$0xff]
      %v420 = vld [vmem:[%s378 + $0x10] sm:$0xff]
      %v421 = vld [vmem:[%s378 + $0x18] sm:$0xff]
      %p422 = scmp.gt.s32.totalorder %s20, 0
      %s423 = scalar_select %p422, 1, 0
      %s424 = scvt.s32.f32 %s423
      %v425 = vstv %s424
      %v426 = vmul.f32 %v418, %v425
      %v427 = vmul.f32 %v419, %v425
      %v428 = vmul.f32 %v420, %v425
      %v429 = vmul.f32 %v421, %v425
      %v430 = vld [vmem:[%s395] sm:$0xff]
      %v431 = vld [vmem:[%s395 + $0x8] sm:$0xff]
      %v432 = vld [vmem:[%s395 + $0x10] sm:$0xff]
      %v433 = vld [vmem:[%s395 + $0x18] sm:$0xff]
      %p434 = scmp.lt.s32.totalorder %s20, 7
      %s435 = scalar_select %p434, 1, 0
      %s436 = scvt.s32.f32 %s435
      %v437 = vstv %s436
      %v438 = vmul.f32 %v430, %v437
      %v439 = vmul.f32 %v431, %v437
      %v440 = vmul.f32 %v432, %v437
      %v441 = vmul.f32 %v433, %v437
      %v442 = vld [vmem:[%s364] sm:$0xff]
      %v443 = vld [vmem:[%s364 + $0x8] sm:$0xff]
      %v444 = vld [vmem:[%s364 + $0x10] sm:$0xff]
      %v445 = vld [vmem:[%s364 + $0x18] sm:$0xff]
      %v446 = vld [vmem:[%s364 + $0x20] sm:$0xff]
      %v447 = vld [vmem:[%s364 + $0x28] sm:$0xff]
      %v448 = vld [vmem:[%s364 + $0x30] sm:$0xff]
      %v449 = vld [vmem:[%s364 + $0x38] sm:$0xff]
      %v450 = vld [vmem:[%s364 + $0x40] sm:$0xff]
      %v451 = vld [vmem:[%s364 + $0x48] sm:$0xff]
      %v452 = vld [vmem:[%s364 + $0x50] sm:$0xff]
      %v453 = vld [vmem:[%s364 + $0x58] sm:$0xff]
      %v454 = vld [vmem:[%s364 + $0x60] sm:$0xff]
      %v455 = vld [vmem:[%s364 + $0x68] sm:$0xff]
      %v456 = vld [vmem:[%s364 + $0x70] sm:$0xff]
      %v457 = vld [vmem:[%s364 + $0x78] sm:$0xff]
      %vm482 = vcmask 1040384
      %v483 = vrot.slane %v426, 7
      %v484 = vrot.slane %v427, 7
      %v485 = vsel %vm482, %v483, %v484
      %v486 = vrot.slane %v428, 7
      %v487 = vsel %vm482, %v484, %v486
      %v488 = vrot.slane %v429, 7
      %v489 = vsel %vm482, %v486, %v488
      %v490 = vrot.slane %v442, 7
      %v491 = vrot.slane %v443, 7
      %v492 = vsel %vm482, %v490, %v491
      %v493 = vrot.slane %v444, 7
      %v494 = vsel %vm482, %v491, %v493
      %v495 = vrot.slane %v445, 7
      %v496 = vsel %vm482, %v493, %v495
      %v497 = vrot.slane %v446, 7
      %v498 = vrot.slane %v447, 7
      %v499 = vsel %vm482, %v497, %v498
      %v500 = vrot.slane %v448, 7
      %v501 = vsel %vm482, %v498, %v500
      %v502 = vrot.slane %v449, 7
      %v503 = vsel %vm482, %v500, %v502
      %v504 = vrot.slane %v450, 7
      %v505 = vrot.slane %v451, 7
      %v506 = vsel %vm482, %v504, %v505
      %v507 = vrot.slane %v452, 7
      %v508 = vsel %vm482, %v505, %v507
      %v509 = vrot.slane %v453, 7
      %v510 = vsel %vm482, %v507, %v509
      %v511 = vrot.slane %v454, 7
      %v512 = vrot.slane %v455, 7
      %v513 = vsel %vm482, %v511, %v512
      %v514 = vrot.slane %v456, 7
      %v515 = vsel %vm482, %v512, %v514
      %v516 = vrot.slane %v457, 7
      %v517 = vsel %vm482, %v514, %v516
      %v518 = vrot.slane %v438, 7
      %v519 = vrot.slane %v439, 7
      %v520 = vsel %vm482, %v518, %v519
      %v521 = vrot.slane %v440, 7
      %v522 = vsel %vm482, %v519, %v521
      %v523 = vrot.slane %v441, 7
      %v524 = vsel %vm482, %v521, %v523
      %v549 = vsel %vm482, 0.0, %v483
      %v550 = vsel %vm482, 0.0, %v490
      %v551 = vsel %vm482, 0.0, %v497
      %v552 = vsel %vm482, 0.0, %v504
      %v553 = vsel %vm482, 0.0, %v511
      %v554 = vsel %vm482, 0.0, %v518
      %vm555 = vcmask 1046528
      %v556 = vrot.slane %v426, 1
      %v557 = vrot.slane %v427, 1
      %v558 = vsel %vm555, %v556, %v557
      %v559 = vrot.slane %v428, 1
      %v560 = vsel %vm555, %v557, %v559
      %v561 = vrot.slane %v429, 1
      %v562 = vsel %vm555, %v559, %v561
      %v563 = vrot.slane %v442, 1
      %v564 = vrot.slane %v443, 1
      %v565 = vsel %vm555, %v563, %v564
      %v566 = vrot.slane %v444, 1
      %v567 = vsel %vm555, %v564, %v566
      %v568 = vrot.slane %v445, 1
      %v569 = vsel %vm555, %v566, %v568
      %v570 = vrot.slane %v446, 1
      %v571 = vrot.slane %v447, 1
      %v572 = vsel %vm555, %v570, %v571
      %v573 = vrot.slane %v448, 1
      %v574 = vsel %vm555, %v571, %v573
      %v575 = vrot.slane %v449, 1
      %v576 = vsel %vm555, %v573, %v575
      %v577 = vrot.slane %v450, 1
      %v578 = vrot.slane %v451, 1
      %v579 = vsel %vm555, %v577, %v578
      %v580 = vrot.slane %v452, 1
      %v581 = vsel %vm555, %v578, %v580
      %v582 = vrot.slane %v453, 1
      %v583 = vsel %vm555, %v580, %v582
      %v584 = vrot.slane %v454, 1
      %v585 = vrot.slane %v455, 1
      %v586 = vsel %vm555, %v584, %v585
      %v587 = vrot.slane %v456, 1
      %v588 = vsel %vm555, %v585, %v587
      %v589 = vrot.slane %v457, 1
      %v590 = vsel %vm555, %v587, %v589
      %v591 = vrot.slane %v438, 1
      %v592 = vrot.slane %v439, 1
      %v593 = vsel %vm555, %v591, %v592
      %v594 = vrot.slane %v440, 1
      %v595 = vsel %vm555, %v592, %v594
      %v596 = vrot.slane %v441, 1
      %v597 = vsel %vm555, %v594, %v596
      %v604 = vsel %vm555, %v561, 0.0
      %v605 = vsel %vm555, %v568, 0.0
      %v606 = vsel %vm555, %v575, 0.0
      %v607 = vsel %vm555, %v582, 0.0
      %v608 = vsel %vm555, %v589, 0.0
      %v609 = vsel %vm555, %v596, 0.0
      %610 = vrot.lane.b32.xlu0 %v426, 32
      %v611 = vpop.permute.xlu0 %610
      %612 = vrot.lane.b32.xlu0 %v427, 32
      %v613 = vpop.permute.xlu0 %612
      %614 = vrot.lane.b32.xlu0 %v428, 32
      %v615 = vpop.permute.xlu0 %614
      %616 = vrot.lane.b32.xlu0 %v429, 32
      %v617 = vpop.permute.xlu0 %616
      %618 = vrot.lane.b32.xlu0 %v442, 32
      %v619 = vpop.permute.xlu0 %618
      %620 = vrot.lane.b32.xlu0 %v443, 32
      %v621 = vpop.permute.xlu0 %620
      %622 = vrot.lane.b32.xlu0 %v444, 32
      %v623 = vpop.permute.xlu0 %622
      %624 = vrot.lane.b32.xlu0 %v445, 32
      %v625 = vpop.permute.xlu0 %624
      %626 = vrot.lane.b32.xlu0 %v446, 32
      %v627 = vpop.permute.xlu0 %626
      %628 = vrot.lane.b32.xlu0 %v447, 32
      %v629 = vpop.permute.xlu0 %628
      %630 = vrot.lane.b32.xlu0 %v448, 32
      %v631 = vpop.permute.xlu0 %630
      %632 = vrot.lane.b32.xlu0 %v449, 32
      %v633 = vpop.permute.xlu0 %632
      %634 = vrot.lane.b32.xlu0 %v450, 32
      %v635 = vpop.permute.xlu0 %634
      %636 = vrot.lane.b32.xlu0 %v451, 32
      %v637 = vpop.permute.xlu0 %636
      %638 = vrot.lane.b32.xlu0 %v452, 32
      %v639 = vpop.permute.xlu0 %638
      %640 = vrot.lane.b32.xlu0 %v453, 32
      %v641 = vpop.permute.xlu0 %640
      %642 = vrot.lane.b32.xlu0 %v454, 32
      %v643 = vpop.permute.xlu0 %642
      %644 = vrot.lane.b32.xlu0 %v455, 32
      %v645 = vpop.permute.xlu0 %644
      %646 = vrot.lane.b32.xlu0 %v456, 32
      %v647 = vpop.permute.xlu0 %646
      %648 = vrot.lane.b32.xlu0 %v457, 32
      %v649 = vpop.permute.xlu0 %648
      %650 = vrot.lane.b32.xlu0 %v438, 32
      %v651 = vpop.permute.xlu0 %650
      %652 = vrot.lane.b32.xlu0 %v439, 32
      %v653 = vpop.permute.xlu0 %652
      %654 = vrot.lane.b32.xlu0 %v440, 32
      %v655 = vpop.permute.xlu0 %654
      %656 = vrot.lane.b32.xlu0 %v441, 32
      %v657 = vpop.permute.xlu0 %656
      %688 = vrot.lane.b32.xlu0 %v558, 64
      %v689 = vpop.permute.xlu0 %688
      %690 = vrot.lane.b32.xlu0 %v560, 64
      %v691 = vpop.permute.xlu0 %690
      %692 = vrot.lane.b32.xlu0 %v562, 64
      %v693 = vpop.permute.xlu0 %692
      %694 = vrot.lane.b32.xlu0 %v604, 64
      %v695 = vpop.permute.xlu0 %694
      %696 = vrot.lane.b32.xlu0 %v565, 64
      %v697 = vpop.permute.xlu0 %696
      %698 = vrot.lane.b32.xlu0 %v567, 64
      %v699 = vpop.permute.xlu0 %698
      %700 = vrot.lane.b32.xlu0 %v569, 64
      %v701 = vpop.permute.xlu0 %700
      %702 = vrot.lane.b32.xlu0 %v605, 64
      %v703 = vpop.permute.xlu0 %702
      %704 = vrot.lane.b32.xlu0 %v572, 64
      %v705 = vpop.permute.xlu0 %704
      %706 = vrot.lane.b32.xlu0 %v574, 64
      %v707 = vpop.permute.xlu0 %706
      %708 = vrot.lane.b32.xlu0 %v576, 64
      %v709 = vpop.permute.xlu0 %708
      %710 = vrot.lane.b32.xlu0 %v606, 64
      %v711 = vpop.permute.xlu0 %710
      %712 = vrot.lane.b32.xlu0 %v579, 64
      %v713 = vpop.permute.xlu0 %712
      %714 = vrot.lane.b32.xlu0 %v581, 64
      %v715 = vpop.permute.xlu0 %714
      %716 = vrot.lane.b32.xlu0 %v583, 64
      %v717 = vpop.permute.xlu0 %716
      %718 = vrot.lane.b32.xlu0 %v607, 64
      %v719 = vpop.permute.xlu0 %718
      %720 = vrot.lane.b32.xlu0 %v586, 64
      %v721 = vpop.permute.xlu0 %720
      %722 = vrot.lane.b32.xlu0 %v588, 64
      %v723 = vpop.permute.xlu0 %722
      %724 = vrot.lane.b32.xlu0 %v590, 64
      %v725 = vpop.permute.xlu0 %724
      %726 = vrot.lane.b32.xlu0 %v608, 64
      %v727 = vpop.permute.xlu0 %726
      %728 = vrot.lane.b32.xlu0 %v593, 64
      %v729 = vpop.permute.xlu0 %728
      %730 = vrot.lane.b32.xlu0 %v595, 64
      %v731 = vpop.permute.xlu0 %730
      %732 = vrot.lane.b32.xlu0 %v597, 64
      %v733 = vpop.permute.xlu0 %732
      %734 = vrot.lane.b32.xlu0 %v609, 64
      %v735 = vpop.permute.xlu0 %734
      %vm760 = vcmask 261120
      %v761 = vsel %vm760, %v549, %v611
      %v762 = vsel %vm760, %v485, %v613
      %v763 = vsel %vm760, %v487, %v615
      %v764 = vsel %vm760, %v489, %v617
      %v765 = vsel %vm760, %v550, %v619
      %v766 = vsel %vm760, %v492, %v621
      %v767 = vsel %vm760, %v494, %v623
      %v768 = vsel %vm760, %v496, %v625
      %v769 = vsel %vm760, %v551, %v627
      %v770 = vsel %vm760, %v499, %v629
      %v771 = vsel %vm760, %v501, %v631
      %v772 = vsel %vm760, %v503, %v633
      %v773 = vsel %vm760, %v552, %v635
      %v774 = vsel %vm760, %v506, %v637
      %v775 = vsel %vm760, %v508, %v639
      %v776 = vsel %vm760, %v510, %v641
      %v777 = vsel %vm760, %v553, %v643
      %v778 = vsel %vm760, %v513, %v645
      %v779 = vsel %vm760, %v515, %v647
      %v780 = vsel %vm760, %v517, %v649
      %v781 = vsel %vm760, %v554, %v651
      %v782 = vsel %vm760, %v520, %v653
      %v783 = vsel %vm760, %v522, %v655
      %v784 = vsel %vm760, %v524, %v657
      %vm785 = vcmask 523264
      %v786 = vsel %vm785, %v761, %v689
      %v787 = vsel %vm785, %v762, %v691
      %v788 = vsel %vm785, %v763, %v693
      %v789 = vsel %vm785, %v764, %v695
      %v790 = vsel %vm785, %v765, %v697
      %v791 = vsel %vm785, %v766, %v699
      %v792 = vsel %vm785, %v767, %v701
      %v793 = vsel %vm785, %v768, %v703
      %v794 = vsel %vm785, %v769, %v705
      %v795 = vsel %vm785, %v770, %v707
      %v796 = vsel %vm785, %v771, %v709
      %v797 = vsel %vm785, %v772, %v711
      %v798 = vsel %vm785, %v773, %v713
      %v799 = vsel %vm785, %v774, %v715
      %v800 = vsel %vm785, %v775, %v717
      %v801 = vsel %vm785, %v776, %v719
      %v802 = vsel %vm785, %v777, %v721
      %v803 = vsel %vm785, %v778, %v723
      %v804 = vsel %vm785, %v779, %v725
      %v805 = vsel %vm785, %v780, %v727
      %v806 = vsel %vm785, %v781, %v729
      %v807 = vsel %vm785, %v782, %v731
      %v808 = vsel %vm785, %v783, %v733
      %v809 = vsel %vm785, %v784, %v735
      %v810 = vld [vmem:[%s3] sm:$0xff]
      %v811 = vld [vmem:[%s3 + $0x8] sm:$0xff]
      %v812 = vld [vmem:[%s3 + $0x10] sm:$0xff]
      %v813 = vld [vmem:[%s3 + $0x18] sm:$0xff]
      %v814 = vld [vmem:[%s3 + $0x20] sm:$0xff]
      %v815 = vld [vmem:[%s3 + $0x28] sm:$0xff]
      %v816 = vld [vmem:[%s3 + $0x30] sm:$0xff]
      %v817 = vld [vmem:[%s3 + $0x38] sm:$0xff]
      %v818 = vld [vmem:[%s3 + $0x40] sm:$0xff]
      %v819 = vld [vmem:[%s3 + $0x48] sm:$0xff]
      %v820 = vld [vmem:[%s3 + $0x50] sm:$0xff]
      %v821 = vld [vmem:[%s3 + $0x58] sm:$0xff]
      %s822 = scalar_lea.vmem %s3, 96
      %v823 = vld [vmem:[%s822] sm:$0xff]
      %v824 = vld [vmem:[%s822 + $0x8] sm:$0xff]
      %v825 = vld [vmem:[%s822 + $0x10] sm:$0xff]
      %v826 = vld [vmem:[%s822 + $0x18] sm:$0xff]
      %v827 = vld [vmem:[%s822 + $0x20] sm:$0xff]
      %v828 = vld [vmem:[%s822 + $0x28] sm:$0xff]
      %v829 = vld [vmem:[%s822 + $0x30] sm:$0xff]
      %v830 = vld [vmem:[%s822 + $0x38] sm:$0xff]
      %v831 = vld [vmem:[%s822 + $0x40] sm:$0xff]
      %v832 = vld [vmem:[%s822 + $0x48] sm:$0xff]
      %v833 = vld [vmem:[%s822 + $0x50] sm:$0xff]
      %v834 = vld [vmem:[%s822 + $0x58] sm:$0xff]
      %vm835 = vcmask 785408
      %v837 = vsel %vm835, %v786, 0
      %v840 = vsel %vm835, %v787, 0
      %v843 = vsel %vm835, %v788, 0
      %v846 = vsel %vm835, %v789, 0
      %v849 = vsel %vm835, %v790, 0
      %v852 = vsel %vm835, %v791, 0
      %v855 = vsel %vm835, %v792, 0
      %v858 = vsel %vm835, %v793, 0
      %v861 = vsel %vm835, %v794, 0
      %v864 = vsel %vm835, %v795, 0
      %v867 = vsel %vm835, %v796, 0
      %v870 = vsel %vm835, %v797, 0
      %v873 = vsel %vm835, %v798, 0
      %v876 = vsel %vm835, %v799, 0
      %v879 = vsel %vm835, %v800, 0
      %v882 = vsel %vm835, %v801, 0
      %884 = vmatprep.subr.mxu0 0.0
      %885 = vmatpush1.msra.mxu0 %v823
      %886 = vmatprep.subr.mxu0 0.0
      %887 = vmatpush1.msra.mxu0 %v824
      %888 = vmatprep.subr.mxu0 0.0
      %889 = vmatpush1.msra.mxu0 %v825
      %890 = vmatprep.subr.mxu0 0.0
      %891 = vmatpush1.msra.mxu0 %v826
      %892 = vmatprep.subr.mxu0 0.0
      %893 = vmatpush1.msra.mxu0 %v827
      %894 = vmatprep.subr.mxu0 0.0
      %895 = vmatpush1.msra.mxu0 %v828
      %896 = vmatprep.subr.mxu0 0.0
      %897 = vmatpush1.msra.mxu0 %v829
      %898 = vmatprep.subr.mxu0 0.0
      %899 = vmatpush1.msra.mxu0 %v830
      %900 = vmatprep.subr.mxu0 0.0
      %901 = vmatpush1.msra.mxu0 %v831
      %902 = vmatprep.subr.mxu0 0.0
      %903 = vmatpush1.msra.mxu0 %v832
      %904 = vmatprep.subr.mxu0 0.0
      %905 = vmatpush1.msra.mxu0 %v833
      %906 = vmatprep.subr.mxu0 0.0
      %907 = vmatpush1.msra.mxu0 %v834
      %908 = vmatprep.subr.mxu0 0.0
      %909 = vmatpush1.msra.mxu0 0.0
      %910 = vmatprep.subr.mxu0 0.0
      %911 = vmatpush1.msra.mxu0 0.0
      %912 = vmatprep.subr.mxu0 0.0
      %913 = vmatpush1.msra.mxu0 0.0
      %914 = vmatprep.subr.mxu0 0.0
      %915 = vmatpush1.msra.mxu0 0.0
      %916 = vmatprep.subr.mxu0 0.0
      %917 = vmatpush1.msra.mxu0 0.0
      %918 = vmatprep.subr.mxu0 0.0
      %919 = vmatpush1.msra.mxu0 0.0
      %920 = vmatprep.subr.mxu0 0.0
      %921 = vmatpush1.msra.mxu0 0.0
      %922 = vmatprep.subr.mxu0 0.0
      %923 = vmatpush1.msra.mxu0 0.0
      %924 = vmatprep.subr.mxu0 0.0
      %925 = vmatpush1.msra.mxu0 0.0
      %926 = vmatprep.subr.mxu0 0.0
      %927 = vmatpush1.msra.mxu0 0.0
      %928 = vmatprep.subr.mxu0 0.0
      %929 = vmatpush1.msra.mxu0 0.0
      %930 = vmatprep.subr.mxu0 0.0
      %931 = vmatpush1.msra.mxu0 0.0
      %932 = vmatprep.subr.mxu0 0.0
      %933 = vmatpush1.msra.mxu0 0.0
      %934 = vmatprep.subr.mxu0 0.0
      %935 = vmatpush1.msra.mxu0 0.0
      %936 = vmatprep.subr.mxu0 0.0
      %937 = vmatpush1.msra.mxu0 0.0
      %938 = vmatprep.subr.mxu0 0.0
      %939 = vmatpush1.msra.mxu0 0.0
      %940 = vmatprep.subr.mxu0 0.0
      %941 = vmatpush1.msra.mxu0 0.0
      %942 = vmatprep.subr.mxu0 0.0
      %943 = vmatpush1.msra.mxu0 0.0
      %944 = vmatprep.subr.mxu0 0.0
      %945 = vmatpush1.msra.mxu0 0.0
      %946 = vmatprep.subr.mxu0 0.0
      %947 = vmatpush1.msra.mxu0 0.0
      %948 = vmatprep.mubr.f32.mxu0 0.0
      %949 = vmatmul.mubr.f32.gmra.mrb[0].mxu0 %v837
      %v950 = vpop.f32.mrb[0].mxu0
      %v951 = vadd.f32 0.0, %v950
      %v952 = vpop.f32.mrb[0].mxu0
      %953 = vmatprep.mubr.f32.mxu0 0.0
      %954 = vmatmul.mubr.f32.gmra.mrb[0].mxu0 %v840
      %v955 = vpop.f32.mrb[0].mxu0
      %v956 = vadd.f32 0.0, %v955
      %v957 = vpop.f32.mrb[0].mxu0
      %958 = vmatprep.mubr.f32.mxu0 0.0
      %959 = vmatmul.mubr.f32.gmra.mrb[0].mxu0 %v843
      %v960 = vpop.f32.mrb[0].mxu0
      %v961 = vadd.f32 0.0, %v960
      %v962 = vpop.f32.mrb[0].mxu0
      %963 = vmatprep.mubr.f32.mxu0 0.0
      %964 = vmatmul.mubr.f32.gmra.mrb[0].mxu0 %v846
      %v965 = vpop.f32.mrb[0].mxu0
      %v966 = vadd.f32 0.0, %v965
      %v967 = vpop.f32.mrb[0].mxu0
      %968 = vmatprep.mubr.f32.mxu0 0.0
      %969 = vmatmul.mubr.f32.gmra.mrb[0].mxu0 %v849
      %v970 = vpop.f32.mrb[0].mxu0
      %v971 = vadd.f32 0.0, %v970
      %v972 = vpop.f32.mrb[0].mxu0
      %973 = vmatprep.mubr.f32.mxu0 0.0
      %974 = vmatmul.mubr.f32.gmra.mrb[0].mxu0 %v852
      %v975 = vpop.f32.mrb[0].mxu0
      %v976 = vadd.f32 0.0, %v975
      %v977 = vpop.f32.mrb[0].mxu0
      %978 = vmatprep.mubr.f32.mxu0 0.0
      %979 = vmatmul.mubr.f32.gmra.mrb[0].mxu0 %v855
      %v980 = vpop.f32.mrb[0].mxu0
      %v981 = vadd.f32 0.0, %v980
      %v982 = vpop.f32.mrb[0].mxu0
      %983 = vmatprep.mubr.f32.mxu0 0.0
      %984 = vmatmul.mubr.f32.gmra.mrb[0].mxu0 %v858
      %v985 = vpop.f32.mrb[0].mxu0
      %v986 = vadd.f32 0.0, %v985
      %v987 = vpop.f32.mrb[0].mxu0
      %988 = vmatprep.mubr.f32.mxu0 0.0
      %989 = vmatmul.mubr.f32.gmra.mrb[0].mxu0 %v861
      %v990 = vpop.f32.mrb[0].mxu0
      %v991 = vadd.f32 0.0, %v990
      %v992 = vpop.f32.mrb[0].mxu0
      %993 = vmatprep.mubr.f32.mxu0 0.0
      %994 = vmatmul.mubr.f32.gmra.mrb[0].mxu0 %v864
      %v995 = vpop.f32.mrb[0].mxu0
      %v996 = vadd.f32 0.0, %v995
      %v997 = vpop.f32.mrb[0].mxu0
      %998 = vmatprep.mubr.f32.mxu0 0.0
      %999 = vmatmul.mubr.f32.gmra.mrb[0].mxu0 %v867
      %v1000 = vpop.f32.mrb[0].mxu0
      %v1001 = vadd.f32 0.0, %v1000
      %v1002 = vpop.f32.mrb[0].mxu0
      %1003 = vmatprep.mubr.f32.mxu0 0.0
      %1004 = vmatmul.mubr.f32.gmra.mrb[0].mxu0 %v870
      %v1005 = vpop.f32.mrb[0].mxu0
      %v1006 = vadd.f32 0.0, %v1005
      %v1007 = vpop.f32.mrb[0].mxu0
      %1008 = vmatprep.mubr.f32.mxu0 0.0
      %1009 = vmatmul.mubr.f32.gmra.mrb[0].mxu0 %v873
      %v1010 = vpop.f32.mrb[0].mxu0
      %v1011 = vadd.f32 0.0, %v1010
      %v1012 = vpop.f32.mrb[0].mxu0
      %1013 = vmatprep.mubr.f32.mxu0 0.0
      %1014 = vmatmul.mubr.f32.gmra.mrb[0].mxu0 %v876
      %v1015 = vpop.f32.mrb[0].mxu0
      %v1016 = vadd.f32 0.0, %v1015
      %v1017 = vpop.f32.mrb[0].mxu0
      %1018 = vmatprep.mubr.f32.mxu0 0.0
      %1019 = vmatmul.mubr.f32.gmra.mrb[0].mxu0 %v879
      %v1020 = vpop.f32.mrb[0].mxu0
      %v1021 = vadd.f32 0.0, %v1020
      %v1022 = vpop.f32.mrb[0].mxu0
      %1023 = vmatprep.mubr.f32.mxu0 0.0
      %1024 = vmatmul.mubr.f32.gmra.mrb[0].mxu0 %v882
      %v1025 = vpop.f32.mrb[0].mxu0
      %v1026 = vadd.f32 0.0, %v1025
      %v1027 = vpop.f32.mrb[0].mxu0
      %1028 = vdwg.mxu0
      %v1030 = vsel %vm835, %v802, 0
      %v1033 = vsel %vm835, %v803, 0
      %v1036 = vsel %vm835, %v804, 0
      %v1039 = vsel %vm835, %v805, 0
      %1041 = vmatprep.subr.mxu0 0.0
      %1042 = vmatpush1.msra.mxu0 %v810
      %1043 = vmatprep.subr.mxu0 0.0
      %1044 = vmatpush1.msra.mxu0 %v811
      %1045 = vmatprep.subr.mxu0 0.0
      %1046 = vmatpush1.msra.mxu0 %v812
      %1047 = vmatprep.subr.mxu0 0.0
      %1048 = vmatpush1.msra.mxu0 %v813
      %1049 = vmatprep.subr.mxu0 0.0
      %1050 = vmatpush1.msra.mxu0 %v814
      %1051 = vmatprep.subr.mxu0 0.0
      %1052 = vmatpush1.msra.mxu0 %v815
      %1053 = vmatprep.subr.mxu0 0.0
      %1054 = vmatpush1.msra.mxu0 %v816
      %1055 = vmatprep.subr.mxu0 0.0
      %1056 = vmatpush1.msra.mxu0 %v817
      %1057 = vmatprep.subr.mxu0 0.0
      %1058 = vmatpush1.msra.mxu0 %v818
      %1059 = vmatprep.subr.mxu0 0.0
      %1060 = vmatpush1.msra.mxu0 %v819
      %1061 = vmatprep.subr.mxu0 0.0
      %1062 = vmatpush1.msra.mxu0 %v820
      %1063 = vmatprep.subr.mxu0 0.0
      %1064 = vmatpush1.msra.mxu0 %v821
      %1065 = vmatprep.subr.mxu0 0.0
      %1066 = vmatpush1.msra.mxu0 0.0
      %1067 = vmatprep.subr.mxu0 0.0
      %1068 = vmatpush1.msra.mxu0 0.0
      %1069 = vmatprep.subr.mxu0 0.0
      %1070 = vmatpush1.msra.mxu0 0.0
      %1071 = vmatprep.subr.mxu0 0.0
      %1072 = vmatpush1.msra.mxu0 0.0
      %1073 = vmatprep.subr.mxu0 0.0
      %1074 = vmatpush1.msra.mxu0 0.0
      %1075 = vmatprep.subr.mxu0 0.0
      %1076 = vmatpush1.msra.mxu0 0.0
      %1077 = vmatprep.subr.mxu0 0.0
      %1078 = vmatpush1.msra.mxu0 0.0
      %1079 = vmatprep.subr.mxu0 0.0
      %1080 = vmatpush1.msra.mxu0 0.0
      %1081 = vmatprep.subr.mxu0 0.0
      %1082 = vmatpush1.msra.mxu0 0.0
      %1083 = vmatprep.subr.mxu0 0.0
      %1084 = vmatpush1.msra.mxu0 0.0
      %1085 = vmatprep.subr.mxu0 0.0
      %1086 = vmatpush1.msra.mxu0 0.0
      %1087 = vmatprep.subr.mxu0 0.0
      %1088 = vmatpush1.msra.mxu0 0.0
      %1089 = vmatprep.subr.mxu0 0.0
      %1090 = vmatpush1.msra.mxu0 0.0
      %1091 = vmatprep.subr.mxu0 0.0
      %1092 = vmatpush1.msra.mxu0 0.0
      %1093 = vmatprep.subr.mxu0 0.0
      %1094 = vmatpush1.msra.mxu0 0.0
      %1095 = vmatprep.subr.mxu0 0.0
      %1096 = vmatpush1.msra.mxu0 0.0
      %1097 = vmatprep.subr.mxu0 0.0
      %1098 = vmatpush1.msra.mxu0 0.0
      %1099 = vmatprep.subr.mxu0 0.0
      %1100 = vmatpush1.msra.mxu0 0.0
      %1101 = vmatprep.subr.mxu0 0.0
      %1102 = vmatpush1.msra.mxu0 0.0
      %1103 = vmatprep.subr.mxu0 0.0
      %1104 = vmatpush1.msra.mxu0 0.0
      %1105 = vmatprep.mubr.f32.mxu0 0.0
      %1106 = vmatmul.mubr.f32.gmra.mrb[0].mxu0 %v849
      %v1107 = vpop.f32.mrb[0].mxu0
      %v1108 = vadd.f32 %v951, %v1107
      %v1109 = vpop.f32.mrb[0].mxu0
      %1110 = vmatprep.mubr.f32.mxu0 0.0
      %1111 = vmatmul.mubr.f32.gmra.mrb[0].mxu0 %v852
      %v1112 = vpop.f32.mrb[0].mxu0
      %v1113 = vadd.f32 %v956, %v1112
      %v1114 = vpop.f32.mrb[0].mxu0
      %1115 = vmatprep.mubr.f32.mxu0 0.0
      %1116 = vmatmul.mubr.f32.gmra.mrb[0].mxu0 %v855
      %v1117 = vpop.f32.mrb[0].mxu0
      %v1118 = vadd.f32 %v961, %v1117
      %v1119 = vpop.f32.mrb[0].mxu0
      %1120 = vmatprep.mubr.f32.mxu0 0.0
      %1121 = vmatmul.mubr.f32.gmra.mrb[0].mxu0 %v858
      %v1122 = vpop.f32.mrb[0].mxu0
      %v1123 = vadd.f32 %v966, %v1122
      %v1124 = vpop.f32.mrb[0].mxu0
      %1125 = vmatprep.mubr.f32.mxu0 0.0
      %1126 = vmatmul.mubr.f32.gmra.mrb[0].mxu0 %v861
      %v1127 = vpop.f32.mrb[0].mxu0
      %v1128 = vadd.f32 %v971, %v1127
      %v1129 = vpop.f32.mrb[0].mxu0
      %1130 = vmatprep.mubr.f32.mxu0 0.0
      %1131 = vmatmul.mubr.f32.gmra.mrb[0].mxu0 %v864
      %v1132 = vpop.f32.mrb[0].mxu0
      %v1133 = vadd.f32 %v976, %v1132
      %v1134 = vpop.f32.mrb[0].mxu0
      %1135 = vmatprep.mubr.f32.mxu0 0.0
      %1136 = vmatmul.mubr.f32.gmra.mrb[0].mxu0 %v867
      %v1137 = vpop.f32.mrb[0].mxu0
      %v1138 = vadd.f32 %v981, %v1137
      %v1139 = vpop.f32.mrb[0].mxu0
      %1140 = vmatprep.mubr.f32.mxu0 0.0
      %1141 = vmatmul.mubr.f32.gmra.mrb[0].mxu0 %v870
      %v1142 = vpop.f32.mrb[0].mxu0
      %v1143 = vadd.f32 %v986, %v1142
      %v1144 = vpop.f32.mrb[0].mxu0
      %1145 = vmatprep.mubr.f32.mxu0 0.0
      %1146 = vmatmul.mubr.f32.gmra.mrb[0].mxu0 %v873
      %v1147 = vpop.f32.mrb[0].mxu0
      %v1148 = vadd.f32 %v991, %v1147
      %v1149 = vpop.f32.mrb[0].mxu0
      %1150 = vmatprep.mubr.f32.mxu0 0.0
      %1151 = vmatmul.mubr.f32.gmra.mrb[0].mxu0 %v876
      %v1152 = vpop.f32.mrb[0].mxu0
      %v1153 = vadd.f32 %v996, %v1152
      %v1154 = vpop.f32.mrb[0].mxu0
      %1155 = vmatprep.mubr.f32.mxu0 0.0
      %1156 = vmatmul.mubr.f32.gmra.mrb[0].mxu0 %v879
      %v1157 = vpop.f32.mrb[0].mxu0
      %v1158 = vadd.f32 %v1001, %v1157
      %v1159 = vpop.f32.mrb[0].mxu0
      %1160 = vmatprep.mubr.f32.mxu0 0.0
      %1161 = vmatmul.mubr.f32.gmra.mrb[0].mxu0 %v882
      %v1162 = vpop.f32.mrb[0].mxu0
      %v1163 = vadd.f32 %v1006, %v1162
      %v1164 = vpop.f32.mrb[0].mxu0
      %1165 = vmatprep.mubr.f32.mxu0 0.0
      %1166 = vmatmul.mubr.f32.gmra.mrb[0].mxu0 %v1030
      %v1167 = vpop.f32.mrb[0].mxu0
      %v1168 = vadd.f32 %v1011, %v1167
      %v1169 = vpop.f32.mrb[0].mxu0
      %1170 = vmatprep.mubr.f32.mxu0 0.0
      %1171 = vmatmul.mubr.f32.gmra.mrb[0].mxu0 %v1033
      %v1172 = vpop.f32.mrb[0].mxu0
      %v1173 = vadd.f32 %v1016, %v1172
      %v1174 = vpop.f32.mrb[0].mxu0
      %1175 = vmatprep.mubr.f32.mxu0 0.0
      %1176 = vmatmul.mubr.f32.gmra.mrb[0].mxu0 %v1036
      %v1177 = vpop.f32.mrb[0].mxu0
      %v1178 = vadd.f32 %v1021, %v1177
      %v1179 = vpop.f32.mrb[0].mxu0
      %1180 = vmatprep.mubr.f32.mxu0 0.0
      %1181 = vmatmul.mubr.f32.gmra.mrb[0].mxu0 %v1039
      %v1182 = vpop.f32.mrb[0].mxu0
      %v1183 = vadd.f32 %v1026, %v1182
      %v1184 = vpop.f32.mrb[0].mxu0
      %1185 = vdwg.mxu0
      %v1186 = vld [vmem:[%s405] sm:$0xff]
      %v1187 = vld [vmem:[%s405 + $0x8] sm:$0xff]
      %v1188 = vld [vmem:[%s405 + $0x10] sm:$0xff]
      %v1189 = vld [vmem:[%s405 + $0x18] sm:$0xff]
      %v1190 = vld [vmem:[%s405 + $0x40] sm:$0xff]
      %v1191 = vld [vmem:[%s405 + $0x48] sm:$0xff]
      %v1192 = vld [vmem:[%s405 + $0x50] sm:$0xff]
      %v1193 = vld [vmem:[%s405 + $0x58] sm:$0xff]
      %v1194 = vld [vmem:[%s405 + $0x80] sm:$0xff]
      %v1195 = vld [vmem:[%s405 + $0x88] sm:$0xff]
      %v1196 = vld [vmem:[%s405 + $0x90] sm:$0xff]
      %v1197 = vld [vmem:[%s405 + $0x98] sm:$0xff]
      %v1198 = vld [vmem:[%s405 + $0xc0] sm:$0xff]
      %v1199 = vld [vmem:[%s405 + $0xc8] sm:$0xff]
      %v1200 = vld [vmem:[%s405 + $0xd0] sm:$0xff]
      %v1201 = vld [vmem:[%s405 + $0xd8] sm:$0xff]
      %v1202 = vadd.f32 %v1108, %v1186
      %v1203 = vadd.f32 %v1113, %v1187
      %v1204 = vadd.f32 %v1118, %v1188
      %v1205 = vadd.f32 %v1123, %v1189
      %v1206 = vadd.f32 %v1128, %v1190
      %v1207 = vadd.f32 %v1133, %v1191
      %v1208 = vadd.f32 %v1138, %v1192
      %v1209 = vadd.f32 %v1143, %v1193
      %v1210 = vadd.f32 %v1148, %v1194
      %v1211 = vadd.f32 %v1153, %v1195
      %v1212 = vadd.f32 %v1158, %v1196
      %v1213 = vadd.f32 %v1163, %v1197
      %v1214 = vadd.f32 %v1168, %v1198
      %v1215 = vadd.f32 %v1173, %v1199
      %v1216 = vadd.f32 %v1178, %v1200
      %v1217 = vadd.f32 %v1183, %v1201
      %vm1218 = vcmp.ge.f32.partialorder %v1202, 0.0
      %vm1219 = vcmp.ge.f32.partialorder %v1203, 0.0
      %vm1220 = vcmp.ge.f32.partialorder %v1204, 0.0
      %vm1221 = vcmp.ge.f32.partialorder %v1205, 0.0
      %vm1222 = vcmp.ge.f32.partialorder %v1206, 0.0
      %vm1223 = vcmp.ge.f32.partialorder %v1207, 0.0
      %vm1224 = vcmp.ge.f32.partialorder %v1208, 0.0
      %vm1225 = vcmp.ge.f32.partialorder %v1209, 0.0
      %vm1226 = vcmp.ge.f32.partialorder %v1210, 0.0
      %vm1227 = vcmp.ge.f32.partialorder %v1211, 0.0
      %vm1228 = vcmp.ge.f32.partialorder %v1212, 0.0
      %vm1229 = vcmp.ge.f32.partialorder %v1213, 0.0
      %vm1230 = vcmp.ge.f32.partialorder %v1214, 0.0
      %vm1231 = vcmp.ge.f32.partialorder %v1215, 0.0
      %vm1232 = vcmp.ge.f32.partialorder %v1216, 0.0
      %vm1233 = vcmp.ge.f32.partialorder %v1217, 0.0
      %v1234 = vmul.f32 %v1202, 0.2
      %v1235 = vmul.f32 %v1203, 0.2
      %v1236 = vmul.f32 %v1204, 0.2
      %v1237 = vmul.f32 %v1205, 0.2
      %v1238 = vmul.f32 %v1206, 0.2
      %v1239 = vmul.f32 %v1207, 0.2
      %v1240 = vmul.f32 %v1208, 0.2
      %v1241 = vmul.f32 %v1209, 0.2
      %v1242 = vmul.f32 %v1210, 0.2
      %v1243 = vmul.f32 %v1211, 0.2
      %v1244 = vmul.f32 %v1212, 0.2
      %v1245 = vmul.f32 %v1213, 0.2
      %v1246 = vmul.f32 %v1214, 0.2
      %v1247 = vmul.f32 %v1215, 0.2
      %v1248 = vmul.f32 %v1216, 0.2
      %v1249 = vmul.f32 %v1217, 0.2
      %v1250 = vsel %vm1218, %v1202, %v1234
      %v1251 = vsel %vm1219, %v1203, %v1235
      %v1252 = vsel %vm1220, %v1204, %v1236
      %v1253 = vsel %vm1221, %v1205, %v1237
      %v1254 = vsel %vm1222, %v1206, %v1238
      %v1255 = vsel %vm1223, %v1207, %v1239
      %v1256 = vsel %vm1224, %v1208, %v1240
      %v1257 = vsel %vm1225, %v1209, %v1241
      %v1258 = vsel %vm1226, %v1210, %v1242
      %v1259 = vsel %vm1227, %v1211, %v1243
      %v1260 = vsel %vm1228, %v1212, %v1244
      %v1261 = vsel %vm1229, %v1213, %v1245
      %v1262 = vsel %vm1230, %v1214, %v1246
      %v1263 = vsel %vm1231, %v1215, %v1247
      %v1264 = vsel %vm1232, %v1216, %v1248
      %v1265 = vsel %vm1233, %v1217, %v1249
      %1266 = vst.msk [vmem:[%s416] sm:$0xff] %vm760, %v1250
      %1267 = vst.msk [vmem:[%s416 + $0x8] sm:$0xff] %vm760, %v1251
      %1268 = vst.msk [vmem:[%s416 + $0x10] sm:$0xff] %vm760, %v1252
      %1269 = vst.msk [vmem:[%s416 + $0x18] sm:$0xff] %vm760, %v1253
      %1270 = vst.msk [vmem:[%s416 + $0x40] sm:$0xff] %vm760, %v1254
      %1271 = vst.msk [vmem:[%s416 + $0x48] sm:$0xff] %vm760, %v1255
      %1272 = vst.msk [vmem:[%s416 + $0x50] sm:$0xff] %vm760, %v1256
      %1273 = vst.msk [vmem:[%s416 + $0x58] sm:$0xff] %vm760, %v1257
      %1274 = vst.msk [vmem:[%s416 + $0x80] sm:$0xff] %vm760, %v1258
      %1275 = vst.msk [vmem:[%s416 + $0x88] sm:$0xff] %vm760, %v1259
      %1276 = vst.msk [vmem:[%s416 + $0x90] sm:$0xff] %vm760, %v1260
      %1277 = vst.msk [vmem:[%s416 + $0x98] sm:$0xff] %vm760, %v1261
      %1278 = vst.msk [vmem:[%s416 + $0xc0] sm:$0xff] %vm760, %v1262
      %1279 = vst.msk [vmem:[%s416 + $0xc8] sm:$0xff] %vm760, %v1263
      %1280 = vst.msk [vmem:[%s416 + $0xd0] sm:$0xff] %vm760, %v1264
      %1281 = vst.msk [vmem:[%s416 + $0xd8] sm:$0xff] %vm760, %v1265
      %s1282 = scalar_lea.vmem %s3, 192
      %v1283 = vld [vmem:[%s1282] sm:$0xff]
      %v1284 = vld [vmem:[%s1282 + $0x8] sm:$0xff]
      %v1285 = vld [vmem:[%s1282 + $0x10] sm:$0xff]
      %v1286 = vld [vmem:[%s1282 + $0x18] sm:$0xff]
      %v1287 = vld [vmem:[%s1282 + $0x20] sm:$0xff]
      %v1288 = vld [vmem:[%s1282 + $0x28] sm:$0xff]
      %v1289 = vld [vmem:[%s1282 + $0x30] sm:$0xff]
      %v1290 = vld [vmem:[%s1282 + $0x38] sm:$0xff]
      %v1291 = vld [vmem:[%s1282 + $0x40] sm:$0xff]
      %v1292 = vld [vmem:[%s1282 + $0x48] sm:$0xff]
      %v1293 = vld [vmem:[%s1282 + $0x50] sm:$0xff]
      %v1294 = vld [vmem:[%s1282 + $0x58] sm:$0xff]
      %s1295 = scalar_lea.vmem %s3, 288
      %v1296 = vld [vmem:[%s1295] sm:$0xff]
      %v1297 = vld [vmem:[%s1295 + $0x8] sm:$0xff]
      %v1298 = vld [vmem:[%s1295 + $0x10] sm:$0xff]
      %v1299 = vld [vmem:[%s1295 + $0x18] sm:$0xff]
      %v1300 = vld [vmem:[%s1295 + $0x20] sm:$0xff]
      %v1301 = vld [vmem:[%s1295 + $0x28] sm:$0xff]
      %v1302 = vld [vmem:[%s1295 + $0x30] sm:$0xff]
      %v1303 = vld [vmem:[%s1295 + $0x38] sm:$0xff]
      %v1304 = vld [vmem:[%s1295 + $0x40] sm:$0xff]
      %v1305 = vld [vmem:[%s1295 + $0x48] sm:$0xff]
      %v1306 = vld [vmem:[%s1295 + $0x50] sm:$0xff]
      %v1307 = vld [vmem:[%s1295 + $0x58] sm:$0xff]
      %v1309 = vsel %vm835, %v806, 0
      %v1312 = vsel %vm835, %v807, 0
      %v1315 = vsel %vm835, %v808, 0
      %v1318 = vsel %vm835, %v809, 0
      %1320 = vmatprep.subr.mxu0 0.0
      %1321 = vmatpush1.msra.mxu0 %v1296
      %1322 = vmatprep.subr.mxu0 0.0
      %1323 = vmatpush1.msra.mxu0 %v1297
      %1324 = vmatprep.subr.mxu0 0.0
      %1325 = vmatpush1.msra.mxu0 %v1298
      %1326 = vmatprep.subr.mxu0 0.0
      %1327 = vmatpush1.msra.mxu0 %v1299
      %1328 = vmatprep.subr.mxu0 0.0
      %1329 = vmatpush1.msra.mxu0 %v1300
      %1330 = vmatprep.subr.mxu0 0.0
      %1331 = vmatpush1.msra.mxu0 %v1301
      %1332 = vmatprep.subr.mxu0 0.0
      %1333 = vmatpush1.msra.mxu0 %v1302
      %1334 = vmatprep.subr.mxu0 0.0
      %1335 = vmatpush1.msra.mxu0 %v1303
      %1336 = vmatprep.subr.mxu0 0.0
      %1337 = vmatpush1.msra.mxu0 %v1304
      %1338 = vmatprep.subr.mxu0 0.0
      %1339 = vmatpush1.msra.mxu0 %v1305
      %1340 = vmatprep.subr.mxu0 0.0
      %1341 = vmatpush1.msra.mxu0 %v1306
      %1342 = vmatprep.subr.mxu0 0.0
      %1343 = vmatpush1.msra.mxu0 %v1307
      %1344 = vmatprep.subr.mxu0 0.0
      %1345 = vmatpush1.msra.mxu0 0.0
      %1346 = vmatprep.subr.mxu0 0.0
      %1347 = vmatpush1.msra.mxu0 0.0
      %1348 = vmatprep.subr.mxu0 0.0
      %1349 = vmatpush1.msra.mxu0 0.0
      %1350 = vmatprep.subr.mxu0 0.0
      %1351 = vmatpush1.msra.mxu0 0.0
      %1352 = vmatprep.subr.mxu0 0.0
      %1353 = vmatpush1.msra.mxu0 0.0
      %1354 = vmatprep.subr.mxu0 0.0
      %1355 = vmatpush1.msra.mxu0 0.0
      %1356 = vmatprep.subr.mxu0 0.0
      %1357 = vmatpush1.msra.mxu0 0.0
      %1358 = vmatprep.subr.mxu0 0.0
      %1359 = vmatpush1.msra.mxu0 0.0
      %1360 = vmatprep.subr.mxu0 0.0
      %1361 = vmatpush1.msra.mxu0 0.0
      %1362 = vmatprep.subr.mxu0 0.0
      %1363 = vmatpush1.msra.mxu0 0.0
      %1364 = vmatprep.subr.mxu0 0.0
      %1365 = vmatpush1.msra.mxu0 0.0
      %1366 = vmatprep.subr.mxu0 0.0
      %1367 = vmatpush1.msra.mxu0 0.0
      %1368 = vmatprep.subr.mxu0 0.0
      %1369 = vmatpush1.msra.mxu0 0.0
      %1370 = vmatprep.subr.mxu0 0.0
      %1371 = vmatpush1.msra.mxu0 0.0
      %1372 = vmatprep.subr.mxu0 0.0
      %1373 = vmatpush1.msra.mxu0 0.0
      %1374 = vmatprep.subr.mxu0 0.0
      %1375 = vmatpush1.msra.mxu0 0.0
      %1376 = vmatprep.subr.mxu0 0.0
      %1377 = vmatpush1.msra.mxu0 0.0
      %1378 = vmatprep.subr.mxu0 0.0
      %1379 = vmatpush1.msra.mxu0 0.0
      %1380 = vmatprep.subr.mxu0 0.0
      %1381 = vmatpush1.msra.mxu0 0.0
      %1382 = vmatprep.subr.mxu0 0.0
      %1383 = vmatpush1.msra.mxu0 0.0
      %1384 = vmatprep.mubr.f32.mxu0 0.0
      %1385 = vmatmul.mubr.f32.gmra.mrb[0].mxu0 %v861
      %v1386 = vpop.f32.mrb[0].mxu0
      %v1387 = vadd.f32 0.0, %v1386
      %v1388 = vpop.f32.mrb[0].mxu0
      %1389 = vmatprep.mubr.f32.mxu0 0.0
      %1390 = vmatmul.mubr.f32.gmra.mrb[0].mxu0 %v864
      %v1391 = vpop.f32.mrb[0].mxu0
      %v1392 = vadd.f32 0.0, %v1391
      %v1393 = vpop.f32.mrb[0].mxu0
      %1394 = vmatprep.mubr.f32.mxu0 0.0
      %1395 = vmatmul.mubr.f32.gmra.mrb[0].mxu0 %v867
      %v1396 = vpop.f32.mrb[0].mxu0
      %v1397 = vadd.f32 0.0, %v1396
      %v1398 = vpop.f32.mrb[0].mxu0
      %1399 = vmatprep.mubr.f32.mxu0 0.0
      %1400 = vmatmul.mubr.f32.gmra.mrb[0].mxu0 %v870
      %v1401 = vpop.f32.mrb[0].mxu0
      %v1402 = vadd.f32 0.0, %v1401
      %v1403 = vpop.f32.mrb[0].mxu0
      %1404 = vmatprep.mubr.f32.mxu0 0.0
      %1405 = vmatmul.mubr.f32.gmra.mrb[0].mxu0 %v873
      %v1406 = vpop.f32.mrb[0].mxu0
      %v1407 = vadd.f32 0.0, %v1406
      %v1408 = vpop.f32.mrb[0].mxu0
      %1409 = vmatprep.mubr.f32.mxu0 0.0
      %1410 = vmatmul.mubr.f32.gmra.mrb[0].mxu0 %v876
      %v1411 = vpop.f32.mrb[0].mxu0
      %v1412 = vadd.f32 0.0, %v1411
      %v1413 = vpop.f32.mrb[0].mxu0
      %1414 = vmatprep.mubr.f32.mxu0 0.0
      %1415 = vmatmul.mubr.f32.gmra.mrb[0].mxu0 %v879
      %v1416 = vpop.f32.mrb[0].mxu0
      %v1417 = vadd.f32 0.0, %v1416
      %v1418 = vpop.f32.mrb[0].mxu0
      %1419 = vmatprep.mubr.f32.mxu0 0.0
      %1420 = vmatmul.mubr.f32.gmra.mrb[0].mxu0 %v882
      %v1421 = vpop.f32.mrb[0].mxu0
      %v1422 = vadd.f32 0.0, %v1421
      %v1423 = vpop.f32.mrb[0].mxu0
      %1424 = vmatprep.mubr.f32.mxu0 0.0
      %1425 = vmatmul.mubr.f32.gmra.mrb[0].mxu0 %v1030
      %v1426 = vpop.f32.mrb[0].mxu0
      %v1427 = vadd.f32 0.0, %v1426
      %v1428 = vpop.f32.mrb[0].mxu0
      %1429 = vmatprep.mubr.f32.mxu0 0.0
      %1430 = vmatmul.mubr.f32.gmra.mrb[0].mxu0 %v1033
      %v1431 = vpop.f32.mrb[0].mxu0
      %v1432 = vadd.f32 0.0, %v1431
      %v1433 = vpop.f32.mrb[0].mxu0
      %1434 = vmatprep.mubr.f32.mxu0 0.0
      %1435 = vmatmul.mubr.f32.gmra.mrb[0].mxu0 %v1036
      %v1436 = vpop.f32.mrb[0].mxu0
      %v1437 = vadd.f32 0.0, %v1436
      %v1438 = vpop.f32.mrb[0].mxu0
      %1439 = vmatprep.mubr.f32.mxu0 0.0
      %1440 = vmatmul.mubr.f32.gmra.mrb[0].mxu0 %v1039
      %v1441 = vpop.f32.mrb[0].mxu0
      %v1442 = vadd.f32 0.0, %v1441
      %v1443 = vpop.f32.mrb[0].mxu0
      %1444 = vmatprep.mubr.f32.mxu0 0.0
      %1445 = vmatmul.mubr.f32.gmra.mrb[0].mxu0 %v1309
      %v1446 = vpop.f32.mrb[0].mxu0
      %v1447 = vadd.f32 0.0, %v1446
      %v1448 = vpop.f32.mrb[0].mxu0
      %1449 = vmatprep.mubr.f32.mxu0 0.0
      %1450 = vmatmul.mubr.f32.gmra.mrb[0].mxu0 %v1312
      %v1451 = vpop.f32.mrb[0].mxu0
      %v1452 = vadd.f32 0.0, %v1451
      %v1453 = vpop.f32.mrb[0].mxu0
      %1454 = vmatprep.mubr.f32.mxu0 0.0
      %1455 = vmatmul.mubr.f32.gmra.mrb[0].mxu0 %v1315
      %v1456 = vpop.f32.mrb[0].mxu0
      %v1457 = vadd.f32 0.0, %v1456
      %v1458 = vpop.f32.mrb[0].mxu0
      %1459 = vmatprep.mubr.f32.mxu0 0.0
      %1460 = vmatmul.mubr.f32.gmra.mrb[0].mxu0 %v1318
      %v1461 = vpop.f32.mrb[0].mxu0
      %v1462 = vadd.f32 0.0, %v1461
      %v1463 = vpop.f32.mrb[0].mxu0
      %1464 = vdwg.mxu0
      %1465 = vmatprep.subr.mxu0 0.0
      %1466 = vmatpush1.msra.mxu0 %v1283
      %1467 = vmatprep.subr.mxu0 0.0
      %1468 = vmatpush1.msra.mxu0 %v1284
      %1469 = vmatprep.subr.mxu0 0.0
      %1470 = vmatpush1.msra.mxu0 %v1285
      %1471 = vmatprep.subr.mxu0 0.0
      %1472 = vmatpush1.msra.mxu0 %v1286
      %1473 = vmatprep.subr.mxu0 0.0
      %1474 = vmatpush1.msra.mxu0 %v1287
      %1475 = vmatprep.subr.mxu0 0.0
      %1476 = vmatpush1.msra.mxu0 %v1288
      %1477 = vmatprep.subr.mxu0 0.0
      %1478 = vmatpush1.msra.mxu0 %v1289
      %1479 = vmatprep.subr.mxu0 0.0
      %1480 = vmatpush1.msra.mxu0 %v1290
      %1481 = vmatprep.subr.mxu0 0.0
      %1482 = vmatpush1.msra.mxu0 %v1291
      %1483 = vmatprep.subr.mxu0 0.0
      %1484 = vmatpush1.msra.mxu0 %v1292
      %1485 = vmatprep.subr.mxu0 0.0
      %1486 = vmatpush1.msra.mxu0 %v1293
      %1487 = vmatprep.subr.mxu0 0.0
      %1488 = vmatpush1.msra.mxu0 %v1294
      %1489 = vmatprep.subr.mxu0 0.0
      %1490 = vmatpush1.msra.mxu0 0.0
      %1491 = vmatprep.subr.mxu0 0.0
      %1492 = vmatpush1.msra.mxu0 0.0
      %1493 = vmatprep.subr.mxu0 0.0
      %1494 = vmatpush1.msra.mxu0 0.0
      %1495 = vmatprep.subr.mxu0 0.0
      %1496 = vmatpush1.msra.mxu0 0.0
      %1497 = vmatprep.subr.mxu0 0.0
      %1498 = vmatpush1.msra.mxu0 0.0
      %1499 = vmatprep.subr.mxu0 0.0
      %1500 = vmatpush1.msra.mxu0 0.0
      %1501 = vmatprep.subr.mxu0 0.0
      %1502 = vmatpush1.msra.mxu0 0.0
      %1503 = vmatprep.subr.mxu0 0.0
      %1504 = vmatpush1.msra.mxu0 0.0
      %1505 = vmatprep.subr.mxu0 0.0
      %1506 = vmatpush1.msra.mxu0 0.0
      %1507 = vmatprep.subr.mxu0 0.0
      %1508 = vmatpush1.msra.mxu0 0.0
      %1509 = vmatprep.subr.mxu0 0.0
      %1510 = vmatpush1.msra.mxu0 0.0
      %1511 = vmatprep.subr.mxu0 0.0
      %1512 = vmatpush1.msra.mxu0 0.0
      %1513 = vmatprep.subr.mxu0 0.0
      %1514 = vmatpush1.msra.mxu0 0.0
      %1515 = vmatprep.subr.mxu0 0.0
      %1516 = vmatpush1.msra.mxu0 0.0
      %1517 = vmatprep.subr.mxu0 0.0
      %1518 = vmatpush1.msra.mxu0 0.0
      %1519 = vmatprep.subr.mxu0 0.0
      %1520 = vmatpush1.msra.mxu0 0.0
      %1521 = vmatprep.subr.mxu0 0.0
      %1522 = vmatpush1.msra.mxu0 0.0
      %1523 = vmatprep.subr.mxu0 0.0
      %1524 = vmatpush1.msra.mxu0 0.0
      %1525 = vmatprep.subr.mxu0 0.0
      %1526 = vmatpush1.msra.mxu0 0.0
      %1527 = vmatprep.subr.mxu0 0.0
      %1528 = vmatpush1.msra.mxu0 0.0
      %1529 = vmatprep.mubr.f32.mxu0 0.0
      %1530 = vmatmul.mubr.f32.gmra.mrb[0].mxu0 %v849
      %v1531 = vpop.f32.mrb[0].mxu0
      %v1532 = vadd.f32 %v1387, %v1531
      %v1533 = vpop.f32.mrb[0].mxu0
      %1534 = vmatprep.mubr.f32.mxu0 0.0
      %1535 = vmatmul.mubr.f32.gmra.mrb[0].mxu0 %v852
      %v1536 = vpop.f32.mrb[0].mxu0
      %v1537 = vadd.f32 %v1392, %v1536
      %v1538 = vpop.f32.mrb[0].mxu0
      %1539 = vmatprep.mubr.f32.mxu0 0.0
      %1540 = vmatmul.mubr.f32.gmra.mrb[0].mxu0 %v855
      %v1541 = vpop.f32.mrb[0].mxu0
      %v1542 = vadd.f32 %v1397, %v1541
      %v1543 = vpop.f32.mrb[0].mxu0
      %1544 = vmatprep.mubr.f32.mxu0 0.0
      %1545 = vmatmul.mubr.f32.gmra.mrb[0].mxu0 %v858
      %v1546 = vpop.f32.mrb[0].mxu0
      %v1547 = vadd.f32 %v1402, %v1546
      %v1548 = vpop.f32.mrb[0].mxu0
      %1549 = vmatprep.mubr.f32.mxu0 0.0
      %1550 = vmatmul.mubr.f32.gmra.mrb[0].mxu0 %v861
      %v1551 = vpop.f32.mrb[0].mxu0
      %v1552 = vadd.f32 %v1407, %v1551
      %v1553 = vpop.f32.mrb[0].mxu0
      %1554 = vmatprep.mubr.f32.mxu0 0.0
      %1555 = vmatmul.mubr.f32.gmra.mrb[0].mxu0 %v864
      %v1556 = vpop.f32.mrb[0].mxu0
      %v1557 = vadd.f32 %v1412, %v1556
      %v1558 = vpop.f32.mrb[0].mxu0
      %1559 = vmatprep.mubr.f32.mxu0 0.0
      %1560 = vmatmul.mubr.f32.gmra.mrb[0].mxu0 %v867
      %v1561 = vpop.f32.mrb[0].mxu0
      %v1562 = vadd.f32 %v1417, %v1561
      %v1563 = vpop.f32.mrb[0].mxu0
      %1564 = vmatprep.mubr.f32.mxu0 0.0
      %1565 = vmatmul.mubr.f32.gmra.mrb[0].mxu0 %v870
      %v1566 = vpop.f32.mrb[0].mxu0
      %v1567 = vadd.f32 %v1422, %v1566
      %v1568 = vpop.f32.mrb[0].mxu0
      %1569 = vmatprep.mubr.f32.mxu0 0.0
      %1570 = vmatmul.mubr.f32.gmra.mrb[0].mxu0 %v873
      %v1571 = vpop.f32.mrb[0].mxu0
      %v1572 = vadd.f32 %v1427, %v1571
      %v1573 = vpop.f32.mrb[0].mxu0
      %1574 = vmatprep.mubr.f32.mxu0 0.0
      %1575 = vmatmul.mubr.f32.gmra.mrb[0].mxu0 %v876
      %v1576 = vpop.f32.mrb[0].mxu0
      %v1577 = vadd.f32 %v1432, %v1576
      %v1578 = vpop.f32.mrb[0].mxu0
      %1579 = vmatprep.mubr.f32.mxu0 0.0
      %1580 = vmatmul.mubr.f32.gmra.mrb[0].mxu0 %v879
      %v1581 = vpop.f32.mrb[0].mxu0
      %v1582 = vadd.f32 %v1437, %v1581
      %v1583 = vpop.f32.mrb[0].mxu0
      %1584 = vmatprep.mubr.f32.mxu0 0.0
      %1585 = vmatmul.mubr.f32.gmra.mrb[0].mxu0 %v882
      %v1586 = vpop.f32.mrb[0].mxu0
      %v1587 = vadd.f32 %v1442, %v1586
      %v1588 = vpop.f32.mrb[0].mxu0
      %1589 = vmatprep.mubr.f32.mxu0 0.0
      %1590 = vmatmul.mubr.f32.gmra.mrb[0].mxu0 %v1030
      %v1591 = vpop.f32.mrb[0].mxu0
      %v1592 = vadd.f32 %v1447, %v1591
      %v1593 = vpop.f32.mrb[0].mxu0
      %1594 = vmatprep.mubr.f32.mxu0 0.0
      %1595 = vmatmul.mubr.f32.gmra.mrb[0].mxu0 %v1033
      %v1596 = vpop.f32.mrb[0].mxu0
      %v1597 = vadd.f32 %v1452, %v1596
      %v1598 = vpop.f32.mrb[0].mxu0
      %1599 = vmatprep.mubr.f32.mxu0 0.0
      %1600 = vmatmul.mubr.f32.gmra.mrb[0].mxu0 %v1036
      %v1601 = vpop.f32.mrb[0].mxu0
      %v1602 = vadd.f32 %v1457, %v1601
      %v1603 = vpop.f32.mrb[0].mxu0
      %1604 = vmatprep.mubr.f32.mxu0 0.0
      %1605 = vmatmul.mubr.f32.gmra.mrb[0].mxu0 %v1039
      %v1606 = vpop.f32.mrb[0].mxu0
      %v1607 = vadd.f32 %v1462, %v1606
      %v1608 = vpop.f32.mrb[0].mxu0
      %1609 = vdwg.mxu0
      %s1610 = scalar_lea.vmem %s405, 32
      %v1611 = vld [vmem:[%s1610] sm:$0xff]
      %v1612 = vld [vmem:[%s1610 + $0x8] sm:$0xff]
      %v1613 = vld [vmem:[%s1610 + $0x10] sm:$0xff]
      %v1614 = vld [vmem:[%s1610 + $0x18] sm:$0xff]
      %v1615 = vld [vmem:[%s1610 + $0x40] sm:$0xff]
      %v1616 = vld [vmem:[%s1610 + $0x48] sm:$0xff]
      %v1617 = vld [vmem:[%s1610 + $0x50] sm:$0xff]
      %v1618 = vld [vmem:[%s1610 + $0x58] sm:$0xff]
      %v1619 = vld [vmem:[%s1610 + $0x80] sm:$0xff]
      %v1620 = vld [vmem:[%s1610 + $0x88] sm:$0xff]
      %v1621 = vld [vmem:[%s1610 + $0x90] sm:$0xff]
      %v1622 = vld [vmem:[%s1610 + $0x98] sm:$0xff]
      %v1623 = vld [vmem:[%s1610 + $0xc0] sm:$0xff]
      %v1624 = vld [vmem:[%s1610 + $0xc8] sm:$0xff]
      %v1625 = vld [vmem:[%s1610 + $0xd0] sm:$0xff]
      %v1626 = vld [vmem:[%s1610 + $0xd8] sm:$0xff]
      %v1627 = vadd.f32 %v1532, %v1611
      %v1628 = vadd.f32 %v1537, %v1612
      %v1629 = vadd.f32 %v1542, %v1613
      %v1630 = vadd.f32 %v1547, %v1614
      %v1631 = vadd.f32 %v1552, %v1615
      %v1632 = vadd.f32 %v1557, %v1616
      %v1633 = vadd.f32 %v1562, %v1617
      %v1634 = vadd.f32 %v1567, %v1618
      %v1635 = vadd.f32 %v1572, %v1619
      %v1636 = vadd.f32 %v1577, %v1620
      %v1637 = vadd.f32 %v1582, %v1621
      %v1638 = vadd.f32 %v1587, %v1622
      %v1639 = vadd.f32 %v1592, %v1623
      %v1640 = vadd.f32 %v1597, %v1624
      %v1641 = vadd.f32 %v1602, %v1625
      %v1642 = vadd.f32 %v1607, %v1626
      %vm1643 = vcmp.ge.f32.partialorder %v1627, 0.0
      %vm1644 = vcmp.ge.f32.partialorder %v1628, 0.0
      %vm1645 = vcmp.ge.f32.partialorder %v1629, 0.0
      %vm1646 = vcmp.ge.f32.partialorder %v1630, 0.0
      %vm1647 = vcmp.ge.f32.partialorder %v1631, 0.0
      %vm1648 = vcmp.ge.f32.partialorder %v1632, 0.0
      %vm1649 = vcmp.ge.f32.partialorder %v1633, 0.0
      %vm1650 = vcmp.ge.f32.partialorder %v1634, 0.0
      %vm1651 = vcmp.ge.f32.partialorder %v1635, 0.0
      %vm1652 = vcmp.ge.f32.partialorder %v1636, 0.0
      %vm1653 = vcmp.ge.f32.partialorder %v1637, 0.0
      %vm1654 = vcmp.ge.f32.partialorder %v1638, 0.0
      %vm1655 = vcmp.ge.f32.partialorder %v1639, 0.0
      %vm1656 = vcmp.ge.f32.partialorder %v1640, 0.0
      %vm1657 = vcmp.ge.f32.partialorder %v1641, 0.0
      %vm1658 = vcmp.ge.f32.partialorder %v1642, 0.0
      %v1659 = vmul.f32 %v1627, 0.2
      %v1660 = vmul.f32 %v1628, 0.2
      %v1661 = vmul.f32 %v1629, 0.2
      %v1662 = vmul.f32 %v1630, 0.2
      %v1663 = vmul.f32 %v1631, 0.2
      %v1664 = vmul.f32 %v1632, 0.2
      %v1665 = vmul.f32 %v1633, 0.2
      %v1666 = vmul.f32 %v1634, 0.2
      %v1667 = vmul.f32 %v1635, 0.2
      %v1668 = vmul.f32 %v1636, 0.2
      %v1669 = vmul.f32 %v1637, 0.2
      %v1670 = vmul.f32 %v1638, 0.2
      %v1671 = vmul.f32 %v1639, 0.2
      %v1672 = vmul.f32 %v1640, 0.2
      %v1673 = vmul.f32 %v1641, 0.2
      %v1674 = vmul.f32 %v1642, 0.2
      %v1675 = vsel %vm1643, %v1627, %v1659
      %v1676 = vsel %vm1644, %v1628, %v1660
      %v1677 = vsel %vm1645, %v1629, %v1661
      %v1678 = vsel %vm1646, %v1630, %v1662
      %v1679 = vsel %vm1647, %v1631, %v1663
      %v1680 = vsel %vm1648, %v1632, %v1664
      %v1681 = vsel %vm1649, %v1633, %v1665
      %v1682 = vsel %vm1650, %v1634, %v1666
      %v1683 = vsel %vm1651, %v1635, %v1667
      %v1684 = vsel %vm1652, %v1636, %v1668
      %v1685 = vsel %vm1653, %v1637, %v1669
      %v1686 = vsel %vm1654, %v1638, %v1670
      %v1687 = vsel %vm1655, %v1639, %v1671
      %v1688 = vsel %vm1656, %v1640, %v1672
      %v1689 = vsel %vm1657, %v1641, %v1673
      %v1690 = vsel %vm1658, %v1642, %v1674
      %s1691 = scalar_lea.vmem %s416, 32
      %1692 = vst.msk [vmem:[%s1691] sm:$0xff] %vm760, %v1675
      %1693 = vst.msk [vmem:[%s1691 + $0x8] sm:$0xff] %vm760, %v1676
      %1694 = vst.msk [vmem:[%s1691 + $0x10] sm:$0xff] %vm760, %v1677
      %1695 = vst.msk [vmem:[%s1691 + $0x18] sm:$0xff] %vm760, %v1678
      %1696 = vst.msk [vmem:[%s1691 + $0x40] sm:$0xff] %vm760, %v1679
      %1697 = vst.msk [vmem:[%s1691 + $0x48] sm:$0xff] %vm760, %v1680
      %1698 = vst.msk [vmem:[%s1691 + $0x50] sm:$0xff] %vm760, %v1681
      %1699 = vst.msk [vmem:[%s1691 + $0x58] sm:$0xff] %vm760, %v1682
      %1700 = vst.msk [vmem:[%s1691 + $0x80] sm:$0xff] %vm760, %v1683
      %1701 = vst.msk [vmem:[%s1691 + $0x88] sm:$0xff] %vm760, %v1684
      %1702 = vst.msk [vmem:[%s1691 + $0x90] sm:$0xff] %vm760, %v1685
      %1703 = vst.msk [vmem:[%s1691 + $0x98] sm:$0xff] %vm760, %v1686
      %1704 = vst.msk [vmem:[%s1691 + $0xc0] sm:$0xff] %vm760, %v1687
      %1705 = vst.msk [vmem:[%s1691 + $0xc8] sm:$0xff] %vm760, %v1688
      %1706 = vst.msk [vmem:[%s1691 + $0xd0] sm:$0xff] %vm760, %v1689
      %1707 = vst.msk [vmem:[%s1691 + $0xd8] sm:$0xff] %vm760, %v1690
      %s1708 = smul.u32 4, %s20
      %p1709 = scmp.lt.s32.totalorder %s21, 1
      %s1710 = scalar_select %p1709, %s21, 1
      %p1711 = scmp.lt.s32.totalorder %s1708, 31
      %s1712 = scalar_select %p1711, %s1708, 31
      %s1713 = smul.addr %s1712, 8
      %s1714 = smul.addr %s1710, 256
      %s1715 = sadd.s32 %s1713, %s1714
      %s1716 = smul.addr %s1715, 8
      %s1717 = scalar_lea.vmem %s5, %s1716
      // Predicated region
      $region41: #{rgb_slab_decoder_forward.6} parent=39 // pred_check
        %p1718 = pneg %p195
      $region42: #{rgb_slab_decoder_forward.6} parent=39 // pred_check_branch
        %1720 = sbr.rel (%p1718) target = $region44
      $region43: #{rgb_slab_decoder_forward.6} parent=39 // pred_region
        %s1721 = smul.u32 4, %s20
      $region44: #{rgb_slab_decoder_forward.6} parent=39 // pred_fallthru
        _
    $region40: #{rgb_slab_decoder_forward.6} parent=5 // pred_fallthru
      _
    %p1722 = scmp.le.s32.totalorder 2, %s11
    // Predicated region
    $region45: #{rgb_slab_decoder_forward.6} parent=5 // pred_check
      %p1723 = pneg %p1722
    $region46: #{rgb_slab_decoder_forward.6} parent=5 // pred_check_branch
      %1725 = sbr.rel (%p1723) target = $region48
    $region47: #{rgb_slab_decoder_forward.6} parent=5 // pred_region
      %s1726 = ssub.s32 %s11, 2
      // Predicated region
      $region49: #{rgb_slab_decoder_forward.6} parent=47 // pred_check
        %p1727 = pneg %p201
      $region50: #{rgb_slab_decoder_forward.6} parent=47 // pred_check_branch
        %1729 = sbr.rel (%p1727) target = $region52
      $region51: #{rgb_slab_decoder_forward.6} parent=47 // pred_region
        %s1730 = smul.u32 4, %s22
        %p1731 = scmp.lt.s32.totalorder %s23, 1
        %s1732 = scalar_select %p1731, %s23, 1
        %p1733 = scmp.lt.s32.totalorder %s1730, 31
        %s1734 = scalar_select %p1733, %s1730, 31
        %s1735 = smul.addr %s1734, 8
        %s1736 = smul.addr %s1732, 256
        %s1737 = sadd.s32 %s1735, %s1736
        %s1738 = smul.addr %s1737, 8
        %s1739 = scalar_lea.vmem %s5, %s1738
      $region52: #{rgb_slab_decoder_forward.6} parent=47 // pred_fallthru
        _
    $region48: #{rgb_slab_decoder_forward.6} parent=5 // pred_fallthru
      _
  $region6: #{rgb_slab_decoder_forward.6} parent=0 // loop_footer
    %s15 = sadd.s32 1, %s11
  $region7: #{rgb_slab_decoder_forward.6} parent=0 // loop_footer_branch
    %10 = sbr.rel target = $region3
  $region8: #{rgb_slab_decoder_forward.6} parent=0 // loop_exit
    _

// kernel: rgb_slab_decoder_forward.7
$region0: #{rgb_slab_decoder_forward.7}
  #allocation0 [shape = 'u32[]', space=smem, size = 0x4, offset = 0x4, fixed_abs, tag = 'smem constant byte address 0x4 - core index']
  #allocation1 [shape = 'u32[144,128]{1,0:T(1,128)}', space=vmem, size = 0x12000, scoped, tag = 'internal scratch']
  %s0 = inlined_call_operand.vmem [shape: f32[2,64,64,16], index: 0, kind: input, shape index: {}, may-alias: {0,1,2}]
  %s1 = inlined_call_operand.vmem [shape: f32[2,64,64,16], index: 1, kind: input, shape index: {}, may-alias: {0,1,2}]
  %s2 = inlined_call_operand.vmem [shape: f32[2,64,64,16], index: 2, kind: input, shape index: {}, may-alias: {0,1,2}]
  %s3 = inlined_call_operand.vmem [shape: f32[2,2,48,12], index: 3, kind: input, shape index: {}]
  %s4 = inlined_call_operand.hbm [shape: f32[64,2,64,12], index: 4, kind: input, shape index: {}]
  %s5 = inlined_call_operand.vmem [shape: f32[2,64,2,64,12], index: 5, kind: output, shape index: {}]
  %s6 = sld [smem:[#allocation0]]
  $region57: #{rgb_slab_decoder_forward.7} parent=0
    _
  %s8 = ssub.s32 1, %s6
  %s9 = scalar_select 0, %s8, %s6
  $region1: #{rgb_slab_decoder_forward.7} parent=0
    #allocation2 [shape = 'u8[524288]{0}', space=vmem, size = 0x80000, scoped, tag = 'input window, operand 4']
    #allocation3 [shape = 's32[2]{0}', space=sflag, size = 0x8, scoped, tag = 'scoped memory for rgb_slab_decoder_forward.7']
    %10 = vsyncpa [#allocation3], 0
    %s11 = scalar_lea.sflag [#allocation3], 1
    %12 = vsyncpa %s11, 0
    loop: start=0, step=1, limit=34
    $region2: #{rgb_slab_decoder_forward.7} parent=1 // loop_pre_header
      _
    $region3: #{rgb_slab_decoder_forward.7} parent=1 // loop_header
      %s14 = sphi 0, %s18
      %p15 = scmp.ge.s32.totalorder %s14, 34
      %s21 = sphi 0, %s33
      %s22 = sphi 0, %s29
      %s23 = sphi 0, %s21
      %s24 = sphi 0, %s22
      %s25 = sphi 0, %s23
      %s26 = sphi 0, %s24
      %s38 = sphi 0, %s40
      %s41 = sphi 0, %s38
      %s42 = sphi 0, %s41
      %s58 = sphi 0, %s42
      %s74 = sphi 0, %s76
      %s77 = sphi 0, %s74
      %s78 = sphi 0, %s77
      %s94 = sphi 0, %s78
      %s110 = sphi 0, %s112
      %s113 = sphi 0, %s110
      %s114 = sphi 0, %s113
      %s130 = sphi 0, %s114
      %s134 = sphi 0, %s134
      %s136 = sphi 0, %s134
      %s137 = sphi 0, %s136
      %s151 = sphi 0, %s137
      %s157 = sphi 0, %s159
      %s160 = sphi 0, %s157
      %s161 = sphi 0, %s160
      %s177 = sphi 0, %s161
      %s185 = sphi 0, %s187
      %s188 = sphi 0, %s185
      %s189 = sphi 0, %s188
      %s205 = sphi 0, %s189
    $region4: #{rgb_slab_decoder_forward.7} parent=1 // loop_header_branch
      %17 = sbr.rel (%p15) target = $region8
    $region5: #{rgb_slab_decoder_forward.7} parent=1 // loop_body
      %s19 = ssub.s32 %s14, 1
      %s20 = ssub.s32 %s14, 2
      %s27 = sadd.s32 1, %s22
      %p28 = scmp.ge.s32.totalorder %s27, 2
      %s29 = scalar_select %p28, 0, %s27
      %s30 = sadd.s32 1, %s21
      %s31 = scalar_select %p28, %s30, %s21
      %p32 = scmp.ge.s32.totalorder %s31, 16
      %s33 = scalar_select %p32, 0, %s31
      %s34 = ssub.s32 %s22, %s29
      %s35 = ssub.s32 %s21, %s33
      %s36 = sor.u32 %s34, %s35
      %p37 = scmp.eq.s32.totalorder %s36, 0
      %s39 = sadd.s32 %s38, 1
      %s40 = scalar_select %p37, %s38, %s39
      %p43 = pneg %p37
      %p44 = scmp.eq.s32.totalorder %s14, 31
      %p45 = por %p43, %p44
      %p46 = scmp.ne.s32.totalorder %s38, %s41
      %p47 = scmp.eq.s32.totalorder %s14, 0
      %p48 = por %p46, %p47
      %p49 = scmp.ne.s32.totalorder %s38, %s41
      %p50 = scmp.eq.s32.totalorder %s19, 31
      %p51 = por %p49, %p50
      %p52 = scmp.ne.s32.totalorder %s41, %s42
      %p53 = scmp.eq.s32.totalorder %s19, 0
      %p54 = por %p52, %p53
      %p55 = scmp.ne.s32.totalorder %s41, %s42
      %p56 = scmp.eq.s32.totalorder %s20, 31
      %p57 = por %p55, %p56
      %p59 = scmp.ne.s32.totalorder %s42, %s58
      %p60 = scmp.eq.s32.totalorder %s20, 0
      %p61 = por %p59, %p60
      %s62 = smul.u32 %s21, 4
      %s63 = ssub.s32 %s62, 1
      %p64 = scmp.gt.s32.totalorder %s63, 0
      %s65 = scalar_select %p64, %s63, 0
      %s66 = smul.u32 %s33, 4
      %s67 = ssub.s32 %s66, 1
      %p68 = scmp.gt.s32.totalorder %s67, 0
      %s69 = scalar_select %p68, %s67, 0
      %s70 = ssub.s32 %s22, %s29
      %s71 = ssub.s32 %s65, %s69
      %s72 = sor.u32 %s70, %s71
      %p73 = scmp.eq.s32.totalorder %s72, 0
      %s75 = sadd.s32 %s74, 1
      %s76 = scalar_select %p73, %s74, %s75
      %p79 = pneg %p73
      %p80 = scmp.eq.s32.totalorder %s14, 31
      %p81 = por %p79, %p80
      %p82 = scmp.ne.s32.totalorder %s74, %s77
      %p83 = scmp.eq.s32.totalorder %s14, 0
      %p84 = por %p82, %p83
      %p85 = scmp.ne.s32.totalorder %s74, %s77
      %p86 = scmp.eq.s32.totalorder %s19, 31
      %p87 = por %p85, %p86
      %p88 = scmp.ne.s32.totalorder %s77, %s78
      %p89 = scmp.eq.s32.totalorder %s19, 0
      %p90 = por %p88, %p89
      %p91 = scmp.ne.s32.totalorder %s77, %s78
      %p92 = scmp.eq.s32.totalorder %s20, 31
      %p93 = por %p91, %p92
      %p95 = scmp.ne.s32.totalorder %s78, %s94
      %p96 = scmp.eq.s32.totalorder %s20, 0
      %p97 = por %p95, %p96
      %s98 = sadd.s32 %s21, 1
      %s99 = smul.u32 %s98, 4
      %p100 = scmp.lt.s32.totalorder %s99, 63
      %s101 = scalar_select %p100, %s99, 63
      %s102 = sadd.s32 %s33, 1
      %s103 = smul.u32 %s102, 4
      %p104 = scmp.lt.s32.totalorder %s103, 63
      %s105 = scalar_select %p104, %s103, 63
      %s106 = ssub.s32 %s22, %s29
      %s107 = ssub.s32 %s101, %s105
      %s108 = sor.u32 %s106, %s107
      %p109 = scmp.eq.s32.totalorder %s108, 0
      %s111 = sadd.s32 %s110, 1
      %s112 = scalar_select %p109, %s110, %s111
      %p115 = pneg %p109
      %p116 = scmp.eq.s32.totalorder %s14, 31
      %p117 = por %p115, %p116
      %p118 = scmp.ne.s32.totalorder %s110, %s113
      %p119 = scmp.eq.s32.totalorder %s14, 0
      %p120 = por %p118, %p119
      %p121 = scmp.ne.s32.totalorder %s110, %s113
      %p122 = scmp.eq.s32.totalorder %s19, 31
      %p123 = por %p121, %p122
      %p124 = scmp.ne.s32.totalorder %s113, %s114
      %p125 = scmp.eq.s32.totalorder %s19, 0
      %p126 = por %p124, %p125
      %p127 = scmp.ne.s32.totalorder %s113, %s114
      %p128 = scmp.eq.s32.totalorder %s20, 31
      %p129 = por %p127, %p128
      %p131 = scmp.ne.s32.totalorder %s114, %s130
      %p132 = scmp.eq.s32.totalorder %s20, 0
      %p133 = por %p131, %p132
      %s135 = sadd.s32 %s134, 1
      %p138 = scmp.eq.s32.totalorder %s14, 31
      %p139 = scmp.ne.s32.totalorder %s134, %s136
      %p140 = scmp.eq.s32.totalorder %s14, 0
      %p141 = por %p139, %p140
      %p142 = scmp.ne.s32.totalorder %s134, %s136
      %p143 = scmp.eq.s32.totalorder %s19, 31
      %p144 = por %p142, %p143
      %p145 = scmp.ne.s32.totalorder %s136, %s137
      %p146 = scmp.eq.s32.totalorder %s19, 0
      %p147 = por %p145, %p146
      %p148 = scmp.ne.s32.totalorder %s136, %s137
      %p149 = scmp.eq.s32.totalorder %s20, 31
      %p150 = por %p148, %p149
      %p152 = scmp.ne.s32.totalorder %s137, %s151
      %p153 = scmp.eq.s32.totalorder %s20, 0
      %p154 = por %p152, %p153
      %s155 = ssub.s32 %s21, %s33
      %p156 = scmp.eq.s32.totalorder %s155, 0
      %s158 = sadd.s32 %s157, 1
      %s159 = scalar_select %p156, %s157, %s158
      %p162 = pneg %p156
      %p163 = scmp.eq.s32.totalorder %s14, 31
      %p164 = por %p162, %p163
      %p165 = scmp.ne.s32.totalorder %s157, %s160
      %p166 = scmp.eq.s32.totalorder %s14, 0
      %p167 = por %p165, %p166
      %p168 = scmp.ne.s32.totalorder %s157, %s160
      %p169 = scmp.eq.s32.totalorder %s19, 31
      %p170 = por %p168, %p169
      %p171 = scmp.ne.s32.totalorder %s160, %s161
      %p172 = scmp.eq.s32.totalorder %s19, 0
      %p173 = por %p171, %p172
      %p174 = scmp.ne.s32.totalorder %s160, %s161
      %p175 = scmp.eq.s32.totalorder %s20, 31
      %p176 = por %p174, %p175
      %p178 = scmp.ne.s32.totalorder %s161, %s177
      %p179 = scmp.eq.s32.totalorder %s20, 0
      %p180 = por %p178, %p179
      %s181 = ssub.s32 %s22, %s29
      %s182 = ssub.s32 %s21, %s33
      %s183 = sor.u32 %s181, %s182
      %p184 = scmp.eq.s32.totalorder %s183, 0
      %s186 = sadd.s32 %s185, 1
      %s187 = scalar_select %p184, %s185, %s186
      %p190 = pneg %p184
      %p191 = scmp.eq.s32.totalorder %s14, 31
      %p192 = por %p190, %p191
      %p193 = scmp.ne.s32.totalorder %s185, %s188
      %p194 = scmp.eq.s32.totalorder %s14, 0
      %p195 = por %p193, %p194
      %p196 = scmp.ne.s32.totalorder %s185, %s188
      %p197 = scmp.eq.s32.totalorder %s19, 31
      %p198 = por %p196, %p197
      %p199 = scmp.ne.s32.totalorder %s188, %s189
      %p200 = scmp.eq.s32.totalorder %s19, 0
      %p201 = por %p199, %p200
      %p202 = scmp.ne.s32.totalorder %s188, %s189
      %p203 = scmp.eq.s32.totalorder %s20, 31
      %p204 = por %p202, %p203
      %p206 = scmp.ne.s32.totalorder %s189, %s205
      %p207 = scmp.eq.s32.totalorder %s20, 0
      %p208 = por %p206, %p207
      %p209 = scmp.le.s32.totalorder 1, %s14
      %p210 = scmp.lt.s32.totalorder %s14, 33
      %p211 = pnand %p209, %p210
      %p212 = pneg %p211
      // Predicated region
      $region9: #{rgb_slab_decoder_forward.7} parent=5 // pred_check
        _
      $region10: #{rgb_slab_decoder_forward.7} parent=5 // pred_check_branch
        %214 = sbr.rel (%p211) target = $region12
      $region11: #{rgb_slab_decoder_forward.7} parent=5 // pred_region
        %s215 = ssub.s32 %s14, 1
        // Predicated region
        $region13: #{rgb_slab_decoder_forward.7} parent=11 // pred_check
          %p216 = pneg %p147
        $region14: #{rgb_slab_decoder_forward.7} parent=11 // pred_check_branch
          %218 = sbr.rel (%p216) target = $region16
        $region15: #{rgb_slab_decoder_forward.7} parent=11 // pred_region
          _
        $region16: #{rgb_slab_decoder_forward.7} parent=11 // pred_fallthru
          _
      $region12: #{rgb_slab_decoder_forward.7} parent=5 // pred_fallthru
        _
      %p219 = scmp.lt.s32.totalorder %s14, 32
      // Predicated region
      $region17: #{rgb_slab_decoder_forward.7} parent=5 // pred_check
        %p220 = pneg %p219
      $region18: #{rgb_slab_decoder_forward.7} parent=5 // pred_check_branch
        %222 = sbr.rel (%p220) target = $region20
      $region19: #{rgb_slab_decoder_forward.7} parent=5 // pred_region
        // Predicated region
        $region21: #{rgb_slab_decoder_forward.7} parent=19 // pred_check
          %p223 = pneg %p48
        $region22: #{rgb_slab_decoder_forward.7} parent=19 // pred_check_branch
          %225 = sbr.rel (%p223) target = $region24
        $region23: #{rgb_slab_decoder_forward.7} parent=19 // pred_region
          %s226 = smul.u32 4, %s21
          %p227 = scmp.lt.s32.totalorder %s22, 1
          %s228 = scalar_select %p227, %s22, 1
          %p229 = scmp.lt.s32.totalorder %s226, 63
          %s230 = scalar_select %p229, %s226, 63
          %s231 = smul.addr %s230, 8
          %s232 = smul.addr %s228, 512
          %s233 = sadd.s32 %s231, %s232
          %s234 = smul.addr %s233, 8
          %s235 = scalar_lea.vmem %s0, %s234
          %s236 = smul.u32 4, %s21
        $region24: #{rgb_slab_decoder_forward.7} parent=19 // pred_fallthru
          _
        // Predicated region
        $region25: #{rgb_slab_decoder_forward.7} parent=19 // pred_check
          %p237 = pneg %p84
        $region26: #{rgb_slab_decoder_forward.7} parent=19 // pred_check_branch
          %239 = sbr.rel (%p237) target = $region28
        $region27: #{rgb_slab_decoder_forward.7} parent=19 // pred_region
          %s240 = smul.u32 %s21, 4
          %s241 = ssub.s32 %s240, 1
          %p242 = scmp.gt.s32.totalorder %s241, 0
          %s243 = scalar_select %p242, %s241, 0
          %p244 = scmp.lt.s32.totalorder %s22, 1
          %s245 = scalar_select %p244, %s22, 1
          %p246 = scmp.lt.s32.totalorder %s243, 63
          %s247 = scalar_select %p246, %s243, 63
          %s248 = smul.addr %s247, 8
          %s249 = smul.addr %s245, 512
          %s250 = sadd.s32 %s248, %s249
          %s251 = smul.addr %s250, 8
          %s252 = scalar_lea.vmem %s1, %s251
          %s253 = smul.u32 %s21, 4
          %s254 = ssub.s32 %s253, 1
          %p255 = scmp.gt.s32.totalorder %s254, 0
          %s256 = scalar_select %p255, %s254, 0
        $region28: #{rgb_slab_decoder_forward.7} parent=19 // pred_fallthru
          _
        // Predicated region
        $region29: #{rgb_slab_decoder_forward.7} parent=19 // pred_check
          %p257 = pneg %p120
        $region30: #{rgb_slab_decoder_forward.7} parent=19 // pred_check_branch
          %259 = sbr.rel (%p257) target = $region32
        $region31: #{rgb_slab_decoder_forward.7} parent=19 // pred_region
          %s260 = sadd.s32 %s21, 1
          %s261 = smul.u32 %s260, 4
          %p262 = scmp.lt.s32.totalorder %s261, 63
          %s263 = scalar_select %p262, %s261, 63
          %p264 = scmp.lt.s32.totalorder %s22, 1
          %s265 = scalar_select %p264, %s22, 1
          %p266 = scmp.lt.s32.totalorder %s263, 63
          %s267 = scalar_select %p266, %s263, 63
          %s268 = smul.addr %s267, 8
          %s269 = smul.addr %s265, 512
          %s270 = sadd.s32 %s268, %s269
          %s271 = smul.addr %s270, 8
          %s272 = scalar_lea.vmem %s2, %s271
          %s273 = sadd.s32 %s21, 1
          %s274 = smul.u32 %s273, 4
          %p275 = scmp.lt.s32.totalorder %s274, 63
          %s276 = scalar_select %p275, %s274, 63
        $region32: #{rgb_slab_decoder_forward.7} parent=19 // pred_fallthru
          _
        // Predicated region
        $region33: #{rgb_slab_decoder_forward.7} parent=19 // pred_check
          %p277 = pneg %p167
        $region34: #{rgb_slab_decoder_forward.7} parent=19 // pred_check_branch
          %279 = sbr.rel (%p277) target = $region36
        $region35: #{rgb_slab_decoder_forward.7} parent=19 // pred_region
          %s280 = sand.u32 %s157, 1
          %s281 = scalar_lea.sflag [#allocation3], %s280
          %s282 = sand.u32 %s157, 1
          %s283 = smul.addr %s282, 512
          %s284 = scalar_lea.vmem [#allocation2], %s283
          %s285 = smul.u32 4, %s21
          %s287 = ssub.s32 8192, 8192
          %288 = vsyncadd %s281, %s287
          %s289 = smul.addr %s285, 16
          %s290 = smul.addr %s289, 128
          %s291 = scalar_lea.hbm %s4, %s290
          %s292 = sshll.u32 %s284, 4
          %s293 = int_to_ptr.vmem [resolvable:$true] %s292
          %298 = dma.hbm_to_vmem [thread:$0]  %s291, 8192, %s293, %s281, 128, 128, 8
        $region36: #{rgb_slab_decoder_forward.7} parent=19 // pred_fallthru
          _
      $region20: #{rgb_slab_decoder_forward.7} parent=5 // pred_fallthru
        _
      %p299 = scmp.le.s32.totalorder 1, %s14
      %p300 = scmp.lt.s32.totalorder %s14, 33
      %p301 = pnand %p299, %p300
      %p302 = pneg %p301
      // Predicated region
      $region37: #{rgb_slab_decoder_forward.7} parent=5 // pred_check
        _
      $region38: #{rgb_slab_decoder_forward.7} parent=5 // pred_check_branch
        %304 = sbr.rel (%p301) target = $region40
      $region39: #{rgb_slab_decoder_forward.7} parent=5 // pred_region
        %s305 = ssub.s32 %s14, 1
        %s306 = sand.u32 %s160, 1
        %s307 = scalar_lea.sflag [#allocation3], %s306
        %s308 = sand.u32 %s160, 1
        %s309 = smul.addr %s308, 512
        %s310 = scalar_lea.vmem [#allocation2], %s309
        // Predicated region
        $region41: #{rgb_slab_decoder_forward.7} parent=39 // pred_check
          %p311 = pneg %p173
        $region42: #{rgb_slab_decoder_forward.7} parent=39 // pred_check_branch
          %313 = sbr.rel (%p311) target = $region44
        $region43: #{rgb_slab_decoder_forward.7} parent=39 // pred_region
          %314 = dma.done %s307, 8192
        $region44: #{rgb_slab_decoder_forward.7} parent=39 // pred_fallthru
          _
        %s315 = smul.u32 4, %s23
        %p316 = scmp.lt.s32.totalorder %s24, 1
        %s317 = scalar_select %p316, %s24, 1
        %p318 = scmp.lt.s32.totalorder %s315, 63
        %s319 = scalar_select %p318, %s315, 63
        %s320 = smul.addr %s319, 8
        %s321 = smul.addr %s317, 512
        %s322 = sadd.s32 %s320, %s321
        %s323 = smul.addr %s322, 8
        %s324 = scalar_lea.vmem %s0, %s323
        %p325 = pneg %p54
        %p326 = pneg %p51
        %s327 = smul.u32 %s23, 4
        %s328 = ssub.s32 %s327, 1
        %p329 = scmp.gt.s32.totalorder %s328, 0
        %s330 = scalar_select %p329, %s328, 0
        %p331 = scmp.lt.s32.totalorder %s24, 1
        %s332 = scalar_select %p331, %s24, 1
        %p333 = scmp.lt.s32.totalorder %s330, 63
        %s334 = scalar_select %p333, %s330, 63
        %s335 = smul.addr %s334, 8
        %s336 = smul.addr %s332, 512
        %s337 = sadd.s32 %s335, %s336
        %s338 = smul.addr %s337, 8
        %s339 = scalar_lea.vmem %s1, %s338
        %p340 = pneg %p90
        %p341 = pneg %p87
        %s342 = sadd.s32 %s23, 1
        %s343 = smul.u32 %s342, 4
        %p344 = scmp.lt.s32.totalorder %s343, 63
        %s345 = scalar_select %p344, %s343, 63
        %p346 = scmp.lt.s32.totalorder %s24, 1
        %s347 = scalar_select %p346, %s24, 1
        %p348 = scmp.lt.s32.totalorder %s345, 63
        %s349 = scalar_select %p348, %s345, 63
        %s350 = smul.addr %s349, 8
        %s351 = smul.addr %s347, 512
        %s352 = sadd.s32 %s350, %s351
        %s353 = smul.addr %s352, 8
        %s354 = scalar_lea.vmem %s2, %s353
        %p355 = pneg %p126
        %p356 = pneg %p123
        %p357 = pneg %p147
        %p358 = pneg %p144
        %s359 = sand.u32 %s160, 1
        %s360 = scalar_lea.sflag [#allocation3], %s359
        %s361 = sand.u32 %s160, 1
        %s362 = smul.addr %s361, 512
        %s363 = scalar_lea.vmem [#allocation2], %s362
        %p364 = pneg %p173
        %p365 = pneg %p170
        %p366 = pneg %p201
        %p367 = pneg %p198
        %s368 = smul.u32 4, %s23
        %p369 = scmp.lt.s32.totalorder %s24, 1
        %s370 = scalar_select %p369, %s24, 1
        %p371 = scmp.lt.s32.totalorder %s368, 63
        %s372 = scalar_select %p371, %s368, 63
        %s373 = smul.addr %s372, 16
        %s374 = smul.addr %s370, 1024
        %s375 = sadd.s32 %s373, %s374
        %s376 = smul.addr %s375, 8
        %s377 = scalar_lea.vmem %s5, %s376
        %s378 = smul.u32 4, %s23
        %p379 = scmp.lt.s32.totalorder %s24, 1
        %s380 = scalar_select %p379, %s24, 1
        %p381 = scmp.lt.s32.totalorder %s378, 63
        %s382 = scalar_select %p381, %s378, 63
        %s383 = smul.addr %s382, 8
        %s384 = smul.addr %s380, 512
        %s385 = sadd.s32 %s383, %s384
        %s386 = smul.addr %s385, 8
        %s387 = scalar_lea.vmem %s0, %s386
        %s388 = smul.u32 4, %s23
        %s389 = smul.u32 %s23, 4
        %s390 = ssub.s32 %s389, 1
        %p391 = scmp.gt.s32.totalorder %s390, 0
        %s392 = scalar_select %p391, %s390, 0
        %p393 = scmp.lt.s32.totalorder %s24, 1
        %s394 = scalar_select %p393, %s24, 1
        %p395 = scmp.lt.s32.totalorder %s392, 63
        %s396 = scalar_select %p395, %s392, 63
        %s397 = smul.addr %s396, 8
        %s398 = smul.addr %s394, 512
        %s399 = sadd.s32 %s397, %s398
        %s400 = smul.addr %s399, 8
        %s401 = scalar_lea.vmem %s1, %s400
        %s402 = smul.u32 %s23, 4
        %s403 = ssub.s32 %s402, 1
        %p404 = scmp.gt.s32.totalorder %s403, 0
        %s405 = scalar_select %p404, %s403, 0
        %s406 = sadd.s32 %s23, 1
        %s407 = smul.u32 %s406, 4
        %p408 = scmp.lt.s32.totalorder %s407, 63
        %s409 = scalar_select %p408, %s407, 63
        %p410 = scmp.lt.s32.totalorder %s24, 1
        %s411 = scalar_select %p410, %s24, 1
        %p412 = scmp.lt.s32.totalorder %s409, 63
        %s413 = scalar_select %p412, %s409, 63
        %s414 = smul.addr %s413, 8
        %s415 = smul.addr %s411, 512
        %s416 = sadd.s32 %s414, %s415
        %s417 = smul.addr %s416, 8
        %s418 = scalar_lea.vmem %s2, %s417
        %s419 = sadd.s32 %s23, 1
        %s420 = smul.u32 %s419, 4
        %p421 = scmp.lt.s32.totalorder %s420, 63
        %s422 = scalar_select %p421, %s420, 63
        %s423 = smul.u32 4, %s23
        %s424 = smul.u32 4, %s23
        %p425 = scmp.lt.s32.totalorder %s24, 1
        %s426 = scalar_select %p425, %s24, 1
        %p427 = scmp.lt.s32.totalorder %s424, 63
        %s428 = scalar_select %p427, %s424, 63
        %s429 = smul.addr %s428, 16
        %s430 = smul.addr %s426, 1024
        %s431 = sadd.s32 %s429, %s430
        %s432 = smul.addr %s431, 8
        %s433 = scalar_lea.vmem %s5, %s432
        %s434 = smul.u32 4, %s23
        %v435 = vld [vmem:[%s401] sm:$0xff]
        %v436 = vld [vmem:[%s401 + $0x8] sm:$0xff]
        %v437 = vld [vmem:[%s401 + $0x10] sm:$0xff]
        %v438 = vld [vmem:[%s401 + $0x18] sm:$0xff]
        %v439 = vld [vmem:[%s401 + $0x20] sm:$0xff]
        %v440 = vld [vmem:[%s401 + $0x28] sm:$0xff]
        %v441 = vld [vmem:[%s401 + $0x30] sm:$0xff]
        %v442 = vld [vmem:[%s401 + $0x38] sm:$0xff]
        %p443 = scmp.gt.s32.totalorder %s23, 0
        %s444 = scalar_select %p443, 1, 0
        %s445 = scvt.s32.f32 %s444
        %v446 = vstv %s445
        %v447 = vmul.f32 %v435, %v446
        %v448 = vmul.f32 %v436, %v446
        %v449 = vmul.f32 %v437, %v446
        %v450 = vmul.f32 %v438, %v446
        %v451 = vmul.f32 %v439, %v446
        %v452 = vmul.f32 %v440, %v446
        %v453 = vmul.f32 %v441, %v446
        %v454 = vmul.f32 %v442, %v446
        %v455 = vld [vmem:[%s418] sm:$0xff]
        %v456 = vld [vmem:[%s418 + $0x8] sm:$0xff]
        %v457 = vld [vmem:[%s418 + $0x10] sm:$0xff]
        %v458 = vld [vmem:[%s418 + $0x18] sm:$0xff]
        %v459 = vld [vmem:[%s418 + $0x20] sm:$0xff]
        %v460 = vld [vmem:[%s418 + $0x28] sm:$0xff]
        %v461 = vld [vmem:[%s418 + $0x30] sm:$0xff]
        %v462 = vld [vmem:[%s418 + $0x38] sm:$0xff]
        %p463 = scmp.lt.s32.totalorder %s23, 15
        %s464 = scalar_select %p463, 1, 0
        %s465 = scvt.s32.f32 %s464
        %v466 = vstv %s465
        %v467 = vmul.f32 %v455, %v466
        %v468 = vmul.f32 %v456, %v466
        %v469 = vmul.f32 %v457, %v466
        %v470 = vmul.f32 %v458, %v466
        %v471 = vmul.f32 %v459, %v466
        %v472 = vmul.f32 %v460, %v466
        %v473 = vmul.f32 %v461, %v466
        %v474 = vmul.f32 %v462, %v466
        %v475 = vld [vmem:[%s387] sm:$0xff]
        %v476 = vld [vmem:[%s387 + $0x8] sm:$0xff]
        %v477 = vld [vmem:[%s387 + $0x10] sm:$0xff]
        %v478 = vld [vmem:[%s387 + $0x18] sm:$0xff]
        %v479 = vld [vmem:[%s387 + $0x20] sm:$0xff]
        %v480 = vld [vmem:[%s387 + $0x28] sm:$0xff]
        %v481 = vld [vmem:[%s387 + $0x30] sm:$0xff]
        %v482 = vld [vmem:[%s387 + $0x38] sm:$0xff]
        %v483 = vld [vmem:[%s387 + $0x40] sm:$0xff]
        %v484 = vld [vmem:[%s387 + $0x48] sm:$0xff]
        %v485 = vld [vmem:[%s387 + $0x50] sm:$0xff]
        %v486 = vld [vmem:[%s387 + $0x58] sm:$0xff]
        %v487 = vld [vmem:[%s387 + $0x60] sm:$0xff]
        %v488 = vld [vmem:[%s387 + $0x68] sm:$0xff]
        %v489 = vld [vmem:[%s387 + $0x70] sm:$0xff]
        %v490 = vld [vmem:[%s387 + $0x78] sm:$0xff]
        %v491 = vld [vmem:[%s387 + $0x80] sm:$0xff]
        %v492 = vld [vmem:[%s387 + $0x88] sm:$0xff]
        %v493 = vld [vmem:[%s387 + $0x90] sm:$0xff]
        %v494 = vld [vmem:[%s387 + $0x98] sm:$0xff]
        %v495 = vld [vmem:[%s387 + $0xa0] sm:$0xff]
        %v496 = vld [vmem:[%s387 + $0xa8] sm:$0xff]
        %v497 = vld [vmem:[%s387 + $0xb0] sm:$0xff]
        %v498 = vld [vmem:[%s387 + $0xb8] sm:$0xff]
        %v499 = vld [vmem:[%s387 + $0xc0] sm:$0xff]
        %v500 = vld [vmem:[%s387 + $0xc8] sm:$0xff]
        %v501 = vld [vmem:[%s387 + $0xd0] sm:$0xff]
        %v502 = vld [vmem:[%s387 + $0xd8] sm:$0xff]
        %v503 = vld [vmem:[%s387 + $0xe0] sm:$0xff]
        %v504 = vld [vmem:[%s387 + $0xe8] sm:$0xff]
        %v505 = vld [vmem:[%s387 + $0xf0] sm:$0xff]
        %v506 = vld [vmem:[%s387 + $0xf8] sm:$0xff]
        %vm555 = vcmask 1040384
        %v556 = vrot.slane %v447, 7
        %v557 = vrot.slane %v448, 7
        %v558 = vsel %vm555, %v556, %v557
        %v559 = vrot.slane %v449, 7
        %v560 = vsel %vm555, %v557, %v559
        %v561 = vrot.slane %v450, 7
        %v562 = vsel %vm555, %v559, %v561
        %v563 = vrot.slane %v451, 7
        %v564 = vsel %vm555, %v561, %v563
        %v565 = vrot.slane %v452, 7
        %v566 = vsel %vm555, %v563, %v565
        %v567 = vrot.slane %v453, 7
        %v568 = vsel %vm555, %v565, %v567
        %v569 = vrot.slane %v454, 7
        %v570 = vsel %vm555, %v567, %v569
        %v571 = vrot.slane %v475, 7
        %v572 = vrot.slane %v476, 7
        %v573 = vsel %vm555, %v571, %v572
        %v574 = vrot.slane %v477, 7
        %v575 = vsel %vm555, %v572, %v574
        %v576 = vrot.slane %v478, 7
        %v577 = vsel %vm555, %v574, %v576
        %v578 = vrot.slane %v479, 7
        %v579 = vsel %vm555, %v576, %v578
        %v580 = vrot.slane %v480, 7
        %v581 = vsel %vm555, %v578, %v580
        %v582 = vrot.slane %v481, 7
        %v583 = vsel %vm555, %v580, %v582
        %v584 = vrot.slane %v482, 7
        %v585 = vsel %vm555, %v582, %v584
        %v586 = vrot.slane %v483, 7
        %v587 = vrot.slane %v484, 7
        %v588 = vsel %vm555, %v586, %v587
        %v589 = vrot.slane %v485, 7
        %v590 = vsel %vm555, %v587, %v589
        %v591 = vrot.slane %v486, 7
        %v592 = vsel %vm555, %v589, %v591
        %v593 = vrot.slane %v487, 7
        %v594 = vsel %vm555, %v591, %v593
        %v595 = vrot.slane %v488, 7
        %v596 = vsel %vm555, %v593, %v595
        %v597 = vrot.slane %v489, 7
        %v598 = vsel %vm555, %v595, %v597
        %v599 = vrot.slane %v490, 7
        %v600 = vsel %vm555, %v597, %v599
        %v601 = vrot.slane %v491, 7
        %v602 = vrot.slane %v492, 7
        %v603 = vsel %vm555, %v601, %v602
        %v604 = vrot.slane %v493, 7
        %v605 = vsel %vm555, %v602, %v604
        %v606 = vrot.slane %v494, 7
        %v607 = vsel %vm555, %v604, %v606
        %v608 = vrot.slane %v495, 7
        %v609 = vsel %vm555, %v606, %v608
        %v610 = vrot.slane %v496, 7
        %v611 = vsel %vm555, %v608, %v610
        %v612 = vrot.slane %v497, 7
        %v613 = vsel %vm555, %v610, %v612
        %v614 = vrot.slane %v498, 7
        %v615 = vsel %vm555, %v612, %v614
        %v616 = vrot.slane %v499, 7
        %v617 = vrot.slane %v500, 7
        %v618 = vsel %vm555, %v616, %v617
        %v619 = vrot.slane %v501, 7
        %v620 = vsel %vm555, %v617, %v619
        %v621 = vrot.slane %v502, 7
        %v622 = vsel %vm555, %v619, %v621
        %v623 = vrot.slane %v503, 7
        %v624 = vsel %vm555, %v621, %v623
        %v625 = vrot.slane %v504, 7
        %v626 = vsel %vm555, %v623, %v625
        %v627 = vrot.slane %v505, 7
        %v628 = vsel %vm555, %v625, %v627
        %v629 = vrot.slane %v506, 7
        %v630 = vsel %vm555, %v627, %v629
        %v631 = vrot.slane %v467, 7
        %v632 = vrot.slane %v468, 7
        %v633 = vsel %vm555, %v631, %v632
        %v634 = vrot.slane %v469, 7
        %v635 = vsel %vm555, %v632, %v634
        %v636 = vrot.slane %v470, 7
        %v637 = vsel %vm555, %v634, %v636
        %v638 = vrot.slane %v471, 7
        %v639 = vsel %vm555, %v636, %v638
        %v640 = vrot.slane %v472, 7
        %v641 = vsel %vm555, %v638, %v640
        %v642 = vrot.slane %v473, 7
        %v643 = vsel %vm555, %v640, %v642
        %v644 = vrot.slane %v474, 7
        %v645 = vsel %vm555, %v642, %v644
        %v694 = vsel %vm555, 0.0, %v556
        %v695 = vsel %vm555, 0.0, %v571
        %v696 = vsel %vm555, 0.0, %v586
        %v697 = vsel %vm555, 0.0, %v601
        %v698 = vsel %vm555, 0.0, %v616
        %v699 = vsel %vm555, 0.0, %v631
        %vm700 = vcmask 1046528
        %v701 = vrot.slane %v447, 1
        %v702 = vrot.slane %v448, 1
        %v703 = vsel %vm700, %v701, %v702
        %v704 = vrot.slane %v449, 1
        %v705 = vsel %vm700, %v702, %v704
        %v706 = vrot.slane %v450, 1
        %v707 = vsel %vm700, %v704, %v706
        %v708 = vrot.slane %v451, 1
        %v709 = vsel %vm700, %v706, %v708
        %v710 = vrot.slane %v452, 1
        %v711 = vsel %vm700, %v708, %v710
        %v712 = vrot.slane %v453, 1
        %v713 = vsel %vm700, %v710, %v712
        %v714 = vrot.slane %v454, 1
        %v715 = vsel %vm700, %v712, %v714
        %v716 = vrot.slane %v475, 1
        %v717 = vrot.slane %v476, 1
        %v718 = vsel %vm700, %v716, %v717
        %v719 = vrot.slane %v477, 1
        %v720 = vsel %vm700, %v717, %v719
        %v721 = vrot.slane %v478, 1
        %v722 = vsel %vm700, %v719, %v721
        %v723 = vrot.slane %v479, 1
        %v724 = vsel %vm700, %v721, %v723
        %v725 = vrot.slane %v480, 1
        %v726 = vsel %vm700, %v723, %v725
        %v727 = vrot.slane %v481, 1
        %v728 = vsel %vm700, %v725, %v727
        %v729 = vrot.slane %v482, 1
        %v730 = vsel %vm700, %v727, %v729
        %v731 = vrot.slane %v483, 1
        %v732 = vrot.slane %v484, 1
        %v733 = vsel %vm700, %v731, %v732
        %v734 = vrot.slane %v485, 1
        %v735 = vsel %vm700, %v732, %v734
        %v736 = vrot.slane %v486, 1
        %v737 = vsel %vm700, %v734, %v736
        %v738 = vrot.slane %v487, 1
        %v739 = vsel %vm700, %v736, %v738
        %v740 = vrot.slane %v488, 1
        %v741 = vsel %vm700, %v738, %v740
        %v742 = vrot.slane %v489, 1
        %v743 = vsel %vm700, %v740, %v742
        %v744 = vrot.slane %v490, 1
        %v745 = vsel %vm700, %v742, %v744
        %v746 = vrot.slane %v491, 1
        %v747 = vrot.slane %v492, 1
        %v748 = vsel %vm700, %v746, %v747
        %v749 = vrot.slane %v493, 1
        %v750 = vsel %vm700, %v747, %v749
        %v751 = vrot.slane %v494, 1
        %v752 = vsel %vm700, %v749, %v751
        %v753 = vrot.slane %v495, 1
        %v754 = vsel %vm700, %v751, %v753
        %v755 = vrot.slane %v496, 1
        %v756 = vsel %vm700, %v753, %v755
        %v757 = vrot.slane %v497, 1
        %v758 = vsel %vm700, %v755, %v757
        %v759 = vrot.slane %v498, 1
        %v760 = vsel %vm700, %v757, %v759
        %v761 = vrot.slane %v499, 1
        %v762 = vrot.slane %v500, 1
        %v763 = vsel %vm700, %v761, %v762
        %v764 = vrot.slane %v501, 1
        %v765 = vsel %vm700, %v762, %v764
        %v766 = vrot.slane %v502, 1
        %v767 = vsel %vm700, %v764, %v766
        %v768 = vrot.slane %v503, 1
        %v769 = vsel %vm700, %v766, %v768
        %v770 = vrot.slane %v504, 1
        %v771 = vsel %vm700, %v768, %v770
        %v772 = vrot.slane %v505, 1
        %v773 = vsel %vm700, %v770, %v772
        %v774 = vrot.slane %v506, 1
        %v775 = vsel %vm700, %v772, %v774
        %v776 = vrot.slane %v467, 1
        %v777 = vrot.slane %v468, 1
        %v778 = vsel %vm700, %v776, %v777
        %v779 = vrot.slane %v469, 1
        %v780 = vsel %vm700, %v777, %v779
        %v781 = vrot.slane %v470, 1
        %v782 = vsel %vm700, %v779, %v781
        %v783 = vrot.slane %v471, 1
        %v784 = vsel %vm700, %v781, %v783
        %v785 = vrot.slane %v472, 1
        %v786 = vsel %vm700, %v783, %v785
        %v787 = vrot.slane %v473, 1
        %v788 = vsel %vm700, %v785, %v787
        %v789 = vrot.slane %v474, 1
        %v790 = vsel %vm700, %v787, %v789
        %v797 = vsel %vm700, %v714, 0.0
        %v798 = vsel %vm700, %v729, 0.0
        %v799 = vsel %vm700, %v744, 0.0
        %v800 = vsel %vm700, %v759, 0.0
        %v801 = vsel %vm700, %v774, 0.0
        %v802 = vsel %vm700, %v789, 0.0
        %803 = vrot.lane.b32.xlu0 %v447, 16
        %v804 = vpop.permute.xlu0 %803
        %805 = vrot.lane.b32.xlu0 %v448, 16
        %v806 = vpop.permute.xlu0 %805
        %807 = vrot.lane.b32.xlu0 %v449, 16
        %v808 = vpop.permute.xlu0 %807
        %809 = vrot.lane.b32.xlu0 %v450, 16
        %v810 = vpop.permute.xlu0 %809
        %811 = vrot.lane.b32.xlu0 %v451, 16
        %v812 = vpop.permute.xlu0 %811
        %813 = vrot.lane.b32.xlu0 %v452, 16
        %v814 = vpop.permute.xlu0 %813
        %815 = vrot.lane.b32.xlu0 %v453, 16
        %v816 = vpop.permute.xlu0 %815
        %817 = vrot.lane.b32.xlu0 %v454, 16
        %v818 = vpop.permute.xlu0 %817
        %819 = vrot.lane.b32.xlu0 %v475, 16
        %v820 = vpop.permute.xlu0 %819
        %821 = vrot.lane.b32.xlu0 %v476, 16
        %v822 = vpop.permute.xlu0 %821
        %823 = vrot.lane.b32.xlu0 %v477, 16
        %v824 = vpop.permute.xlu0 %823
        %825 = vrot.lane.b32.xlu0 %v478, 16
        %v826 = vpop.permute.xlu0 %825
        %827 = vrot.lane.b32.xlu0 %v479, 16
        %v828 = vpop.permute.xlu0 %827
        %829 = vrot.lane.b32.xlu0 %v480, 16
        %v830 = vpop.permute.xlu0 %829
        %831 = vrot.lane.b32.xlu0 %v481, 16
        %v832 = vpop.permute.xlu0 %831
        %833 = vrot.lane.b32.xlu0 %v482, 16
        %v834 = vpop.permute.xlu0 %833
        %835 = vrot.lane.b32.xlu0 %v483, 16
        %v836 = vpop.permute.xlu0 %835
        %837 = vrot.lane.b32.xlu0 %v484, 16
        %v838 = vpop.permute.xlu0 %837
        %839 = vrot.lane.b32.xlu0 %v485, 16
        %v840 = vpop.permute.xlu0 %839
        %841 = vrot.lane.b32.xlu0 %v486, 16
        %v842 = vpop.permute.xlu0 %841
        %843 = vrot.lane.b32.xlu0 %v487, 16
        %v844 = vpop.permute.xlu0 %843
        %845 = vrot.lane.b32.xlu0 %v488, 16
        %v846 = vpop.permute.xlu0 %845
        %847 = vrot.lane.b32.xlu0 %v489, 16
        %v848 = vpop.permute.xlu0 %847
        %849 = vrot.lane.b32.xlu0 %v490, 16
        %v850 = vpop.permute.xlu0 %849
        %851 = vrot.lane.b32.xlu0 %v491, 16
        %v852 = vpop.permute.xlu0 %851
        %853 = vrot.lane.b32.xlu0 %v492, 16
        %v854 = vpop.permute.xlu0 %853
        %855 = vrot.lane.b32.xlu0 %v493, 16
        %v856 = vpop.permute.xlu0 %855
        %857 = vrot.lane.b32.xlu0 %v494, 16
        %v858 = vpop.permute.xlu0 %857
        %859 = vrot.lane.b32.xlu0 %v495, 16
        %v860 = vpop.permute.xlu0 %859
        %861 = vrot.lane.b32.xlu0 %v496, 16
        %v862 = vpop.permute.xlu0 %861
        %863 = vrot.lane.b32.xlu0 %v497, 16
        %v864 = vpop.permute.xlu0 %863
        %865 = vrot.lane.b32.xlu0 %v498, 16
        %v866 = vpop.permute.xlu0 %865
        %867 = vrot.lane.b32.xlu0 %v499, 16
        %v868 = vpop.permute.xlu0 %867
        %869 = vrot.lane.b32.xlu0 %v500, 16
        %v870 = vpop.permute.xlu0 %869
        %871 = vrot.lane.b32.xlu0 %v501, 16
        %v872 = vpop.permute.xlu0 %871
        %873 = vrot.lane.b32.xlu0 %v502, 16
        %v874 = vpop.permute.xlu0 %873
        %875 = vrot.lane.b32.xlu0 %v503, 16
        %v876 = vpop.permute.xlu0 %875
        %877 = vrot.lane.b32.xlu0 %v504, 16
        %v878 = vpop.permute.xlu0 %877
        %879 = vrot.lane.b32.xlu0 %v505, 16
        %v880 = vpop.permute.xlu0 %879
        %881 = vrot.lane.b32.xlu0 %v506, 16
        %v882 = vpop.permute.xlu0 %881
        %883 = vrot.lane.b32.xlu0 %v467, 16
        %v884 = vpop.permute.xlu0 %883
        %885 = vrot.lane.b32.xlu0 %v468, 16
        %v886 = vpop.permute.xlu0 %885
        %887 = vrot.lane.b32.xlu0 %v469, 16
        %v888 = vpop.permute.xlu0 %887
        %889 = vrot.lane.b32.xlu0 %v470, 16
        %v890 = vpop.permute.xlu0 %889
        %891 = vrot.lane.b32.xlu0 %v471, 16
        %v892 = vpop.permute.xlu0 %891
        %893 = vrot.lane.b32.xlu0 %v472, 16
        %v894 = vpop.permute.xlu0 %893
        %895 = vrot.lane.b32.xlu0 %v473, 16
        %v896 = vpop.permute.xlu0 %895
        %897 = vrot.lane.b32.xlu0 %v474, 16
        %v898 = vpop.permute.xlu0 %897
        %953 = vrot.lane.b32.xlu0 %v703, 32
        %v954 = vpop.permute.xlu0 %953
        %955 = vrot.lane.b32.xlu0 %v705, 32
        %v956 = vpop.permute.xlu0 %955
        %957 = vrot.lane.b32.xlu0 %v707, 32
        %v958 = vpop.permute.xlu0 %957
        %959 = vrot.lane.b32.xlu0 %v709, 32
        %v960 = vpop.permute.xlu0 %959
        %961 = vrot.lane.b32.xlu0 %v711, 32
        %v962 = vpop.permute.xlu0 %961
        %963 = vrot.lane.b32.xlu0 %v713, 32
        %v964 = vpop.permute.xlu0 %963
        %965 = vrot.lane.b32.xlu0 %v715, 32
        %v966 = vpop.permute.xlu0 %965
        %967 = vrot.lane.b32.xlu0 %v797, 32
        %v968 = vpop.permute.xlu0 %967
        %969 = vrot.lane.b32.xlu0 %v718, 32
        %v970 = vpop.permute.xlu0 %969
        %971 = vrot.lane.b32.xlu0 %v720, 32
        %v972 = vpop.permute.xlu0 %971
        %973 = vrot.lane.b32.xlu0 %v722, 32
        %v974 = vpop.permute.xlu0 %973
        %975 = vrot.lane.b32.xlu0 %v724, 32
        %v976 = vpop.permute.xlu0 %975
        %977 = vrot.lane.b32.xlu0 %v726, 32
        %v978 = vpop.permute.xlu0 %977
        %979 = vrot.lane.b32.xlu0 %v728, 32
        %v980 = vpop.permute.xlu0 %979
        %981 = vrot.lane.b32.xlu0 %v730, 32
        %v982 = vpop.permute.xlu0 %981
        %983 = vrot.lane.b32.xlu0 %v798, 32
        %v984 = vpop.permute.xlu0 %983
        %985 = vrot.lane.b32.xlu0 %v733, 32
        %v986 = vpop.permute.xlu0 %985
        %987 = vrot.lane.b32.xlu0 %v735, 32
        %v988 = vpop.permute.xlu0 %987
        %989 = vrot.lane.b32.xlu0 %v737, 32
        %v990 = vpop.permute.xlu0 %989
        %991 = vrot.lane.b32.xlu0 %v739, 32
        %v992 = vpop.permute.xlu0 %991
        %993 = vrot.lane.b32.xlu0 %v741, 32
        %v994 = vpop.permute.xlu0 %993
        %995 = vrot.lane.b32.xlu0 %v743, 32
        %v996 = vpop.permute.xlu0 %995
        %997 = vrot.lane.b32.xlu0 %v745, 32
        %v998 = vpop.permute.xlu0 %997
        %999 = vrot.lane.b32.xlu0 %v799, 32
        %v1000 = vpop.permute.xlu0 %999
        %1001 = vrot.lane.b32.xlu0 %v748, 32
        %v1002 = vpop.permute.xlu0 %1001
        %1003 = vrot.lane.b32.xlu0 %v750, 32
        %v1004 = vpop.permute.xlu0 %1003
        %1005 = vrot.lane.b32.xlu0 %v752, 32
        %v1006 = vpop.permute.xlu0 %1005
        %1007 = vrot.lane.b32.xlu0 %v754, 32
        %v1008 = vpop.permute.xlu0 %1007
        %1009 = vrot.lane.b32.xlu0 %v756, 32
        %v1010 = vpop.permute.xlu0 %1009
        %1011 = vrot.lane.b32.xlu0 %v758, 32
        %v1012 = vpop.permute.xlu0 %1011
        %1013 = vrot.lane.b32.xlu0 %v760, 32
        %v1014 = vpop.permute.xlu0 %1013
        %1015 = vrot.lane.b32.xlu0 %v800, 32
        %v1016 = vpop.permute.xlu0 %1015
        %1017 = vrot.lane.b32.xlu0 %v763, 32
        %v1018 = vpop.permute.xlu0 %1017
        %1019 = vrot.lane.b32.xlu0 %v765, 32
        %v1020 = vpop.permute.xlu0 %1019
        %1021 = vrot.lane.b32.xlu0 %v767, 32
        %v1022 = vpop.permute.xlu0 %1021
        %1023 = vrot.lane.b32.xlu0 %v769, 32
        %v1024 = vpop.permute.xlu0 %1023
        %1025 = vrot.lane.b32.xlu0 %v771, 32
        %v1026 = vpop.permute.xlu0 %1025
        %1027 = vrot.lane.b32.xlu0 %v773, 32
        %v1028 = vpop.permute.xlu0 %1027
        %1029 = vrot.lane.b32.xlu0 %v775, 32
        %v1030 = vpop.permute.xlu0 %1029
        %1031 = vrot.lane.b32.xlu0 %v801, 32
        %v1032 = vpop.permute.xlu0 %1031
        %1033 = vrot.lane.b32.xlu0 %v778, 32
        %v1034 = vpop.permute.xlu0 %1033
        %1035 = vrot.lane.b32.xlu0 %v780, 32
        %v1036 = vpop.permute.xlu0 %1035
        %1037 = vrot.lane.b32.xlu0 %v782, 32
        %v1038 = vpop.permute.xlu0 %1037
        %1039 = vrot.lane.b32.xlu0 %v784, 32
        %v1040 = vpop.permute.xlu0 %1039
        %1041 = vrot.lane.b32.xlu0 %v786, 32
        %v1042 = vpop.permute.xlu0 %1041
        %1043 = vrot.lane.b32.xlu0 %v788, 32
        %v1044 = vpop.permute.xlu0 %1043
        %1045 = vrot.lane.b32.xlu0 %v790, 32
        %v1046 = vpop.permute.xlu0 %1045
        %1047 = vrot.lane.b32.xlu0 %v802, 32
        %v1048 = vpop.permute.xlu0 %1047
        %vm1097 = vcmask 130048
        %v1098 = vsel %vm1097, %v694, %v804
        %v1099 = vsel %vm1097, %v558, %v806
        %v1100 = vsel %vm1097, %v560, %v808
        %v1101 = vsel %vm1097, %v562, %v810
        %v1102 = vsel %vm1097, %v564, %v812
        %v1103 = vsel %vm1097, %v566, %v814
        %v1104 = vsel %vm1097, %v568, %v816
        %v1105 = vsel %vm1097, %v570, %v818
        %v1106 = vsel %vm1097, %v695, %v820
        %v1107 = vsel %vm1097, %v573, %v822
        %v1108 = vsel %vm1097, %v575, %v824
        %v1109 = vsel %vm1097, %v577, %v826
        %v1110 = vsel %vm1097, %v579, %v828
        %v1111 = vsel %vm1097, %v581, %v830
        %v1112 = vsel %vm1097, %v583, %v832
        %v1113 = vsel %vm1097, %v585, %v834
        %v1114 = vsel %vm1097, %v696, %v836
        %v1115 = vsel %vm1097, %v588, %v838
        %v1116 = vsel %vm1097, %v590, %v840
        %v1117 = vsel %vm1097, %v592, %v842
        %v1118 = vsel %vm1097, %v594, %v844
        %v1119 = vsel %vm1097, %v596, %v846
        %v1120 = vsel %vm1097, %v598, %v848
        %v1121 = vsel %vm1097, %v600, %v850
        %v1122 = vsel %vm1097, %v697, %v852
        %v1123 = vsel %vm1097, %v603, %v854
        %v1124 = vsel %vm1097, %v605, %v856
        %v1125 = vsel %vm1097, %v607, %v858
        %v1126 = vsel %vm1097, %v609, %v860
        %v1127 = vsel %vm1097, %v611, %v862
        %v1128 = vsel %vm1097, %v613, %v864
        %v1129 = vsel %vm1097, %v615, %v866
        %v1130 = vsel %vm1097, %v698, %v868
        %v1131 = vsel %vm1097, %v618, %v870
        %v1132 = vsel %vm1097, %v620, %v872
        %v1133 = vsel %vm1097, %v622, %v874
        %v1134 = vsel %vm1097, %v624, %v876
        %v1135 = vsel %vm1097, %v626, %v878
        %v1136 = vsel %vm1097, %v628, %v880
        %v1137 = vsel %vm1097, %v630, %v882
        %v1138 = vsel %vm1097, %v699, %v884
        %v1139 = vsel %vm1097, %v633, %v886
        %v1140 = vsel %vm1097, %v635, %v888
        %v1141 = vsel %vm1097, %v637, %v890
        %v1142 = vsel %vm1097, %v639, %v892
        %v1143 = vsel %vm1097, %v641, %v894
        %v1144 = vsel %vm1097, %v643, %v896
        %v1145 = vsel %vm1097, %v645, %v898
        %vm1146 = vcmask 261120
        %v1147 = vsel %vm1146, %v1098, %v954
        %v1148 = vsel %vm1146, %v1099, %v956
        %v1149 = vsel %vm1146, %v1100, %v958
        %v1150 = vsel %vm1146, %v1101, %v960
        %v1151 = vsel %vm1146, %v1102, %v962
        %v1152 = vsel %vm1146, %v1103, %v964
        %v1153 = vsel %vm1146, %v1104, %v966
        %v1154 = vsel %vm1146, %v1105, %v968
        %v1155 = vsel %vm1146, %v1106, %v970
        %v1156 = vsel %vm1146, %v1107, %v972
        %v1157 = vsel %vm1146, %v1108, %v974
        %v1158 = vsel %vm1146, %v1109, %v976
        %v1159 = vsel %vm1146, %v1110, %v978
        %v1160 = vsel %vm1146, %v1111, %v980
        %v1161 = vsel %vm1146, %v1112, %v982
        %v1162 = vsel %vm1146, %v1113, %v984
        %v1163 = vsel %vm1146, %v1114, %v986
        %v1164 = vsel %vm1146, %v1115, %v988
        %v1165 = vsel %vm1146, %v1116, %v990
        %v1166 = vsel %vm1146, %v1117, %v992
        %v1167 = vsel %vm1146, %v1118, %v994
        %v1168 = vsel %vm1146, %v1119, %v996
        %v1169 = vsel %vm1146, %v1120, %v998
        %v1170 = vsel %vm1146, %v1121, %v1000
        %v1171 = vsel %vm1146, %v1122, %v1002
        %v1172 = vsel %vm1146, %v1123, %v1004
        %v1173 = vsel %vm1146, %v1124, %v1006
        %v1174 = vsel %vm1146, %v1125, %v1008
        %v1175 = vsel %vm1146, %v1126, %v1010
        %v1176 = vsel %vm1146, %v1127, %v1012
        %v1177 = vsel %vm1146, %v1128, %v1014
        %v1178 = vsel %vm1146, %v1129, %v1016
        %v1179 = vsel %vm1146, %v1130, %v1018
        %v1180 = vsel %vm1146, %v1131, %v1020
        %v1181 = vsel %vm1146, %v1132, %v1022
        %v1182 = vsel %vm1146, %v1133, %v1024
        %v1183 = vsel %vm1146, %v1134, %v1026
        %v1184 = vsel %vm1146, %v1135, %v1028
        %v1185 = vsel %vm1146, %v1136, %v1030
        %v1186 = vsel %vm1146, %v1137, %v1032
        %v1187 = vsel %vm1146, %v1138, %v1034
        %v1188 = vsel %vm1146, %v1139, %v1036
        %v1189 = vsel %vm1146, %v1140, %v1038
        %v1190 = vsel %vm1146, %v1141, %v1040
        %v1191 = vsel %vm1146, %v1142, %v1042
        %v1192 = vsel %vm1146, %v1143, %v1044
        %v1193 = vsel %vm1146, %v1144, %v1046
        %v1194 = vsel %vm1146, %v1145, %v1048
        %v1195 = vld [vmem:[%s3] sm:$0xff]
        %v1196 = vld [vmem:[%s3 + $0x8] sm:$0xff]
        %v1197 = vld [vmem:[%s3 + $0x10] sm:$0xff]
        %v1198 = vld [vmem:[%s3 + $0x18] sm:$0xff]
        %v1199 = vld [vmem:[%s3 + $0x20] sm:$0xff]
        %v1200 = vld [vmem:[%s3 + $0x28] sm:$0xff]
        %s1201 = scalar_lea.vmem %s3, 48
        %v1202 = vld [vmem:[%s1201] sm:$0xff]
        %v1203 = vld [vmem:[%s1201 + $0x8] sm:$0xff]
        %v1204 = vld [vmem:[%s1201 + $0x10] sm:$0xff]
        %v1205 = vld [vmem:[%s1201 + $0x18] sm:$0xff]
        %v1206 = vld [vmem:[%s1201 + $0x20] sm:$0xff]
        %v1207 = vld [vmem:[%s1201 + $0x28] sm:$0xff]
        %vm1208 = vcmask 392192
        %v1210 = vsel %vm1208, %v1147, 0
        %v1213 = vsel %vm1208, %v1148, 0
        %v1216 = vsel %vm1208, %v1149, 0
        %v1219 = vsel %vm1208, %v1150, 0
        %v1222 = vsel %vm1208, %v1151, 0
        %v1225 = vsel %vm1208, %v1152, 0
        %v1228 = vsel %vm1208, %v1153, 0
        %v1231 = vsel %vm1208, %v1154, 0
        %v1234 = vsel %vm1208, %v1155, 0
        %v1237 = vsel %vm1208, %v1156, 0
        %v1240 = vsel %vm1208, %v1157, 0
        %v1243 = vsel %vm1208, %v1158, 0
        %v1246 = vsel %vm1208, %v1159, 0
        %v1249 = vsel %vm1208, %v1160, 0
        %v1252 = vsel %vm1208, %v1161, 0
        %v1255 = vsel %vm1208, %v1162, 0
        %v1258 = vsel %vm1208, %v1163, 0
        %v1261 = vsel %vm1208, %v1164, 0
        %v1264 = vsel %vm1208, %v1165, 0
        %v1267 = vsel %vm1208, %v1166, 0
        %v1270 = vsel %vm1208, %v1167, 0
        %v1273 = vsel %vm1208, %v1168, 0
        %v1276 = vsel %vm1208, %v1169, 0
        %v1279 = vsel %vm1208, %v1170, 0
        %v1282 = vsel %vm1208, %v1171, 0
        %v1285 = vsel %vm1208, %v1172, 0
        %v1288 = vsel %vm1208, %v1173, 0
        %v1291 = vsel %vm1208, %v1174, 0
        %v1294 = vsel %vm1208, %v1175, 0
        %v1297 = vsel %vm1208, %v1176, 0
        %v1300 = vsel %vm1208, %v1177, 0
        %v1303 = vsel %vm1208, %v1178, 0
        %1305 = vmatprep.subr.mxu0 0.0
        %1306 = vmatpush1.msra.mxu0 %v1202
        %1307 = vmatprep.subr.mxu0 0.0
        %1308 = vmatpush1.msra.mxu0 %v1203
        %1309 = vmatprep.subr.mxu0 0.0
        %1310 = vmatpush1.msra.mxu0 %v1204
        %1311 = vmatprep.subr.mxu0 0.0
        %1312 = vmatpush1.msra.mxu0 %v1205
        %1313 = vmatprep.subr.mxu0 0.0
        %1314 = vmatpush1.msra.mxu0 %v1206
        %1315 = vmatprep.subr.mxu0 0.0
        %1316 = vmatpush1.msra.mxu0 %v1207
        %1317 = vmatprep.subr.mxu0 0.0
        %1318 = vmatpush1.msra.mxu0 0.0
        %1319 = vmatprep.subr.mxu0 0.0
        %1320 = vmatpush1.msra.mxu0 0.0
        %1321 = vmatprep.subr.mxu0 0.0
        %1322 = vmatpush1.msra.mxu0 0.0
        %1323 = vmatprep.subr.mxu0 0.0
        %1324 = vmatpush1.msra.mxu0 0.0
        %1325 = vmatprep.subr.mxu0 0.0
        %1326 = vmatpush1.msra.mxu0 0.0
        %1327 = vmatprep.subr.mxu0 0.0
        %1328 = vmatpush1.msra.mxu0 0.0
        %1329 = vmatprep.subr.mxu0 0.0
        %1330 = vmatpush1.msra.mxu0 0.0
        %1331 = vmatprep.subr.mxu0 0.0
        %1332 = vmatpush1.msra.mxu0 0.0
        %1333 = vmatprep.subr.mxu0 0.0
        %1334 = vmatpush1.msra.mxu0 0.0
        %1335 = vmatprep.subr.mxu0 0.0
        %1336 = vmatpush1.msra.mxu0 0.0
        %1337 = vmatprep.subr.mxu0 0.0
        %1338 = vmatpush1.msra.mxu0 0.0
        %1339 = vmatprep.subr.mxu0 0.0
        %1340 = vmatpush1.msra.mxu0 0.0
        %1341 = vmatprep.subr.mxu0 0.0
        %1342 = vmatpush1.msra.mxu0 0.0
        %1343 = vmatprep.subr.mxu0 0.0
        %1344 = vmatpush1.msra.mxu0 0.0
        %1345 = vmatprep.subr.mxu0 0.0
        %1346 = vmatpush1.msra.mxu0 0.0
        %1347 = vmatprep.subr.mxu0 0.0
        %1348 = vmatpush1.msra.mxu0 0.0
        %1349 = vmatprep.subr.mxu0 0.0
        %1350 = vmatpush1.msra.mxu0 0.0
        %1351 = vmatprep.subr.mxu0 0.0
        %1352 = vmatpush1.msra.mxu0 0.0
        %1353 = vmatprep.subr.mxu0 0.0
        %1354 = vmatpush1.msra.mxu0 0.0
        %1355 = vmatprep.subr.mxu0 0.0
        %1356 = vmatpush1.msra.mxu0 0.0
        %1357 = vmatprep.subr.mxu0 0.0
        %1358 = vmatpush1.msra.mxu0 0.0
        %1359 = vmatprep.subr.mxu0 0.0
        %1360 = vmatpush1.msra.mxu0 0.0
        %1361 = vmatprep.subr.mxu0 0.0
        %1362 = vmatpush1.msra.mxu0 0.0
        %1363 = vmatprep.subr.mxu0 0.0
        %1364 = vmatpush1.msra.mxu0 0.0
        %1365 = vmatprep.subr.mxu0 0.0
        %1366 = vmatpush1.msra.mxu0 0.0
        %1367 = vmatprep.subr.mxu0 0.0
        %1368 = vmatpush1.msra.mxu0 0.0
        %1369 = vmatprep.mubr.f32.mxu0 0.0
        %1370 = vmatmul.mubr.f32.gmra.mrb[0].mxu0 %v1210
        %v1371 = vpop.f32.mrb[0].mxu0
        %v1372 = vadd.f32 0.0, %v1371
        %v1373 = vpop.f32.mrb[0].mxu0
        %1374 = vmatprep.mubr.f32.mxu0 0.0
        %1375 = vmatmul.mubr.f32.gmra.mrb[0].mxu0 %v1213
        %v1376 = vpop.f32.mrb[0].mxu0
        %v1377 = vadd.f32 0.0, %v1376
        %v1378 = vpop.f32.mrb[0].mxu0
        %1379 = vmatprep.mubr.f32.mxu0 0.0
        %1380 = vmatmul.mubr.f32.gmra.mrb[0].mxu0 %v1216
        %v1381 = vpop.f32.mrb[0].mxu0
        %v1382 = vadd.f32 0.0, %v1381
        %v1383 = vpop.f32.mrb[0].mxu0
        %1384 = vmatprep.mubr.f32.mxu0 0.0
        %1385 = vmatmul.mubr.f32.gmra.mrb[0].mxu0 %v1219
        %v1386 = vpop.f32.mrb[0].mxu0
        %v1387 = vadd.f32 0.0, %v1386
        %v1388 = vpop.f32.mrb[0].mxu0
        %1389 = vmatprep.mubr.f32.mxu0 0.0
        %1390 = vmatmul.mubr.f32.gmra.mrb[0].mxu0 %v1222
        %v1391 = vpop.f32.mrb[0].mxu0
        %v1392 = vadd.f32 0.0, %v1391
        %v1393 = vpop.f32.mrb[0].mxu0
        %1394 = vmatprep.mubr.f32.mxu0 0.0
        %1395 = vmatmul.mubr.f32.gmra.mrb[0].mxu0 %v1225
        %v1396 = vpop.f32.mrb[0].mxu0
        %v1397 = vadd.f32 0.0, %v1396
        %v1398 = vpop.f32.mrb[0].mxu0
        %1399 = vmatprep.mubr.f32.mxu0 0.0
        %1400 = vmatmul.mubr.f32.gmra.mrb[0].mxu0 %v1228
        %v1401 = vpop.f32.mrb[0].mxu0
        %v1402 = vadd.f32 0.0, %v1401
        %v1403 = vpop.f32.mrb[0].mxu0
        %1404 = vmatprep.mubr.f32.mxu0 0.0
        %1405 = vmatmul.mubr.f32.gmra.mrb[0].mxu0 %v1231
        %v1406 = vpop.f32.mrb[0].mxu0
        %v1407 = vadd.f32 0.0, %v1406
        %v1408 = vpop.f32.mrb[0].mxu0
        %1409 = vmatprep.mubr.f32.mxu0 0.0
        %1410 = vmatmul.mubr.f32.gmra.mrb[0].mxu0 %v1234
        %v1411 = vpop.f32.mrb[0].mxu0
        %v1412 = vadd.f32 0.0, %v1411
        %v1413 = vpop.f32.mrb[0].mxu0
        %1414 = vmatprep.mubr.f32.mxu0 0.0
        %1415 = vmatmul.mubr.f32.gmra.mrb[0].mxu0 %v1237
        %v1416 = vpop.f32.mrb[0].mxu0
        %v1417 = vadd.f32 0.0, %v1416
        %v1418 = vpop.f32.mrb[0].mxu0
        %1419 = vmatprep.mubr.f32.mxu0 0.0
        %1420 = vmatmul.mubr.f32.gmra.mrb[0].mxu0 %v1240
        %v1421 = vpop.f32.mrb[0].mxu0
        %v1422 = vadd.f32 0.0, %v1421
        %v1423 = vpop.f32.mrb[0].mxu0
        %1424 = vmatprep.mubr.f32.mxu0 0.0
        %1425 = vmatmul.mubr.f32.gmra.mrb[0].mxu0 %v1243
        %v1426 = vpop.f32.mrb[0].mxu0
        %v1427 = vadd.f32 0.0, %v1426
        %v1428 = vpop.f32.mrb[0].mxu0
        %1429 = vmatprep.mubr.f32.mxu0 0.0
        %1430 = vmatmul.mubr.f32.gmra.mrb[0].mxu0 %v1246
        %v1431 = vpop.f32.mrb[0].mxu0
        %v1432 = vadd.f32 0.0, %v1431
        %v1433 = vpop.f32.mrb[0].mxu0
        %1434 = vmatprep.mubr.f32.mxu0 0.0
        %1435 = vmatmul.mubr.f32.gmra.mrb[0].mxu0 %v1249
        %v1436 = vpop.f32.mrb[0].mxu0
        %v1437 = vadd.f32 0.0, %v1436
        %v1438 = vpop.f32.mrb[0].mxu0
        %1439 = vmatprep.mubr.f32.mxu0 0.0
        %1440 = vmatmul.mubr.f32.gmra.mrb[0].mxu0 %v1252
        %v1441 = vpop.f32.mrb[0].mxu0
        %v1442 = vadd.f32 0.0, %v1441
        %v1443 = vpop.f32.mrb[0].mxu0
        %1444 = vmatprep.mubr.f32.mxu0 0.0
        %1445 = vmatmul.mubr.f32.gmra.mrb[0].mxu0 %v1255
        %v1446 = vpop.f32.mrb[0].mxu0
        %v1447 = vadd.f32 0.0, %v1446
        %v1448 = vpop.f32.mrb[0].mxu0
        %1449 = vmatprep.mubr.f32.mxu0 0.0
        %1450 = vmatmul.mubr.f32.gmra.mrb[0].mxu0 %v1258
        %v1451 = vpop.f32.mrb[0].mxu0
        %v1452 = vadd.f32 0.0, %v1451
        %v1453 = vpop.f32.mrb[0].mxu0
        %1454 = vmatprep.mubr.f32.mxu0 0.0
        %1455 = vmatmul.mubr.f32.gmra.mrb[0].mxu0 %v1261
        %v1456 = vpop.f32.mrb[0].mxu0
        %v1457 = vadd.f32 0.0, %v1456
        %v1458 = vpop.f32.mrb[0].mxu0
        %1459 = vmatprep.mubr.f32.mxu0 0.0
        %1460 = vmatmul.mubr.f32.gmra.mrb[0].mxu0 %v1264
        %v1461 = vpop.f32.mrb[0].mxu0
        %v1462 = vadd.f32 0.0, %v1461
        %v1463 = vpop.f32.mrb[0].mxu0
        %1464 = vmatprep.mubr.f32.mxu0 0.0
        %1465 = vmatmul.mubr.f32.gmra.mrb[0].mxu0 %v1267
        %v1466 = vpop.f32.mrb[0].mxu0
        %v1467 = vadd.f32 0.0, %v1466
        %v1468 = vpop.f32.mrb[0].mxu0
        %1469 = vmatprep.mubr.f32.mxu0 0.0
        %1470 = vmatmul.mubr.f32.gmra.mrb[0].mxu0 %v1270
        %v1471 = vpop.f32.mrb[0].mxu0
        %v1472 = vadd.f32 0.0, %v1471
        %v1473 = vpop.f32.mrb[0].mxu0
        %1474 = vmatprep.mubr.f32.mxu0 0.0
        %1475 = vmatmul.mubr.f32.gmra.mrb[0].mxu0 %v1273
        %v1476 = vpop.f32.mrb[0].mxu0
        %v1477 = vadd.f32 0.0, %v1476
        %v1478 = vpop.f32.mrb[0].mxu0
        %1479 = vmatprep.mubr.f32.mxu0 0.0
        %1480 = vmatmul.mubr.f32.gmra.mrb[0].mxu0 %v1276
        %v1481 = vpop.f32.mrb[0].mxu0
        %v1482 = vadd.f32 0.0, %v1481
        %v1483 = vpop.f32.mrb[0].mxu0
        %1484 = vmatprep.mubr.f32.mxu0 0.0
        %1485 = vmatmul.mubr.f32.gmra.mrb[0].mxu0 %v1279
        %v1486 = vpop.f32.mrb[0].mxu0
        %v1487 = vadd.f32 0.0, %v1486
        %v1488 = vpop.f32.mrb[0].mxu0
        %1489 = vmatprep.mubr.f32.mxu0 0.0
        %1490 = vmatmul.mubr.f32.gmra.mrb[0].mxu0 %v1282
        %v1491 = vpop.f32.mrb[0].mxu0
        %v1492 = vadd.f32 0.0, %v1491
        %v1493 = vpop.f32.mrb[0].mxu0
        %1494 = vmatprep.mubr.f32.mxu0 0.0
        %1495 = vmatmul.mubr.f32.gmra.mrb[0].mxu0 %v1285
        %v1496 = vpop.f32.mrb[0].mxu0
        %v1497 = vadd.f32 0.0, %v1496
        %v1498 = vpop.f32.mrb[0].mxu0
        %1499 = vmatprep.mubr.f32.mxu0 0.0
        %1500 = vmatmul.mubr.f32.gmra.mrb[0].mxu0 %v1288
        %v1501 = vpop.f32.mrb[0].mxu0
        %v1502 = vadd.f32 0.0, %v1501
        %v1503 = vpop.f32.mrb[0].mxu0
        %1504 = vmatprep.mubr.f32.mxu0 0.0
        %1505 = vmatmul.mubr.f32.gmra.mrb[0].mxu0 %v1291
        %v1506 = vpop.f32.mrb[0].mxu0
        %v1507 = vadd.f32 0.0, %v1506
        %v1508 = vpop.f32.mrb[0].mxu0
        %1509 = vmatprep.mubr.f32.mxu0 0.0
        %1510 = vmatmul.mubr.f32.gmra.mrb[0].mxu0 %v1294
        %v1511 = vpop.f32.mrb[0].mxu0
        %v1512 = vadd.f32 0.0, %v1511
        %v1513 = vpop.f32.mrb[0].mxu0
        %1514 = vmatprep.mubr.f32.mxu0 0.0
        %1515 = vmatmul.mubr.f32.gmra.mrb[0].mxu0 %v1297
        %v1516 = vpop.f32.mrb[0].mxu0
        %v1517 = vadd.f32 0.0, %v1516
        %v1518 = vpop.f32.mrb[0].mxu0
        %1519 = vmatprep.mubr.f32.mxu0 0.0
        %1520 = vmatmul.mubr.f32.gmra.mrb[0].mxu0 %v1300
        %v1521 = vpop.f32.mrb[0].mxu0
        %v1522 = vadd.f32 0.0, %v1521
        %v1523 = vpop.f32.mrb[0].mxu0
        %1524 = vmatprep.mubr.f32.mxu0 0.0
        %1525 = vmatmul.mubr.f32.gmra.mrb[0].mxu0 %v1303
        %v1526 = vpop.f32.mrb[0].mxu0
        %v1527 = vadd.f32 0.0, %v1526
        %v1528 = vpop.f32.mrb[0].mxu0
        %1529 = vdwg.mxu0
        %v1531 = vsel %vm1208, %v1179, 0
        %v1534 = vsel %vm1208, %v1180, 0
        %v1537 = vsel %vm1208, %v1181, 0
        %v1540 = vsel %vm1208, %v1182, 0
        %v1543 = vsel %vm1208, %v1183, 0
        %v1546 = vsel %vm1208, %v1184, 0
        %v1549 = vsel %vm1208, %v1185, 0
        %v1552 = vsel %vm1208, %v1186, 0
        %1554 = vmatprep.subr.mxu0 0.0
        %1555 = vmatpush1.msra.mxu0 %v1195
        %1556 = vmatprep.subr.mxu0 0.0
        %1557 = vmatpush1.msra.mxu0 %v1196
        %1558 = vmatprep.subr.mxu0 0.0
        %1559 = vmatpush1.msra.mxu0 %v1197
        %1560 = vmatprep.subr.mxu0 0.0
        %1561 = vmatpush1.msra.mxu0 %v1198
        %1562 = vmatprep.subr.mxu0 0.0
        %1563 = vmatpush1.msra.mxu0 %v1199
        %1564 = vmatprep.subr.mxu0 0.0
        %1565 = vmatpush1.msra.mxu0 %v1200
        %1566 = vmatprep.subr.mxu0 0.0
        %1567 = vmatpush1.msra.mxu0 0.0
        %1568 = vmatprep.subr.mxu0 0.0
        %1569 = vmatpush1.msra.mxu0 0.0
        %1570 = vmatprep.subr.mxu0 0.0
        %1571 = vmatpush1.msra.mxu0 0.0
        %1572 = vmatprep.subr.mxu0 0.0
        %1573 = vmatpush1.msra.mxu0 0.0
        %1574 = vmatprep.subr.mxu0 0.0
        %1575 = vmatpush1.msra.mxu0 0.0
        %1576 = vmatprep.subr.mxu0 0.0
        %1577 = vmatpush1.msra.mxu0 0.0
        %1578 = vmatprep.subr.mxu0 0.0
        %1579 = vmatpush1.msra.mxu0 0.0
        %1580 = vmatprep.subr.mxu0 0.0
        %1581 = vmatpush1.msra.mxu0 0.0
        %1582 = vmatprep.subr.mxu0 0.0
        %1583 = vmatpush1.msra.mxu0 0.0
        %1584 = vmatprep.subr.mxu0 0.0
        %1585 = vmatpush1.msra.mxu0 0.0
        %1586 = vmatprep.subr.mxu0 0.0
        %1587 = vmatpush1.msra.mxu0 0.0
        %1588 = vmatprep.subr.mxu0 0.0
        %1589 = vmatpush1.msra.mxu0 0.0
        %1590 = vmatprep.subr.mxu0 0.0
        %1591 = vmatpush1.msra.mxu0 0.0
        %1592 = vmatprep.subr.mxu0 0.0
        %1593 = vmatpush1.msra.mxu0 0.0
        %1594 = vmatprep.subr.mxu0 0.0
        %1595 = vmatpush1.msra.mxu0 0.0
        %1596 = vmatprep.subr.mxu0 0.0
        %1597 = vmatpush1.msra.mxu0 0.0
        %1598 = vmatprep.subr.mxu0 0.0
        %1599 = vmatpush1.msra.mxu0 0.0
        %1600 = vmatprep.subr.mxu0 0.0
        %1601 = vmatpush1.msra.mxu0 0.0
        %1602 = vmatprep.subr.mxu0 0.0
        %1603 = vmatpush1.msra.mxu0 0.0
        %1604 = vmatprep.subr.mxu0 0.0
        %1605 = vmatpush1.msra.mxu0 0.0
        %1606 = vmatprep.subr.mxu0 0.0
        %1607 = vmatpush1.msra.mxu0 0.0
        %1608 = vmatprep.subr.mxu0 0.0
        %1609 = vmatpush1.msra.mxu0 0.0
        %1610 = vmatprep.subr.mxu0 0.0
        %1611 = vmatpush1.msra.mxu0 0.0
        %1612 = vmatprep.subr.mxu0 0.0
        %1613 = vmatpush1.msra.mxu0 0.0
        %1614 = vmatprep.subr.mxu0 0.0
        %1615 = vmatpush1.msra.mxu0 0.0
        %1616 = vmatprep.subr.mxu0 0.0
        %1617 = vmatpush1.msra.mxu0 0.0
        %1618 = vmatprep.mubr.f32.mxu0 0.0
        %1619 = vmatmul.mubr.f32.gmra.mrb[0].mxu0 %v1234
        %v1620 = vpop.f32.mrb[0].mxu0
        %v1621 = vadd.f32 %v1372, %v1620
        %v1622 = vpop.f32.mrb[0].mxu0
        %1623 = vmatprep.mubr.f32.mxu0 0.0
        %1624 = vmatmul.mubr.f32.gmra.mrb[0].mxu0 %v1237
        %v1625 = vpop.f32.mrb[0].mxu0
        %v1626 = vadd.f32 %v1377, %v1625
        %v1627 = vpop.f32.mrb[0].mxu0
        %1628 = vmatprep.mubr.f32.mxu0 0.0
        %1629 = vmatmul.mubr.f32.gmra.mrb[0].mxu0 %v1240
        %v1630 = vpop.f32.mrb[0].mxu0
        %v1631 = vadd.f32 %v1382, %v1630
        %v1632 = vpop.f32.mrb[0].mxu0
        %1633 = vmatprep.mubr.f32.mxu0 0.0
        %1634 = vmatmul.mubr.f32.gmra.mrb[0].mxu0 %v1243
        %v1635 = vpop.f32.mrb[0].mxu0
        %v1636 = vadd.f32 %v1387, %v1635
        %v1637 = vpop.f32.mrb[0].mxu0
        %1638 = vmatprep.mubr.f32.mxu0 0.0
        %1639 = vmatmul.mubr.f32.gmra.mrb[0].mxu0 %v1246
        %v1640 = vpop.f32.mrb[0].mxu0
        %v1641 = vadd.f32 %v1392, %v1640
        %v1642 = vpop.f32.mrb[0].mxu0
        %1643 = vmatprep.mubr.f32.mxu0 0.0
        %1644 = vmatmul.mubr.f32.gmra.mrb[0].mxu0 %v1249
        %v1645 = vpop.f32.mrb[0].mxu0
        %v1646 = vadd.f32 %v1397, %v1645
        %v1647 = vpop.f32.mrb[0].mxu0
        %1648 = vmatprep.mubr.f32.mxu0 0.0
        %1649 = vmatmul.mubr.f32.gmra.mrb[0].mxu0 %v1252
        %v1650 = vpop.f32.mrb[0].mxu0
        %v1651 = vadd.f32 %v1402, %v1650
        %v1652 = vpop.f32.mrb[0].mxu0
        %1653 = vmatprep.mubr.f32.mxu0 0.0
        %1654 = vmatmul.mubr.f32.gmra.mrb[0].mxu0 %v1255
        %v1655 = vpop.f32.mrb[0].mxu0
        %v1656 = vadd.f32 %v1407, %v1655
        %v1657 = vpop.f32.mrb[0].mxu0
        %1658 = vmatprep.mubr.f32.mxu0 0.0
        %1659 = vmatmul.mubr.f32.gmra.mrb[0].mxu0 %v1258
        %v1660 = vpop.f32.mrb[0].mxu0
        %v1661 = vadd.f32 %v1412, %v1660
        %v1662 = vpop.f32.mrb[0].mxu0
        %1663 = vmatprep.mubr.f32.mxu0 0.0
        %1664 = vmatmul.mubr.f32.gmra.mrb[0].mxu0 %v1261
        %v1665 = vpop.f32.mrb[0].mxu0
        %v1666 = vadd.f32 %v1417, %v1665
        %v1667 = vpop.f32.mrb[0].mxu0
        %1668 = vmatprep.mubr.f32.mxu0 0.0
        %1669 = vmatmul.mubr.f32.gmra.mrb[0].mxu0 %v1264
        %v1670 = vpop.f32.mrb[0].mxu0
        %v1671 = vadd.f32 %v1422, %v1670
        %v1672 = vpop.f32.mrb[0].mxu0
        %1673 = vmatprep.mubr.f32.mxu0 0.0
        %1674 = vmatmul.mubr.f32.gmra.mrb[0].mxu0 %v1267
        %v1675 = vpop.f32.mrb[0].mxu0
        %v1676 = vadd.f32 %v1427, %v1675
        %v1677 = vpop.f32.mrb[0].mxu0
        %1678 = vmatprep.mubr.f32.mxu0 0.0
        %1679 = vmatmul.mubr.f32.gmra.mrb[0].mxu0 %v1270
        %v1680 = vpop.f32.mrb[0].mxu0
        %v1681 = vadd.f32 %v1432, %v1680
        %v1682 = vpop.f32.mrb[0].mxu0
        %1683 = vmatprep.mubr.f32.mxu0 0.0
        %1684 = vmatmul.mubr.f32.gmra.mrb[0].mxu0 %v1273
        %v1685 = vpop.f32.mrb[0].mxu0
        %v1686 = vadd.f32 %v1437, %v1685
        %v1687 = vpop.f32.mrb[0].mxu0
        %1688 = vmatprep.mubr.f32.mxu0 0.0
        %1689 = vmatmul.mubr.f32.gmra.mrb[0].mxu0 %v1276
        %v1690 = vpop.f32.mrb[0].mxu0
        %v1691 = vadd.f32 %v1442, %v1690
        %v1692 = vpop.f32.mrb[0].mxu0
        %1693 = vmatprep.mubr.f32.mxu0 0.0
        %1694 = vmatmul.mubr.f32.gmra.mrb[0].mxu0 %v1279
        %v1695 = vpop.f32.mrb[0].mxu0
        %v1696 = vadd.f32 %v1447, %v1695
        %v1697 = vpop.f32.mrb[0].mxu0
        %1698 = vmatprep.mubr.f32.mxu0 0.0
        %1699 = vmatmul.mubr.f32.gmra.mrb[0].mxu0 %v1282
        %v1700 = vpop.f32.mrb[0].mxu0
        %v1701 = vadd.f32 %v1452, %v1700
        %v1702 = vpop.f32.mrb[0].mxu0
        %1703 = vmatprep.mubr.f32.mxu0 0.0
        %1704 = vmatmul.mubr.f32.gmra.mrb[0].mxu0 %v1285
        %v1705 = vpop.f32.mrb[0].mxu0
        %v1706 = vadd.f32 %v1457, %v1705
        %v1707 = vpop.f32.mrb[0].mxu0
        %1708 = vmatprep.mubr.f32.mxu0 0.0
        %1709 = vmatmul.mubr.f32.gmra.mrb[0].mxu0 %v1288
        %v1710 = vpop.f32.mrb[0].mxu0
        %v1711 = vadd.f32 %v1462, %v1710
        %v1712 = vpop.f32.mrb[0].mxu0
        %1713 = vmatprep.mubr.f32.mxu0 0.0
        %1714 = vmatmul.mubr.f32.gmra.mrb[0].mxu0 %v1291
        %v1715 = vpop.f32.mrb[0].mxu0
        %v1716 = vadd.f32 %v1467, %v1715
        %v1717 = vpop.f32.mrb[0].mxu0
        %1718 = vmatprep.mubr.f32.mxu0 0.0
        %1719 = vmatmul.mubr.f32.gmra.mrb[0].mxu0 %v1294
        %v1720 = vpop.f32.mrb[0].mxu0
        %v1721 = vadd.f32 %v1472, %v1720
        %v1722 = vpop.f32.mrb[0].mxu0
        %1723 = vmatprep.mubr.f32.mxu0 0.0
        %1724 = vmatmul.mubr.f32.gmra.mrb[0].mxu0 %v1297
        %v1725 = vpop.f32.mrb[0].mxu0
        %v1726 = vadd.f32 %v1477, %v1725
        %v1727 = vpop.f32.mrb[0].mxu0
        %1728 = vmatprep.mubr.f32.mxu0 0.0
        %1729 = vmatmul.mubr.f32.gmra.mrb[0].mxu0 %v1300
        %v1730 = vpop.f32.mrb[0].mxu0
        %v1731 = vadd.f32 %v1482, %v1730
        %v1732 = vpop.f32.mrb[0].mxu0
        %1733 = vmatprep.mubr.f32.mxu0 0.0
        %1734 = vmatmul.mubr.f32.gmra.mrb[0].mxu0 %v1303
        %v1735 = vpop.f32.mrb[0].mxu0
        %v1736 = vadd.f32 %v1487, %v1735
        %v1737 = vpop.f32.mrb[0].mxu0
        %1738 = vmatprep.mubr.f32.mxu0 0.0
        %1739 = vmatmul.mubr.f32.gmra.mrb[0].mxu0 %v1531
        %v1740 = vpop.f32.mrb[0].mxu0
        %v1741 = vadd.f32 %v1492, %v1740
        %v1742 = vpop.f32.mrb[0].mxu0
        %1743 = vmatprep.mubr.f32.mxu0 0.0
        %1744 = vmatmul.mubr.f32.gmra.mrb[0].mxu0 %v1534
        %v1745 = vpop.f32.mrb[0].mxu0
        %v1746 = vadd.f32 %v1497, %v1745
        %v1747 = vpop.f32.mrb[0].mxu0
        %1748 = vmatprep.mubr.f32.mxu0 0.0
        %1749 = vmatmul.mubr.f32.gmra.mrb[0].mxu0 %v1537
        %v1750 = vpop.f32.mrb[0].mxu0
        %v1751 = vadd.f32 %v1502, %v1750
        %v1752 = vpop.f32.mrb[0].mxu0
        %1753 = vmatprep.mubr.f32.mxu0 0.0
        %1754 = vmatmul.mubr.f32.gmra.mrb[0].mxu0 %v1540
        %v1755 = vpop.f32.mrb[0].mxu0
        %v1756 = vadd.f32 %v1507, %v1755
        %v1757 = vpop.f32.mrb[0].mxu0
        %1758 = vmatprep.mubr.f32.mxu0 0.0
        %1759 = vmatmul.mubr.f32.gmra.mrb[0].mxu0 %v1543
        %v1760 = vpop.f32.mrb[0].mxu0
        %v1761 = vadd.f32 %v1512, %v1760
        %v1762 = vpop.f32.mrb[0].mxu0
        %1763 = vmatprep.mubr.f32.mxu0 0.0
        %1764 = vmatmul.mubr.f32.gmra.mrb[0].mxu0 %v1546
        %v1765 = vpop.f32.mrb[0].mxu0
        %v1766 = vadd.f32 %v1517, %v1765
        %v1767 = vpop.f32.mrb[0].mxu0
        %1768 = vmatprep.mubr.f32.mxu0 0.0
        %1769 = vmatmul.mubr.f32.gmra.mrb[0].mxu0 %v1549
        %v1770 = vpop.f32.mrb[0].mxu0
        %v1771 = vadd.f32 %v1522, %v1770
        %v1772 = vpop.f32.mrb[0].mxu0
        %1773 = vmatprep.mubr.f32.mxu0 0.0
        %1774 = vmatmul.mubr.f32.gmra.mrb[0].mxu0 %v1552
        %v1775 = vpop.f32.mrb[0].mxu0
        %v1776 = vadd.f32 %v1527, %v1775
        %v1777 = vpop.f32.mrb[0].mxu0
        %1778 = vdwg.mxu0
        %v1779 = vld [vmem:[%s310] sm:$0xff]
        %v1780 = vld [vmem:[%s310 + $0x8] sm:$0xff]
        %v1781 = vld [vmem:[%s310 + $0x10] sm:$0xff]
        %v1782 = vld [vmem:[%s310 + $0x18] sm:$0xff]
        %v1783 = vld [vmem:[%s310 + $0x20] sm:$0xff]
        %v1784 = vld [vmem:[%s310 + $0x28] sm:$0xff]
        %v1785 = vld [vmem:[%s310 + $0x30] sm:$0xff]
        %v1786 = vld [vmem:[%s310 + $0x38] sm:$0xff]
        %v1787 = vld [vmem:[%s310 + $0x80] sm:$0xff]
        %v1788 = vld [vmem:[%s310 + $0x88] sm:$0xff]
        %v1789 = vld [vmem:[%s310 + $0x90] sm:$0xff]
        %v1790 = vld [vmem:[%s310 + $0x98] sm:$0xff]
        %v1791 = vld [vmem:[%s310 + $0xa0] sm:$0xff]
        %v1792 = vld [vmem:[%s310 + $0xa8] sm:$0xff]
        %v1793 = vld [vmem:[%s310 + $0xb0] sm:$0xff]
        %v1794 = vld [vmem:[%s310 + $0xb8] sm:$0xff]
        %v1795 = vld [vmem:[%s310 + $0x100] sm:$0xff]
        %v1796 = vld [vmem:[%s310 + $0x108] sm:$0xff]
        %v1797 = vld [vmem:[%s310 + $0x110] sm:$0xff]
        %v1798 = vld [vmem:[%s310 + $0x118] sm:$0xff]
        %v1799 = vld [vmem:[%s310 + $0x120] sm:$0xff]
        %v1800 = vld [vmem:[%s310 + $0x128] sm:$0xff]
        %v1801 = vld [vmem:[%s310 + $0x130] sm:$0xff]
        %v1802 = vld [vmem:[%s310 + $0x138] sm:$0xff]
        %v1803 = vld [vmem:[%s310 + $0x180] sm:$0xff]
        %v1804 = vld [vmem:[%s310 + $0x188] sm:$0xff]
        %v1805 = vld [vmem:[%s310 + $0x190] sm:$0xff]
        %v1806 = vld [vmem:[%s310 + $0x198] sm:$0xff]
        %v1807 = vld [vmem:[%s310 + $0x1a0] sm:$0xff]
        %v1808 = vld [vmem:[%s310 + $0x1a8] sm:$0xff]
        %v1809 = vld [vmem:[%s310 + $0x1b0] sm:$0xff]
        %v1810 = vld [vmem:[%s310 + $0x1b8] sm:$0xff]
        %v1811 = vadd.f32 %v1621, %v1779
        %v1812 = vadd.f32 %v1626, %v1780
        %v1813 = vadd.f32 %v1631, %v1781
        %v1814 = vadd.f32 %v1636, %v1782
        %v1815 = vadd.f32 %v1641, %v1783
        %v1816 = vadd.f32 %v1646, %v1784
        %v1817 = vadd.f32 %v1651, %v1785
        %v1818 = vadd.f32 %v1656, %v1786
        %v1819 = vadd.f32 %v1661, %v1787
        %v1820 = vadd.f32 %v1666, %v1788
        %v1821 = vadd.f32 %v1671, %v1789
        %v1822 = vadd.f32 %v1676, %v1790
        %v1823 = vadd.f32 %v1681, %v1791
        %v1824 = vadd.f32 %v1686, %v1792
        %v1825 = vadd.f32 %v1691, %v1793
        %v1826 = vadd.f32 %v1696, %v1794
        %v1827 = vadd.f32 %v1701, %v1795
        %v1828 = vadd.f32 %v1706, %v1796
        %v1829 = vadd.f32 %v1711, %v1797
        %v1830 = vadd.f32 %v1716, %v1798
        %v1831 = vadd.f32 %v1721, %v1799
        %v1832 = vadd.f32 %v1726, %v1800
        %v1833 = vadd.f32 %v1731, %v1801
        %v1834 = vadd.f32 %v1736, %v1802
        %v1835 = vadd.f32 %v1741, %v1803
        %v1836 = vadd.f32 %v1746, %v1804
        %v1837 = vadd.f32 %v1751, %v1805
        %v1838 = vadd.f32 %v1756, %v1806
        %v1839 = vadd.f32 %v1761, %v1807
        %v1840 = vadd.f32 %v1766, %v1808
        %v1841 = vadd.f32 %v1771, %v1809
        %v1842 = vadd.f32 %v1776, %v1810
        %v1843 = vmul.f32 %v1811, 25.0
        %v1844 = vmul.f32 %v1812, 25.0
        %v1845 = vmul.f32 %v1813, 25.0
        %v1846 = vmul.f32 %v1814, 25.0
        %v1847 = vmul.f32 %v1815, 25.0
        %v1848 = vmul.f32 %v1816, 25.0
        %v1849 = vmul.f32 %v1817, 25.0
        %v1850 = vmul.f32 %v1818, 25.0
        %v1851 = vmul.f32 %v1819, 25.0
        %v1852 = vmul.f32 %v1820, 25.0
        %v1853 = vmul.f32 %v1821, 25.0
        %v1854 = vmul.f32 %v1822, 25.0
        %v1855 = vmul.f32 %v1823, 25.0
        %v1856 = vmul.f32 %v1824, 25.0
        %v1857 = vmul.f32 %v1825, 25.0
        %v1858 = vmul.f32 %v1826, 25.0
        %v1859 = vmul.f32 %v1827, 25.0
        %v1860 = vmul.f32 %v1828, 25.0
        %v1861 = vmul.f32 %v1829, 25.0
        %v1862 = vmul.f32 %v1830, 25.0
        %v1863 = vmul.f32 %v1831, 25.0
        %v1864 = vmul.f32 %v1832, 25.0
        %v1865 = vmul.f32 %v1833, 25.0
        %v1866 = vmul.f32 %v1834, 25.0
        %v1867 = vmul.f32 %v1835, 25.0
        %v1868 = vmul.f32 %v1836, 25.0
        %v1869 = vmul.f32 %v1837, 25.0
        %v1870 = vmul.f32 %v1838, 25.0
        %v1871 = vmul.f32 %v1839, 25.0
        %v1872 = vmul.f32 %v1840, 25.0
        %v1873 = vmul.f32 %v1841, 25.0
        %v1874 = vmul.f32 %v1842, 25.0
        %v1875 = vadd.f32 %v1843, 100.0
        %v1876 = vadd.f32 %v1844, 100.0
        %v1877 = vadd.f32 %v1845, 100.0
        %v1878 = vadd.f32 %v1846, 100.0
        %v1879 = vadd.f32 %v1847, 100.0
        %v1880 = vadd.f32 %v1848, 100.0
        %v1881 = vadd.f32 %v1849, 100.0
        %v1882 = vadd.f32 %v1850, 100.0
        %v1883 = vadd.f32 %v1851, 100.0
        %v1884 = vadd.f32 %v1852, 100.0
        %v1885 = vadd.f32 %v1853, 100.0
        %v1886 = vadd.f32 %v1854, 100.0
        %v1887 = vadd.f32 %v1855, 100.0
        %v1888 = vadd.f32 %v1856, 100.0
        %v1889 = vadd.f32 %v1857, 100.0
        %v1890 = vadd.f32 %v1858, 100.0
        %v1891 = vadd.f32 %v1859, 100.0
        %v1892 = vadd.f32 %v1860, 100.0
        %v1893 = vadd.f32 %v1861, 100.0
        %v1894 = vadd.f32 %v1862, 100.0
        %v1895 = vadd.f32 %v1863, 100.0
        %v1896 = vadd.f32 %v1864, 100.0
        %v1897 = vadd.f32 %v1865, 100.0
        %v1898 = vadd.f32 %v1866, 100.0
        %v1899 = vadd.f32 %v1867, 100.0
        %v1900 = vadd.f32 %v1868, 100.0
        %v1901 = vadd.f32 %v1869, 100.0
        %v1902 = vadd.f32 %v1870, 100.0
        %v1903 = vadd.f32 %v1871, 100.0
        %v1904 = vadd.f32 %v1872, 100.0
        %v1905 = vadd.f32 %v1873, 100.0
        %v1906 = vadd.f32 %v1874, 100.0
        %v1907 = vmax.f32 %v1875, 0.0
        %v1908 = vmax.f32 %v1876, 0.0
        %v1909 = vmax.f32 %v1877, 0.0
        %v1910 = vmax.f32 %v1878, 0.0
        %v1911 = vmax.f32 %v1879, 0.0
        %v1912 = vmax.f32 %v1880, 0.0
        %v1913 = vmax.f32 %v1881, 0.0
        %v1914 = vmax.f32 %v1882, 0.0
        %v1915 = vmax.f32 %v1883, 0.0
        %v1916 = vmax.f32 %v1884, 0.0
        %v1917 = vmax.f32 %v1885, 0.0
        %v1918 = vmax.f32 %v1886, 0.0
        %v1919 = vmax.f32 %v1887, 0.0
        %v1920 = vmax.f32 %v1888, 0.0
        %v1921 = vmax.f32 %v1889, 0.0
        %v1922 = vmax.f32 %v1890, 0.0
        %v1923 = vmax.f32 %v1891, 0.0
        %v1924 = vmax.f32 %v1892, 0.0
        %v1925 = vmax.f32 %v1893, 0.0
        %v1926 = vmax.f32 %v1894, 0.0
        %v1927 = vmax.f32 %v1895, 0.0
        %v1928 = vmax.f32 %v1896, 0.0
        %v1929 = vmax.f32 %v1897, 0.0
        %v1930 = vmax.f32 %v1898, 0.0
        %v1931 = vmax.f32 %v1899, 0.0
        %v1932 = vmax.f32 %v1900, 0.0
        %v1933 = vmax.f32 %v1901, 0.0
        %v1934 = vmax.f32 %v1902, 0.0
        %v1935 = vmax.f32 %v1903, 0.0
        %v1936 = vmax.f32 %v1904, 0.0
        %v1937 = vmax.f32 %v1905, 0.0
        %v1938 = vmax.f32 %v1906, 0.0
        %vm1939 = vcmask 97280
        %1940 = vst.msk [vmem:[%s433] sm:$0xff] %vm1939, %v1907
        %1941 = vst.msk [vmem:[%s433 + $0x8] sm:$0xff] %vm1939, %v1908
        %1942 = vst.msk [vmem:[%s433 + $0x10] sm:$0xff] %vm1939, %v1909
        %1943 = vst.msk [vmem:[%s433 + $0x18] sm:$0xff] %vm1939, %v1910
        %1944 = vst.msk [vmem:[%s433 + $0x20] sm:$0xff] %vm1939, %v1911
        %1945 = vst.msk [vmem:[%s433 + $0x28] sm:$0xff] %vm1939, %v1912
        %1946 = vst.msk [vmem:[%s433 + $0x30] sm:$0xff] %vm1939, %v1913
        %1947 = vst.msk [vmem:[%s433 + $0x38] sm:$0xff] %vm1939, %v1914
        %1948 = vst.msk [vmem:[%s433 + $0x80] sm:$0xff] %vm1939, %v1915
        %1949 = vst.msk [vmem:[%s433 + $0x88] sm:$0xff] %vm1939, %v1916
        %1950 = vst.msk [vmem:[%s433 + $0x90] sm:$0xff] %vm1939, %v1917
        %1951 = vst.msk [vmem:[%s433 + $0x98] sm:$0xff] %vm1939, %v1918
        %1952 = vst.msk [vmem:[%s433 + $0xa0] sm:$0xff] %vm1939, %v1919
        %1953 = vst.msk [vmem:[%s433 + $0xa8] sm:$0xff] %vm1939, %v1920
        %1954 = vst.msk [vmem:[%s433 + $0xb0] sm:$0xff] %vm1939, %v1921
        %1955 = vst.msk [vmem:[%s433 + $0xb8] sm:$0xff] %vm1939, %v1922
        %1956 = vst.msk [vmem:[%s433 + $0x100] sm:$0xff] %vm1939, %v1923
        %1957 = vst.msk [vmem:[%s433 + $0x108] sm:$0xff] %vm1939, %v1924
        %1958 = vst.msk [vmem:[%s433 + $0x110] sm:$0xff] %vm1939, %v1925
        %1959 = vst.msk [vmem:[%s433 + $0x118] sm:$0xff] %vm1939, %v1926
        %1960 = vst.msk [vmem:[%s433 + $0x120] sm:$0xff] %vm1939, %v1927
        %1961 = vst.msk [vmem:[%s433 + $0x128] sm:$0xff] %vm1939, %v1928
        %1962 = vst.msk [vmem:[%s433 + $0x130] sm:$0xff] %vm1939, %v1929
        %1963 = vst.msk [vmem:[%s433 + $0x138] sm:$0xff] %vm1939, %v1930
        %1964 = vst.msk [vmem:[%s433 + $0x180] sm:$0xff] %vm1939, %v1931
        %1965 = vst.msk [vmem:[%s433 + $0x188] sm:$0xff] %vm1939, %v1932
        %1966 = vst.msk [vmem:[%s433 + $0x190] sm:$0xff] %vm1939, %v1933
        %1967 = vst.msk [vmem:[%s433 + $0x198] sm:$0xff] %vm1939, %v1934
        %1968 = vst.msk [vmem:[%s433 + $0x1a0] sm:$0xff] %vm1939, %v1935
        %1969 = vst.msk [vmem:[%s433 + $0x1a8] sm:$0xff] %vm1939, %v1936
        %1970 = vst.msk [vmem:[%s433 + $0x1b0] sm:$0xff] %vm1939, %v1937
        %1971 = vst.msk [vmem:[%s433 + $0x1b8] sm:$0xff] %vm1939, %v1938
        %s1972 = scalar_lea.vmem %s3, 96
        %v1973 = vld [vmem:[%s1972] sm:$0xff]
        %v1974 = vld [vmem:[%s1972 + $0x8] sm:$0xff]
        %v1975 = vld [vmem:[%s1972 + $0x10] sm:$0xff]
        %v1976 = vld [vmem:[%s1972 + $0x18] sm:$0xff]
        %v1977 = vld [vmem:[%s1972 + $0x20] sm:$0xff]
        %v1978 = vld [vmem:[%s1972 + $0x28] sm:$0xff]
        %s1979 = scalar_lea.vmem %s3, 144
        %v1980 = vld [vmem:[%s1979] sm:$0xff]
        %v1981 = vld [vmem:[%s1979 + $0x8] sm:$0xff]
        %v1982 = vld [vmem:[%s1979 + $0x10] sm:$0xff]
        %v1983 = vld [vmem:[%s1979 + $0x18] sm:$0xff]
        %v1984 = vld [vmem:[%s1979 + $0x20] sm:$0xff]
        %v1985 = vld [vmem:[%s1979 + $0x28] sm:$0xff]
        %v1987 = vsel %vm1208, %v1187, 0
        %v1990 = vsel %vm1208, %v1188, 0
        %v1993 = vsel %vm1208, %v1189, 0
        %v1996 = vsel %vm1208, %v1190, 0
        %v1999 = vsel %vm1208, %v1191, 0
        %v2002 = vsel %vm1208, %v1192, 0
        %v2005 = vsel %vm1208, %v1193, 0
        %v2008 = vsel %vm1208, %v1194, 0
        %2010 = vmatprep.subr.mxu0 0.0
        %2011 = vmatpush1.msra.mxu0 %v1980
        %2012 = vmatprep.subr.mxu0 0.0
        %2013 = vmatpush1.msra.mxu0 %v1981
        %2014 = vmatprep.subr.mxu0 0.0
        %2015 = vmatpush1.msra.mxu0 %v1982
        %2016 = vmatprep.subr.mxu0 0.0
        %2017 = vmatpush1.msra.mxu0 %v1983
        %2018 = vmatprep.subr.mxu0 0.0
        %2019 = vmatpush1.msra.mxu0 %v1984
        %2020 = vmatprep.subr.mxu0 0.0
        %2021 = vmatpush1.msra.mxu0 %v1985
        %2022 = vmatprep.subr.mxu0 0.0
        %2023 = vmatpush1.msra.mxu0 0.0
        %2024 = vmatprep.subr.mxu0 0.0
        %2025 = vmatpush1.msra.mxu0 0.0
        %2026 = vmatprep.subr.mxu0 0.0
        %2027 = vmatpush1.msra.mxu0 0.0
        %2028 = vmatprep.subr.mxu0 0.0
        %2029 = vmatpush1.msra.mxu0 0.0
        %2030 = vmatprep.subr.mxu0 0.0
        %2031 = vmatpush1.msra.mxu0 0.0
        %2032 = vmatprep.subr.mxu0 0.0
        %2033 = vmatpush1.msra.mxu0 0.0
        %2034 = vmatprep.subr.mxu0 0.0
        %2035 = vmatpush1.msra.mxu0 0.0
        %2036 = vmatprep.subr.mxu0 0.0
        %2037 = vmatpush1.msra.mxu0 0.0
        %2038 = vmatprep.subr.mxu0 0.0
        %2039 = vmatpush1.msra.mxu0 0.0
        %2040 = vmatprep.subr.mxu0 0.0
        %2041 = vmatpush1.msra.mxu0 0.0
        %2042 = vmatprep.subr.mxu0 0.0
        %2043 = vmatpush1.msra.mxu0 0.0
        %2044 = vmatprep.subr.mxu0 0.0
        %2045 = vmatpush1.msra.mxu0 0.0
        %2046 = vmatprep.subr.mxu0 0.0
        %2047 = vmatpush1.msra.mxu0 0.0
        %2048 = vmatprep.subr.mxu0 0.0
        %2049 = vmatpush1.msra.mxu0 0.0
        %2050 = vmatprep.subr.mxu0 0.0
        %2051 = vmatpush1.msra.mxu0 0.0
        %2052 = vmatprep.subr.mxu0 0.0
        %2053 = vmatpush1.msra.mxu0 0.0
        %2054 = vmatprep.subr.mxu0 0.0
        %2055 = vmatpush1.msra.mxu0 0.0
        %2056 = vmatprep.subr.mxu0 0.0
        %2057 = vmatpush1.msra.mxu0 0.0
        %2058 = vmatprep.subr.mxu0 0.0
        %2059 = vmatpush1.msra.mxu0 0.0
        %2060 = vmatprep.subr.mxu0 0.0
        %2061 = vmatpush1.msra.mxu0 0.0
        %2062 = vmatprep.subr.mxu0 0.0
        %2063 = vmatpush1.msra.mxu0 0.0
        %2064 = vmatprep.subr.mxu0 0.0
        %2065 = vmatpush1.msra.mxu0 0.0
        %2066 = vmatprep.subr.mxu0 0.0
        %2067 = vmatpush1.msra.mxu0 0.0
        %2068 = vmatprep.subr.mxu0 0.0
        %2069 = vmatpush1.msra.mxu0 0.0
        %2070 = vmatprep.subr.mxu0 0.0
        %2071 = vmatpush1.msra.mxu0 0.0
        %2072 = vmatprep.subr.mxu0 0.0
        %2073 = vmatpush1.msra.mxu0 0.0
        %2074 = vmatprep.mubr.f32.mxu0 0.0
        %2075 = vmatmul.mubr.f32.gmra.mrb[0].mxu0 %v1258
        %v2076 = vpop.f32.mrb[0].mxu0
        %v2077 = vadd.f32 0.0, %v2076
        %v2078 = vpop.f32.mrb[0].mxu0
        %2079 = vmatprep.mubr.f32.mxu0 0.0
        %2080 = vmatmul.mubr.f32.gmra.mrb[0].mxu0 %v1261
        %v2081 = vpop.f32.mrb[0].mxu0
        %v2082 = vadd.f32 0.0, %v2081
        %v2083 = vpop.f32.mrb[0].mxu0
        %2084 = vmatprep.mubr.f32.mxu0 0.0
        %2085 = vmatmul.mubr.f32.gmra.mrb[0].mxu0 %v1264
        %v2086 = vpop.f32.mrb[0].mxu0
        %v2087 = vadd.f32 0.0, %v2086
        %v2088 = vpop.f32.mrb[0].mxu0
        %2089 = vmatprep.mubr.f32.mxu0 0.0
        %2090 = vmatmul.mubr.f32.gmra.mrb[0].mxu0 %v1267
        %v2091 = vpop.f32.mrb[0].mxu0
        %v2092 = vadd.f32 0.0, %v2091
        %v2093 = vpop.f32.mrb[0].mxu0
        %2094 = vmatprep.mubr.f32.mxu0 0.0
        %2095 = vmatmul.mubr.f32.gmra.mrb[0].mxu0 %v1270
        %v2096 = vpop.f32.mrb[0].mxu0
        %v2097 = vadd.f32 0.0, %v2096
        %v2098 = vpop.f32.mrb[0].mxu0
        %2099 = vmatprep.mubr.f32.mxu0 0.0
        %2100 = vmatmul.mubr.f32.gmra.mrb[0].mxu0 %v1273
        %v2101 = vpop.f32.mrb[0].mxu0
        %v2102 = vadd.f32 0.0, %v2101
        %v2103 = vpop.f32.mrb[0].mxu0
        %2104 = vmatprep.mubr.f32.mxu0 0.0
        %2105 = vmatmul.mubr.f32.gmra.mrb[0].mxu0 %v1276
        %v2106 = vpop.f32.mrb[0].mxu0
        %v2107 = vadd.f32 0.0, %v2106
        %v2108 = vpop.f32.mrb[0].mxu0
        %2109 = vmatprep.mubr.f32.mxu0 0.0
        %2110 = vmatmul.mubr.f32.gmra.mrb[0].mxu0 %v1279
        %v2111 = vpop.f32.mrb[0].mxu0
        %v2112 = vadd.f32 0.0, %v2111
        %v2113 = vpop.f32.mrb[0].mxu0
        %2114 = vmatprep.mubr.f32.mxu0 0.0
        %2115 = vmatmul.mubr.f32.gmra.mrb[0].mxu0 %v1282
        %v2116 = vpop.f32.mrb[0].mxu0
        %v2117 = vadd.f32 0.0, %v2116
        %v2118 = vpop.f32.mrb[0].mxu0
        %2119 = vmatprep.mubr.f32.mxu0 0.0
        %2120 = vmatmul.mubr.f32.gmra.mrb[0].mxu0 %v1285
        %v2121 = vpop.f32.mrb[0].mxu0
        %v2122 = vadd.f32 0.0, %v2121
        %v2123 = vpop.f32.mrb[0].mxu0
        %2124 = vmatprep.mubr.f32.mxu0 0.0
        %2125 = vmatmul.mubr.f32.gmra.mrb[0].mxu0 %v1288
        %v2126 = vpop.f32.mrb[0].mxu0
        %v2127 = vadd.f32 0.0, %v2126
        %v2128 = vpop.f32.mrb[0].mxu0
        %2129 = vmatprep.mubr.f32.mxu0 0.0
        %2130 = vmatmul.mubr.f32.gmra.mrb[0].mxu0 %v1291
        %v2131 = vpop.f32.mrb[0].mxu0
        %v2132 = vadd.f32 0.0, %v2131
        %v2133 = vpop.f32.mrb[0].mxu0
        %2134 = vmatprep.mubr.f32.mxu0 0.0
        %2135 = vmatmul.mubr.f32.gmra.mrb[0].mxu0 %v1294
        %v2136 = vpop.f32.mrb[0].mxu0
        %v2137 = vadd.f32 0.0, %v2136
        %v2138 = vpop.f32.mrb[0].mxu0
        %2139 = vmatprep.mubr.f32.mxu0 0.0
        %2140 = vmatmul.mubr.f32.gmra.mrb[0].mxu0 %v1297
        %v2141 = vpop.f32.mrb[0].mxu0
        %v2142 = vadd.f32 0.0, %v2141
        %v2143 = vpop.f32.mrb[0].mxu0
        %2144 = vmatprep.mubr.f32.mxu0 0.0
        %2145 = vmatmul.mubr.f32.gmra.mrb[0].mxu0 %v1300
        %v2146 = vpop.f32.mrb[0].mxu0
        %v2147 = vadd.f32 0.0, %v2146
        %v2148 = vpop.f32.mrb[0].mxu0
        %2149 = vmatprep.mubr.f32.mxu0 0.0
        %2150 = vmatmul.mubr.f32.gmra.mrb[0].mxu0 %v1303
        %v2151 = vpop.f32.mrb[0].mxu0
        %v2152 = vadd.f32 0.0, %v2151
        %v2153 = vpop.f32.mrb[0].mxu0
        %2154 = vmatprep.mubr.f32.mxu0 0.0
        %2155 = vmatmul.mubr.f32.gmra.mrb[0].mxu0 %v1531
        %v2156 = vpop.f32.mrb[0].mxu0
        %v2157 = vadd.f32 0.0, %v2156
        %v2158 = vpop.f32.mrb[0].mxu0
        %2159 = vmatprep.mubr.f32.mxu0 0.0
        %2160 = vmatmul.mubr.f32.gmra.mrb[0].mxu0 %v1534
        %v2161 = vpop.f32.mrb[0].mxu0
        %v2162 = vadd.f32 0.0, %v2161
        %v2163 = vpop.f32.mrb[0].mxu0
        %2164 = vmatprep.mubr.f32.mxu0 0.0
        %2165 = vmatmul.mubr.f32.gmra.mrb[0].mxu0 %v1537
        %v2166 = vpop.f32.mrb[0].mxu0
        %v2167 = vadd.f32 0.0, %v2166
        %v2168 = vpop.f32.mrb[0].mxu0
        %2169 = vmatprep.mubr.f32.mxu0 0.0
        %2170 = vmatmul.mubr.f32.gmra.mrb[0].mxu0 %v1540
        %v2171 = vpop.f32.mrb[0].mxu0
        %v2172 = vadd.f32 0.0, %v2171
        %v2173 = vpop.f32.mrb[0].mxu0
        %2174 = vmatprep.mubr.f32.mxu0 0.0
        %2175 = vmatmul.mubr.f32.gmra.mrb[0].mxu0 %v1543
        %v2176 = vpop.f32.mrb[0].mxu0
        %v2177 = vadd.f32 0.0, %v2176
        %v2178 = vpop.f32.mrb[0].mxu0
        %2179 = vmatprep.mubr.f32.mxu0 0.0
        %2180 = vmatmul.mubr.f32.gmra.mrb[0].mxu0 %v1546
        %v2181 = vpop.f32.mrb[0].mxu0
        %v2182 = vadd.f32 0.0, %v2181
        %v2183 = vpop.f32.mrb[0].mxu0
        %2184 = vmatprep.mubr.f32.mxu0 0.0
        %2185 = vmatmul.mubr.f32.gmra.mrb[0].mxu0 %v1549
        %v2186 = vpop.f32.mrb[0].mxu0
        %v2187 = vadd.f32 0.0, %v2186
        %v2188 = vpop.f32.mrb[0].mxu0
        %2189 = vmatprep.mubr.f32.mxu0 0.0
        %2190 = vmatmul.mubr.f32.gmra.mrb[0].mxu0 %v1552
        %v2191 = vpop.f32.mrb[0].mxu0
        %v2192 = vadd.f32 0.0, %v2191
        %v2193 = vpop.f32.mrb[0].mxu0
        %2194 = vmatprep.mubr.f32.mxu0 0.0
        %2195 = vmatmul.mubr.f32.gmra.mrb[0].mxu0 %v1987
        %v2196 = vpop.f32.mrb[0].mxu0
        %v2197 = vadd.f32 0.0, %v2196
        %v2198 = vpop.f32.mrb[0].mxu0
        %2199 = vmatprep.mubr.f32.mxu0 0.0
        %2200 = vmatmul.mubr.f32.gmra.mrb[0].mxu0 %v1990
        %v2201 = vpop.f32.mrb[0].mxu0
        %v2202 = vadd.f32 0.0, %v2201
        %v2203 = vpop.f32.mrb[0].mxu0
        %2204 = vmatprep.mubr.f32.mxu0 0.0
        %2205 = vmatmul.mubr.f32.gmra.mrb[0].mxu0 %v1993
        %v2206 = vpop.f32.mrb[0].mxu0
        %v2207 = vadd.f32 0.0, %v2206
        %v2208 = vpop.f32.mrb[0].mxu0
        %2209 = vmatprep.mubr.f32.mxu0 0.0
        %2210 = vmatmul.mubr.f32.gmra.mrb[0].mxu0 %v1996
        %v2211 = vpop.f32.mrb[0].mxu0
        %v2212 = vadd.f32 0.0, %v2211
        %v2213 = vpop.f32.mrb[0].mxu0
        %2214 = vmatprep.mubr.f32.mxu0 0.0
        %2215 = vmatmul.mubr.f32.gmra.mrb[0].mxu0 %v1999
        %v2216 = vpop.f32.mrb[0].mxu0
        %v2217 = vadd.f32 0.0, %v2216
        %v2218 = vpop.f32.mrb[0].mxu0
        %2219 = vmatprep.mubr.f32.mxu0 0.0
        %2220 = vmatmul.mubr.f32.gmra.mrb[0].mxu0 %v2002
        %v2221 = vpop.f32.mrb[0].mxu0
        %v2222 = vadd.f32 0.0, %v2221
        %v2223 = vpop.f32.mrb[0].mxu0
        %2224 = vmatprep.mubr.f32.mxu0 0.0
        %2225 = vmatmul.mubr.f32.gmra.mrb[0].mxu0 %v2005
        %v2226 = vpop.f32.mrb[0].mxu0
        %v2227 = vadd.f32 0.0, %v2226
        %v2228 = vpop.f32.mrb[0].mxu0
        %2229 = vmatprep.mubr.f32.mxu0 0.0
        %2230 = vmatmul.mubr.f32.gmra.mrb[0].mxu0 %v2008
        %v2231 = vpop.f32.mrb[0].mxu0
        %v2232 = vadd.f32 0.0, %v2231
        %v2233 = vpop.f32.mrb[0].mxu0
        %2234 = vdwg.mxu0
        %2235 = vmatprep.subr.mxu0 0.0
        %2236 = vmatpush1.msra.mxu0 %v1973
        %2237 = vmatprep.subr.mxu0 0.0
        %2238 = vmatpush1.msra.mxu0 %v1974
        %2239 = vmatprep.subr.mxu0 0.0
        %2240 = vmatpush1.msra.mxu0 %v1975
        %2241 = vmatprep.subr.mxu0 0.0
        %2242 = vmatpush1.msra.mxu0 %v1976
        %2243 = vmatprep.subr.mxu0 0.0
        %2244 = vmatpush1.msra.mxu0 %v1977
        %2245 = vmatprep.subr.mxu0 0.0
        %2246 = vmatpush1.msra.mxu0 %v1978
        %2247 = vmatprep.subr.mxu0 0.0
        %2248 = vmatpush1.msra.mxu0 0.0
        %2249 = vmatprep.subr.mxu0 0.0
        %2250 = vmatpush1.msra.mxu0 0.0
        %2251 = vmatprep.subr.mxu0 0.0
        %2252 = vmatpush1.msra.mxu0 0.0
        %2253 = vmatprep.subr.mxu0 0.0
        %2254 = vmatpush1.msra.mxu0 0.0
        %2255 = vmatprep.subr.mxu0 0.0
        %2256 = vmatpush1.msra.mxu0 0.0
        %2257 = vmatprep.subr.mxu0 0.0
        %2258 = vmatpush1.msra.mxu0 0.0
        %2259 = vmatprep.subr.mxu0 0.0
        %2260 = vmatpush1.msra.mxu0 0.0
        %2261 = vmatprep.subr.mxu0 0.0
        %2262 = vmatpush1.msra.mxu0 0.0
        %2263 = vmatprep.subr.mxu0 0.0
        %2264 = vmatpush1.msra.mxu0 0.0
        %2265 = vmatprep.subr.mxu0 0.0
        %2266 = vmatpush1.msra.mxu0 0.0
        %2267 = vmatprep.subr.mxu0 0.0
        %2268 = vmatpush1.msra.mxu0 0.0
        %2269 = vmatprep.subr.mxu0 0.0
        %2270 = vmatpush1.msra.mxu0 0.0
        %2271 = vmatprep.subr.mxu0 0.0
        %2272 = vmatpush1.msra.mxu0 0.0
        %2273 = vmatprep.subr.mxu0 0.0
        %2274 = vmatpush1.msra.mxu0 0.0
        %2275 = vmatprep.subr.mxu0 0.0
        %2276 = vmatpush1.msra.mxu0 0.0
        %2277 = vmatprep.subr.mxu0 0.0
        %2278 = vmatpush1.msra.mxu0 0.0
        %2279 = vmatprep.subr.mxu0 0.0
        %2280 = vmatpush1.msra.mxu0 0.0
        %2281 = vmatprep.subr.mxu0 0.0
        %2282 = vmatpush1.msra.mxu0 0.0
        %2283 = vmatprep.subr.mxu0 0.0
        %2284 = vmatpush1.msra.mxu0 0.0
        %2285 = vmatprep.subr.mxu0 0.0
        %2286 = vmatpush1.msra.mxu0 0.0
        %2287 = vmatprep.subr.mxu0 0.0
        %2288 = vmatpush1.msra.mxu0 0.0
        %2289 = vmatprep.subr.mxu0 0.0
        %2290 = vmatpush1.msra.mxu0 0.0
        %2291 = vmatprep.subr.mxu0 0.0
        %2292 = vmatpush1.msra.mxu0 0.0
        %2293 = vmatprep.subr.mxu0 0.0
        %2294 = vmatpush1.msra.mxu0 0.0
        %2295 = vmatprep.subr.mxu0 0.0
        %2296 = vmatpush1.msra.mxu0 0.0
        %2297 = vmatprep.subr.mxu0 0.0
        %2298 = vmatpush1.msra.mxu0 0.0
        %2299 = vmatprep.mubr.f32.mxu0 0.0
        %2300 = vmatmul.mubr.f32.gmra.mrb[0].mxu0 %v1234
        %v2301 = vpop.f32.mrb[0].mxu0
        %v2302 = vadd.f32 %v2077, %v2301
        %v2303 = vpop.f32.mrb[0].mxu0
        %2304 = vmatprep.mubr.f32.mxu0 0.0
        %2305 = vmatmul.mubr.f32.gmra.mrb[0].mxu0 %v1237
        %v2306 = vpop.f32.mrb[0].mxu0
        %v2307 = vadd.f32 %v2082, %v2306
        %v2308 = vpop.f32.mrb[0].mxu0
        %2309 = vmatprep.mubr.f32.mxu0 0.0
        %2310 = vmatmul.mubr.f32.gmra.mrb[0].mxu0 %v1240
        %v2311 = vpop.f32.mrb[0].mxu0
        %v2312 = vadd.f32 %v2087, %v2311
        %v2313 = vpop.f32.mrb[0].mxu0
        %2314 = vmatprep.mubr.f32.mxu0 0.0
        %2315 = vmatmul.mubr.f32.gmra.mrb[0].mxu0 %v1243
        %v2316 = vpop.f32.mrb[0].mxu0
        %v2317 = vadd.f32 %v2092, %v2316
        %v2318 = vpop.f32.mrb[0].mxu0
        %2319 = vmatprep.mubr.f32.mxu0 0.0
        %2320 = vmatmul.mubr.f32.gmra.mrb[0].mxu0 %v1246
        %v2321 = vpop.f32.mrb[0].mxu0
        %v2322 = vadd.f32 %v2097, %v2321
        %v2323 = vpop.f32.mrb[0].mxu0
        %2324 = vmatprep.mubr.f32.mxu0 0.0
        %2325 = vmatmul.mubr.f32.gmra.mrb[0].mxu0 %v1249
        %v2326 = vpop.f32.mrb[0].mxu0
        %v2327 = vadd.f32 %v2102, %v2326
        %v2328 = vpop.f32.mrb[0].mxu0
        %2329 = vmatprep.mubr.f32.mxu0 0.0
        %2330 = vmatmul.mubr.f32.gmra.mrb[0].mxu0 %v1252
        %v2331 = vpop.f32.mrb[0].mxu0
        %v2332 = vadd.f32 %v2107, %v2331
        %v2333 = vpop.f32.mrb[0].mxu0
        %2334 = vmatprep.mubr.f32.mxu0 0.0
        %2335 = vmatmul.mubr.f32.gmra.mrb[0].mxu0 %v1255
        %v2336 = vpop.f32.mrb[0].mxu0
        %v2337 = vadd.f32 %v2112, %v2336
        %v2338 = vpop.f32.mrb[0].mxu0
        %2339 = vmatprep.mubr.f32.mxu0 0.0
        %2340 = vmatmul.mubr.f32.gmra.mrb[0].mxu0 %v1258
        %v2341 = vpop.f32.mrb[0].mxu0
        %v2342 = vadd.f32 %v2117, %v2341
        %v2343 = vpop.f32.mrb[0].mxu0
        %2344 = vmatprep.mubr.f32.mxu0 0.0
        %2345 = vmatmul.mubr.f32.gmra.mrb[0].mxu0 %v1261
        %v2346 = vpop.f32.mrb[0].mxu0
        %v2347 = vadd.f32 %v2122, %v2346
        %v2348 = vpop.f32.mrb[0].mxu0
        %2349 = vmatprep.mubr.f32.mxu0 0.0
        %2350 = vmatmul.mubr.f32.gmra.mrb[0].mxu0 %v1264
        %v2351 = vpop.f32.mrb[0].mxu0
        %v2352 = vadd.f32 %v2127, %v2351
        %v2353 = vpop.f32.mrb[0].mxu0
        %2354 = vmatprep.mubr.f32.mxu0 0.0
        %2355 = vmatmul.mubr.f32.gmra.mrb[0].mxu0 %v1267
        %v2356 = vpop.f32.mrb[0].mxu0
        %v2357 = vadd.f32 %v2132, %v2356
        %v2358 = vpop.f32.mrb[0].mxu0
        %2359 = vmatprep.mubr.f32.mxu0 0.0
        %2360 = vmatmul.mubr.f32.gmra.mrb[0].mxu0 %v1270
        %v2361 = vpop.f32.mrb[0].mxu0
        %v2362 = vadd.f32 %v2137, %v2361
        %v2363 = vpop.f32.mrb[0].mxu0
        %2364 = vmatprep.mubr.f32.mxu0 0.0
        %2365 = vmatmul.mubr.f32.gmra.mrb[0].mxu0 %v1273
        %v2366 = vpop.f32.mrb[0].mxu0
        %v2367 = vadd.f32 %v2142, %v2366
        %v2368 = vpop.f32.mrb[0].mxu0
        %2369 = vmatprep.mubr.f32.mxu0 0.0
        %2370 = vmatmul.mubr.f32.gmra.mrb[0].mxu0 %v1276
        %v2371 = vpop.f32.mrb[0].mxu0
        %v2372 = vadd.f32 %v2147, %v2371
        %v2373 = vpop.f32.mrb[0].mxu0
        %2374 = vmatprep.mubr.f32.mxu0 0.0
        %2375 = vmatmul.mubr.f32.gmra.mrb[0].mxu0 %v1279
        %v2376 = vpop.f32.mrb[0].mxu0
        %v2377 = vadd.f32 %v2152, %v2376
        %v2378 = vpop.f32.mrb[0].mxu0
        %2379 = vmatprep.mubr.f32.mxu0 0.0
        %2380 = vmatmul.mubr.f32.gmra.mrb[0].mxu0 %v1282
        %v2381 = vpop.f32.mrb[0].mxu0
        %v2382 = vadd.f32 %v2157, %v2381
        %v2383 = vpop.f32.mrb[0].mxu0
        %2384 = vmatprep.mubr.f32.mxu0 0.0
        %2385 = vmatmul.mubr.f32.gmra.mrb[0].mxu0 %v1285
        %v2386 = vpop.f32.mrb[0].mxu0
        %v2387 = vadd.f32 %v2162, %v2386
        %v2388 = vpop.f32.mrb[0].mxu0
        %2389 = vmatprep.mubr.f32.mxu0 0.0
        %2390 = vmatmul.mubr.f32.gmra.mrb[0].mxu0 %v1288
        %v2391 = vpop.f32.mrb[0].mxu0
        %v2392 = vadd.f32 %v2167, %v2391
        %v2393 = vpop.f32.mrb[0].mxu0
        %2394 = vmatprep.mubr.f32.mxu0 0.0
        %2395 = vmatmul.mubr.f32.gmra.mrb[0].mxu0 %v1291
        %v2396 = vpop.f32.mrb[0].mxu0
        %v2397 = vadd.f32 %v2172, %v2396
        %v2398 = vpop.f32.mrb[0].mxu0
        %2399 = vmatprep.mubr.f32.mxu0 0.0
        %2400 = vmatmul.mubr.f32.gmra.mrb[0].mxu0 %v1294
        %v2401 = vpop.f32.mrb[0].mxu0
        %v2402 = vadd.f32 %v2177, %v2401
        %v2403 = vpop.f32.mrb[0].mxu0
        %2404 = vmatprep.mubr.f32.mxu0 0.0
        %2405 = vmatmul.mubr.f32.gmra.mrb[0].mxu0 %v1297
        %v2406 = vpop.f32.mrb[0].mxu0
        %v2407 = vadd.f32 %v2182, %v2406
        %v2408 = vpop.f32.mrb[0].mxu0
        %2409 = vmatprep.mubr.f32.mxu0 0.0
        %2410 = vmatmul.mubr.f32.gmra.mrb[0].mxu0 %v1300
        %v2411 = vpop.f32.mrb[0].mxu0
        %v2412 = vadd.f32 %v2187, %v2411
        %v2413 = vpop.f32.mrb[0].mxu0
        %2414 = vmatprep.mubr.f32.mxu0 0.0
        %2415 = vmatmul.mubr.f32.gmra.mrb[0].mxu0 %v1303
        %v2416 = vpop.f32.mrb[0].mxu0
        %v2417 = vadd.f32 %v2192, %v2416
        %v2418 = vpop.f32.mrb[0].mxu0
        %2419 = vmatprep.mubr.f32.mxu0 0.0
        %2420 = vmatmul.mubr.f32.gmra.mrb[0].mxu0 %v1531
        %v2421 = vpop.f32.mrb[0].mxu0
        %v2422 = vadd.f32 %v2197, %v2421
        %v2423 = vpop.f32.mrb[0].mxu0
        %2424 = vmatprep.mubr.f32.mxu0 0.0
        %2425 = vmatmul.mubr.f32.gmra.mrb[0].mxu0 %v1534
        %v2426 = vpop.f32.mrb[0].mxu0
        %v2427 = vadd.f32 %v2202, %v2426
        %v2428 = vpop.f32.mrb[0].mxu0
        %2429 = vmatprep.mubr.f32.mxu0 0.0
        %2430 = vmatmul.mubr.f32.gmra.mrb[0].mxu0 %v1537
        %v2431 = vpop.f32.mrb[0].mxu0
        %v2432 = vadd.f32 %v2207, %v2431
        %v2433 = vpop.f32.mrb[0].mxu0
        %2434 = vmatprep.mubr.f32.mxu0 0.0
        %2435 = vmatmul.mubr.f32.gmra.mrb[0].mxu0 %v1540
        %v2436 = vpop.f32.mrb[0].mxu0
        %v2437 = vadd.f32 %v2212, %v2436
        %v2438 = vpop.f32.mrb[0].mxu0
        %2439 = vmatprep.mubr.f32.mxu0 0.0
        %2440 = vmatmul.mubr.f32.gmra.mrb[0].mxu0 %v1543
        %v2441 = vpop.f32.mrb[0].mxu0
        %v2442 = vadd.f32 %v2217, %v2441
        %v2443 = vpop.f32.mrb[0].mxu0
        %2444 = vmatprep.mubr.f32.mxu0 0.0
        %2445 = vmatmul.mubr.f32.gmra.mrb[0].mxu0 %v1546
        %v2446 = vpop.f32.mrb[0].mxu0
        %v2447 = vadd.f32 %v2222, %v2446
        %v2448 = vpop.f32.mrb[0].mxu0
        %2449 = vmatprep.mubr.f32.mxu0 0.0
        %2450 = vmatmul.mubr.f32.gmra.mrb[0].mxu0 %v1549
        %v2451 = vpop.f32.mrb[0].mxu0
        %v2452 = vadd.f32 %v2227, %v2451
        %v2453 = vpop.f32.mrb[0].mxu0
        %2454 = vmatprep.mubr.f32.mxu0 0.0
        %2455 = vmatmul.mubr.f32.gmra.mrb[0].mxu0 %v1552
        %v2456 = vpop.f32.mrb[0].mxu0
        %v2457 = vadd.f32 %v2232, %v2456
        %v2458 = vpop.f32.mrb[0].mxu0
        %2459 = vdwg.mxu0
        %s2460 = scalar_lea.vmem %s310, 64 [#allocation2]
        %v2461 = vld [vmem:[%s2460] sm:$0xff]
        %v2462 = vld [vmem:[%s2460 + $0x8] sm:$0xff]
        %v2463 = vld [vmem:[%s2460 + $0x10] sm:$0xff]
        %v2464 = vld [vmem:[%s2460 + $0x18] sm:$0xff]
        %v2465 = vld [vmem:[%s2460 + $0x20] sm:$0xff]
        %v2466 = vld [vmem:[%s2460 + $0x28] sm:$0xff]
        %v2467 = vld [vmem:[%s2460 + $0x30] sm:$0xff]
        %v2468 = vld [vmem:[%s2460 + $0x38] sm:$0xff]
        %v2469 = vld [vmem:[%s2460 + $0x80] sm:$0xff]
        %v2470 = vld [vmem:[%s2460 + $0x88] sm:$0xff]
        %v2471 = vld [vmem:[%s2460 + $0x90] sm:$0xff]
        %v2472 = vld [vmem:[%s2460 + $0x98] sm:$0xff]
        %v2473 = vld [vmem:[%s2460 + $0xa0] sm:$0xff]
        %v2474 = vld [vmem:[%s2460 + $0xa8] sm:$0xff]
        %v2475 = vld [vmem:[%s2460 + $0xb0] sm:$0xff]
        %v2476 = vld [vmem:[%s2460 + $0xb8] sm:$0xff]
        %v2477 = vld [vmem:[%s2460 + $0x100] sm:$0xff]
        %v2478 = vld [vmem:[%s2460 + $0x108] sm:$0xff]
        %v2479 = vld [vmem:[%s2460 + $0x110] sm:$0xff]
        %v2480 = vld [vmem:[%s2460 + $0x118] sm:$0xff]
        %v2481 = vld [vmem:[%s2460 + $0x120] sm:$0xff]
        %v2482 = vld [vmem:[%s2460 + $0x128] sm:$0xff]
        %v2483 = vld [vmem:[%s2460 + $0x130] sm:$0xff]
        %v2484 = vld [vmem:[%s2460 + $0x138] sm:$0xff]
        %v2485 = vld [vmem:[%s2460 + $0x180] sm:$0xff]
        %v2486 = vld [vmem:[%s2460 + $0x188] sm:$0xff]
        %v2487 = vld [vmem:[%s2460 + $0x190] sm:$0xff]
        %v2488 = vld [vmem:[%s2460 + $0x198] sm:$0xff]
        %v2489 = vld [vmem:[%s2460 + $0x1a0] sm:$0xff]
        %v2490 = vld [vmem:[%s2460 + $0x1a8] sm:$0xff]
        %v2491 = vld [vmem:[%s2460 + $0x1b0] sm:$0xff]
        %v2492 = vld [vmem:[%s2460 + $0x1b8] sm:$0xff]
        %v2493 = vadd.f32 %v2302, %v2461
        %v2494 = vadd.f32 %v2307, %v2462
        %v2495 = vadd.f32 %v2312, %v2463
        %v2496 = vadd.f32 %v2317, %v2464
        %v2497 = vadd.f32 %v2322, %v2465
        %v2498 = vadd.f32 %v2327, %v2466
        %v2499 = vadd.f32 %v2332, %v2467
        %v2500 = vadd.f32 %v2337, %v2468
        %v2501 = vadd.f32 %v2342, %v2469
        %v2502 = vadd.f32 %v2347, %v2470
        %v2503 = vadd.f32 %v2352, %v2471
        %v2504 = vadd.f32 %v2357, %v2472
        %v2505 = vadd.f32 %v2362, %v2473
        %v2506 = vadd.f32 %v2367, %v2474
        %v2507 = vadd.f32 %v2372, %v2475
        %v2508 = vadd.f32 %v2377, %v2476
        %v2509 = vadd.f32 %v2382, %v2477
        %v2510 = vadd.f32 %v2387, %v2478
        %v2511 = vadd.f32 %v2392, %v2479
        %v2512 = vadd.f32 %v2397, %v2480
        %v2513 = vadd.f32 %v2402, %v2481
        %v2514 = vadd.f32 %v2407, %v2482
        %v2515 = vadd.f32 %v2412, %v2483
        %v2516 = vadd.f32 %v2417, %v2484
        %v2517 = vadd.f32 %v2422, %v2485
        %v2518 = vadd.f32 %v2427, %v2486
        %v2519 = vadd.f32 %v2432, %v2487
        %v2520 = vadd.f32 %v2437, %v2488
        %v2521 = vadd.f32 %v2442, %v2489
        %v2522 = vadd.f32 %v2447, %v2490
        %v2523 = vadd.f32 %v2452, %v2491
        %v2524 = vadd.f32 %v2457, %v2492
        %v2525 = vmul.f32 %v2493, 25.0
        %v2526 = vmul.f32 %v2494, 25.0
        %v2527 = vmul.f32 %v2495, 25.0
        %v2528 = vmul.f32 %v2496, 25.0
        %v2529 = vmul.f32 %v2497, 25.0
        %v2530 = vmul.f32 %v2498, 25.0
        %v2531 = vmul.f32 %v2499, 25.0
        %v2532 = vmul.f32 %v2500, 25.0
        %v2533 = vmul.f32 %v2501, 25.0
        %v2534 = vmul.f32 %v2502, 25.0
        %v2535 = vmul.f32 %v2503, 25.0
        %v2536 = vmul.f32 %v2504, 25.0
        %v2537 = vmul.f32 %v2505, 25.0
        %v2538 = vmul.f32 %v2506, 25.0
        %v2539 = vmul.f32 %v2507, 25.0
        %v2540 = vmul.f32 %v2508, 25.0
        %v2541 = vmul.f32 %v2509, 25.0
        %v2542 = vmul.f32 %v2510, 25.0
        %v2543 = vmul.f32 %v2511, 25.0
        %v2544 = vmul.f32 %v2512, 25.0
        %v2545 = vmul.f32 %v2513, 25.0
        %v2546 = vmul.f32 %v2514, 25.0
        %v2547 = vmul.f32 %v2515, 25.0
        %v2548 = vmul.f32 %v2516, 25.0
        %v2549 = vmul.f32 %v2517, 25.0
        %v2550 = vmul.f32 %v2518, 25.0
        %v2551 = vmul.f32 %v2519, 25.0
        %v2552 = vmul.f32 %v2520, 25.0
        %v2553 = vmul.f32 %v2521, 25.0
        %v2554 = vmul.f32 %v2522, 25.0
        %v2555 = vmul.f32 %v2523, 25.0
        %v2556 = vmul.f32 %v2524, 25.0
        %v2557 = vadd.f32 %v2525, 100.0
        %v2558 = vadd.f32 %v2526, 100.0
        %v2559 = vadd.f32 %v2527, 100.0
        %v2560 = vadd.f32 %v2528, 100.0
        %v2561 = vadd.f32 %v2529, 100.0
        %v2562 = vadd.f32 %v2530, 100.0
        %v2563 = vadd.f32 %v2531, 100.0
        %v2564 = vadd.f32 %v2532, 100.0
        %v2565 = vadd.f32 %v2533, 100.0
        %v2566 = vadd.f32 %v2534, 100.0
        %v2567 = vadd.f32 %v2535, 100.0
        %v2568 = vadd.f32 %v2536, 100.0
        %v2569 = vadd.f32 %v2537, 100.0
        %v2570 = vadd.f32 %v2538, 100.0
        %v2571 = vadd.f32 %v2539, 100.0
        %v2572 = vadd.f32 %v2540, 100.0
        %v2573 = vadd.f32 %v2541, 100.0
        %v2574 = vadd.f32 %v2542, 100.0
        %v2575 = vadd.f32 %v2543, 100.0
        %v2576 = vadd.f32 %v2544, 100.0
        %v2577 = vadd.f32 %v2545, 100.0
        %v2578 = vadd.f32 %v2546, 100.0
        %v2579 = vadd.f32 %v2547, 100.0
        %v2580 = vadd.f32 %v2548, 100.0
        %v2581 = vadd.f32 %v2549, 100.0
        %v2582 = vadd.f32 %v2550, 100.0
        %v2583 = vadd.f32 %v2551, 100.0
        %v2584 = vadd.f32 %v2552, 100.0
        %v2585 = vadd.f32 %v2553, 100.0
        %v2586 = vadd.f32 %v2554, 100.0
        %v2587 = vadd.f32 %v2555, 100.0
        %v2588 = vadd.f32 %v2556, 100.0
        %v2589 = vmax.f32 %v2557, 0.0
        %v2590 = vmax.f32 %v2558, 0.0
        %v2591 = vmax.f32 %v2559, 0.0
        %v2592 = vmax.f32 %v2560, 0.0
        %v2593 = vmax.f32 %v2561, 0.0
        %v2594 = vmax.f32 %v2562, 0.0
        %v2595 = vmax.f32 %v2563, 0.0
        %v2596 = vmax.f32 %v2564, 0.0
        %v2597 = vmax.f32 %v2565, 0.0
        %v2598 = vmax.f32 %v2566, 0.0
        %v2599 = vmax.f32 %v2567, 0.0
        %v2600 = vmax.f32 %v2568, 0.0
        %v2601 = vmax.f32 %v2569, 0.0
        %v2602 = vmax.f32 %v2570, 0.0
        %v2603 = vmax.f32 %v2571, 0.0
        %v2604 = vmax.f32 %v2572, 0.0
        %v2605 = vmax.f32 %v2573, 0.0
        %v2606 = vmax.f32 %v2574, 0.0
        %v2607 = vmax.f32 %v2575, 0.0
        %v2608 = vmax.f32 %v2576, 0.0
        %v2609 = vmax.f32 %v2577, 0.0
        %v2610 = vmax.f32 %v2578, 0.0
        %v2611 = vmax.f32 %v2579, 0.0
        %v2612 = vmax.f32 %v2580, 0.0
        %v2613 = vmax.f32 %v2581, 0.0
        %v2614 = vmax.f32 %v2582, 0.0
        %v2615 = vmax.f32 %v2583, 0.0
        %v2616 = vmax.f32 %v2584, 0.0
        %v2617 = vmax.f32 %v2585, 0.0
        %v2618 = vmax.f32 %v2586, 0.0
        %v2619 = vmax.f32 %v2587, 0.0
        %v2620 = vmax.f32 %v2588, 0.0
        %s2621 = scalar_lea.vmem %s433, 64
        %2622 = vst.msk [vmem:[%s2621] sm:$0xff] %vm1939, %v2589
        %2623 = vst.msk [vmem:[%s2621 + $0x8] sm:$0xff] %vm1939, %v2590
        %2624 = vst.msk [vmem:[%s2621 + $0x10] sm:$0xff] %vm1939, %v2591
        %2625 = vst.msk [vmem:[%s2621 + $0x18] sm:$0xff] %vm1939, %v2592
        %2626 = vst.msk [vmem:[%s2621 + $0x20] sm:$0xff] %vm1939, %v2593
        %2627 = vst.msk [vmem:[%s2621 + $0x28] sm:$0xff] %vm1939, %v2594
        %2628 = vst.msk [vmem:[%s2621 + $0x30] sm:$0xff] %vm1939, %v2595
        %2629 = vst.msk [vmem:[%s2621 + $0x38] sm:$0xff] %vm1939, %v2596
        %2630 = vst.msk [vmem:[%s2621 + $0x80] sm:$0xff] %vm1939, %v2597
        %2631 = vst.msk [vmem:[%s2621 + $0x88] sm:$0xff] %vm1939, %v2598
        %2632 = vst.msk [vmem:[%s2621 + $0x90] sm:$0xff] %vm1939, %v2599
        %2633 = vst.msk [vmem:[%s2621 + $0x98] sm:$0xff] %vm1939, %v2600
        %2634 = vst.msk [vmem:[%s2621 + $0xa0] sm:$0xff] %vm1939, %v2601
        %2635 = vst.msk [vmem:[%s2621 + $0xa8] sm:$0xff] %vm1939, %v2602
        %2636 = vst.msk [vmem:[%s2621 + $0xb0] sm:$0xff] %vm1939, %v2603
        %2637 = vst.msk [vmem:[%s2621 + $0xb8] sm:$0xff] %vm1939, %v2604
        %2638 = vst.msk [vmem:[%s2621 + $0x100] sm:$0xff] %vm1939, %v2605
        %2639 = vst.msk [vmem:[%s2621 + $0x108] sm:$0xff] %vm1939, %v2606
        %2640 = vst.msk [vmem:[%s2621 + $0x110] sm:$0xff] %vm1939, %v2607
        %2641 = vst.msk [vmem:[%s2621 + $0x118] sm:$0xff] %vm1939, %v2608
        %2642 = vst.msk [vmem:[%s2621 + $0x120] sm:$0xff] %vm1939, %v2609
        %2643 = vst.msk [vmem:[%s2621 + $0x128] sm:$0xff] %vm1939, %v2610
        %2644 = vst.msk [vmem:[%s2621 + $0x130] sm:$0xff] %vm1939, %v2611
        %2645 = vst.msk [vmem:[%s2621 + $0x138] sm:$0xff] %vm1939, %v2612
        %2646 = vst.msk [vmem:[%s2621 + $0x180] sm:$0xff] %vm1939, %v2613
        %2647 = vst.msk [vmem:[%s2621 + $0x188] sm:$0xff] %vm1939, %v2614
        %2648 = vst.msk [vmem:[%s2621 + $0x190] sm:$0xff] %vm1939, %v2615
        %2649 = vst.msk [vmem:[%s2621 + $0x198] sm:$0xff] %vm1939, %v2616
        %2650 = vst.msk [vmem:[%s2621 + $0x1a0] sm:$0xff] %vm1939, %v2617
        %2651 = vst.msk [vmem:[%s2621 + $0x1a8] sm:$0xff] %vm1939, %v2618
        %2652 = vst.msk [vmem:[%s2621 + $0x1b0] sm:$0xff] %vm1939, %v2619
        %2653 = vst.msk [vmem:[%s2621 + $0x1b8] sm:$0xff] %vm1939, %v2620
        %s2654 = smul.u32 4, %s23
        %p2655 = scmp.lt.s32.totalorder %s24, 1
        %s2656 = scalar_select %p2655, %s24, 1
        %p2657 = scmp.lt.s32.totalorder %s2654, 63
        %s2658 = scalar_select %p2657, %s2654, 63
        %s2659 = smul.addr %s2658, 16
        %s2660 = smul.addr %s2656, 1024
        %s2661 = sadd.s32 %s2659, %s2660
        %s2662 = smul.addr %s2661, 8
        %s2663 = scalar_lea.vmem %s5, %s2662
        // Predicated region
        $region45: #{rgb_slab_decoder_forward.7} parent=39 // pred_check
          %p2664 = pneg %p198
        $region46: #{rgb_slab_decoder_forward.7} parent=39 // pred_check_branch
          %2666 = sbr.rel (%p2664) target = $region48
        $region47: #{rgb_slab_decoder_forward.7} parent=39 // pred_region
          %s2667 = smul.u32 4, %s23
        $region48: #{rgb_slab_decoder_forward.7} parent=39 // pred_fallthru
          _
      $region40: #{rgb_slab_decoder_forward.7} parent=5 // pred_fallthru
        _
      %p2668 = scmp.le.s32.totalorder 2, %s14
      // Predicated region
      $region49: #{rgb_slab_decoder_forward.7} parent=5 // pred_check
        %p2669 = pneg %p2668
      $region50: #{rgb_slab_decoder_forward.7} parent=5 // pred_check_branch
        %2671 = sbr.rel (%p2669) target = $region52
      $region51: #{rgb_slab_decoder_forward.7} parent=5 // pred_region
        %s2672 = ssub.s32 %s14, 2
        // Predicated region
        $region53: #{rgb_slab_decoder_forward.7} parent=51 // pred_check
          %p2673 = pneg %p204
        $region54: #{rgb_slab_decoder_forward.7} parent=51 // pred_check_branch
          %2675 = sbr.rel (%p2673) target = $region56
        $region55: #{rgb_slab_decoder_forward.7} parent=51 // pred_region
          %s2676 = smul.u32 4, %s25
          %p2677 = scmp.lt.s32.totalorder %s26, 1
          %s2678 = scalar_select %p2677, %s26, 1
          %p2679 = scmp.lt.s32.totalorder %s2676, 63
          %s2680 = scalar_select %p2679, %s2676, 63
          %s2681 = smul.addr %s2680, 16
          %s2682 = smul.addr %s2678, 1024
          %s2683 = sadd.s32 %s2681, %s2682
          %s2684 = smul.addr %s2683, 8
          %s2685 = scalar_lea.vmem %s5, %s2684
        $region56: #{rgb_slab_decoder_forward.7} parent=51 // pred_fallthru
          _
      $region52: #{rgb_slab_decoder_forward.7} parent=5 // pred_fallthru
        _
    $region6: #{rgb_slab_decoder_forward.7} parent=1 // loop_footer
      %s18 = sadd.s32 1, %s14
    $region7: #{rgb_slab_decoder_forward.7} parent=1 // loop_footer_branch
      %13 = sbr.rel target = $region3
    $region8: #{rgb_slab_decoder_forward.7} parent=1 // loop_exit
      _
    %2686 = vsyncpa [#allocation3], 1
    %s2687 = scalar_lea.sflag [#allocation3], 1
    %2688 = vsyncpa %s2687, 1

</llo_original>
